<compile_context>
chip_gen: v6e
topology: v6e:2x2x1
jax: 0.10.0
libtpu: 0.0.40
codegen_flags: <defaults>
</compile_context>

<pallas_src>
import functools
import math

import jax
import jax.numpy as jnp
from jax.experimental import pallas as pl
from jax.experimental.pallas import tpu as pltpu


def _basic_block_kernel(x_ref, w1_ref, s1_ref, b1_ref, w2_ref, s2_ref, b2_ref,
                        *rest, H, W, dil, ext_residual):
    """One grid step = one batch image (batch dim squeezed).

    x_ref   : (H, W, Cin)        input image
    w1_ref  : (9, Cin, Cmid)     conv1 taps (HW flattened on tap axis)
    s1/b1   : (1, Cmid)          folded BN1 scale / bias (f32)
    w2_ref  : (9, Cmid, Cout)    conv2 taps
    s2/b2   : (1, Cout)          folded BN2 scale / bias (f32)
    rest    : [res_ref,] o_ref, xpad_ref, midpad_ref
              optional external residual (H, W, Cout), output (H, W, Cout),
              VMEM scratch for padded input and padded intermediate.
    """
    if ext_residual:
        res_ref, o_ref, xpad_ref, midpad_ref = rest
    else:
        o_ref, xpad_ref, midpad_ref = rest

    cin = x_ref.shape[-1]
    cmid = w1_ref.shape[-1]
    cout = w2_ref.shape[-1]

    # ---- pad input in VMEM: zero border, copy interior ----
    xpad_ref[...] = jnp.zeros_like(xpad_ref)
    xpad_ref[dil:dil + H, dil:dil + W, :] = x_ref[...]

    # ---- conv1 (3x3 dilated) -> BN1 -> ReLU, kept resident in VMEM ----
    xp = xpad_ref[...]
    acc1 = jnp.zeros((H * W, cmid), jnp.float32)
    for kh in range(3):
        for kw in range(3):
            patch = xp[kh * dil:kh * dil + H, kw * dil:kw * dil + W, :]
            acc1 = acc1 + jnp.dot(patch.reshape(H * W, cin),
                                  w1_ref[kh * 3 + kw],
                                  preferred_element_type=jnp.float32)
    mid = jnp.maximum(acc1 * s1_ref[...] + b1_ref[...], 0.0)      # (H*W, Cmid)

    # ---- pad intermediate in VMEM ----
    midpad_ref[...] = jnp.zeros_like(midpad_ref)
    midpad_ref[dil:dil + H, dil:dil + W, :] = (
        mid.reshape(H, W, cmid).astype(midpad_ref.dtype))

    # ---- conv2 (3x3 dilated) -> BN2 -> +residual -> ReLU ----
    mp = midpad_ref[...]
    acc2 = jnp.zeros((H * W, cout), jnp.float32)
    for kh in range(3):
        for kw in range(3):
            patch = mp[kh * dil:kh * dil + H, kw * dil:kw * dil + W, :]
            acc2 = acc2 + jnp.dot(patch.reshape(H * W, cmid),
                                  w2_ref[kh * 3 + kw],
                                  preferred_element_type=jnp.float32)
    out = acc2 * s2_ref[...] + b2_ref[...]
    out = out.reshape(H, W, cout)

    res = res_ref[...] if ext_residual else x_ref[...]            # identity skip
    out = out + res.astype(jnp.float32)
    out = jnp.maximum(out, 0.0)
    o_ref[...] = out.astype(o_ref.dtype)


def _basic_block_fused(x_nhwc, w1, s1, b1, w2, s2, b2, *, dil, residual=None):
    """x_nhwc: (N, H, W, Cin); w1: (9, Cin, Cmid); w2: (9, Cmid, Cout)."""
    N, H, W, Cin = x_nhwc.shape
    Cmid = w1.shape[-1]
    Cout = w2.shape[-1]
    Hp, Wp = H + 2 * dil, W + 2 * dil
    dtype = x_nhwc.dtype

    ext_residual = residual is not None
    if not ext_residual:
        assert Cin == Cout, "identity residual requires Cin == Cout"

    s1_2 = s1.reshape(1, Cmid).astype(jnp.float32)
    b1_2 = b1.reshape(1, Cmid).astype(jnp.float32)
    s2_2 = s2.reshape(1, Cout).astype(jnp.float32)
    b2_2 = b2.reshape(1, Cout).astype(jnp.float32)

    in_specs = [
        # input image, one batch element per grid step (batch dim squeezed)
        pl.BlockSpec((None, H, W, Cin), lambda n: (n, 0, 0, 0)),
        # weights / BN params: resident (constant index_map)
        pl.BlockSpec((9, Cin, Cmid), lambda n: (0, 0, 0)),
        pl.BlockSpec((1, Cmid), lambda n: (0, 0)),
        pl.BlockSpec((1, Cmid), lambda n: (0, 0)),
        pl.BlockSpec((9, Cmid, Cout), lambda n: (0, 0, 0)),
        pl.BlockSpec((1, Cout), lambda n: (0, 0)),
        pl.BlockSpec((1, Cout), lambda n: (0, 0)),
    ]
    args = [x_nhwc, w1, s1_2, b1_2, w2, s2_2, b2_2]
    if ext_residual:
        in_specs.append(pl.BlockSpec((None, H, W, Cout), lambda n: (n, 0, 0, 0)))
        args.append(residual)

    itemsize = jnp.dtype(dtype).itemsize
    w_itemsize = jnp.dtype(w1.dtype).itemsize
    flops = 2 * N * H * W * 9 * (Cin * Cmid + Cmid * Cout)
    bytes_accessed = (x_nhwc.size * itemsize
                      + (w1.size + w2.size) * w_itemsize
                      + N * H * W * Cout * itemsize * (2 if ext_residual else 1))

    # Rough per-step VMEM need (double-buffered I/O + resident weights + scratch).
    blk_in = H * W * Cin * itemsize
    blk_out = H * W * Cout * itemsize
    blk_res = blk_out if ext_residual else 0
    weights = ((w1.size + w2.size) * w_itemsize
               + (s1_2.size + b1_2.size + s2_2.size + b2_2.size) * 4)
    scratch = (Hp * Wp * Cin + Hp * Wp * Cmid) * itemsize
    vmem_need = 2 * (blk_in + blk_out + blk_res) + weights + scratch
    vmem_limit = int(min(max(2 * vmem_need + (4 << 20), 32 << 20), 64 << 20))

    kernel = functools.partial(_basic_block_kernel, H=H, W=W, dil=dil,
                               ext_residual=ext_residual)

    return pl.pallas_call(
        kernel,
        out_shape=jax.ShapeDtypeStruct((N, H, W, Cout), dtype),
        grid_spec=pltpu.PrefetchScalarGridSpec(
            num_scalar_prefetch=0,
            grid=(N,),
            in_specs=in_specs,
            out_specs=pl.BlockSpec((None, H, W, Cout), lambda n: (n, 0, 0, 0)),
            scratch_shapes=[pltpu.VMEM((Hp, Wp, Cin), dtype),
                            pltpu.VMEM((Hp, Wp, Cmid), dtype)],
        ),
        compiler_params=pltpu.CompilerParams(
            dimension_semantics=("parallel",),
            vmem_limit_bytes=vmem_limit),
        cost_estimate=pl.CostEstimate(
            flops=flops, transcendentals=0, bytes_accessed=bytes_accessed),
    )(*args)


def basic_block_pallas(x_nchw, params, *, dilation=1, residual_nchw=None,
                       eps=1e-5):
    """BasicBlock forward (stride=1), matching the PyTorch module in eval mode.

    x_nchw : (N, C, H, W) like PyTorch.
    params : (w1, g1, b1, m1, v1, w2, g2, b2, m2, v2) with PyTorch shapes:
             w*: (Cout, Cin, 3, 3); BN params/stats: (Cout,).
    """
    (w1, g1, b1, m1, v1, w2, g2, b2, m2, v2) = params

    x = jnp.transpose(x_nchw, (0, 2, 3, 1))                       # NCHW -> NHWC
    residual = (None if residual_nchw is None
                else jnp.transpose(residual_nchw, (0, 2, 3, 1)))

    # Fold eval-mode BatchNorm into per-channel scale/bias.
    s1 = g1 / jnp.sqrt(v1 + eps)
    bb1 = b1 - m1 * s1
    s2 = g2 / jnp.sqrt(v2 + eps)
    bb2 = b2 - m2 * s2

    # OIHW -> HWIO -> (9, Cin, Cout)
    def to_taps(w):
        cout, cin = w.shape[0], w.shape[1]
        return jnp.transpose(w, (2, 3, 1, 0)).reshape(9, cin, cout)

    out = _basic_block_fused(x, to_taps(w1), s1, bb1, to_taps(w2), s2, bb2,
                             dil=dilation, residual=residual)
    return jnp.transpose(out, (0, 3, 1, 2))                       # NHWC -> NCHW


def basic_block_reference(x_nchw, params, *, dilation=1, residual_nchw=None,
                          eps=1e-5):
    """Pure-JAX reference (lax.conv), eval-mode BN."""
    (w1, g1, b1, m1, v1, w2, g2, b2, m2, v2) = params

    def conv(x, w):
        return jax.lax.conv_general_dilated(
            x, w, window_strides=(1, 1),
            padding=((dilation, dilation), (dilation, dilation)),
            rhs_dilation=(dilation, dilation),
            dimension_numbers=("NCHW", "OIHW", "NCHW"),
            precision=jax.lax.Precision.HIGHEST)

    def bn(x, g, b, m, v):
        s = g / jnp.sqrt(v + eps)
        bb = b - m * s
        return x * s[None, :, None, None] + bb[None, :, None, None]

    residual = x_nchw if residual_nchw is None else residual_nchw
    out = jax.nn.relu(bn(conv(x_nchw, w1), g1, b1, m1, v1))
    out = bn(conv(out, w2), g2, b2, m2, v2) + residual
    return jax.nn.relu(out)


def init_basic_block_params(key, inplanes, planes, dtype=jnp.float32):
    ks = jax.random.split(key, 10)
    fan1 = inplanes * 9
    fan2 = planes * 9
    w1 = jax.random.normal(ks[0], (planes, inplanes, 3, 3), dtype) / math.sqrt(fan1)
    w2 = jax.random.normal(ks[1], (planes, planes, 3, 3), dtype) / math.sqrt(fan2)
    g1 = 1.0 + 0.1 * jax.random.normal(ks[2], (planes,), dtype)
    b1 = 0.1 * jax.random.normal(ks[3], (planes,), dtype)
    m1 = 0.1 * jax.random.normal(ks[4], (planes,), dtype)
    v1 = 1.0 + 0.5 * jax.random.uniform(ks[5], (planes,), dtype)
    g2 = 1.0 + 0.1 * jax.random.normal(ks[6], (planes,), dtype)
    b2 = 0.1 * jax.random.normal(ks[7], (planes,), dtype)
    m2 = 0.1 * jax.random.normal(ks[8], (planes,), dtype)
    v2 = 1.0 + 0.5 * jax.random.uniform(ks[9], (planes,), dtype)
    return (w1, g1, b1, m1, v1, w2, g2, b2, m2, v2)


if __name__ == "__main__":
    key = jax.random.PRNGKey(0)
    kx, kp = jax.random.split(key)

    batch, channels, spatial = 2, 4, 16
    x = jax.random.normal(kx, (batch, channels, spatial, spatial), jnp.float32)
    params = init_basic_block_params(kp, channels, channels)

    # dilation = 1, identity residual
    out = basic_block_pallas(x, params, dilation=1)
    out = jax.block_until_ready(out)
    ref = basic_block_reference(x, params, dilation=1)
    assert out.shape == x.shape
    assert jnp.allclose(out, ref, atol=1e-3, rtol=1e-3), "mismatch (dil=1)"

    # dilation = 2, identity residual
    out2 = basic_block_pallas(x, params, dilation=2)
    out2 = jax.block_until_ready(out2)
    ref2 = basic_block_reference(x, params, dilation=2)
    assert jnp.allclose(out2, ref2, atol=1e-3, rtol=1e-3), "mismatch (dil=2)"

    print("KERNEL_OK")
</pallas_src>

<mosaic_0001>
module attributes {stable_mosaic.version = 11 : i64} {
  func.func @_basic_block_kernel(%arg0: i32, %arg1: memref<1x16x16x4xf32, #tpu.memory_space<vmem>>, %arg2: memref<9x4x4xf32, #tpu.memory_space<vmem>>, %arg3: memref<1x4xf32, #tpu.memory_space<vmem>>, %arg4: memref<1x4xf32, #tpu.memory_space<vmem>>, %arg5: memref<9x4x4xf32, #tpu.memory_space<vmem>>, %arg6: memref<1x4xf32, #tpu.memory_space<vmem>>, %arg7: memref<1x4xf32, #tpu.memory_space<vmem>>, %arg8: memref<1x16x16x4xf32, #tpu.memory_space<vmem>>, %arg9: memref<18x18x4xf32, #tpu.memory_space<vmem>>, %arg10: memref<18x18x4xf32, #tpu.memory_space<vmem>>) attributes {dimension_semantics = [#tpu.dimension_semantics<parallel>], iteration_bounds = array<i64: 2>, scalar_prefetch = 0 : i64, scratch_operands = 2 : i64, tpu.core_type = #tpu.core_type<tc>, window_params = [{transform_indices = @transform_0, window_bounds = array<i64: 1, 16, 16, 4>}, {pipeline_mode = #tpu.pipeline_mode<synchronous>, transform_indices = @transform_1, window_bounds = array<i64: 9, 4, 4>}, {pipeline_mode = #tpu.pipeline_mode<synchronous>, transform_indices = @transform_2, window_bounds = array<i64: 1, 4>}, {pipeline_mode = #tpu.pipeline_mode<synchronous>, transform_indices = @transform_3, window_bounds = array<i64: 1, 4>}, {pipeline_mode = #tpu.pipeline_mode<synchronous>, transform_indices = @transform_4, window_bounds = array<i64: 9, 4, 4>}, {pipeline_mode = #tpu.pipeline_mode<synchronous>, transform_indices = @transform_5, window_bounds = array<i64: 1, 4>}, {pipeline_mode = #tpu.pipeline_mode<synchronous>, transform_indices = @transform_6, window_bounds = array<i64: 1, 4>}, {transform_indices = @transform_7, window_bounds = array<i64: 1, 16, 16, 4>}]} {
    %cst = arith.constant 0.000000e+00 : f32
    %0 = vector.broadcast %cst : f32 to vector<18x18x4xf32>
    %c0 = arith.constant 0 : index
    %c0_0 = arith.constant 0 : index
    %c0_1 = arith.constant 0 : index
    %1 = vector.load %arg9[%c0, %c0_0, %c0_1] : memref<18x18x4xf32, #tpu.memory_space<vmem>>, vector<18x18x4xf32>
    tpu.vector_store %arg9[%c0, %c0_0, %c0_1], %0 {strides = array<i32>} : memref<18x18x4xf32, #tpu.memory_space<vmem>>, vector<18x18x4xf32>,
    %c0_2 = arith.constant 0 : index
    %c0_3 = arith.constant 0 : index
    %c0_4 = arith.constant 0 : index
    %c0_5 = arith.constant 0 : index
    %2 = vector.load %arg1[%c0_2, %c0_3, %c0_4, %c0_5] : memref<1x16x16x4xf32, #tpu.memory_space<vmem>>, vector<1x16x16x4xf32>
    %3 = vector.shape_cast %2 : vector<1x16x16x4xf32> to vector<16x16x4xf32>
    %c1 = arith.constant 1 : index
    %c1_6 = arith.constant 1 : index
    %c0_7 = arith.constant 0 : index
    %4 = vector.load %arg9[%c1, %c1_6, %c0_7] : memref<18x18x4xf32, #tpu.memory_space<vmem>>, vector<16x16x4xf32>
    tpu.vector_store %arg9[%c1, %c1_6, %c0_7], %3 {strides = array<i32>} : memref<18x18x4xf32, #tpu.memory_space<vmem>>, vector<16x16x4xf32>,
    %c0_8 = arith.constant 0 : index
    %c0_9 = arith.constant 0 : index
    %c0_10 = arith.constant 0 : index
    %5 = vector.load %arg9[%c0_8, %c0_9, %c0_10] : memref<18x18x4xf32, #tpu.memory_space<vmem>>, vector<18x18x4xf32>
    %cst_11 = arith.constant 0.000000e+00 : f32
    %6 = vector.broadcast %cst_11 : f32 to vector<256x4xf32>
    %7 = vector.extract_strided_slice %5 {offsets = [0, 0, 0], sizes = [16, 16, 4], strides = [1, 1, 1]} : vector<18x18x4xf32> to vector<16x16x4xf32>
    %8 = vector.shape_cast %7 : vector<16x16x4xf32> to vector<256x4xf32>
    %c0_12 = arith.constant 0 : index
    %c0_13 = arith.constant 0 : index
    %c0_14 = arith.constant 0 : index
    %9 = vector.load %arg2[%c0_12, %c0_13, %c0_14] : memref<9x4x4xf32, #tpu.memory_space<vmem>>, vector<1x4x4xf32>
    %10 = vector.shape_cast %9 : vector<1x4x4xf32> to vector<4x4xf32>
    %cst_15 = arith.constant dense<0.000000e+00> : vector<256x4xf32>
    %11 = tpu.matmul %8, %10, %cst_15 {dimension_numbers = #tpu.dot_dimension_numbers<[1], [0], [0], [1], [0, 0, 1, 1], [], []>} : vector<256x4xf32>, vector<4x4xf32>, vector<256x4xf32> -> vector<256x4xf32>
    %12 = arith.addf %6, %11 : vector<256x4xf32>
    %13 = vector.extract_strided_slice %5 {offsets = [0, 1, 0], sizes = [16, 16, 4], strides = [1, 1, 1]} : vector<18x18x4xf32> to vector<16x16x4xf32>
    %14 = vector.shape_cast %13 : vector<16x16x4xf32> to vector<256x4xf32>
    %c1_16 = arith.constant 1 : index
    %c0_17 = arith.constant 0 : index
    %c0_18 = arith.constant 0 : index
    %15 = vector.load %arg2[%c1_16, %c0_17, %c0_18] : memref<9x4x4xf32, #tpu.memory_space<vmem>>, vector<1x4x4xf32>
    %16 = vector.shape_cast %15 : vector<1x4x4xf32> to vector<4x4xf32>
    %cst_19 = arith.constant dense<0.000000e+00> : vector<256x4xf32>
    %17 = tpu.matmul %14, %16, %cst_19 {dimension_numbers = #tpu.dot_dimension_numbers<[1], [0], [0], [1], [0, 0, 1, 1], [], []>} : vector<256x4xf32>, vector<4x4xf32>, vector<256x4xf32> -> vector<256x4xf32>
    %18 = arith.addf %12, %17 : vector<256x4xf32>
    %19 = vector.extract_strided_slice %5 {offsets = [0, 2, 0], sizes = [16, 16, 4], strides = [1, 1, 1]} : vector<18x18x4xf32> to vector<16x16x4xf32>
    %20 = vector.shape_cast %19 : vector<16x16x4xf32> to vector<256x4xf32>
    %c2 = arith.constant 2 : index
    %c0_20 = arith.constant 0 : index
    %c0_21 = arith.constant 0 : index
    %21 = vector.load %arg2[%c2, %c0_20, %c0_21] : memref<9x4x4xf32, #tpu.memory_space<vmem>>, vector<1x4x4xf32>
    %22 = vector.shape_cast %21 : vector<1x4x4xf32> to vector<4x4xf32>
    %cst_22 = arith.constant dense<0.000000e+00> : vector<256x4xf32>
    %23 = tpu.matmul %20, %22, %cst_22 {dimension_numbers = #tpu.dot_dimension_numbers<[1], [0], [0], [1], [0, 0, 1, 1], [], []>} : vector<256x4xf32>, vector<4x4xf32>, vector<256x4xf32> -> vector<256x4xf32>
    %24 = arith.addf %18, %23 : vector<256x4xf32>
    %25 = vector.extract_strided_slice %5 {offsets = [1, 0, 0], sizes = [16, 16, 4], strides = [1, 1, 1]} : vector<18x18x4xf32> to vector<16x16x4xf32>
    %26 = vector.shape_cast %25 : vector<16x16x4xf32> to vector<256x4xf32>
    %c3 = arith.constant 3 : index
    %c0_23 = arith.constant 0 : index
    %c0_24 = arith.constant 0 : index
    %27 = vector.load %arg2[%c3, %c0_23, %c0_24] : memref<9x4x4xf32, #tpu.memory_space<vmem>>, vector<1x4x4xf32>
    %28 = vector.shape_cast %27 : vector<1x4x4xf32> to vector<4x4xf32>
    %cst_25 = arith.constant dense<0.000000e+00> : vector<256x4xf32>
    %29 = tpu.matmul %26, %28, %cst_25 {dimension_numbers = #tpu.dot_dimension_numbers<[1], [0], [0], [1], [0, 0, 1, 1], [], []>} : vector<256x4xf32>, vector<4x4xf32>, vector<256x4xf32> -> vector<256x4xf32>
    %30 = arith.addf %24, %29 : vector<256x4xf32>
    %31 = vector.extract_strided_slice %5 {offsets = [1, 1, 0], sizes = [16, 16, 4], strides = [1, 1, 1]} : vector<18x18x4xf32> to vector<16x16x4xf32>
    %32 = vector.shape_cast %31 : vector<16x16x4xf32> to vector<256x4xf32>
    %c4 = arith.constant 4 : index
    %c0_26 = arith.constant 0 : index
    %c0_27 = arith.constant 0 : index
    %33 = vector.load %arg2[%c4, %c0_26, %c0_27] : memref<9x4x4xf32, #tpu.memory_space<vmem>>, vector<1x4x4xf32>
    %34 = vector.shape_cast %33 : vector<1x4x4xf32> to vector<4x4xf32>
    %cst_28 = arith.constant dense<0.000000e+00> : vector<256x4xf32>
    %35 = tpu.matmul %32, %34, %cst_28 {dimension_numbers = #tpu.dot_dimension_numbers<[1], [0], [0], [1], [0, 0, 1, 1], [], []>} : vector<256x4xf32>, vector<4x4xf32>, vector<256x4xf32> -> vector<256x4xf32>
    %36 = arith.addf %30, %35 : vector<256x4xf32>
    %37 = vector.extract_strided_slice %5 {offsets = [1, 2, 0], sizes = [16, 16, 4], strides = [1, 1, 1]} : vector<18x18x4xf32> to vector<16x16x4xf32>
    %38 = vector.shape_cast %37 : vector<16x16x4xf32> to vector<256x4xf32>
    %c5 = arith.constant 5 : index
    %c0_29 = arith.constant 0 : index
    %c0_30 = arith.constant 0 : index
    %39 = vector.load %arg2[%c5, %c0_29, %c0_30] : memref<9x4x4xf32, #tpu.memory_space<vmem>>, vector<1x4x4xf32>
    %40 = vector.shape_cast %39 : vector<1x4x4xf32> to vector<4x4xf32>
    %cst_31 = arith.constant dense<0.000000e+00> : vector<256x4xf32>
    %41 = tpu.matmul %38, %40, %cst_31 {dimension_numbers = #tpu.dot_dimension_numbers<[1], [0], [0], [1], [0, 0, 1, 1], [], []>} : vector<256x4xf32>, vector<4x4xf32>, vector<256x4xf32> -> vector<256x4xf32>
    %42 = arith.addf %36, %41 : vector<256x4xf32>
    %43 = vector.extract_strided_slice %5 {offsets = [2, 0, 0], sizes = [16, 16, 4], strides = [1, 1, 1]} : vector<18x18x4xf32> to vector<16x16x4xf32>
    %44 = vector.shape_cast %43 : vector<16x16x4xf32> to vector<256x4xf32>
    %c6 = arith.constant 6 : index
    %c0_32 = arith.constant 0 : index
    %c0_33 = arith.constant 0 : index
    %45 = vector.load %arg2[%c6, %c0_32, %c0_33] : memref<9x4x4xf32, #tpu.memory_space<vmem>>, vector<1x4x4xf32>
    %46 = vector.shape_cast %45 : vector<1x4x4xf32> to vector<4x4xf32>
    %cst_34 = arith.constant dense<0.000000e+00> : vector<256x4xf32>
    %47 = tpu.matmul %44, %46, %cst_34 {dimension_numbers = #tpu.dot_dimension_numbers<[1], [0], [0], [1], [0, 0, 1, 1], [], []>} : vector<256x4xf32>, vector<4x4xf32>, vector<256x4xf32> -> vector<256x4xf32>
    %48 = arith.addf %42, %47 : vector<256x4xf32>
    %49 = vector.extract_strided_slice %5 {offsets = [2, 1, 0], sizes = [16, 16, 4], strides = [1, 1, 1]} : vector<18x18x4xf32> to vector<16x16x4xf32>
    %50 = vector.shape_cast %49 : vector<16x16x4xf32> to vector<256x4xf32>
    %c7 = arith.constant 7 : index
    %c0_35 = arith.constant 0 : index
    %c0_36 = arith.constant 0 : index
    %51 = vector.load %arg2[%c7, %c0_35, %c0_36] : memref<9x4x4xf32, #tpu.memory_space<vmem>>, vector<1x4x4xf32>
    %52 = vector.shape_cast %51 : vector<1x4x4xf32> to vector<4x4xf32>
    %cst_37 = arith.constant dense<0.000000e+00> : vector<256x4xf32>
    %53 = tpu.matmul %50, %52, %cst_37 {dimension_numbers = #tpu.dot_dimension_numbers<[1], [0], [0], [1], [0, 0, 1, 1], [], []>} : vector<256x4xf32>, vector<4x4xf32>, vector<256x4xf32> -> vector<256x4xf32>
    %54 = arith.addf %48, %53 : vector<256x4xf32>
    %55 = vector.extract_strided_slice %5 {offsets = [2, 2, 0], sizes = [16, 16, 4], strides = [1, 1, 1]} : vector<18x18x4xf32> to vector<16x16x4xf32>
    %56 = vector.shape_cast %55 : vector<16x16x4xf32> to vector<256x4xf32>
    %c8 = arith.constant 8 : index
    %c0_38 = arith.constant 0 : index
    %c0_39 = arith.constant 0 : index
    %57 = vector.load %arg2[%c8, %c0_38, %c0_39] : memref<9x4x4xf32, #tpu.memory_space<vmem>>, vector<1x4x4xf32>
    %58 = vector.shape_cast %57 : vector<1x4x4xf32> to vector<4x4xf32>
    %cst_40 = arith.constant dense<0.000000e+00> : vector<256x4xf32>
    %59 = tpu.matmul %56, %58, %cst_40 {dimension_numbers = #tpu.dot_dimension_numbers<[1], [0], [0], [1], [0, 0, 1, 1], [], []>} : vector<256x4xf32>, vector<4x4xf32>, vector<256x4xf32> -> vector<256x4xf32>
    %60 = arith.addf %54, %59 : vector<256x4xf32>
    %c0_41 = arith.constant 0 : index
    %c0_42 = arith.constant 0 : index
    %61 = vector.load %arg3[%c0_41, %c0_42] : memref<1x4xf32, #tpu.memory_space<vmem>>, vector<1x4xf32>
    %62 = vector.broadcast %61 : vector<1x4xf32> to vector<256x4xf32>
    %63 = arith.mulf %60, %62 : vector<256x4xf32>
    %c0_43 = arith.constant 0 : index
    %c0_44 = arith.constant 0 : index
    %64 = vector.load %arg4[%c0_43, %c0_44] : memref<1x4xf32, #tpu.memory_space<vmem>>, vector<1x4xf32>
    %65 = vector.broadcast %64 : vector<1x4xf32> to vector<256x4xf32>
    %66 = arith.addf %63, %65 : vector<256x4xf32>
    %cst_45 = arith.constant 0.000000e+00 : f32
    %67 = vector.broadcast %cst_45 : f32 to vector<256x4xf32>
    %68 = arith.maximumf %66, %67 : vector<256x4xf32>
    %cst_46 = arith.constant 0.000000e+00 : f32
    %69 = vector.broadcast %cst_46 : f32 to vector<18x18x4xf32>
    %c0_47 = arith.constant 0 : index
    %c0_48 = arith.constant 0 : index
    %c0_49 = arith.constant 0 : index
    %70 = vector.load %arg10[%c0_47, %c0_48, %c0_49] : memref<18x18x4xf32, #tpu.memory_space<vmem>>, vector<18x18x4xf32>
    tpu.vector_store %arg10[%c0_47, %c0_48, %c0_49], %69 {strides = array<i32>} : memref<18x18x4xf32, #tpu.memory_space<vmem>>, vector<18x18x4xf32>,
    %71 = vector.shape_cast %68 : vector<256x4xf32> to vector<16x16x4xf32>
    %c1_50 = arith.constant 1 : index
    %c1_51 = arith.constant 1 : index
    %c0_52 = arith.constant 0 : index
    %72 = vector.load %arg10[%c1_50, %c1_51, %c0_52] : memref<18x18x4xf32, #tpu.memory_space<vmem>>, vector<16x16x4xf32>
    tpu.vector_store %arg10[%c1_50, %c1_51, %c0_52], %71 {strides = array<i32>} : memref<18x18x4xf32, #tpu.memory_space<vmem>>, vector<16x16x4xf32>,
    %c0_53 = arith.constant 0 : index
    %c0_54 = arith.constant 0 : index
    %c0_55 = arith.constant 0 : index
    %73 = vector.load %arg10[%c0_53, %c0_54, %c0_55] : memref<18x18x4xf32, #tpu.memory_space<vmem>>, vector<18x18x4xf32>
    %cst_56 = arith.constant 0.000000e+00 : f32
    %74 = vector.broadcast %cst_56 : f32 to vector<256x4xf32>
    %75 = vector.extract_strided_slice %73 {offsets = [0, 0, 0], sizes = [16, 16, 4], strides = [1, 1, 1]} : vector<18x18x4xf32> to vector<16x16x4xf32>
    %76 = vector.shape_cast %75 : vector<16x16x4xf32> to vector<256x4xf32>
    %c0_57 = arith.constant 0 : index
    %c0_58 = arith.constant 0 : index
    %c0_59 = arith.constant 0 : index
    %77 = vector.load %arg5[%c0_57, %c0_58, %c0_59] : memref<9x4x4xf32, #tpu.memory_space<vmem>>, vector<1x4x4xf32>
    %78 = vector.shape_cast %77 : vector<1x4x4xf32> to vector<4x4xf32>
    %cst_60 = arith.constant dense<0.000000e+00> : vector<256x4xf32>
    %79 = tpu.matmul %76, %78, %cst_60 {dimension_numbers = #tpu.dot_dimension_numbers<[1], [0], [0], [1], [0, 0, 1, 1], [], []>} : vector<256x4xf32>, vector<4x4xf32>, vector<256x4xf32> -> vector<256x4xf32>
    %80 = arith.addf %74, %79 : vector<256x4xf32>
    %81 = vector.extract_strided_slice %73 {offsets = [0, 1, 0], sizes = [16, 16, 4], strides = [1, 1, 1]} : vector<18x18x4xf32> to vector<16x16x4xf32>
    %82 = vector.shape_cast %81 : vector<16x16x4xf32> to vector<256x4xf32>
    %c1_61 = arith.constant 1 : index
    %c0_62 = arith.constant 0 : index
    %c0_63 = arith.constant 0 : index
    %83 = vector.load %arg5[%c1_61, %c0_62, %c0_63] : memref<9x4x4xf32, #tpu.memory_space<vmem>>, vector<1x4x4xf32>
    %84 = vector.shape_cast %83 : vector<1x4x4xf32> to vector<4x4xf32>
    %cst_64 = arith.constant dense<0.000000e+00> : vector<256x4xf32>
    %85 = tpu.matmul %82, %84, %cst_64 {dimension_numbers = #tpu.dot_dimension_numbers<[1], [0], [0], [1], [0, 0, 1, 1], [], []>} : vector<256x4xf32>, vector<4x4xf32>, vector<256x4xf32> -> vector<256x4xf32>
    %86 = arith.addf %80, %85 : vector<256x4xf32>
    %87 = vector.extract_strided_slice %73 {offsets = [0, 2, 0], sizes = [16, 16, 4], strides = [1, 1, 1]} : vector<18x18x4xf32> to vector<16x16x4xf32>
    %88 = vector.shape_cast %87 : vector<16x16x4xf32> to vector<256x4xf32>
    %c2_65 = arith.constant 2 : index
    %c0_66 = arith.constant 0 : index
    %c0_67 = arith.constant 0 : index
    %89 = vector.load %arg5[%c2_65, %c0_66, %c0_67] : memref<9x4x4xf32, #tpu.memory_space<vmem>>, vector<1x4x4xf32>
    %90 = vector.shape_cast %89 : vector<1x4x4xf32> to vector<4x4xf32>
    %cst_68 = arith.constant dense<0.000000e+00> : vector<256x4xf32>
    %91 = tpu.matmul %88, %90, %cst_68 {dimension_numbers = #tpu.dot_dimension_numbers<[1], [0], [0], [1], [0, 0, 1, 1], [], []>} : vector<256x4xf32>, vector<4x4xf32>, vector<256x4xf32> -> vector<256x4xf32>
    %92 = arith.addf %86, %91 : vector<256x4xf32>
    %93 = vector.extract_strided_slice %73 {offsets = [1, 0, 0], sizes = [16, 16, 4], strides = [1, 1, 1]} : vector<18x18x4xf32> to vector<16x16x4xf32>
    %94 = vector.shape_cast %93 : vector<16x16x4xf32> to vector<256x4xf32>
    %c3_69 = arith.constant 3 : index
    %c0_70 = arith.constant 0 : index
    %c0_71 = arith.constant 0 : index
    %95 = vector.load %arg5[%c3_69, %c0_70, %c0_71] : memref<9x4x4xf32, #tpu.memory_space<vmem>>, vector<1x4x4xf32>
    %96 = vector.shape_cast %95 : vector<1x4x4xf32> to vector<4x4xf32>
    %cst_72 = arith.constant dense<0.000000e+00> : vector<256x4xf32>
    %97 = tpu.matmul %94, %96, %cst_72 {dimension_numbers = #tpu.dot_dimension_numbers<[1], [0], [0], [1], [0, 0, 1, 1], [], []>} : vector<256x4xf32>, vector<4x4xf32>, vector<256x4xf32> -> vector<256x4xf32>
    %98 = arith.addf %92, %97 : vector<256x4xf32>
    %99 = vector.extract_strided_slice %73 {offsets = [1, 1, 0], sizes = [16, 16, 4], strides = [1, 1, 1]} : vector<18x18x4xf32> to vector<16x16x4xf32>
    %100 = vector.shape_cast %99 : vector<16x16x4xf32> to vector<256x4xf32>
    %c4_73 = arith.constant 4 : index
    %c0_74 = arith.constant 0 : index
    %c0_75 = arith.constant 0 : index
    %101 = vector.load %arg5[%c4_73, %c0_74, %c0_75] : memref<9x4x4xf32, #tpu.memory_space<vmem>>, vector<1x4x4xf32>
    %102 = vector.shape_cast %101 : vector<1x4x4xf32> to vector<4x4xf32>
    %cst_76 = arith.constant dense<0.000000e+00> : vector<256x4xf32>
    %103 = tpu.matmul %100, %102, %cst_76 {dimension_numbers = #tpu.dot_dimension_numbers<[1], [0], [0], [1], [0, 0, 1, 1], [], []>} : vector<256x4xf32>, vector<4x4xf32>, vector<256x4xf32> -> vector<256x4xf32>
    %104 = arith.addf %98, %103 : vector<256x4xf32>
    %105 = vector.extract_strided_slice %73 {offsets = [1, 2, 0], sizes = [16, 16, 4], strides = [1, 1, 1]} : vector<18x18x4xf32> to vector<16x16x4xf32>
    %106 = vector.shape_cast %105 : vector<16x16x4xf32> to vector<256x4xf32>
    %c5_77 = arith.constant 5 : index
    %c0_78 = arith.constant 0 : index
    %c0_79 = arith.constant 0 : index
    %107 = vector.load %arg5[%c5_77, %c0_78, %c0_79] : memref<9x4x4xf32, #tpu.memory_space<vmem>>, vector<1x4x4xf32>
    %108 = vector.shape_cast %107 : vector<1x4x4xf32> to vector<4x4xf32>
    %cst_80 = arith.constant dense<0.000000e+00> : vector<256x4xf32>
    %109 = tpu.matmul %106, %108, %cst_80 {dimension_numbers = #tpu.dot_dimension_numbers<[1], [0], [0], [1], [0, 0, 1, 1], [], []>} : vector<256x4xf32>, vector<4x4xf32>, vector<256x4xf32> -> vector<256x4xf32>
    %110 = arith.addf %104, %109 : vector<256x4xf32>
    %111 = vector.extract_strided_slice %73 {offsets = [2, 0, 0], sizes = [16, 16, 4], strides = [1, 1, 1]} : vector<18x18x4xf32> to vector<16x16x4xf32>
    %112 = vector.shape_cast %111 : vector<16x16x4xf32> to vector<256x4xf32>
    %c6_81 = arith.constant 6 : index
    %c0_82 = arith.constant 0 : index
    %c0_83 = arith.constant 0 : index
    %113 = vector.load %arg5[%c6_81, %c0_82, %c0_83] : memref<9x4x4xf32, #tpu.memory_space<vmem>>, vector<1x4x4xf32>
    %114 = vector.shape_cast %113 : vector<1x4x4xf32> to vector<4x4xf32>
    %cst_84 = arith.constant dense<0.000000e+00> : vector<256x4xf32>
    %115 = tpu.matmul %112, %114, %cst_84 {dimension_numbers = #tpu.dot_dimension_numbers<[1], [0], [0], [1], [0, 0, 1, 1], [], []>} : vector<256x4xf32>, vector<4x4xf32>, vector<256x4xf32> -> vector<256x4xf32>
    %116 = arith.addf %110, %115 : vector<256x4xf32>
    %117 = vector.extract_strided_slice %73 {offsets = [2, 1, 0], sizes = [16, 16, 4], strides = [1, 1, 1]} : vector<18x18x4xf32> to vector<16x16x4xf32>
    %118 = vector.shape_cast %117 : vector<16x16x4xf32> to vector<256x4xf32>
    %c7_85 = arith.constant 7 : index
    %c0_86 = arith.constant 0 : index
    %c0_87 = arith.constant 0 : index
    %119 = vector.load %arg5[%c7_85, %c0_86, %c0_87] : memref<9x4x4xf32, #tpu.memory_space<vmem>>, vector<1x4x4xf32>
    %120 = vector.shape_cast %119 : vector<1x4x4xf32> to vector<4x4xf32>
    %cst_88 = arith.constant dense<0.000000e+00> : vector<256x4xf32>
    %121 = tpu.matmul %118, %120, %cst_88 {dimension_numbers = #tpu.dot_dimension_numbers<[1], [0], [0], [1], [0, 0, 1, 1], [], []>} : vector<256x4xf32>, vector<4x4xf32>, vector<256x4xf32> -> vector<256x4xf32>
    %122 = arith.addf %116, %121 : vector<256x4xf32>
    %123 = vector.extract_strided_slice %73 {offsets = [2, 2, 0], sizes = [16, 16, 4], strides = [1, 1, 1]} : vector<18x18x4xf32> to vector<16x16x4xf32>
    %124 = vector.shape_cast %123 : vector<16x16x4xf32> to vector<256x4xf32>
    %c8_89 = arith.constant 8 : index
    %c0_90 = arith.constant 0 : index
    %c0_91 = arith.constant 0 : index
    %125 = vector.load %arg5[%c8_89, %c0_90, %c0_91] : memref<9x4x4xf32, #tpu.memory_space<vmem>>, vector<1x4x4xf32>
    %126 = vector.shape_cast %125 : vector<1x4x4xf32> to vector<4x4xf32>
    %cst_92 = arith.constant dense<0.000000e+00> : vector<256x4xf32>
    %127 = tpu.matmul %124, %126, %cst_92 {dimension_numbers = #tpu.dot_dimension_numbers<[1], [0], [0], [1], [0, 0, 1, 1], [], []>} : vector<256x4xf32>, vector<4x4xf32>, vector<256x4xf32> -> vector<256x4xf32>
    %128 = arith.addf %122, %127 : vector<256x4xf32>
    %c0_93 = arith.constant 0 : index
    %c0_94 = arith.constant 0 : index
    %129 = vector.load %arg6[%c0_93, %c0_94] : memref<1x4xf32, #tpu.memory_space<vmem>>, vector<1x4xf32>
    %130 = vector.broadcast %129 : vector<1x4xf32> to vector<256x4xf32>
    %131 = arith.mulf %128, %130 : vector<256x4xf32>
    %c0_95 = arith.constant 0 : index
    %c0_96 = arith.constant 0 : index
    %132 = vector.load %arg7[%c0_95, %c0_96] : memref<1x4xf32, #tpu.memory_space<vmem>>, vector<1x4xf32>
    %133 = vector.broadcast %132 : vector<1x4xf32> to vector<256x4xf32>
    %134 = arith.addf %131, %133 : vector<256x4xf32>
    %135 = vector.shape_cast %134 : vector<256x4xf32> to vector<16x16x4xf32>
    %c0_97 = arith.constant 0 : index
    %c0_98 = arith.constant 0 : index
    %c0_99 = arith.constant 0 : index
    %c0_100 = arith.constant 0 : index
    %136 = vector.load %arg1[%c0_97, %c0_98, %c0_99, %c0_100] : memref<1x16x16x4xf32, #tpu.memory_space<vmem>>, vector<1x16x16x4xf32>
    %137 = vector.shape_cast %136 : vector<1x16x16x4xf32> to vector<16x16x4xf32>
    %138 = arith.addf %135, %137 : vector<16x16x4xf32>
    %cst_101 = arith.constant 0.000000e+00 : f32
    %139 = vector.broadcast %cst_101 : f32 to vector<16x16x4xf32>
    %140 = arith.maximumf %138, %139 : vector<16x16x4xf32>
    %c0_102 = arith.constant 0 : index
    %c0_103 = arith.constant 0 : index
    %c0_104 = arith.constant 0 : index
    %c0_105 = arith.constant 0 : index
    %141 = vector.load %arg8[%c0_102, %c0_103, %c0_104, %c0_105] : memref<1x16x16x4xf32, #tpu.memory_space<vmem>>, vector<1x16x16x4xf32>
    %142 = vector.shape_cast %141 : vector<1x16x16x4xf32> to vector<16x16x4xf32>
    %143 = vector.shape_cast %140 : vector<16x16x4xf32> to vector<1x16x16x4xf32>
    tpu.vector_store %arg8[%c0_102, %c0_103, %c0_104, %c0_105], %143 {strides = array<i32>} : memref<1x16x16x4xf32, #tpu.memory_space<vmem>>, vector<1x16x16x4xf32>,
    return
  }
  func.func @transform_0(%arg0: i32) -> (i32, i32, i32, i32) {
    %c0_i32 = arith.constant 0 : i32
    %c0_i32_0 = arith.constant 0 : i32
    %c0_i32_1 = arith.constant 0 : i32
    %c0_i32_2 = arith.constant 0 : i32
    return %arg0, %c0_i32, %c0_i32_0, %c0_i32_1 : i32, i32, i32, i32
  }
  func.func @transform_1(%arg0: i32) -> (i32, i32, i32) {
    %c0_i32 = arith.constant 0 : i32
    %c0_i32_0 = arith.constant 0 : i32
    %c0_i32_1 = arith.constant 0 : i32
    %c0_i32_2 = arith.constant 0 : i32
    return %c0_i32, %c0_i32_0, %c0_i32_1 : i32, i32, i32
  }
  func.func @transform_2(%arg0: i32) -> (i32, i32) {
    %c0_i32 = arith.constant 0 : i32
    %c0_i32_0 = arith.constant 0 : i32
    %c0_i32_1 = arith.constant 0 : i32
    return %c0_i32, %c0_i32_0 : i32, i32
  }
  func.func @transform_3(%arg0: i32) -> (i32, i32) {
    %c0_i32 = arith.constant 0 : i32
    %c0_i32_0 = arith.constant 0 : i32
    %c0_i32_1 = arith.constant 0 : i32
    return %c0_i32, %c0_i32_0 : i32, i32
  }
  func.func @transform_4(%arg0: i32) -> (i32, i32, i32) {
    %c0_i32 = arith.constant 0 : i32
    %c0_i32_0 = arith.constant 0 : i32
    %c0_i32_1 = arith.constant 0 : i32
    %c0_i32_2 = arith.constant 0 : i32
    return %c0_i32, %c0_i32_0, %c0_i32_1 : i32, i32, i32
  }
  func.func @transform_5(%arg0: i32) -> (i32, i32) {
    %c0_i32 = arith.constant 0 : i32
    %c0_i32_0 = arith.constant 0 : i32
    %c0_i32_1 = arith.constant 0 : i32
    return %c0_i32, %c0_i32_0 : i32, i32
  }
  func.func @transform_6(%arg0: i32) -> (i32, i32) {
    %c0_i32 = arith.constant 0 : i32
    %c0_i32_0 = arith.constant 0 : i32
    %c0_i32_1 = arith.constant 0 : i32
    return %c0_i32, %c0_i32_0 : i32, i32
  }
  func.func @transform_7(%arg0: i32) -> (i32, i32, i32, i32) {
    %c0_i32 = arith.constant 0 : i32
    %c0_i32_0 = arith.constant 0 : i32
    %c0_i32_1 = arith.constant 0 : i32
    %c0_i32_2 = arith.constant 0 : i32
    return %arg0, %c0_i32, %c0_i32_0, %c0_i32_1 : i32, i32, i32, i32
  }
}

</mosaic_0001>

<llo_original>
// kernel: tpu_custom_call.1
$region0: #{tpu_custom_call.1}
  #allocation0 [shape = 'u32[]', space=smem, size = 0x4, offset = 0x4, fixed_abs, tag = 'smem constant byte address 0x4 - core index']
  #allocation1 [shape = 'u32[144,128]{1,0:T(1,128)}', space=vmem, size = 0x12000, scoped, tag = 'internal scratch']
  #allocation2 [shape = 'f32[18,18,4]{2,1,0:T(8,128)}', space=vmem, size = 0x36000, scoped, tag = 'scratch operand']
  #allocation3 [shape = 'f32[18,18,4]{2,1,0:T(8,128)}', space=vmem, size = 0x36000, scoped, tag = 'scratch operand']
  %s0 = inlined_call_operand.vmem [shape: f32[2,16,16,4], index: 0, kind: input, shape index: {}]
  %s1 = inlined_call_operand.vmem [shape: f32[9,4,4], index: 1, kind: input, shape index: {}]
  %s2 = inlined_call_operand.vmem [shape: f32[1,4], index: 2, kind: input, shape index: {}]
  %s3 = inlined_call_operand.vmem [shape: f32[1,4], index: 3, kind: input, shape index: {}]
  %s4 = inlined_call_operand.vmem [shape: f32[9,4,4], index: 4, kind: input, shape index: {}]
  %s5 = inlined_call_operand.vmem [shape: f32[1,4], index: 5, kind: input, shape index: {}]
  %s6 = inlined_call_operand.vmem [shape: f32[1,4], index: 6, kind: input, shape index: {}]
  %s7 = inlined_call_operand.vmem [shape: f32[2,16,16,4], index: 7, kind: output, shape index: {}]
  %s8 = sld [smem:[#allocation0]]
  $region61: #{tpu_custom_call.1} parent=0
    _
  %s10 = ssub.s32 1, %s8
  %s11 = scalar_select 0, %s10, %s8
  loop: start=0, step=1, limit=4
  $region2: #{tpu_custom_call.1} parent=0 // loop_pre_header
    _
  $region3: #{tpu_custom_call.1} parent=0 // loop_header
    %s13 = sphi 0, %s17
    %p14 = scmp.ge.s32.totalorder %s13, 4
    %s23 = sphi 0, %s25
    %s26 = sphi 0, %s23
    %s27 = sphi 0, %s26
    %s43 = sphi 0, %s27
    %s47 = sphi 0, %s47
    %s49 = sphi 0, %s47
    %s50 = sphi 0, %s49
    %s64 = sphi 0, %s50
    %s68 = sphi 0, %s68
    %s70 = sphi 0, %s68
    %s71 = sphi 0, %s70
    %s85 = sphi 0, %s71
    %s89 = sphi 0, %s89
    %s91 = sphi 0, %s89
    %s92 = sphi 0, %s91
    %s106 = sphi 0, %s92
    %s110 = sphi 0, %s110
    %s112 = sphi 0, %s110
    %s113 = sphi 0, %s112
    %s127 = sphi 0, %s113
    %s131 = sphi 0, %s131
    %s133 = sphi 0, %s131
    %s134 = sphi 0, %s133
    %s148 = sphi 0, %s134
    %s152 = sphi 0, %s152
    %s154 = sphi 0, %s152
    %s155 = sphi 0, %s154
    %s169 = sphi 0, %s155
    %s175 = sphi 0, %s177
    %s178 = sphi 0, %s175
    %s179 = sphi 0, %s178
    %s195 = sphi 0, %s179
  $region4: #{tpu_custom_call.1} parent=0 // loop_header_branch
    %16 = sbr.rel (%p14) target = $region8
  $region5: #{tpu_custom_call.1} parent=0 // loop_body
    %s18 = ssub.s32 %s13, 1
    %s19 = ssub.s32 %s13, 2
    %s20 = sadd.s32 %s13, 1
    %s21 = ssub.s32 %s13, %s20
    %p22 = scmp.eq.s32.totalorder %s21, 0
    %s24 = sadd.s32 %s23, 1
    %s25 = scalar_select %p22, %s23, %s24
    %p28 = pneg %p22
    %p29 = scmp.eq.s32.totalorder %s13, 1
    %p30 = por %p28, %p29
    %p31 = scmp.ne.s32.totalorder %s23, %s26
    %p32 = scmp.eq.s32.totalorder %s13, 0
    %p33 = por %p31, %p32
    %p34 = scmp.ne.s32.totalorder %s23, %s26
    %p35 = scmp.eq.s32.totalorder %s18, 1
    %p36 = por %p34, %p35
    %p37 = scmp.ne.s32.totalorder %s26, %s27
    %p38 = scmp.eq.s32.totalorder %s18, 0
    %p39 = por %p37, %p38
    %p40 = scmp.ne.s32.totalorder %s26, %s27
    %p41 = scmp.eq.s32.totalorder %s19, 1
    %p42 = por %p40, %p41
    %p44 = scmp.ne.s32.totalorder %s27, %s43
    %p45 = scmp.eq.s32.totalorder %s19, 0
    %p46 = por %p44, %p45
    %s48 = sadd.s32 %s47, 1
    %p51 = scmp.eq.s32.totalorder %s13, 1
    %p52 = scmp.ne.s32.totalorder %s47, %s49
    %p53 = scmp.eq.s32.totalorder %s13, 0
    %p54 = por %p52, %p53
    %p55 = scmp.ne.s32.totalorder %s47, %s49
    %p56 = scmp.eq.s32.totalorder %s18, 1
    %p57 = por %p55, %p56
    %p58 = scmp.ne.s32.totalorder %s49, %s50
    %p59 = scmp.eq.s32.totalorder %s18, 0
    %p60 = por %p58, %p59
    %p61 = scmp.ne.s32.totalorder %s49, %s50
    %p62 = scmp.eq.s32.totalorder %s19, 1
    %p63 = por %p61, %p62
    %p65 = scmp.ne.s32.totalorder %s50, %s64
    %p66 = scmp.eq.s32.totalorder %s19, 0
    %p67 = por %p65, %p66
    %s69 = sadd.s32 %s68, 1
    %p72 = scmp.eq.s32.totalorder %s13, 1
    %p73 = scmp.ne.s32.totalorder %s68, %s70
    %p74 = scmp.eq.s32.totalorder %s13, 0
    %p75 = por %p73, %p74
    %p76 = scmp.ne.s32.totalorder %s68, %s70
    %p77 = scmp.eq.s32.totalorder %s18, 1
    %p78 = por %p76, %p77
    %p79 = scmp.ne.s32.totalorder %s70, %s71
    %p80 = scmp.eq.s32.totalorder %s18, 0
    %p81 = por %p79, %p80
    %p82 = scmp.ne.s32.totalorder %s70, %s71
    %p83 = scmp.eq.s32.totalorder %s19, 1
    %p84 = por %p82, %p83
    %p86 = scmp.ne.s32.totalorder %s71, %s85
    %p87 = scmp.eq.s32.totalorder %s19, 0
    %p88 = por %p86, %p87
    %s90 = sadd.s32 %s89, 1
    %p93 = scmp.eq.s32.totalorder %s13, 1
    %p94 = scmp.ne.s32.totalorder %s89, %s91
    %p95 = scmp.eq.s32.totalorder %s13, 0
    %p96 = por %p94, %p95
    %p97 = scmp.ne.s32.totalorder %s89, %s91
    %p98 = scmp.eq.s32.totalorder %s18, 1
    %p99 = por %p97, %p98
    %p100 = scmp.ne.s32.totalorder %s91, %s92
    %p101 = scmp.eq.s32.totalorder %s18, 0
    %p102 = por %p100, %p101
    %p103 = scmp.ne.s32.totalorder %s91, %s92
    %p104 = scmp.eq.s32.totalorder %s19, 1
    %p105 = por %p103, %p104
    %p107 = scmp.ne.s32.totalorder %s92, %s106
    %p108 = scmp.eq.s32.totalorder %s19, 0
    %p109 = por %p107, %p108
    %s111 = sadd.s32 %s110, 1
    %p114 = scmp.eq.s32.totalorder %s13, 1
    %p115 = scmp.ne.s32.totalorder %s110, %s112
    %p116 = scmp.eq.s32.totalorder %s13, 0
    %p117 = por %p115, %p116
    %p118 = scmp.ne.s32.totalorder %s110, %s112
    %p119 = scmp.eq.s32.totalorder %s18, 1
    %p120 = por %p118, %p119
    %p121 = scmp.ne.s32.totalorder %s112, %s113
    %p122 = scmp.eq.s32.totalorder %s18, 0
    %p123 = por %p121, %p122
    %p124 = scmp.ne.s32.totalorder %s112, %s113
    %p125 = scmp.eq.s32.totalorder %s19, 1
    %p126 = por %p124, %p125
    %p128 = scmp.ne.s32.totalorder %s113, %s127
    %p129 = scmp.eq.s32.totalorder %s19, 0
    %p130 = por %p128, %p129
    %s132 = sadd.s32 %s131, 1
    %p135 = scmp.eq.s32.totalorder %s13, 1
    %p136 = scmp.ne.s32.totalorder %s131, %s133
    %p137 = scmp.eq.s32.totalorder %s13, 0
    %p138 = por %p136, %p137
    %p139 = scmp.ne.s32.totalorder %s131, %s133
    %p140 = scmp.eq.s32.totalorder %s18, 1
    %p141 = por %p139, %p140
    %p142 = scmp.ne.s32.totalorder %s133, %s134
    %p143 = scmp.eq.s32.totalorder %s18, 0
    %p144 = por %p142, %p143
    %p145 = scmp.ne.s32.totalorder %s133, %s134
    %p146 = scmp.eq.s32.totalorder %s19, 1
    %p147 = por %p145, %p146
    %p149 = scmp.ne.s32.totalorder %s134, %s148
    %p150 = scmp.eq.s32.totalorder %s19, 0
    %p151 = por %p149, %p150
    %s153 = sadd.s32 %s152, 1
    %p156 = scmp.eq.s32.totalorder %s13, 1
    %p157 = scmp.ne.s32.totalorder %s152, %s154
    %p158 = scmp.eq.s32.totalorder %s13, 0
    %p159 = por %p157, %p158
    %p160 = scmp.ne.s32.totalorder %s152, %s154
    %p161 = scmp.eq.s32.totalorder %s18, 1
    %p162 = por %p160, %p161
    %p163 = scmp.ne.s32.totalorder %s154, %s155
    %p164 = scmp.eq.s32.totalorder %s18, 0
    %p165 = por %p163, %p164
    %p166 = scmp.ne.s32.totalorder %s154, %s155
    %p167 = scmp.eq.s32.totalorder %s19, 1
    %p168 = por %p166, %p167
    %p170 = scmp.ne.s32.totalorder %s155, %s169
    %p171 = scmp.eq.s32.totalorder %s19, 0
    %p172 = por %p170, %p171
    %s173 = ssub.s32 %s13, %s20
    %p174 = scmp.eq.s32.totalorder %s173, 0
    %s176 = sadd.s32 %s175, 1
    %s177 = scalar_select %p174, %s175, %s176
    %p180 = pneg %p174
    %p181 = scmp.eq.s32.totalorder %s13, 1
    %p182 = por %p180, %p181
    %p183 = scmp.ne.s32.totalorder %s175, %s178
    %p184 = scmp.eq.s32.totalorder %s13, 0
    %p185 = por %p183, %p184
    %p186 = scmp.ne.s32.totalorder %s175, %s178
    %p187 = scmp.eq.s32.totalorder %s18, 1
    %p188 = por %p186, %p187
    %p189 = scmp.ne.s32.totalorder %s178, %s179
    %p190 = scmp.eq.s32.totalorder %s18, 0
    %p191 = por %p189, %p190
    %p192 = scmp.ne.s32.totalorder %s178, %s179
    %p193 = scmp.eq.s32.totalorder %s19, 1
    %p194 = por %p192, %p193
    %p196 = scmp.ne.s32.totalorder %s179, %s195
    %p197 = scmp.eq.s32.totalorder %s19, 0
    %p198 = por %p196, %p197
    %p199 = scmp.le.s32.totalorder 1, %s13
    %p200 = scmp.lt.s32.totalorder %s13, 3
    %p201 = pnand %p199, %p200
    %p202 = pneg %p201
    // Predicated region
    $region9: #{tpu_custom_call.1} parent=5 // pred_check
      _
    $region10: #{tpu_custom_call.1} parent=5 // pred_check_branch
      %204 = sbr.rel (%p201) target = $region12
    $region11: #{tpu_custom_call.1} parent=5 // pred_region
      %s205 = ssub.s32 %s13, 1
      // Predicated region
      $region13: #{tpu_custom_call.1} parent=11 // pred_check
        %p206 = pneg %p60
      $region14: #{tpu_custom_call.1} parent=11 // pred_check_branch
        %208 = sbr.rel (%p206) target = $region16
      $region15: #{tpu_custom_call.1} parent=11 // pred_region
        _
      $region16: #{tpu_custom_call.1} parent=11 // pred_fallthru
        _
      // Predicated region
      $region17: #{tpu_custom_call.1} parent=11 // pred_check
        %p209 = pneg %p81
      $region18: #{tpu_custom_call.1} parent=11 // pred_check_branch
        %211 = sbr.rel (%p209) target = $region20
      $region19: #{tpu_custom_call.1} parent=11 // pred_region
        _
      $region20: #{tpu_custom_call.1} parent=11 // pred_fallthru
        _
      // Predicated region
      $region21: #{tpu_custom_call.1} parent=11 // pred_check
        %p212 = pneg %p102
      $region22: #{tpu_custom_call.1} parent=11 // pred_check_branch
        %214 = sbr.rel (%p212) target = $region24
      $region23: #{tpu_custom_call.1} parent=11 // pred_region
        _
      $region24: #{tpu_custom_call.1} parent=11 // pred_fallthru
        _
      // Predicated region
      $region25: #{tpu_custom_call.1} parent=11 // pred_check
        %p215 = pneg %p123
      $region26: #{tpu_custom_call.1} parent=11 // pred_check_branch
        %217 = sbr.rel (%p215) target = $region28
      $region27: #{tpu_custom_call.1} parent=11 // pred_region
        _
      $region28: #{tpu_custom_call.1} parent=11 // pred_fallthru
        _
      // Predicated region
      $region29: #{tpu_custom_call.1} parent=11 // pred_check
        %p218 = pneg %p144
      $region30: #{tpu_custom_call.1} parent=11 // pred_check_branch
        %220 = sbr.rel (%p218) target = $region32
      $region31: #{tpu_custom_call.1} parent=11 // pred_region
        _
      $region32: #{tpu_custom_call.1} parent=11 // pred_fallthru
        _
      // Predicated region
      $region33: #{tpu_custom_call.1} parent=11 // pred_check
        %p221 = pneg %p165
      $region34: #{tpu_custom_call.1} parent=11 // pred_check_branch
        %223 = sbr.rel (%p221) target = $region36
      $region35: #{tpu_custom_call.1} parent=11 // pred_region
        _
      $region36: #{tpu_custom_call.1} parent=11 // pred_fallthru
        _
    $region12: #{tpu_custom_call.1} parent=5 // pred_fallthru
      _
    %p224 = scmp.lt.s32.totalorder %s13, 2
    // Predicated region
    $region37: #{tpu_custom_call.1} parent=5 // pred_check
      %p225 = pneg %p224
    $region38: #{tpu_custom_call.1} parent=5 // pred_check_branch
      %227 = sbr.rel (%p225) target = $region40
    $region39: #{tpu_custom_call.1} parent=5 // pred_region
      // Predicated region
      $region41: #{tpu_custom_call.1} parent=39 // pred_check
        %p228 = pneg %p33
      $region42: #{tpu_custom_call.1} parent=39 // pred_check_branch
        %230 = sbr.rel (%p228) target = $region44
      $region43: #{tpu_custom_call.1} parent=39 // pred_region
        %p231 = scmp.lt.s32.totalorder %s13, 1
        %s232 = scalar_select %p231, %s13, 1
        %s233 = smul.addr %s232, 32
        %s234 = smul.addr %s233, 8
        %s235 = scalar_lea.vmem %s0, %s234
      $region44: #{tpu_custom_call.1} parent=39 // pred_fallthru
        _
    $region40: #{tpu_custom_call.1} parent=5 // pred_fallthru
      _
    %p236 = scmp.le.s32.totalorder 1, %s13
    %p237 = scmp.lt.s32.totalorder %s13, 3
    %p238 = pnand %p236, %p237
    %p239 = pneg %p238
    // Predicated region
    $region45: #{tpu_custom_call.1} parent=5 // pred_check
      _
    $region46: #{tpu_custom_call.1} parent=5 // pred_check_branch
      %241 = sbr.rel (%p238) target = $region48
    $region47: #{tpu_custom_call.1} parent=5 // pred_region
      %s242 = ssub.s32 %s13, 1
      %p243 = scmp.lt.s32.totalorder %s18, 1
      %s244 = scalar_select %p243, %s18, 1
      %s245 = smul.addr %s244, 32
      %s246 = smul.addr %s245, 8
      %s247 = scalar_lea.vmem %s0, %s246
      %p248 = pneg %p39
      %p249 = pneg %p36
      %p250 = pneg %p60
      %p251 = pneg %p57
      %p252 = pneg %p81
      %p253 = pneg %p78
      %p254 = pneg %p102
      %p255 = pneg %p99
      %p256 = pneg %p123
      %p257 = pneg %p120
      %p258 = pneg %p144
      %p259 = pneg %p141
      %p260 = pneg %p165
      %p261 = pneg %p162
      %p262 = pneg %p191
      %p263 = pneg %p188
      %p264 = scmp.lt.s32.totalorder %s18, 1
      %s265 = scalar_select %p264, %s18, 1
      %s266 = smul.addr %s265, 32
      %s267 = smul.addr %s266, 8
      %s268 = scalar_lea.vmem %s7, %s267
      %p269 = scmp.lt.s32.totalorder %s18, 1
      %s270 = scalar_select %p269, %s18, 1
      %s271 = smul.addr %s270, 32
      %s272 = smul.addr %s271, 8
      %s273 = scalar_lea.vmem %s0, %s272
      %p274 = scmp.lt.s32.totalorder %s18, 1
      %s275 = scalar_select %p274, %s18, 1
      %s276 = smul.addr %s275, 32
      %s277 = smul.addr %s276, 8
      %s278 = scalar_lea.vmem %s7, %s277
      %vm279 = vcmask 31744
      %280 = vst.msk [vmem:[#allocation2] sm:$0xff] %vm279, 0.0
      %281 = vst.msk [vmem:[#allocation2 + $0x8] sm:$0xff] %vm279, 0.0
      %vm282 = vcmask 25600
      %283 = vst.msk [vmem:[#allocation2 + $0x10] sm:$0x3] %vm282, 0.0
      %284 = vst.msk [vmem:[#allocation2 + $0x18] sm:$0xff] %vm279, 0.0
      %285 = vst.msk [vmem:[#allocation2 + $0x20] sm:$0xff] %vm279, 0.0
      %286 = vst.msk [vmem:[#allocation2 + $0x28] sm:$0x3] %vm282, 0.0
      %287 = vst.msk [vmem:[#allocation2 + $0x30] sm:$0xff] %vm279, 0.0
      %288 = vst.msk [vmem:[#allocation2 + $0x38] sm:$0xff] %vm279, 0.0
      %289 = vst.msk [vmem:[#allocation2 + $0x40] sm:$0x3] %vm282, 0.0
      %290 = vst.msk [vmem:[#allocation2 + $0x48] sm:$0xff] %vm279, 0.0
      %291 = vst.msk [vmem:[#allocation2 + $0x50] sm:$0xff] %vm279, 0.0
      %292 = vst.msk [vmem:[#allocation2 + $0x58] sm:$0x3] %vm282, 0.0
      %293 = vst.msk [vmem:[#allocation2 + $0x60] sm:$0xff] %vm279, 0.0
      %294 = vst.msk [vmem:[#allocation2 + $0x68] sm:$0xff] %vm279, 0.0
      %295 = vst.msk [vmem:[#allocation2 + $0x70] sm:$0x3] %vm282, 0.0
      %296 = vst.msk [vmem:[#allocation2 + $0x78] sm:$0xff] %vm279, 0.0
      %297 = vst.msk [vmem:[#allocation2 + $0x80] sm:$0xff] %vm279, 0.0
      %298 = vst.msk [vmem:[#allocation2 + $0x88] sm:$0x3] %vm282, 0.0
      %299 = vst.msk [vmem:[#allocation2 + $0x90] sm:$0xff] %vm279, 0.0
      %300 = vst.msk [vmem:[#allocation2 + $0x98] sm:$0xff] %vm279, 0.0
      %301 = vst.msk [vmem:[#allocation2 + $0xa0] sm:$0x3] %vm282, 0.0
      %302 = vst.msk [vmem:[#allocation2 + $0xa8] sm:$0xff] %vm279, 0.0
      %303 = vst.msk [vmem:[#allocation2 + $0xb0] sm:$0xff] %vm279, 0.0
      %304 = vst.msk [vmem:[#allocation2 + $0xb8] sm:$0x3] %vm282, 0.0
      %305 = vst.msk [vmem:[#allocation2 + $0xc0] sm:$0xff] %vm279, 0.0
      %306 = vst.msk [vmem:[#allocation2 + $0xc8] sm:$0xff] %vm279, 0.0
      %307 = vst.msk [vmem:[#allocation2 + $0xd0] sm:$0x3] %vm282, 0.0
      %308 = vst.msk [vmem:[#allocation2 + $0xd8] sm:$0xff] %vm279, 0.0
      %309 = vst.msk [vmem:[#allocation2 + $0xe0] sm:$0xff] %vm279, 0.0
      %310 = vst.msk [vmem:[#allocation2 + $0xe8] sm:$0x3] %vm282, 0.0
      %311 = vst.msk [vmem:[#allocation2 + $0xf0] sm:$0xff] %vm279, 0.0
      %312 = vst.msk [vmem:[#allocation2 + $0xf8] sm:$0xff] %vm279, 0.0
      %313 = vst.msk [vmem:[#allocation2 + $0x100] sm:$0x3] %vm282, 0.0
      %314 = vst.msk [vmem:[#allocation2 + $0x108] sm:$0xff] %vm279, 0.0
      %315 = vst.msk [vmem:[#allocation2 + $0x110] sm:$0xff] %vm279, 0.0
      %316 = vst.msk [vmem:[#allocation2 + $0x118] sm:$0x3] %vm282, 0.0
      %317 = vst.msk [vmem:[#allocation2 + $0x120] sm:$0xff] %vm279, 0.0
      %318 = vst.msk [vmem:[#allocation2 + $0x128] sm:$0xff] %vm279, 0.0
      %319 = vst.msk [vmem:[#allocation2 + $0x130] sm:$0x3] %vm282, 0.0
      %320 = vst.msk [vmem:[#allocation2 + $0x138] sm:$0xff] %vm279, 0.0
      %321 = vst.msk [vmem:[#allocation2 + $0x140] sm:$0xff] %vm279, 0.0
      %322 = vst.msk [vmem:[#allocation2 + $0x148] sm:$0x3] %vm282, 0.0
      %323 = vst.msk [vmem:[#allocation2 + $0x150] sm:$0xff] %vm279, 0.0
      %324 = vst.msk [vmem:[#allocation2 + $0x158] sm:$0xff] %vm279, 0.0
      %325 = vst.msk [vmem:[#allocation2 + $0x160] sm:$0x3] %vm282, 0.0
      %326 = vst.msk [vmem:[#allocation2 + $0x168] sm:$0xff] %vm279, 0.0
      %327 = vst.msk [vmem:[#allocation2 + $0x170] sm:$0xff] %vm279, 0.0
      %328 = vst.msk [vmem:[#allocation2 + $0x178] sm:$0x3] %vm282, 0.0
      %329 = vst.msk [vmem:[#allocation2 + $0x180] sm:$0xff] %vm279, 0.0
      %330 = vst.msk [vmem:[#allocation2 + $0x188] sm:$0xff] %vm279, 0.0
      %331 = vst.msk [vmem:[#allocation2 + $0x190] sm:$0x3] %vm282, 0.0
      %332 = vst.msk [vmem:[#allocation2 + $0x198] sm:$0xff] %vm279, 0.0
      %333 = vst.msk [vmem:[#allocation2 + $0x1a0] sm:$0xff] %vm279, 0.0
      %334 = vst.msk [vmem:[#allocation2 + $0x1a8] sm:$0x3] %vm282, 0.0
      %v335 = vld [vmem:[%s273] sm:$0xff]
      %v336 = vld [vmem:[%s273 + $0x8] sm:$0xff]
      %v337 = vld [vmem:[%s273 + $0x10] sm:$0xff]
      %v338 = vld [vmem:[%s273 + $0x18] sm:$0xff]
      %v339 = vld [vmem:[%s273 + $0x20] sm:$0xff]
      %v340 = vld [vmem:[%s273 + $0x28] sm:$0xff]
      %v341 = vld [vmem:[%s273 + $0x30] sm:$0xff]
      %v342 = vld [vmem:[%s273 + $0x38] sm:$0xff]
      %v343 = vld [vmem:[%s273 + $0x40] sm:$0xff]
      %v344 = vld [vmem:[%s273 + $0x48] sm:$0xff]
      %v345 = vld [vmem:[%s273 + $0x50] sm:$0xff]
      %v346 = vld [vmem:[%s273 + $0x58] sm:$0xff]
      %v347 = vld [vmem:[%s273 + $0x60] sm:$0xff]
      %v348 = vld [vmem:[%s273 + $0x68] sm:$0xff]
      %v349 = vld [vmem:[%s273 + $0x70] sm:$0xff]
      %v350 = vld [vmem:[%s273 + $0x78] sm:$0xff]
      %v351 = vld [vmem:[%s273 + $0x80] sm:$0xff]
      %v352 = vld [vmem:[%s273 + $0x88] sm:$0xff]
      %v353 = vld [vmem:[%s273 + $0x90] sm:$0xff]
      %v354 = vld [vmem:[%s273 + $0x98] sm:$0xff]
      %v355 = vld [vmem:[%s273 + $0xa0] sm:$0xff]
      %v356 = vld [vmem:[%s273 + $0xa8] sm:$0xff]
      %v357 = vld [vmem:[%s273 + $0xb0] sm:$0xff]
      %v358 = vld [vmem:[%s273 + $0xb8] sm:$0xff]
      %v359 = vld [vmem:[%s273 + $0xc0] sm:$0xff]
      %v360 = vld [vmem:[%s273 + $0xc8] sm:$0xff]
      %v361 = vld [vmem:[%s273 + $0xd0] sm:$0xff]
      %v362 = vld [vmem:[%s273 + $0xd8] sm:$0xff]
      %v363 = vld [vmem:[%s273 + $0xe0] sm:$0xff]
      %v364 = vld [vmem:[%s273 + $0xe8] sm:$0xff]
      %v365 = vld [vmem:[%s273 + $0xf0] sm:$0xff]
      %v366 = vld [vmem:[%s273 + $0xf8] sm:$0xff]
      %s367 = scalar_lea.vmem [#allocation2], 24
      %368 = vst.msk [vmem:[%s367 + $0x1] sm:$0xff] %vm279, %v335
      %369 = vst.msk [vmem:[%s367 + $0x9] sm:$0xff] %vm279, %v336
      %370 = vst.msk [vmem:[%s367 + $0x19] sm:$0xff] %vm279, %v337
      %371 = vst.msk [vmem:[%s367 + $0x21] sm:$0xff] %vm279, %v338
      %372 = vst.msk [vmem:[%s367 + $0x31] sm:$0xff] %vm279, %v339
      %373 = vst.msk [vmem:[%s367 + $0x39] sm:$0xff] %vm279, %v340
      %374 = vst.msk [vmem:[%s367 + $0x49] sm:$0xff] %vm279, %v341
      %375 = vst.msk [vmem:[%s367 + $0x51] sm:$0xff] %vm279, %v342
      %376 = vst.msk [vmem:[%s367 + $0x61] sm:$0xff] %vm279, %v343
      %377 = vst.msk [vmem:[%s367 + $0x69] sm:$0xff] %vm279, %v344
      %378 = vst.msk [vmem:[%s367 + $0x79] sm:$0xff] %vm279, %v345
      %379 = vst.msk [vmem:[%s367 + $0x81] sm:$0xff] %vm279, %v346
      %380 = vst.msk [vmem:[%s367 + $0x91] sm:$0xff] %vm279, %v347
      %381 = vst.msk [vmem:[%s367 + $0x99] sm:$0xff] %vm279, %v348
      %382 = vst.msk [vmem:[%s367 + $0xa9] sm:$0xff] %vm279, %v349
      %383 = vst.msk [vmem:[%s367 + $0xb1] sm:$0xff] %vm279, %v350
      %384 = vst.msk [vmem:[%s367 + $0xc1] sm:$0xff] %vm279, %v351
      %385 = vst.msk [vmem:[%s367 + $0xc9] sm:$0xff] %vm279, %v352
      %386 = vst.msk [vmem:[%s367 + $0xd9] sm:$0xff] %vm279, %v353
      %387 = vst.msk [vmem:[%s367 + $0xe1] sm:$0xff] %vm279, %v354
      %388 = vst.msk [vmem:[%s367 + $0xf1] sm:$0xff] %vm279, %v355
      %389 = vst.msk [vmem:[%s367 + $0xf9] sm:$0xff] %vm279, %v356
      %390 = vst.msk [vmem:[%s367 + $0x109] sm:$0xff] %vm279, %v357
      %391 = vst.msk [vmem:[%s367 + $0x111] sm:$0xff] %vm279, %v358
      %392 = vst.msk [vmem:[%s367 + $0x121] sm:$0xff] %vm279, %v359
      %393 = vst.msk [vmem:[%s367 + $0x129] sm:$0xff] %vm279, %v360
      %394 = vst.msk [vmem:[%s367 + $0x139] sm:$0xff] %vm279, %v361
      %395 = vst.msk [vmem:[%s367 + $0x141] sm:$0xff] %vm279, %v362
      %396 = vst.msk [vmem:[%s367 + $0x151] sm:$0xff] %vm279, %v363
      %397 = vst.msk [vmem:[%s367 + $0x159] sm:$0xff] %vm279, %v364
      %398 = vst.msk [vmem:[%s367 + $0x169] sm:$0xff] %vm279, %v365
      %399 = vst.msk [vmem:[%s367 + $0x171] sm:$0xff] %vm279, %v366
      %v400 = vld [vmem:[#allocation2] sm:$0xff]
      %v401 = vld [vmem:[#allocation2 + $0x8] sm:$0xff]
      %v402 = vld [vmem:[#allocation2 + $0x10] sm:$0x3]
      %v403 = vld [vmem:[#allocation2 + $0x18] sm:$0xff]
      %v404 = vld [vmem:[#allocation2 + $0x20] sm:$0xff]
      %v405 = vld [vmem:[#allocation2 + $0x28] sm:$0x3]
      %v406 = vld [vmem:[#allocation2 + $0x30] sm:$0xff]
      %v407 = vld [vmem:[#allocation2 + $0x38] sm:$0xff]
      %v408 = vld [vmem:[#allocation2 + $0x40] sm:$0x3]
      %v409 = vld [vmem:[#allocation2 + $0x48] sm:$0xff]
      %v410 = vld [vmem:[#allocation2 + $0x50] sm:$0xff]
      %v411 = vld [vmem:[#allocation2 + $0x58] sm:$0x3]
      %v412 = vld [vmem:[#allocation2 + $0x60] sm:$0xff]
      %v413 = vld [vmem:[#allocation2 + $0x68] sm:$0xff]
      %v414 = vld [vmem:[#allocation2 + $0x70] sm:$0x3]
      %v415 = vld [vmem:[#allocation2 + $0x78] sm:$0xff]
      %v416 = vld [vmem:[#allocation2 + $0x80] sm:$0xff]
      %v417 = vld [vmem:[#allocation2 + $0x88] sm:$0x3]
      %v418 = vld [vmem:[#allocation2 + $0x90] sm:$0xff]
      %v419 = vld [vmem:[#allocation2 + $0x98] sm:$0xff]
      %v420 = vld [vmem:[#allocation2 + $0xa0] sm:$0x3]
      %v421 = vld [vmem:[#allocation2 + $0xa8] sm:$0xff]
      %v422 = vld [vmem:[#allocation2 + $0xb0] sm:$0xff]
      %v423 = vld [vmem:[#allocation2 + $0xb8] sm:$0x3]
      %v424 = vld [vmem:[#allocation2 + $0xc0] sm:$0xff]
      %v425 = vld [vmem:[#allocation2 + $0xc8] sm:$0xff]
      %v426 = vld [vmem:[#allocation2 + $0xd0] sm:$0x3]
      %v427 = vld [vmem:[#allocation2 + $0xd8] sm:$0xff]
      %v428 = vld [vmem:[#allocation2 + $0xe0] sm:$0xff]
      %v429 = vld [vmem:[#allocation2 + $0xe8] sm:$0x3]
      %v430 = vld [vmem:[#allocation2 + $0xf0] sm:$0xff]
      %v431 = vld [vmem:[#allocation2 + $0xf8] sm:$0xff]
      %v432 = vld [vmem:[#allocation2 + $0x100] sm:$0x3]
      %v433 = vld [vmem:[#allocation2 + $0x108] sm:$0xff]
      %v434 = vld [vmem:[#allocation2 + $0x110] sm:$0xff]
      %v435 = vld [vmem:[#allocation2 + $0x118] sm:$0x3]
      %v436 = vld [vmem:[#allocation2 + $0x120] sm:$0xff]
      %v437 = vld [vmem:[#allocation2 + $0x128] sm:$0xff]
      %v438 = vld [vmem:[#allocation2 + $0x130] sm:$0x3]
      %v439 = vld [vmem:[#allocation2 + $0x138] sm:$0xff]
      %v440 = vld [vmem:[#allocation2 + $0x140] sm:$0xff]
      %v441 = vld [vmem:[#allocation2 + $0x148] sm:$0x3]
      %v442 = vld [vmem:[#allocation2 + $0x150] sm:$0xff]
      %v443 = vld [vmem:[#allocation2 + $0x158] sm:$0xff]
      %v444 = vld [vmem:[#allocation2 + $0x160] sm:$0x3]
      %v445 = vld [vmem:[#allocation2 + $0x168] sm:$0xff]
      %v446 = vld [vmem:[#allocation2 + $0x170] sm:$0xff]
      %v447 = vld [vmem:[#allocation2 + $0x178] sm:$0x3]
      %v448 = vld [vmem:[#allocation2 + $0x180] sm:$0xff]
      %v449 = vld [vmem:[#allocation2 + $0x188] sm:$0xff]
      %v450 = vld [vmem:[#allocation2 + $0x190] sm:$0x3]
      %v451 = vld [vmem:[#allocation2 + $0x198] sm:$0xff]
      %v452 = vld [vmem:[#allocation2 + $0x1a0] sm:$0xff]
      %v453 = vld [vmem:[#allocation2 + $0x1a8] sm:$0x3]
      %v454 = vld [vmem:[%s1] sm:$0xf]
      %vm503 = vcmask 1046528
      %v504 = vrot.slane %v400, 1
      %v505 = vrot.slane %v401, 1
      %v506 = vsel %vm503, %v504, %v505
      %v507 = vrot.slane %v402, 1
      %v508 = vsel %vm503, %v505, %v507
      %v509 = vrot.slane %v403, 1
      %v510 = vrot.slane %v404, 1
      %v511 = vsel %vm503, %v509, %v510
      %v512 = vrot.slane %v405, 1
      %v513 = vsel %vm503, %v510, %v512
      %v514 = vrot.slane %v406, 1
      %v515 = vrot.slane %v407, 1
      %v516 = vsel %vm503, %v514, %v515
      %v517 = vrot.slane %v408, 1
      %v518 = vsel %vm503, %v515, %v517
      %v519 = vrot.slane %v409, 1
      %v520 = vrot.slane %v410, 1
      %v521 = vsel %vm503, %v519, %v520
      %v522 = vrot.slane %v411, 1
      %v523 = vsel %vm503, %v520, %v522
      %v524 = vrot.slane %v412, 1
      %v525 = vrot.slane %v413, 1
      %v526 = vsel %vm503, %v524, %v525
      %v527 = vrot.slane %v414, 1
      %v528 = vsel %vm503, %v525, %v527
      %v529 = vrot.slane %v415, 1
      %v530 = vrot.slane %v416, 1
      %v531 = vsel %vm503, %v529, %v530
      %v532 = vrot.slane %v417, 1
      %v533 = vsel %vm503, %v530, %v532
      %v534 = vrot.slane %v418, 1
      %v535 = vrot.slane %v419, 1
      %v536 = vsel %vm503, %v534, %v535
      %v537 = vrot.slane %v420, 1
      %v538 = vsel %vm503, %v535, %v537
      %v539 = vrot.slane %v421, 1
      %v540 = vrot.slane %v422, 1
      %v541 = vsel %vm503, %v539, %v540
      %v542 = vrot.slane %v423, 1
      %v543 = vsel %vm503, %v540, %v542
      %v544 = vrot.slane %v424, 1
      %v545 = vrot.slane %v425, 1
      %v546 = vsel %vm503, %v544, %v545
      %v547 = vrot.slane %v426, 1
      %v548 = vsel %vm503, %v545, %v547
      %v549 = vrot.slane %v427, 1
      %v550 = vrot.slane %v428, 1
      %v551 = vsel %vm503, %v549, %v550
      %v552 = vrot.slane %v429, 1
      %v553 = vsel %vm503, %v550, %v552
      %v554 = vrot.slane %v430, 1
      %v555 = vrot.slane %v431, 1
      %v556 = vsel %vm503, %v554, %v555
      %v557 = vrot.slane %v432, 1
      %v558 = vsel %vm503, %v555, %v557
      %v559 = vrot.slane %v433, 1
      %v560 = vrot.slane %v434, 1
      %v561 = vsel %vm503, %v559, %v560
      %v562 = vrot.slane %v435, 1
      %v563 = vsel %vm503, %v560, %v562
      %v564 = vrot.slane %v436, 1
      %v565 = vrot.slane %v437, 1
      %v566 = vsel %vm503, %v564, %v565
      %v567 = vrot.slane %v438, 1
      %v568 = vsel %vm503, %v565, %v567
      %v569 = vrot.slane %v439, 1
      %v570 = vrot.slane %v440, 1
      %v571 = vsel %vm503, %v569, %v570
      %v572 = vrot.slane %v441, 1
      %v573 = vsel %vm503, %v570, %v572
      %v574 = vrot.slane %v442, 1
      %v575 = vrot.slane %v443, 1
      %v576 = vsel %vm503, %v574, %v575
      %v577 = vrot.slane %v444, 1
      %v578 = vsel %vm503, %v575, %v577
      %v579 = vrot.slane %v445, 1
      %v580 = vrot.slane %v446, 1
      %v581 = vsel %vm503, %v579, %v580
      %v582 = vrot.slane %v447, 1
      %v583 = vsel %vm503, %v580, %v582
      %s584 = scalar_lea.vmem %s1, 4
      %v585 = vld [vmem:[%s584] sm:$0xf]
      %v586 = vsel %vm279, %v506, 0
      %v588 = vsel %vm279, %v508, 0
      %v590 = vsel %vm279, %v511, 0
      %v592 = vsel %vm279, %v513, 0
      %v594 = vsel %vm279, %v516, 0
      %v596 = vsel %vm279, %v518, 0
      %v598 = vsel %vm279, %v521, 0
      %v600 = vsel %vm279, %v523, 0
      %v602 = vsel %vm279, %v526, 0
      %v604 = vsel %vm279, %v528, 0
      %v606 = vsel %vm279, %v531, 0
      %v608 = vsel %vm279, %v533, 0
      %v610 = vsel %vm279, %v536, 0
      %v612 = vsel %vm279, %v538, 0
      %v614 = vsel %vm279, %v541, 0
      %v616 = vsel %vm279, %v543, 0
      %v618 = vsel %vm279, %v546, 0
      %v620 = vsel %vm279, %v548, 0
      %v622 = vsel %vm279, %v551, 0
      %v624 = vsel %vm279, %v553, 0
      %v626 = vsel %vm279, %v556, 0
      %v628 = vsel %vm279, %v558, 0
      %v630 = vsel %vm279, %v561, 0
      %v632 = vsel %vm279, %v563, 0
      %v634 = vsel %vm279, %v566, 0
      %v636 = vsel %vm279, %v568, 0
      %v638 = vsel %vm279, %v571, 0
      %v640 = vsel %vm279, %v573, 0
      %v642 = vsel %vm279, %v576, 0
      %v644 = vsel %vm279, %v578, 0
      %v646 = vsel %vm279, %v581, 0
      %v648 = vsel %vm279, %v583, 0
      %vm650 = vcmask 1043456
      %v652 = vsel %vm650, %v585, 0
      %654 = vmatprep.subr.mxu0 0.0
      %655 = vmatpush1.msra.mxu0 0.0
      %656 = vmatprep.subr.mxu0 0.0
      %657 = vmatpush1.msra.mxu0 0.0
      %658 = vmatprep.subr.mxu0 0.0
      %659 = vmatpush1.msra.mxu0 0.0
      %660 = vmatprep.subr.mxu0 0.0
      %661 = vmatpush1.msra.mxu0 0.0
      %662 = vmatprep.subr.mxu0 0.0
      %663 = vmatpush1.msra.mxu0 0.0
      %664 = vmatprep.subr.mxu0 0.0
      %665 = vmatpush1.msra.mxu0 0.0
      %666 = vmatprep.subr.mxu0 0.0
      %667 = vmatpush1.msra.mxu0 0.0
      %668 = vmatprep.subr.mxu0 0.0
      %669 = vmatpush1.msra.mxu0 0.0
      %670 = vmatprep.subr.mxu0 0.0
      %671 = vmatpush1.msra.mxu0 0.0
      %672 = vmatprep.subr.mxu0 0.0
      %673 = vmatpush1.msra.mxu0 0.0
      %674 = vmatprep.subr.mxu0 0.0
      %675 = vmatpush1.msra.mxu0 0.0
      %676 = vmatprep.subr.mxu0 0.0
      %677 = vmatpush1.msra.mxu0 0.0
      %678 = vmatprep.subr.mxu0 0.0
      %679 = vmatpush1.msra.mxu0 0.0
      %680 = vmatprep.subr.mxu0 0.0
      %681 = vmatpush1.msra.mxu0 0.0
      %682 = vmatprep.subr.mxu0 0.0
      %683 = vmatpush1.msra.mxu0 0.0
      %684 = vmatprep.subr.mxu0 0.0
      %685 = vmatpush1.msra.mxu0 %v652
      %686 = vmatprep.subr.mxu0 0.0
      %687 = vmatpush2.msra.mxu0 0.0
      %688 = vmatprep.subr.mxu0 0.0
      %689 = vmatpush2.msra.mxu0 0.0
      %690 = vmatprep.subr.mxu0 0.0
      %691 = vmatpush2.msra.mxu0 0.0
      %692 = vmatprep.subr.mxu0 0.0
      %693 = vmatpush2.msra.mxu0 0.0
      %694 = vmatprep.subr.mxu0 0.0
      %695 = vmatpush2.msra.mxu0 0.0
      %696 = vmatprep.subr.mxu0 0.0
      %697 = vmatpush2.msra.mxu0 0.0
      %698 = vmatprep.subr.mxu0 0.0
      %699 = vmatpush2.msra.mxu0 0.0
      %700 = vmatprep.subr.mxu0 0.0
      %701 = vmatpush2.msra.mxu0 0.0
      %702 = vmatprep.subr.mxu0 0.0
      %703 = vmatpush2.msra.mxu0 0.0
      %704 = vmatprep.subr.mxu0 0.0
      %705 = vmatpush2.msra.mxu0 0.0
      %706 = vmatprep.subr.mxu0 0.0
      %707 = vmatpush2.msra.mxu0 0.0
      %708 = vmatprep.subr.mxu0 0.0
      %709 = vmatpush2.msra.mxu0 0.0
      %710 = vmatprep.subr.mxu0 0.0
      %711 = vmatpush2.msra.mxu0 0.0
      %712 = vmatprep.subr.mxu0 0.0
      %713 = vmatpush2.msra.mxu0 0.0
      %714 = vmatprep.subr.mxu0 0.0
      %715 = vmatpush2.msra.mxu0 0.0
      %716 = vmatprep.subr.mxu0 0.0
      %717 = vmatpush2.msra.mxu0 0.0
      %718 = vmatprep.mubr.f32.mxu0 0.0
      %719 = vmatmul.mubr.f32.gmra.mxu0 %v586
      %v720 = vpop.f32.mrf.mxu0
      %v721 = vadd.f32 0.0, %v720
      %v722 = vpop.f32.mrf.mxu0
      %723 = vmatprep.mubr.f32.mxu0 0.0
      %724 = vmatmul.mubr.f32.gmra.mxu0 %v588
      %v725 = vpop.f32.mrf.mxu0
      %v726 = vadd.f32 0.0, %v725
      %v727 = vpop.f32.mrf.mxu0
      %728 = vmatprep.mubr.f32.mxu0 0.0
      %729 = vmatmul.mubr.f32.gmra.mxu0 %v590
      %v730 = vpop.f32.mrf.mxu0
      %v731 = vadd.f32 0.0, %v730
      %v732 = vpop.f32.mrf.mxu0
      %733 = vmatprep.mubr.f32.mxu0 0.0
      %734 = vmatmul.mubr.f32.gmra.mxu0 %v592
      %v735 = vpop.f32.mrf.mxu0
      %v736 = vadd.f32 0.0, %v735
      %v737 = vpop.f32.mrf.mxu0
      %738 = vmatprep.mubr.f32.mxu0 0.0
      %739 = vmatmul.mubr.f32.gmra.mxu0 %v594
      %v740 = vpop.f32.mrf.mxu0
      %v741 = vadd.f32 0.0, %v740
      %v742 = vpop.f32.mrf.mxu0
      %743 = vmatprep.mubr.f32.mxu0 0.0
      %744 = vmatmul.mubr.f32.gmra.mxu0 %v596
      %v745 = vpop.f32.mrf.mxu0
      %v746 = vadd.f32 0.0, %v745
      %v747 = vpop.f32.mrf.mxu0
      %748 = vmatprep.mubr.f32.mxu0 0.0
      %749 = vmatmul.mubr.f32.gmra.mxu0 %v598
      %v750 = vpop.f32.mrf.mxu0
      %v751 = vadd.f32 0.0, %v750
      %v752 = vpop.f32.mrf.mxu0
      %753 = vmatprep.mubr.f32.mxu0 0.0
      %754 = vmatmul.mubr.f32.gmra.mxu0 %v600
      %v755 = vpop.f32.mrf.mxu0
      %v756 = vadd.f32 0.0, %v755
      %v757 = vpop.f32.mrf.mxu0
      %758 = vmatprep.mubr.f32.mxu0 0.0
      %759 = vmatmul.mubr.f32.gmra.mxu0 %v602
      %v760 = vpop.f32.mrf.mxu0
      %v761 = vadd.f32 0.0, %v760
      %v762 = vpop.f32.mrf.mxu0
      %763 = vmatprep.mubr.f32.mxu0 0.0
      %764 = vmatmul.mubr.f32.gmra.mxu0 %v604
      %v765 = vpop.f32.mrf.mxu0
      %v766 = vadd.f32 0.0, %v765
      %v767 = vpop.f32.mrf.mxu0
      %768 = vmatprep.mubr.f32.mxu0 0.0
      %769 = vmatmul.mubr.f32.gmra.mxu0 %v606
      %v770 = vpop.f32.mrf.mxu0
      %v771 = vadd.f32 0.0, %v770
      %v772 = vpop.f32.mrf.mxu0
      %773 = vmatprep.mubr.f32.mxu0 0.0
      %774 = vmatmul.mubr.f32.gmra.mxu0 %v608
      %v775 = vpop.f32.mrf.mxu0
      %v776 = vadd.f32 0.0, %v775
      %v777 = vpop.f32.mrf.mxu0
      %778 = vmatprep.mubr.f32.mxu0 0.0
      %779 = vmatmul.mubr.f32.gmra.mxu0 %v610
      %v780 = vpop.f32.mrf.mxu0
      %v781 = vadd.f32 0.0, %v780
      %v782 = vpop.f32.mrf.mxu0
      %783 = vmatprep.mubr.f32.mxu0 0.0
      %784 = vmatmul.mubr.f32.gmra.mxu0 %v612
      %v785 = vpop.f32.mrf.mxu0
      %v786 = vadd.f32 0.0, %v785
      %v787 = vpop.f32.mrf.mxu0
      %788 = vmatprep.mubr.f32.mxu0 0.0
      %789 = vmatmul.mubr.f32.gmra.mxu0 %v614
      %v790 = vpop.f32.mrf.mxu0
      %v791 = vadd.f32 0.0, %v790
      %v792 = vpop.f32.mrf.mxu0
      %793 = vmatprep.mubr.f32.mxu0 0.0
      %794 = vmatmul.mubr.f32.gmra.mxu0 %v616
      %v795 = vpop.f32.mrf.mxu0
      %v796 = vadd.f32 0.0, %v795
      %v797 = vpop.f32.mrf.mxu0
      %798 = vmatprep.mubr.f32.mxu0 0.0
      %799 = vmatmul.mubr.f32.gmra.mxu0 %v618
      %v800 = vpop.f32.mrf.mxu0
      %v801 = vadd.f32 0.0, %v800
      %v802 = vpop.f32.mrf.mxu0
      %803 = vmatprep.mubr.f32.mxu0 0.0
      %804 = vmatmul.mubr.f32.gmra.mxu0 %v620
      %v805 = vpop.f32.mrf.mxu0
      %v806 = vadd.f32 0.0, %v805
      %v807 = vpop.f32.mrf.mxu0
      %808 = vmatprep.mubr.f32.mxu0 0.0
      %809 = vmatmul.mubr.f32.gmra.mxu0 %v622
      %v810 = vpop.f32.mrf.mxu0
      %v811 = vadd.f32 0.0, %v810
      %v812 = vpop.f32.mrf.mxu0
      %813 = vmatprep.mubr.f32.mxu0 0.0
      %814 = vmatmul.mubr.f32.gmra.mxu0 %v624
      %v815 = vpop.f32.mrf.mxu0
      %v816 = vadd.f32 0.0, %v815
      %v817 = vpop.f32.mrf.mxu0
      %818 = vmatprep.mubr.f32.mxu0 0.0
      %819 = vmatmul.mubr.f32.gmra.mxu0 %v626
      %v820 = vpop.f32.mrf.mxu0
      %v821 = vadd.f32 0.0, %v820
      %v822 = vpop.f32.mrf.mxu0
      %823 = vmatprep.mubr.f32.mxu0 0.0
      %824 = vmatmul.mubr.f32.gmra.mxu0 %v628
      %v825 = vpop.f32.mrf.mxu0
      %v826 = vadd.f32 0.0, %v825
      %v827 = vpop.f32.mrf.mxu0
      %828 = vmatprep.mubr.f32.mxu0 0.0
      %829 = vmatmul.mubr.f32.gmra.mxu0 %v630
      %v830 = vpop.f32.mrf.mxu0
      %v831 = vadd.f32 0.0, %v830
      %v832 = vpop.f32.mrf.mxu0
      %833 = vmatprep.mubr.f32.mxu0 0.0
      %834 = vmatmul.mubr.f32.gmra.mxu0 %v632
      %v835 = vpop.f32.mrf.mxu0
      %v836 = vadd.f32 0.0, %v835
      %v837 = vpop.f32.mrf.mxu0
      %838 = vmatprep.mubr.f32.mxu0 0.0
      %839 = vmatmul.mubr.f32.gmra.mxu0 %v634
      %v840 = vpop.f32.mrf.mxu0
      %v841 = vadd.f32 0.0, %v840
      %v842 = vpop.f32.mrf.mxu0
      %843 = vmatprep.mubr.f32.mxu0 0.0
      %844 = vmatmul.mubr.f32.gmra.mxu0 %v636
      %v845 = vpop.f32.mrf.mxu0
      %v846 = vadd.f32 0.0, %v845
      %v847 = vpop.f32.mrf.mxu0
      %848 = vmatprep.mubr.f32.mxu0 0.0
      %849 = vmatmul.mubr.f32.gmra.mxu0 %v638
      %v850 = vpop.f32.mrf.mxu0
      %v851 = vadd.f32 0.0, %v850
      %v852 = vpop.f32.mrf.mxu0
      %853 = vmatprep.mubr.f32.mxu0 0.0
      %854 = vmatmul.mubr.f32.gmra.mxu0 %v640
      %v855 = vpop.f32.mrf.mxu0
      %v856 = vadd.f32 0.0, %v855
      %v857 = vpop.f32.mrf.mxu0
      %858 = vmatprep.mubr.f32.mxu0 0.0
      %859 = vmatmul.mubr.f32.gmra.mxu0 %v642
      %v860 = vpop.f32.mrf.mxu0
      %v861 = vadd.f32 0.0, %v860
      %v862 = vpop.f32.mrf.mxu0
      %863 = vmatprep.mubr.f32.mxu0 0.0
      %864 = vmatmul.mubr.f32.gmra.mxu0 %v644
      %v865 = vpop.f32.mrf.mxu0
      %v866 = vadd.f32 0.0, %v865
      %v867 = vpop.f32.mrf.mxu0
      %868 = vmatprep.mubr.f32.mxu0 0.0
      %869 = vmatmul.mubr.f32.gmra.mxu0 %v646
      %v870 = vpop.f32.mrf.mxu0
      %v871 = vadd.f32 0.0, %v870
      %v872 = vpop.f32.mrf.mxu0
      %873 = vmatprep.mubr.f32.mxu0 0.0
      %874 = vmatmul.mubr.f32.gmra.mxu0 %v648
      %v875 = vpop.f32.mrf.mxu0
      %v876 = vadd.f32 0.0, %v875
      %v877 = vpop.f32.mrf.mxu0
      %878 = vdwg.mxu0
      %v879 = vsel %vm279, %v400, 0
      %v881 = vsel %vm279, %v401, 0
      %v883 = vsel %vm279, %v403, 0
      %v885 = vsel %vm279, %v404, 0
      %v887 = vsel %vm279, %v406, 0
      %v889 = vsel %vm279, %v407, 0
      %v891 = vsel %vm279, %v409, 0
      %v893 = vsel %vm279, %v410, 0
      %v895 = vsel %vm279, %v412, 0
      %v897 = vsel %vm279, %v413, 0
      %v899 = vsel %vm279, %v415, 0
      %v901 = vsel %vm279, %v416, 0
      %v903 = vsel %vm279, %v418, 0
      %v905 = vsel %vm279, %v419, 0
      %v907 = vsel %vm279, %v421, 0
      %v909 = vsel %vm279, %v422, 0
      %v911 = vsel %vm279, %v424, 0
      %v913 = vsel %vm279, %v425, 0
      %v915 = vsel %vm279, %v427, 0
      %v917 = vsel %vm279, %v428, 0
      %v919 = vsel %vm279, %v430, 0
      %v921 = vsel %vm279, %v431, 0
      %v923 = vsel %vm279, %v433, 0
      %v925 = vsel %vm279, %v434, 0
      %v927 = vsel %vm279, %v436, 0
      %v929 = vsel %vm279, %v437, 0
      %v931 = vsel %vm279, %v439, 0
      %v933 = vsel %vm279, %v440, 0
      %v935 = vsel %vm279, %v442, 0
      %v937 = vsel %vm279, %v443, 0
      %v939 = vsel %vm279, %v445, 0
      %v941 = vsel %vm279, %v446, 0
      %v944 = vsel %vm650, %v454, 0
      %946 = vmatprep.subr.mxu0 0.0
      %947 = vmatpush1.msra.mxu0 0.0
      %948 = vmatprep.subr.mxu0 0.0
      %949 = vmatpush1.msra.mxu0 0.0
      %950 = vmatprep.subr.mxu0 0.0
      %951 = vmatpush1.msra.mxu0 0.0
      %952 = vmatprep.subr.mxu0 0.0
      %953 = vmatpush1.msra.mxu0 0.0
      %954 = vmatprep.subr.mxu0 0.0
      %955 = vmatpush1.msra.mxu0 0.0
      %956 = vmatprep.subr.mxu0 0.0
      %957 = vmatpush1.msra.mxu0 0.0
      %958 = vmatprep.subr.mxu0 0.0
      %959 = vmatpush1.msra.mxu0 0.0
      %960 = vmatprep.subr.mxu0 0.0
      %961 = vmatpush1.msra.mxu0 0.0
      %962 = vmatprep.subr.mxu0 0.0
      %963 = vmatpush1.msra.mxu0 0.0
      %964 = vmatprep.subr.mxu0 0.0
      %965 = vmatpush1.msra.mxu0 0.0
      %966 = vmatprep.subr.mxu0 0.0
      %967 = vmatpush1.msra.mxu0 0.0
      %968 = vmatprep.subr.mxu0 0.0
      %969 = vmatpush1.msra.mxu0 0.0
      %970 = vmatprep.subr.mxu0 0.0
      %971 = vmatpush1.msra.mxu0 0.0
      %972 = vmatprep.subr.mxu0 0.0
      %973 = vmatpush1.msra.mxu0 0.0
      %974 = vmatprep.subr.mxu0 0.0
      %975 = vmatpush1.msra.mxu0 0.0
      %976 = vmatprep.subr.mxu0 0.0
      %977 = vmatpush1.msra.mxu0 %v944
      %978 = vmatprep.subr.mxu0 0.0
      %979 = vmatpush2.msra.mxu0 0.0
      %980 = vmatprep.subr.mxu0 0.0
      %981 = vmatpush2.msra.mxu0 0.0
      %982 = vmatprep.subr.mxu0 0.0
      %983 = vmatpush2.msra.mxu0 0.0
      %984 = vmatprep.subr.mxu0 0.0
      %985 = vmatpush2.msra.mxu0 0.0
      %986 = vmatprep.subr.mxu0 0.0
      %987 = vmatpush2.msra.mxu0 0.0
      %988 = vmatprep.subr.mxu0 0.0
      %989 = vmatpush2.msra.mxu0 0.0
      %990 = vmatprep.subr.mxu0 0.0
      %991 = vmatpush2.msra.mxu0 0.0
      %992 = vmatprep.subr.mxu0 0.0
      %993 = vmatpush2.msra.mxu0 0.0
      %994 = vmatprep.subr.mxu0 0.0
      %995 = vmatpush2.msra.mxu0 0.0
      %996 = vmatprep.subr.mxu0 0.0
      %997 = vmatpush2.msra.mxu0 0.0
      %998 = vmatprep.subr.mxu0 0.0
      %999 = vmatpush2.msra.mxu0 0.0
      %1000 = vmatprep.subr.mxu0 0.0
      %1001 = vmatpush2.msra.mxu0 0.0
      %1002 = vmatprep.subr.mxu0 0.0
      %1003 = vmatpush2.msra.mxu0 0.0
      %1004 = vmatprep.subr.mxu0 0.0
      %1005 = vmatpush2.msra.mxu0 0.0
      %1006 = vmatprep.subr.mxu0 0.0
      %1007 = vmatpush2.msra.mxu0 0.0
      %1008 = vmatprep.subr.mxu0 0.0
      %1009 = vmatpush2.msra.mxu0 0.0
      %1010 = vmatprep.mubr.f32.mxu0 0.0
      %1011 = vmatmul.mubr.f32.gmra.mxu0 %v879
      %v1012 = vpop.f32.mrf.mxu0
      %v1013 = vadd.f32 %v721, %v1012
      %v1014 = vpop.f32.mrf.mxu0
      %1015 = vmatprep.mubr.f32.mxu0 0.0
      %1016 = vmatmul.mubr.f32.gmra.mxu0 %v881
      %v1017 = vpop.f32.mrf.mxu0
      %v1018 = vadd.f32 %v726, %v1017
      %v1019 = vpop.f32.mrf.mxu0
      %1020 = vmatprep.mubr.f32.mxu0 0.0
      %1021 = vmatmul.mubr.f32.gmra.mxu0 %v883
      %v1022 = vpop.f32.mrf.mxu0
      %v1023 = vadd.f32 %v731, %v1022
      %v1024 = vpop.f32.mrf.mxu0
      %1025 = vmatprep.mubr.f32.mxu0 0.0
      %1026 = vmatmul.mubr.f32.gmra.mxu0 %v885
      %v1027 = vpop.f32.mrf.mxu0
      %v1028 = vadd.f32 %v736, %v1027
      %v1029 = vpop.f32.mrf.mxu0
      %1030 = vmatprep.mubr.f32.mxu0 0.0
      %1031 = vmatmul.mubr.f32.gmra.mxu0 %v887
      %v1032 = vpop.f32.mrf.mxu0
      %v1033 = vadd.f32 %v741, %v1032
      %v1034 = vpop.f32.mrf.mxu0
      %1035 = vmatprep.mubr.f32.mxu0 0.0
      %1036 = vmatmul.mubr.f32.gmra.mxu0 %v889
      %v1037 = vpop.f32.mrf.mxu0
      %v1038 = vadd.f32 %v746, %v1037
      %v1039 = vpop.f32.mrf.mxu0
      %1040 = vmatprep.mubr.f32.mxu0 0.0
      %1041 = vmatmul.mubr.f32.gmra.mxu0 %v891
      %v1042 = vpop.f32.mrf.mxu0
      %v1043 = vadd.f32 %v751, %v1042
      %v1044 = vpop.f32.mrf.mxu0
      %1045 = vmatprep.mubr.f32.mxu0 0.0
      %1046 = vmatmul.mubr.f32.gmra.mxu0 %v893
      %v1047 = vpop.f32.mrf.mxu0
      %v1048 = vadd.f32 %v756, %v1047
      %v1049 = vpop.f32.mrf.mxu0
      %1050 = vmatprep.mubr.f32.mxu0 0.0
      %1051 = vmatmul.mubr.f32.gmra.mxu0 %v895
      %v1052 = vpop.f32.mrf.mxu0
      %v1053 = vadd.f32 %v761, %v1052
      %v1054 = vpop.f32.mrf.mxu0
      %1055 = vmatprep.mubr.f32.mxu0 0.0
      %1056 = vmatmul.mubr.f32.gmra.mxu0 %v897
      %v1057 = vpop.f32.mrf.mxu0
      %v1058 = vadd.f32 %v766, %v1057
      %v1059 = vpop.f32.mrf.mxu0
      %1060 = vmatprep.mubr.f32.mxu0 0.0
      %1061 = vmatmul.mubr.f32.gmra.mxu0 %v899
      %v1062 = vpop.f32.mrf.mxu0
      %v1063 = vadd.f32 %v771, %v1062
      %v1064 = vpop.f32.mrf.mxu0
      %1065 = vmatprep.mubr.f32.mxu0 0.0
      %1066 = vmatmul.mubr.f32.gmra.mxu0 %v901
      %v1067 = vpop.f32.mrf.mxu0
      %v1068 = vadd.f32 %v776, %v1067
      %v1069 = vpop.f32.mrf.mxu0
      %1070 = vmatprep.mubr.f32.mxu0 0.0
      %1071 = vmatmul.mubr.f32.gmra.mxu0 %v903
      %v1072 = vpop.f32.mrf.mxu0
      %v1073 = vadd.f32 %v781, %v1072
      %v1074 = vpop.f32.mrf.mxu0
      %1075 = vmatprep.mubr.f32.mxu0 0.0
      %1076 = vmatmul.mubr.f32.gmra.mxu0 %v905
      %v1077 = vpop.f32.mrf.mxu0
      %v1078 = vadd.f32 %v786, %v1077
      %v1079 = vpop.f32.mrf.mxu0
      %1080 = vmatprep.mubr.f32.mxu0 0.0
      %1081 = vmatmul.mubr.f32.gmra.mxu0 %v907
      %v1082 = vpop.f32.mrf.mxu0
      %v1083 = vadd.f32 %v791, %v1082
      %v1084 = vpop.f32.mrf.mxu0
      %1085 = vmatprep.mubr.f32.mxu0 0.0
      %1086 = vmatmul.mubr.f32.gmra.mxu0 %v909
      %v1087 = vpop.f32.mrf.mxu0
      %v1088 = vadd.f32 %v796, %v1087
      %v1089 = vpop.f32.mrf.mxu0
      %1090 = vmatprep.mubr.f32.mxu0 0.0
      %1091 = vmatmul.mubr.f32.gmra.mxu0 %v911
      %v1092 = vpop.f32.mrf.mxu0
      %v1093 = vadd.f32 %v801, %v1092
      %v1094 = vpop.f32.mrf.mxu0
      %1095 = vmatprep.mubr.f32.mxu0 0.0
      %1096 = vmatmul.mubr.f32.gmra.mxu0 %v913
      %v1097 = vpop.f32.mrf.mxu0
      %v1098 = vadd.f32 %v806, %v1097
      %v1099 = vpop.f32.mrf.mxu0
      %1100 = vmatprep.mubr.f32.mxu0 0.0
      %1101 = vmatmul.mubr.f32.gmra.mxu0 %v915
      %v1102 = vpop.f32.mrf.mxu0
      %v1103 = vadd.f32 %v811, %v1102
      %v1104 = vpop.f32.mrf.mxu0
      %1105 = vmatprep.mubr.f32.mxu0 0.0
      %1106 = vmatmul.mubr.f32.gmra.mxu0 %v917
      %v1107 = vpop.f32.mrf.mxu0
      %v1108 = vadd.f32 %v816, %v1107
      %v1109 = vpop.f32.mrf.mxu0
      %1110 = vmatprep.mubr.f32.mxu0 0.0
      %1111 = vmatmul.mubr.f32.gmra.mxu0 %v919
      %v1112 = vpop.f32.mrf.mxu0
      %v1113 = vadd.f32 %v821, %v1112
      %v1114 = vpop.f32.mrf.mxu0
      %1115 = vmatprep.mubr.f32.mxu0 0.0
      %1116 = vmatmul.mubr.f32.gmra.mxu0 %v921
      %v1117 = vpop.f32.mrf.mxu0
      %v1118 = vadd.f32 %v826, %v1117
      %v1119 = vpop.f32.mrf.mxu0
      %1120 = vmatprep.mubr.f32.mxu0 0.0
      %1121 = vmatmul.mubr.f32.gmra.mxu0 %v923
      %v1122 = vpop.f32.mrf.mxu0
      %v1123 = vadd.f32 %v831, %v1122
      %v1124 = vpop.f32.mrf.mxu0
      %1125 = vmatprep.mubr.f32.mxu0 0.0
      %1126 = vmatmul.mubr.f32.gmra.mxu0 %v925
      %v1127 = vpop.f32.mrf.mxu0
      %v1128 = vadd.f32 %v836, %v1127
      %v1129 = vpop.f32.mrf.mxu0
      %1130 = vmatprep.mubr.f32.mxu0 0.0
      %1131 = vmatmul.mubr.f32.gmra.mxu0 %v927
      %v1132 = vpop.f32.mrf.mxu0
      %v1133 = vadd.f32 %v841, %v1132
      %v1134 = vpop.f32.mrf.mxu0
      %1135 = vmatprep.mubr.f32.mxu0 0.0
      %1136 = vmatmul.mubr.f32.gmra.mxu0 %v929
      %v1137 = vpop.f32.mrf.mxu0
      %v1138 = vadd.f32 %v846, %v1137
      %v1139 = vpop.f32.mrf.mxu0
      %1140 = vmatprep.mubr.f32.mxu0 0.0
      %1141 = vmatmul.mubr.f32.gmra.mxu0 %v931
      %v1142 = vpop.f32.mrf.mxu0
      %v1143 = vadd.f32 %v851, %v1142
      %v1144 = vpop.f32.mrf.mxu0
      %1145 = vmatprep.mubr.f32.mxu0 0.0
      %1146 = vmatmul.mubr.f32.gmra.mxu0 %v933
      %v1147 = vpop.f32.mrf.mxu0
      %v1148 = vadd.f32 %v856, %v1147
      %v1149 = vpop.f32.mrf.mxu0
      %1150 = vmatprep.mubr.f32.mxu0 0.0
      %1151 = vmatmul.mubr.f32.gmra.mxu0 %v935
      %v1152 = vpop.f32.mrf.mxu0
      %v1153 = vadd.f32 %v861, %v1152
      %v1154 = vpop.f32.mrf.mxu0
      %1155 = vmatprep.mubr.f32.mxu0 0.0
      %1156 = vmatmul.mubr.f32.gmra.mxu0 %v937
      %v1157 = vpop.f32.mrf.mxu0
      %v1158 = vadd.f32 %v866, %v1157
      %v1159 = vpop.f32.mrf.mxu0
      %1160 = vmatprep.mubr.f32.mxu0 0.0
      %1161 = vmatmul.mubr.f32.gmra.mxu0 %v939
      %v1162 = vpop.f32.mrf.mxu0
      %v1163 = vadd.f32 %v871, %v1162
      %v1164 = vpop.f32.mrf.mxu0
      %1165 = vmatprep.mubr.f32.mxu0 0.0
      %1166 = vmatmul.mubr.f32.gmra.mxu0 %v941
      %v1167 = vpop.f32.mrf.mxu0
      %v1168 = vadd.f32 %v876, %v1167
      %v1169 = vpop.f32.mrf.mxu0
      %1170 = vdwg.mxu0
      %vm1171 = vcmask 1045504
      %v1172 = vrot.slane %v400, 2
      %v1173 = vrot.slane %v401, 2
      %v1174 = vsel %vm1171, %v1172, %v1173
      %v1175 = vrot.slane %v402, 2
      %v1176 = vsel %vm1171, %v1173, %v1175
      %v1177 = vrot.slane %v403, 2
      %v1178 = vrot.slane %v404, 2
      %v1179 = vsel %vm1171, %v1177, %v1178
      %v1180 = vrot.slane %v405, 2
      %v1181 = vsel %vm1171, %v1178, %v1180
      %v1182 = vrot.slane %v406, 2
      %v1183 = vrot.slane %v407, 2
      %v1184 = vsel %vm1171, %v1182, %v1183
      %v1185 = vrot.slane %v408, 2
      %v1186 = vsel %vm1171, %v1183, %v1185
      %v1187 = vrot.slane %v409, 2
      %v1188 = vrot.slane %v410, 2
      %v1189 = vsel %vm1171, %v1187, %v1188
      %v1190 = vrot.slane %v411, 2
      %v1191 = vsel %vm1171, %v1188, %v1190
      %v1192 = vrot.slane %v412, 2
      %v1193 = vrot.slane %v413, 2
      %v1194 = vsel %vm1171, %v1192, %v1193
      %v1195 = vrot.slane %v414, 2
      %v1196 = vsel %vm1171, %v1193, %v1195
      %v1197 = vrot.slane %v415, 2
      %v1198 = vrot.slane %v416, 2
      %v1199 = vsel %vm1171, %v1197, %v1198
      %v1200 = vrot.slane %v417, 2
      %v1201 = vsel %vm1171, %v1198, %v1200
      %v1202 = vrot.slane %v418, 2
      %v1203 = vrot.slane %v419, 2
      %v1204 = vsel %vm1171, %v1202, %v1203
      %v1205 = vrot.slane %v420, 2
      %v1206 = vsel %vm1171, %v1203, %v1205
      %v1207 = vrot.slane %v421, 2
      %v1208 = vrot.slane %v422, 2
      %v1209 = vsel %vm1171, %v1207, %v1208
      %v1210 = vrot.slane %v423, 2
      %v1211 = vsel %vm1171, %v1208, %v1210
      %v1212 = vrot.slane %v424, 2
      %v1213 = vrot.slane %v425, 2
      %v1214 = vsel %vm1171, %v1212, %v1213
      %v1215 = vrot.slane %v426, 2
      %v1216 = vsel %vm1171, %v1213, %v1215
      %v1217 = vrot.slane %v427, 2
      %v1218 = vrot.slane %v428, 2
      %v1219 = vsel %vm1171, %v1217, %v1218
      %v1220 = vrot.slane %v429, 2
      %v1221 = vsel %vm1171, %v1218, %v1220
      %v1222 = vrot.slane %v430, 2
      %v1223 = vrot.slane %v431, 2
      %v1224 = vsel %vm1171, %v1222, %v1223
      %v1225 = vrot.slane %v432, 2
      %v1226 = vsel %vm1171, %v1223, %v1225
      %v1227 = vrot.slane %v433, 2
      %v1228 = vrot.slane %v434, 2
      %v1229 = vsel %vm1171, %v1227, %v1228
      %v1230 = vrot.slane %v435, 2
      %v1231 = vsel %vm1171, %v1228, %v1230
      %v1232 = vrot.slane %v436, 2
      %v1233 = vrot.slane %v437, 2
      %v1234 = vsel %vm1171, %v1232, %v1233
      %v1235 = vrot.slane %v438, 2
      %v1236 = vsel %vm1171, %v1233, %v1235
      %v1237 = vrot.slane %v439, 2
      %v1238 = vrot.slane %v440, 2
      %v1239 = vsel %vm1171, %v1237, %v1238
      %v1240 = vrot.slane %v441, 2
      %v1241 = vsel %vm1171, %v1238, %v1240
      %v1242 = vrot.slane %v442, 2
      %v1243 = vrot.slane %v443, 2
      %v1244 = vsel %vm1171, %v1242, %v1243
      %v1245 = vrot.slane %v444, 2
      %v1246 = vsel %vm1171, %v1243, %v1245
      %v1247 = vrot.slane %v445, 2
      %v1248 = vrot.slane %v446, 2
      %v1249 = vsel %vm1171, %v1247, %v1248
      %v1250 = vrot.slane %v447, 2
      %v1251 = vsel %vm1171, %v1248, %v1250
      %s1252 = scalar_lea.vmem %s1, 8
      %v1253 = vld [vmem:[%s1252] sm:$0xf]
      %v1254 = vsel %vm279, %v1174, 0
      %v1256 = vsel %vm279, %v1176, 0
      %v1258 = vsel %vm279, %v1179, 0
      %v1260 = vsel %vm279, %v1181, 0
      %v1262 = vsel %vm279, %v1184, 0
      %v1264 = vsel %vm279, %v1186, 0
      %v1266 = vsel %vm279, %v1189, 0
      %v1268 = vsel %vm279, %v1191, 0
      %v1270 = vsel %vm279, %v1194, 0
      %v1272 = vsel %vm279, %v1196, 0
      %v1274 = vsel %vm279, %v1199, 0
      %v1276 = vsel %vm279, %v1201, 0
      %v1278 = vsel %vm279, %v1204, 0
      %v1280 = vsel %vm279, %v1206, 0
      %v1282 = vsel %vm279, %v1209, 0
      %v1284 = vsel %vm279, %v1211, 0
      %v1286 = vsel %vm279, %v1214, 0
      %v1288 = vsel %vm279, %v1216, 0
      %v1290 = vsel %vm279, %v1219, 0
      %v1292 = vsel %vm279, %v1221, 0
      %v1294 = vsel %vm279, %v1224, 0
      %v1296 = vsel %vm279, %v1226, 0
      %v1298 = vsel %vm279, %v1229, 0
      %v1300 = vsel %vm279, %v1231, 0
      %v1302 = vsel %vm279, %v1234, 0
      %v1304 = vsel %vm279, %v1236, 0
      %v1306 = vsel %vm279, %v1239, 0
      %v1308 = vsel %vm279, %v1241, 0
      %v1310 = vsel %vm279, %v1244, 0
      %v1312 = vsel %vm279, %v1246, 0
      %v1314 = vsel %vm279, %v1249, 0
      %v1316 = vsel %vm279, %v1251, 0
      %v1319 = vsel %vm650, %v1253, 0
      %1321 = vmatprep.subr.mxu0 0.0
      %1322 = vmatpush1.msra.mxu0 0.0
      %1323 = vmatprep.subr.mxu0 0.0
      %1324 = vmatpush1.msra.mxu0 0.0
      %1325 = vmatprep.subr.mxu0 0.0
      %1326 = vmatpush1.msra.mxu0 0.0
      %1327 = vmatprep.subr.mxu0 0.0
      %1328 = vmatpush1.msra.mxu0 0.0
      %1329 = vmatprep.subr.mxu0 0.0
      %1330 = vmatpush1.msra.mxu0 0.0
      %1331 = vmatprep.subr.mxu0 0.0
      %1332 = vmatpush1.msra.mxu0 0.0
      %1333 = vmatprep.subr.mxu0 0.0
      %1334 = vmatpush1.msra.mxu0 0.0
      %1335 = vmatprep.subr.mxu0 0.0
      %1336 = vmatpush1.msra.mxu0 0.0
      %1337 = vmatprep.subr.mxu0 0.0
      %1338 = vmatpush1.msra.mxu0 0.0
      %1339 = vmatprep.subr.mxu0 0.0
      %1340 = vmatpush1.msra.mxu0 0.0
      %1341 = vmatprep.subr.mxu0 0.0
      %1342 = vmatpush1.msra.mxu0 0.0
      %1343 = vmatprep.subr.mxu0 0.0
      %1344 = vmatpush1.msra.mxu0 0.0
      %1345 = vmatprep.subr.mxu0 0.0
      %1346 = vmatpush1.msra.mxu0 0.0
      %1347 = vmatprep.subr.mxu0 0.0
      %1348 = vmatpush1.msra.mxu0 0.0
      %1349 = vmatprep.subr.mxu0 0.0
      %1350 = vmatpush1.msra.mxu0 0.0
      %1351 = vmatprep.subr.mxu0 0.0
      %1352 = vmatpush1.msra.mxu0 %v1319
      %1353 = vmatprep.subr.mxu0 0.0
      %1354 = vmatpush2.msra.mxu0 0.0
      %1355 = vmatprep.subr.mxu0 0.0
      %1356 = vmatpush2.msra.mxu0 0.0
      %1357 = vmatprep.subr.mxu0 0.0
      %1358 = vmatpush2.msra.mxu0 0.0
      %1359 = vmatprep.subr.mxu0 0.0
      %1360 = vmatpush2.msra.mxu0 0.0
      %1361 = vmatprep.subr.mxu0 0.0
      %1362 = vmatpush2.msra.mxu0 0.0
      %1363 = vmatprep.subr.mxu0 0.0
      %1364 = vmatpush2.msra.mxu0 0.0
      %1365 = vmatprep.subr.mxu0 0.0
      %1366 = vmatpush2.msra.mxu0 0.0
      %1367 = vmatprep.subr.mxu0 0.0
      %1368 = vmatpush2.msra.mxu0 0.0
      %1369 = vmatprep.subr.mxu0 0.0
      %1370 = vmatpush2.msra.mxu0 0.0
      %1371 = vmatprep.subr.mxu0 0.0
      %1372 = vmatpush2.msra.mxu0 0.0
      %1373 = vmatprep.subr.mxu0 0.0
      %1374 = vmatpush2.msra.mxu0 0.0
      %1375 = vmatprep.subr.mxu0 0.0
      %1376 = vmatpush2.msra.mxu0 0.0
      %1377 = vmatprep.subr.mxu0 0.0
      %1378 = vmatpush2.msra.mxu0 0.0
      %1379 = vmatprep.subr.mxu0 0.0
      %1380 = vmatpush2.msra.mxu0 0.0
      %1381 = vmatprep.subr.mxu0 0.0
      %1382 = vmatpush2.msra.mxu0 0.0
      %1383 = vmatprep.subr.mxu0 0.0
      %1384 = vmatpush2.msra.mxu0 0.0
      %1385 = vmatprep.mubr.f32.mxu0 0.0
      %1386 = vmatmul.mubr.f32.gmra.mxu0 %v1254
      %v1387 = vpop.f32.mrf.mxu0
      %v1388 = vadd.f32 0.0, %v1387
      %v1389 = vpop.f32.mrf.mxu0
      %1390 = vmatprep.mubr.f32.mxu0 0.0
      %1391 = vmatmul.mubr.f32.gmra.mxu0 %v1256
      %v1392 = vpop.f32.mrf.mxu0
      %v1393 = vadd.f32 0.0, %v1392
      %v1394 = vpop.f32.mrf.mxu0
      %1395 = vmatprep.mubr.f32.mxu0 0.0
      %1396 = vmatmul.mubr.f32.gmra.mxu0 %v1258
      %v1397 = vpop.f32.mrf.mxu0
      %v1398 = vadd.f32 0.0, %v1397
      %v1399 = vpop.f32.mrf.mxu0
      %1400 = vmatprep.mubr.f32.mxu0 0.0
      %1401 = vmatmul.mubr.f32.gmra.mxu0 %v1260
      %v1402 = vpop.f32.mrf.mxu0
      %v1403 = vadd.f32 0.0, %v1402
      %v1404 = vpop.f32.mrf.mxu0
      %1405 = vmatprep.mubr.f32.mxu0 0.0
      %1406 = vmatmul.mubr.f32.gmra.mxu0 %v1262
      %v1407 = vpop.f32.mrf.mxu0
      %v1408 = vadd.f32 0.0, %v1407
      %v1409 = vpop.f32.mrf.mxu0
      %1410 = vmatprep.mubr.f32.mxu0 0.0
      %1411 = vmatmul.mubr.f32.gmra.mxu0 %v1264
      %v1412 = vpop.f32.mrf.mxu0
      %v1413 = vadd.f32 0.0, %v1412
      %v1414 = vpop.f32.mrf.mxu0
      %1415 = vmatprep.mubr.f32.mxu0 0.0
      %1416 = vmatmul.mubr.f32.gmra.mxu0 %v1266
      %v1417 = vpop.f32.mrf.mxu0
      %v1418 = vadd.f32 0.0, %v1417
      %v1419 = vpop.f32.mrf.mxu0
      %1420 = vmatprep.mubr.f32.mxu0 0.0
      %1421 = vmatmul.mubr.f32.gmra.mxu0 %v1268
      %v1422 = vpop.f32.mrf.mxu0
      %v1423 = vadd.f32 0.0, %v1422
      %v1424 = vpop.f32.mrf.mxu0
      %1425 = vmatprep.mubr.f32.mxu0 0.0
      %1426 = vmatmul.mubr.f32.gmra.mxu0 %v1270
      %v1427 = vpop.f32.mrf.mxu0
      %v1428 = vadd.f32 0.0, %v1427
      %v1429 = vpop.f32.mrf.mxu0
      %1430 = vmatprep.mubr.f32.mxu0 0.0
      %1431 = vmatmul.mubr.f32.gmra.mxu0 %v1272
      %v1432 = vpop.f32.mrf.mxu0
      %v1433 = vadd.f32 0.0, %v1432
      %v1434 = vpop.f32.mrf.mxu0
      %1435 = vmatprep.mubr.f32.mxu0 0.0
      %1436 = vmatmul.mubr.f32.gmra.mxu0 %v1274
      %v1437 = vpop.f32.mrf.mxu0
      %v1438 = vadd.f32 0.0, %v1437
      %v1439 = vpop.f32.mrf.mxu0
      %1440 = vmatprep.mubr.f32.mxu0 0.0
      %1441 = vmatmul.mubr.f32.gmra.mxu0 %v1276
      %v1442 = vpop.f32.mrf.mxu0
      %v1443 = vadd.f32 0.0, %v1442
      %v1444 = vpop.f32.mrf.mxu0
      %1445 = vmatprep.mubr.f32.mxu0 0.0
      %1446 = vmatmul.mubr.f32.gmra.mxu0 %v1278
      %v1447 = vpop.f32.mrf.mxu0
      %v1448 = vadd.f32 0.0, %v1447
      %v1449 = vpop.f32.mrf.mxu0
      %1450 = vmatprep.mubr.f32.mxu0 0.0
      %1451 = vmatmul.mubr.f32.gmra.mxu0 %v1280
      %v1452 = vpop.f32.mrf.mxu0
      %v1453 = vadd.f32 0.0, %v1452
      %v1454 = vpop.f32.mrf.mxu0
      %1455 = vmatprep.mubr.f32.mxu0 0.0
      %1456 = vmatmul.mubr.f32.gmra.mxu0 %v1282
      %v1457 = vpop.f32.mrf.mxu0
      %v1458 = vadd.f32 0.0, %v1457
      %v1459 = vpop.f32.mrf.mxu0
      %1460 = vmatprep.mubr.f32.mxu0 0.0
      %1461 = vmatmul.mubr.f32.gmra.mxu0 %v1284
      %v1462 = vpop.f32.mrf.mxu0
      %v1463 = vadd.f32 0.0, %v1462
      %v1464 = vpop.f32.mrf.mxu0
      %1465 = vmatprep.mubr.f32.mxu0 0.0
      %1466 = vmatmul.mubr.f32.gmra.mxu0 %v1286
      %v1467 = vpop.f32.mrf.mxu0
      %v1468 = vadd.f32 0.0, %v1467
      %v1469 = vpop.f32.mrf.mxu0
      %1470 = vmatprep.mubr.f32.mxu0 0.0
      %1471 = vmatmul.mubr.f32.gmra.mxu0 %v1288
      %v1472 = vpop.f32.mrf.mxu0
      %v1473 = vadd.f32 0.0, %v1472
      %v1474 = vpop.f32.mrf.mxu0
      %1475 = vmatprep.mubr.f32.mxu0 0.0
      %1476 = vmatmul.mubr.f32.gmra.mxu0 %v1290
      %v1477 = vpop.f32.mrf.mxu0
      %v1478 = vadd.f32 0.0, %v1477
      %v1479 = vpop.f32.mrf.mxu0
      %1480 = vmatprep.mubr.f32.mxu0 0.0
      %1481 = vmatmul.mubr.f32.gmra.mxu0 %v1292
      %v1482 = vpop.f32.mrf.mxu0
      %v1483 = vadd.f32 0.0, %v1482
      %v1484 = vpop.f32.mrf.mxu0
      %1485 = vmatprep.mubr.f32.mxu0 0.0
      %1486 = vmatmul.mubr.f32.gmra.mxu0 %v1294
      %v1487 = vpop.f32.mrf.mxu0
      %v1488 = vadd.f32 0.0, %v1487
      %v1489 = vpop.f32.mrf.mxu0
      %1490 = vmatprep.mubr.f32.mxu0 0.0
      %1491 = vmatmul.mubr.f32.gmra.mxu0 %v1296
      %v1492 = vpop.f32.mrf.mxu0
      %v1493 = vadd.f32 0.0, %v1492
      %v1494 = vpop.f32.mrf.mxu0
      %1495 = vmatprep.mubr.f32.mxu0 0.0
      %1496 = vmatmul.mubr.f32.gmra.mxu0 %v1298
      %v1497 = vpop.f32.mrf.mxu0
      %v1498 = vadd.f32 0.0, %v1497
      %v1499 = vpop.f32.mrf.mxu0
      %1500 = vmatprep.mubr.f32.mxu0 0.0
      %1501 = vmatmul.mubr.f32.gmra.mxu0 %v1300
      %v1502 = vpop.f32.mrf.mxu0
      %v1503 = vadd.f32 0.0, %v1502
      %v1504 = vpop.f32.mrf.mxu0
      %1505 = vmatprep.mubr.f32.mxu0 0.0
      %1506 = vmatmul.mubr.f32.gmra.mxu0 %v1302
      %v1507 = vpop.f32.mrf.mxu0
      %v1508 = vadd.f32 0.0, %v1507
      %v1509 = vpop.f32.mrf.mxu0
      %1510 = vmatprep.mubr.f32.mxu0 0.0
      %1511 = vmatmul.mubr.f32.gmra.mxu0 %v1304
      %v1512 = vpop.f32.mrf.mxu0
      %v1513 = vadd.f32 0.0, %v1512
      %v1514 = vpop.f32.mrf.mxu0
      %1515 = vmatprep.mubr.f32.mxu0 0.0
      %1516 = vmatmul.mubr.f32.gmra.mxu0 %v1306
      %v1517 = vpop.f32.mrf.mxu0
      %v1518 = vadd.f32 0.0, %v1517
      %v1519 = vpop.f32.mrf.mxu0
      %1520 = vmatprep.mubr.f32.mxu0 0.0
      %1521 = vmatmul.mubr.f32.gmra.mxu0 %v1308
      %v1522 = vpop.f32.mrf.mxu0
      %v1523 = vadd.f32 0.0, %v1522
      %v1524 = vpop.f32.mrf.mxu0
      %1525 = vmatprep.mubr.f32.mxu0 0.0
      %1526 = vmatmul.mubr.f32.gmra.mxu0 %v1310
      %v1527 = vpop.f32.mrf.mxu0
      %v1528 = vadd.f32 0.0, %v1527
      %v1529 = vpop.f32.mrf.mxu0
      %1530 = vmatprep.mubr.f32.mxu0 0.0
      %1531 = vmatmul.mubr.f32.gmra.mxu0 %v1312
      %v1532 = vpop.f32.mrf.mxu0
      %v1533 = vadd.f32 0.0, %v1532
      %v1534 = vpop.f32.mrf.mxu0
      %1535 = vmatprep.mubr.f32.mxu0 0.0
      %1536 = vmatmul.mubr.f32.gmra.mxu0 %v1314
      %v1537 = vpop.f32.mrf.mxu0
      %v1538 = vadd.f32 0.0, %v1537
      %v1539 = vpop.f32.mrf.mxu0
      %1540 = vmatprep.mubr.f32.mxu0 0.0
      %1541 = vmatmul.mubr.f32.gmra.mxu0 %v1316
      %v1542 = vpop.f32.mrf.mxu0
      %v1543 = vadd.f32 0.0, %v1542
      %v1544 = vpop.f32.mrf.mxu0
      %1545 = vdwg.mxu0
      %v1546 = vadd.f32 %v1013, %v1388
      %v1547 = vadd.f32 %v1018, %v1393
      %v1548 = vadd.f32 %v1023, %v1398
      %v1549 = vadd.f32 %v1028, %v1403
      %v1550 = vadd.f32 %v1033, %v1408
      %v1551 = vadd.f32 %v1038, %v1413
      %v1552 = vadd.f32 %v1043, %v1418
      %v1553 = vadd.f32 %v1048, %v1423
      %v1554 = vadd.f32 %v1053, %v1428
      %v1555 = vadd.f32 %v1058, %v1433
      %v1556 = vadd.f32 %v1063, %v1438
      %v1557 = vadd.f32 %v1068, %v1443
      %v1558 = vadd.f32 %v1073, %v1448
      %v1559 = vadd.f32 %v1078, %v1453
      %v1560 = vadd.f32 %v1083, %v1458
      %v1561 = vadd.f32 %v1088, %v1463
      %v1562 = vadd.f32 %v1093, %v1468
      %v1563 = vadd.f32 %v1098, %v1473
      %v1564 = vadd.f32 %v1103, %v1478
      %v1565 = vadd.f32 %v1108, %v1483
      %v1566 = vadd.f32 %v1113, %v1488
      %v1567 = vadd.f32 %v1118, %v1493
      %v1568 = vadd.f32 %v1123, %v1498
      %v1569 = vadd.f32 %v1128, %v1503
      %v1570 = vadd.f32 %v1133, %v1508
      %v1571 = vadd.f32 %v1138, %v1513
      %v1572 = vadd.f32 %v1143, %v1518
      %v1573 = vadd.f32 %v1148, %v1523
      %v1574 = vadd.f32 %v1153, %v1528
      %v1575 = vadd.f32 %v1158, %v1533
      %v1576 = vadd.f32 %v1163, %v1538
      %v1577 = vadd.f32 %v1168, %v1543
      %s1578 = scalar_lea.vmem %s1, 12
      %v1579 = vld [vmem:[%s1578] sm:$0xf]
      %v1581 = vsel %vm279, %v448, 0
      %v1584 = vsel %vm279, %v449, 0
      %v1587 = vsel %vm650, %v1579, 0
      %1589 = vmatprep.subr.mxu0 0.0
      %1590 = vmatpush1.msra.mxu0 0.0
      %1591 = vmatprep.subr.mxu0 0.0
      %1592 = vmatpush1.msra.mxu0 0.0
      %1593 = vmatprep.subr.mxu0 0.0
      %1594 = vmatpush1.msra.mxu0 0.0
      %1595 = vmatprep.subr.mxu0 0.0
      %1596 = vmatpush1.msra.mxu0 0.0
      %1597 = vmatprep.subr.mxu0 0.0
      %1598 = vmatpush1.msra.mxu0 0.0
      %1599 = vmatprep.subr.mxu0 0.0
      %1600 = vmatpush1.msra.mxu0 0.0
      %1601 = vmatprep.subr.mxu0 0.0
      %1602 = vmatpush1.msra.mxu0 0.0
      %1603 = vmatprep.subr.mxu0 0.0
      %1604 = vmatpush1.msra.mxu0 0.0
      %1605 = vmatprep.subr.mxu0 0.0
      %1606 = vmatpush1.msra.mxu0 0.0
      %1607 = vmatprep.subr.mxu0 0.0
      %1608 = vmatpush1.msra.mxu0 0.0
      %1609 = vmatprep.subr.mxu0 0.0
      %1610 = vmatpush1.msra.mxu0 0.0
      %1611 = vmatprep.subr.mxu0 0.0
      %1612 = vmatpush1.msra.mxu0 0.0
      %1613 = vmatprep.subr.mxu0 0.0
      %1614 = vmatpush1.msra.mxu0 0.0
      %1615 = vmatprep.subr.mxu0 0.0
      %1616 = vmatpush1.msra.mxu0 0.0
      %1617 = vmatprep.subr.mxu0 0.0
      %1618 = vmatpush1.msra.mxu0 0.0
      %1619 = vmatprep.subr.mxu0 0.0
      %1620 = vmatpush1.msra.mxu0 %v1587
      %1621 = vmatprep.subr.mxu0 0.0
      %1622 = vmatpush2.msra.mxu0 0.0
      %1623 = vmatprep.subr.mxu0 0.0
      %1624 = vmatpush2.msra.mxu0 0.0
      %1625 = vmatprep.subr.mxu0 0.0
      %1626 = vmatpush2.msra.mxu0 0.0
      %1627 = vmatprep.subr.mxu0 0.0
      %1628 = vmatpush2.msra.mxu0 0.0
      %1629 = vmatprep.subr.mxu0 0.0
      %1630 = vmatpush2.msra.mxu0 0.0
      %1631 = vmatprep.subr.mxu0 0.0
      %1632 = vmatpush2.msra.mxu0 0.0
      %1633 = vmatprep.subr.mxu0 0.0
      %1634 = vmatpush2.msra.mxu0 0.0
      %1635 = vmatprep.subr.mxu0 0.0
      %1636 = vmatpush2.msra.mxu0 0.0
      %1637 = vmatprep.subr.mxu0 0.0
      %1638 = vmatpush2.msra.mxu0 0.0
      %1639 = vmatprep.subr.mxu0 0.0
      %1640 = vmatpush2.msra.mxu0 0.0
      %1641 = vmatprep.subr.mxu0 0.0
      %1642 = vmatpush2.msra.mxu0 0.0
      %1643 = vmatprep.subr.mxu0 0.0
      %1644 = vmatpush2.msra.mxu0 0.0
      %1645 = vmatprep.subr.mxu0 0.0
      %1646 = vmatpush2.msra.mxu0 0.0
      %1647 = vmatprep.subr.mxu0 0.0
      %1648 = vmatpush2.msra.mxu0 0.0
      %1649 = vmatprep.subr.mxu0 0.0
      %1650 = vmatpush2.msra.mxu0 0.0
      %1651 = vmatprep.subr.mxu0 0.0
      %1652 = vmatpush2.msra.mxu0 0.0
      %1653 = vmatprep.mubr.f32.mxu0 0.0
      %1654 = vmatmul.mubr.f32.gmra.mxu0 %v883
      %v1655 = vpop.f32.mrf.mxu0
      %v1656 = vadd.f32 0.0, %v1655
      %v1657 = vpop.f32.mrf.mxu0
      %1658 = vmatprep.mubr.f32.mxu0 0.0
      %1659 = vmatmul.mubr.f32.gmra.mxu0 %v885
      %v1660 = vpop.f32.mrf.mxu0
      %v1661 = vadd.f32 0.0, %v1660
      %v1662 = vpop.f32.mrf.mxu0
      %1663 = vmatprep.mubr.f32.mxu0 0.0
      %1664 = vmatmul.mubr.f32.gmra.mxu0 %v887
      %v1665 = vpop.f32.mrf.mxu0
      %v1666 = vadd.f32 0.0, %v1665
      %v1667 = vpop.f32.mrf.mxu0
      %1668 = vmatprep.mubr.f32.mxu0 0.0
      %1669 = vmatmul.mubr.f32.gmra.mxu0 %v889
      %v1670 = vpop.f32.mrf.mxu0
      %v1671 = vadd.f32 0.0, %v1670
      %v1672 = vpop.f32.mrf.mxu0
      %1673 = vmatprep.mubr.f32.mxu0 0.0
      %1674 = vmatmul.mubr.f32.gmra.mxu0 %v891
      %v1675 = vpop.f32.mrf.mxu0
      %v1676 = vadd.f32 0.0, %v1675
      %v1677 = vpop.f32.mrf.mxu0
      %1678 = vmatprep.mubr.f32.mxu0 0.0
      %1679 = vmatmul.mubr.f32.gmra.mxu0 %v893
      %v1680 = vpop.f32.mrf.mxu0
      %v1681 = vadd.f32 0.0, %v1680
      %v1682 = vpop.f32.mrf.mxu0
      %1683 = vmatprep.mubr.f32.mxu0 0.0
      %1684 = vmatmul.mubr.f32.gmra.mxu0 %v895
      %v1685 = vpop.f32.mrf.mxu0
      %v1686 = vadd.f32 0.0, %v1685
      %v1687 = vpop.f32.mrf.mxu0
      %1688 = vmatprep.mubr.f32.mxu0 0.0
      %1689 = vmatmul.mubr.f32.gmra.mxu0 %v897
      %v1690 = vpop.f32.mrf.mxu0
      %v1691 = vadd.f32 0.0, %v1690
      %v1692 = vpop.f32.mrf.mxu0
      %1693 = vmatprep.mubr.f32.mxu0 0.0
      %1694 = vmatmul.mubr.f32.gmra.mxu0 %v899
      %v1695 = vpop.f32.mrf.mxu0
      %v1696 = vadd.f32 0.0, %v1695
      %v1697 = vpop.f32.mrf.mxu0
      %1698 = vmatprep.mubr.f32.mxu0 0.0
      %1699 = vmatmul.mubr.f32.gmra.mxu0 %v901
      %v1700 = vpop.f32.mrf.mxu0
      %v1701 = vadd.f32 0.0, %v1700
      %v1702 = vpop.f32.mrf.mxu0
      %1703 = vmatprep.mubr.f32.mxu0 0.0
      %1704 = vmatmul.mubr.f32.gmra.mxu0 %v903
      %v1705 = vpop.f32.mrf.mxu0
      %v1706 = vadd.f32 0.0, %v1705
      %v1707 = vpop.f32.mrf.mxu0
      %1708 = vmatprep.mubr.f32.mxu0 0.0
      %1709 = vmatmul.mubr.f32.gmra.mxu0 %v905
      %v1710 = vpop.f32.mrf.mxu0
      %v1711 = vadd.f32 0.0, %v1710
      %v1712 = vpop.f32.mrf.mxu0
      %1713 = vmatprep.mubr.f32.mxu0 0.0
      %1714 = vmatmul.mubr.f32.gmra.mxu0 %v907
      %v1715 = vpop.f32.mrf.mxu0
      %v1716 = vadd.f32 0.0, %v1715
      %v1717 = vpop.f32.mrf.mxu0
      %1718 = vmatprep.mubr.f32.mxu0 0.0
      %1719 = vmatmul.mubr.f32.gmra.mxu0 %v909
      %v1720 = vpop.f32.mrf.mxu0
      %v1721 = vadd.f32 0.0, %v1720
      %v1722 = vpop.f32.mrf.mxu0
      %1723 = vmatprep.mubr.f32.mxu0 0.0
      %1724 = vmatmul.mubr.f32.gmra.mxu0 %v911
      %v1725 = vpop.f32.mrf.mxu0
      %v1726 = vadd.f32 0.0, %v1725
      %v1727 = vpop.f32.mrf.mxu0
      %1728 = vmatprep.mubr.f32.mxu0 0.0
      %1729 = vmatmul.mubr.f32.gmra.mxu0 %v913
      %v1730 = vpop.f32.mrf.mxu0
      %v1731 = vadd.f32 0.0, %v1730
      %v1732 = vpop.f32.mrf.mxu0
      %1733 = vmatprep.mubr.f32.mxu0 0.0
      %1734 = vmatmul.mubr.f32.gmra.mxu0 %v915
      %v1735 = vpop.f32.mrf.mxu0
      %v1736 = vadd.f32 0.0, %v1735
      %v1737 = vpop.f32.mrf.mxu0
      %1738 = vmatprep.mubr.f32.mxu0 0.0
      %1739 = vmatmul.mubr.f32.gmra.mxu0 %v917
      %v1740 = vpop.f32.mrf.mxu0
      %v1741 = vadd.f32 0.0, %v1740
      %v1742 = vpop.f32.mrf.mxu0
      %1743 = vmatprep.mubr.f32.mxu0 0.0
      %1744 = vmatmul.mubr.f32.gmra.mxu0 %v919
      %v1745 = vpop.f32.mrf.mxu0
      %v1746 = vadd.f32 0.0, %v1745
      %v1747 = vpop.f32.mrf.mxu0
      %1748 = vmatprep.mubr.f32.mxu0 0.0
      %1749 = vmatmul.mubr.f32.gmra.mxu0 %v921
      %v1750 = vpop.f32.mrf.mxu0
      %v1751 = vadd.f32 0.0, %v1750
      %v1752 = vpop.f32.mrf.mxu0
      %1753 = vmatprep.mubr.f32.mxu0 0.0
      %1754 = vmatmul.mubr.f32.gmra.mxu0 %v923
      %v1755 = vpop.f32.mrf.mxu0
      %v1756 = vadd.f32 0.0, %v1755
      %v1757 = vpop.f32.mrf.mxu0
      %1758 = vmatprep.mubr.f32.mxu0 0.0
      %1759 = vmatmul.mubr.f32.gmra.mxu0 %v925
      %v1760 = vpop.f32.mrf.mxu0
      %v1761 = vadd.f32 0.0, %v1760
      %v1762 = vpop.f32.mrf.mxu0
      %1763 = vmatprep.mubr.f32.mxu0 0.0
      %1764 = vmatmul.mubr.f32.gmra.mxu0 %v927
      %v1765 = vpop.f32.mrf.mxu0
      %v1766 = vadd.f32 0.0, %v1765
      %v1767 = vpop.f32.mrf.mxu0
      %1768 = vmatprep.mubr.f32.mxu0 0.0
      %1769 = vmatmul.mubr.f32.gmra.mxu0 %v929
      %v1770 = vpop.f32.mrf.mxu0
      %v1771 = vadd.f32 0.0, %v1770
      %v1772 = vpop.f32.mrf.mxu0
      %1773 = vmatprep.mubr.f32.mxu0 0.0
      %1774 = vmatmul.mubr.f32.gmra.mxu0 %v931
      %v1775 = vpop.f32.mrf.mxu0
      %v1776 = vadd.f32 0.0, %v1775
      %v1777 = vpop.f32.mrf.mxu0
      %1778 = vmatprep.mubr.f32.mxu0 0.0
      %1779 = vmatmul.mubr.f32.gmra.mxu0 %v933
      %v1780 = vpop.f32.mrf.mxu0
      %v1781 = vadd.f32 0.0, %v1780
      %v1782 = vpop.f32.mrf.mxu0
      %1783 = vmatprep.mubr.f32.mxu0 0.0
      %1784 = vmatmul.mubr.f32.gmra.mxu0 %v935
      %v1785 = vpop.f32.mrf.mxu0
      %v1786 = vadd.f32 0.0, %v1785
      %v1787 = vpop.f32.mrf.mxu0
      %1788 = vmatprep.mubr.f32.mxu0 0.0
      %1789 = vmatmul.mubr.f32.gmra.mxu0 %v937
      %v1790 = vpop.f32.mrf.mxu0
      %v1791 = vadd.f32 0.0, %v1790
      %v1792 = vpop.f32.mrf.mxu0
      %1793 = vmatprep.mubr.f32.mxu0 0.0
      %1794 = vmatmul.mubr.f32.gmra.mxu0 %v939
      %v1795 = vpop.f32.mrf.mxu0
      %v1796 = vadd.f32 0.0, %v1795
      %v1797 = vpop.f32.mrf.mxu0
      %1798 = vmatprep.mubr.f32.mxu0 0.0
      %1799 = vmatmul.mubr.f32.gmra.mxu0 %v941
      %v1800 = vpop.f32.mrf.mxu0
      %v1801 = vadd.f32 0.0, %v1800
      %v1802 = vpop.f32.mrf.mxu0
      %1803 = vmatprep.mubr.f32.mxu0 0.0
      %1804 = vmatmul.mubr.f32.gmra.mxu0 %v1581
      %v1805 = vpop.f32.mrf.mxu0
      %v1806 = vadd.f32 0.0, %v1805
      %v1807 = vpop.f32.mrf.mxu0
      %1808 = vmatprep.mubr.f32.mxu0 0.0
      %1809 = vmatmul.mubr.f32.gmra.mxu0 %v1584
      %v1810 = vpop.f32.mrf.mxu0
      %v1811 = vadd.f32 0.0, %v1810
      %v1812 = vpop.f32.mrf.mxu0
      %1813 = vdwg.mxu0
      %v1814 = vadd.f32 %v1546, %v1656
      %v1815 = vadd.f32 %v1547, %v1661
      %v1816 = vadd.f32 %v1548, %v1666
      %v1817 = vadd.f32 %v1549, %v1671
      %v1818 = vadd.f32 %v1550, %v1676
      %v1819 = vadd.f32 %v1551, %v1681
      %v1820 = vadd.f32 %v1552, %v1686
      %v1821 = vadd.f32 %v1553, %v1691
      %v1822 = vadd.f32 %v1554, %v1696
      %v1823 = vadd.f32 %v1555, %v1701
      %v1824 = vadd.f32 %v1556, %v1706
      %v1825 = vadd.f32 %v1557, %v1711
      %v1826 = vadd.f32 %v1558, %v1716
      %v1827 = vadd.f32 %v1559, %v1721
      %v1828 = vadd.f32 %v1560, %v1726
      %v1829 = vadd.f32 %v1561, %v1731
      %v1830 = vadd.f32 %v1562, %v1736
      %v1831 = vadd.f32 %v1563, %v1741
      %v1832 = vadd.f32 %v1564, %v1746
      %v1833 = vadd.f32 %v1565, %v1751
      %v1834 = vadd.f32 %v1566, %v1756
      %v1835 = vadd.f32 %v1567, %v1761
      %v1836 = vadd.f32 %v1568, %v1766
      %v1837 = vadd.f32 %v1569, %v1771
      %v1838 = vadd.f32 %v1570, %v1776
      %v1839 = vadd.f32 %v1571, %v1781
      %v1840 = vadd.f32 %v1572, %v1786
      %v1841 = vadd.f32 %v1573, %v1791
      %v1842 = vadd.f32 %v1574, %v1796
      %v1843 = vadd.f32 %v1575, %v1801
      %v1844 = vadd.f32 %v1576, %v1806
      %v1845 = vadd.f32 %v1577, %v1811
      %v1847 = vrot.slane %v448, 1
      %v1848 = vrot.slane %v449, 1
      %v1849 = vsel %vm503, %v1847, %v1848
      %v1850 = vrot.slane %v450, 1
      %v1851 = vsel %vm503, %v1848, %v1850
      %s1852 = scalar_lea.vmem %s1, 16
      %v1853 = vld [vmem:[%s1852] sm:$0xf]
      %v1854 = vsel %vm279, %v1849, 0
      %v1856 = vsel %vm279, %v1851, 0
      %v1859 = vsel %vm650, %v1853, 0
      %1861 = vmatprep.subr.mxu0 0.0
      %1862 = vmatpush1.msra.mxu0 0.0
      %1863 = vmatprep.subr.mxu0 0.0
      %1864 = vmatpush1.msra.mxu0 0.0
      %1865 = vmatprep.subr.mxu0 0.0
      %1866 = vmatpush1.msra.mxu0 0.0
      %1867 = vmatprep.subr.mxu0 0.0
      %1868 = vmatpush1.msra.mxu0 0.0
      %1869 = vmatprep.subr.mxu0 0.0
      %1870 = vmatpush1.msra.mxu0 0.0
      %1871 = vmatprep.subr.mxu0 0.0
      %1872 = vmatpush1.msra.mxu0 0.0
      %1873 = vmatprep.subr.mxu0 0.0
      %1874 = vmatpush1.msra.mxu0 0.0
      %1875 = vmatprep.subr.mxu0 0.0
      %1876 = vmatpush1.msra.mxu0 0.0
      %1877 = vmatprep.subr.mxu0 0.0
      %1878 = vmatpush1.msra.mxu0 0.0
      %1879 = vmatprep.subr.mxu0 0.0
      %1880 = vmatpush1.msra.mxu0 0.0
      %1881 = vmatprep.subr.mxu0 0.0
      %1882 = vmatpush1.msra.mxu0 0.0
      %1883 = vmatprep.subr.mxu0 0.0
      %1884 = vmatpush1.msra.mxu0 0.0
      %1885 = vmatprep.subr.mxu0 0.0
      %1886 = vmatpush1.msra.mxu0 0.0
      %1887 = vmatprep.subr.mxu0 0.0
      %1888 = vmatpush1.msra.mxu0 0.0
      %1889 = vmatprep.subr.mxu0 0.0
      %1890 = vmatpush1.msra.mxu0 0.0
      %1891 = vmatprep.subr.mxu0 0.0
      %1892 = vmatpush1.msra.mxu0 %v1859
      %1893 = vmatprep.subr.mxu0 0.0
      %1894 = vmatpush2.msra.mxu0 0.0
      %1895 = vmatprep.subr.mxu0 0.0
      %1896 = vmatpush2.msra.mxu0 0.0
      %1897 = vmatprep.subr.mxu0 0.0
      %1898 = vmatpush2.msra.mxu0 0.0
      %1899 = vmatprep.subr.mxu0 0.0
      %1900 = vmatpush2.msra.mxu0 0.0
      %1901 = vmatprep.subr.mxu0 0.0
      %1902 = vmatpush2.msra.mxu0 0.0
      %1903 = vmatprep.subr.mxu0 0.0
      %1904 = vmatpush2.msra.mxu0 0.0
      %1905 = vmatprep.subr.mxu0 0.0
      %1906 = vmatpush2.msra.mxu0 0.0
      %1907 = vmatprep.subr.mxu0 0.0
      %1908 = vmatpush2.msra.mxu0 0.0
      %1909 = vmatprep.subr.mxu0 0.0
      %1910 = vmatpush2.msra.mxu0 0.0
      %1911 = vmatprep.subr.mxu0 0.0
      %1912 = vmatpush2.msra.mxu0 0.0
      %1913 = vmatprep.subr.mxu0 0.0
      %1914 = vmatpush2.msra.mxu0 0.0
      %1915 = vmatprep.subr.mxu0 0.0
      %1916 = vmatpush2.msra.mxu0 0.0
      %1917 = vmatprep.subr.mxu0 0.0
      %1918 = vmatpush2.msra.mxu0 0.0
      %1919 = vmatprep.subr.mxu0 0.0
      %1920 = vmatpush2.msra.mxu0 0.0
      %1921 = vmatprep.subr.mxu0 0.0
      %1922 = vmatpush2.msra.mxu0 0.0
      %1923 = vmatprep.subr.mxu0 0.0
      %1924 = vmatpush2.msra.mxu0 0.0
      %1925 = vmatprep.mubr.f32.mxu0 0.0
      %1926 = vmatmul.mubr.f32.gmra.mxu0 %v590
      %v1927 = vpop.f32.mrf.mxu0
      %v1928 = vadd.f32 0.0, %v1927
      %v1929 = vpop.f32.mrf.mxu0
      %1930 = vmatprep.mubr.f32.mxu0 0.0
      %1931 = vmatmul.mubr.f32.gmra.mxu0 %v592
      %v1932 = vpop.f32.mrf.mxu0
      %v1933 = vadd.f32 0.0, %v1932
      %v1934 = vpop.f32.mrf.mxu0
      %1935 = vmatprep.mubr.f32.mxu0 0.0
      %1936 = vmatmul.mubr.f32.gmra.mxu0 %v594
      %v1937 = vpop.f32.mrf.mxu0
      %v1938 = vadd.f32 0.0, %v1937
      %v1939 = vpop.f32.mrf.mxu0
      %1940 = vmatprep.mubr.f32.mxu0 0.0
      %1941 = vmatmul.mubr.f32.gmra.mxu0 %v596
      %v1942 = vpop.f32.mrf.mxu0
      %v1943 = vadd.f32 0.0, %v1942
      %v1944 = vpop.f32.mrf.mxu0
      %1945 = vmatprep.mubr.f32.mxu0 0.0
      %1946 = vmatmul.mubr.f32.gmra.mxu0 %v598
      %v1947 = vpop.f32.mrf.mxu0
      %v1948 = vadd.f32 0.0, %v1947
      %v1949 = vpop.f32.mrf.mxu0
      %1950 = vmatprep.mubr.f32.mxu0 0.0
      %1951 = vmatmul.mubr.f32.gmra.mxu0 %v600
      %v1952 = vpop.f32.mrf.mxu0
      %v1953 = vadd.f32 0.0, %v1952
      %v1954 = vpop.f32.mrf.mxu0
      %1955 = vmatprep.mubr.f32.mxu0 0.0
      %1956 = vmatmul.mubr.f32.gmra.mxu0 %v602
      %v1957 = vpop.f32.mrf.mxu0
      %v1958 = vadd.f32 0.0, %v1957
      %v1959 = vpop.f32.mrf.mxu0
      %1960 = vmatprep.mubr.f32.mxu0 0.0
      %1961 = vmatmul.mubr.f32.gmra.mxu0 %v604
      %v1962 = vpop.f32.mrf.mxu0
      %v1963 = vadd.f32 0.0, %v1962
      %v1964 = vpop.f32.mrf.mxu0
      %1965 = vmatprep.mubr.f32.mxu0 0.0
      %1966 = vmatmul.mubr.f32.gmra.mxu0 %v606
      %v1967 = vpop.f32.mrf.mxu0
      %v1968 = vadd.f32 0.0, %v1967
      %v1969 = vpop.f32.mrf.mxu0
      %1970 = vmatprep.mubr.f32.mxu0 0.0
      %1971 = vmatmul.mubr.f32.gmra.mxu0 %v608
      %v1972 = vpop.f32.mrf.mxu0
      %v1973 = vadd.f32 0.0, %v1972
      %v1974 = vpop.f32.mrf.mxu0
      %1975 = vmatprep.mubr.f32.mxu0 0.0
      %1976 = vmatmul.mubr.f32.gmra.mxu0 %v610
      %v1977 = vpop.f32.mrf.mxu0
      %v1978 = vadd.f32 0.0, %v1977
      %v1979 = vpop.f32.mrf.mxu0
      %1980 = vmatprep.mubr.f32.mxu0 0.0
      %1981 = vmatmul.mubr.f32.gmra.mxu0 %v612
      %v1982 = vpop.f32.mrf.mxu0
      %v1983 = vadd.f32 0.0, %v1982
      %v1984 = vpop.f32.mrf.mxu0
      %1985 = vmatprep.mubr.f32.mxu0 0.0
      %1986 = vmatmul.mubr.f32.gmra.mxu0 %v614
      %v1987 = vpop.f32.mrf.mxu0
      %v1988 = vadd.f32 0.0, %v1987
      %v1989 = vpop.f32.mrf.mxu0
      %1990 = vmatprep.mubr.f32.mxu0 0.0
      %1991 = vmatmul.mubr.f32.gmra.mxu0 %v616
      %v1992 = vpop.f32.mrf.mxu0
      %v1993 = vadd.f32 0.0, %v1992
      %v1994 = vpop.f32.mrf.mxu0
      %1995 = vmatprep.mubr.f32.mxu0 0.0
      %1996 = vmatmul.mubr.f32.gmra.mxu0 %v618
      %v1997 = vpop.f32.mrf.mxu0
      %v1998 = vadd.f32 0.0, %v1997
      %v1999 = vpop.f32.mrf.mxu0
      %2000 = vmatprep.mubr.f32.mxu0 0.0
      %2001 = vmatmul.mubr.f32.gmra.mxu0 %v620
      %v2002 = vpop.f32.mrf.mxu0
      %v2003 = vadd.f32 0.0, %v2002
      %v2004 = vpop.f32.mrf.mxu0
      %2005 = vmatprep.mubr.f32.mxu0 0.0
      %2006 = vmatmul.mubr.f32.gmra.mxu0 %v622
      %v2007 = vpop.f32.mrf.mxu0
      %v2008 = vadd.f32 0.0, %v2007
      %v2009 = vpop.f32.mrf.mxu0
      %2010 = vmatprep.mubr.f32.mxu0 0.0
      %2011 = vmatmul.mubr.f32.gmra.mxu0 %v624
      %v2012 = vpop.f32.mrf.mxu0
      %v2013 = vadd.f32 0.0, %v2012
      %v2014 = vpop.f32.mrf.mxu0
      %2015 = vmatprep.mubr.f32.mxu0 0.0
      %2016 = vmatmul.mubr.f32.gmra.mxu0 %v626
      %v2017 = vpop.f32.mrf.mxu0
      %v2018 = vadd.f32 0.0, %v2017
      %v2019 = vpop.f32.mrf.mxu0
      %2020 = vmatprep.mubr.f32.mxu0 0.0
      %2021 = vmatmul.mubr.f32.gmra.mxu0 %v628
      %v2022 = vpop.f32.mrf.mxu0
      %v2023 = vadd.f32 0.0, %v2022
      %v2024 = vpop.f32.mrf.mxu0
      %2025 = vmatprep.mubr.f32.mxu0 0.0
      %2026 = vmatmul.mubr.f32.gmra.mxu0 %v630
      %v2027 = vpop.f32.mrf.mxu0
      %v2028 = vadd.f32 0.0, %v2027
      %v2029 = vpop.f32.mrf.mxu0
      %2030 = vmatprep.mubr.f32.mxu0 0.0
      %2031 = vmatmul.mubr.f32.gmra.mxu0 %v632
      %v2032 = vpop.f32.mrf.mxu0
      %v2033 = vadd.f32 0.0, %v2032
      %v2034 = vpop.f32.mrf.mxu0
      %2035 = vmatprep.mubr.f32.mxu0 0.0
      %2036 = vmatmul.mubr.f32.gmra.mxu0 %v634
      %v2037 = vpop.f32.mrf.mxu0
      %v2038 = vadd.f32 0.0, %v2037
      %v2039 = vpop.f32.mrf.mxu0
      %2040 = vmatprep.mubr.f32.mxu0 0.0
      %2041 = vmatmul.mubr.f32.gmra.mxu0 %v636
      %v2042 = vpop.f32.mrf.mxu0
      %v2043 = vadd.f32 0.0, %v2042
      %v2044 = vpop.f32.mrf.mxu0
      %2045 = vmatprep.mubr.f32.mxu0 0.0
      %2046 = vmatmul.mubr.f32.gmra.mxu0 %v638
      %v2047 = vpop.f32.mrf.mxu0
      %v2048 = vadd.f32 0.0, %v2047
      %v2049 = vpop.f32.mrf.mxu0
      %2050 = vmatprep.mubr.f32.mxu0 0.0
      %2051 = vmatmul.mubr.f32.gmra.mxu0 %v640
      %v2052 = vpop.f32.mrf.mxu0
      %v2053 = vadd.f32 0.0, %v2052
      %v2054 = vpop.f32.mrf.mxu0
      %2055 = vmatprep.mubr.f32.mxu0 0.0
      %2056 = vmatmul.mubr.f32.gmra.mxu0 %v642
      %v2057 = vpop.f32.mrf.mxu0
      %v2058 = vadd.f32 0.0, %v2057
      %v2059 = vpop.f32.mrf.mxu0
      %2060 = vmatprep.mubr.f32.mxu0 0.0
      %2061 = vmatmul.mubr.f32.gmra.mxu0 %v644
      %v2062 = vpop.f32.mrf.mxu0
      %v2063 = vadd.f32 0.0, %v2062
      %v2064 = vpop.f32.mrf.mxu0
      %2065 = vmatprep.mubr.f32.mxu0 0.0
      %2066 = vmatmul.mubr.f32.gmra.mxu0 %v646
      %v2067 = vpop.f32.mrf.mxu0
      %v2068 = vadd.f32 0.0, %v2067
      %v2069 = vpop.f32.mrf.mxu0
      %2070 = vmatprep.mubr.f32.mxu0 0.0
      %2071 = vmatmul.mubr.f32.gmra.mxu0 %v648
      %v2072 = vpop.f32.mrf.mxu0
      %v2073 = vadd.f32 0.0, %v2072
      %v2074 = vpop.f32.mrf.mxu0
      %2075 = vmatprep.mubr.f32.mxu0 0.0
      %2076 = vmatmul.mubr.f32.gmra.mxu0 %v1854
      %v2077 = vpop.f32.mrf.mxu0
      %v2078 = vadd.f32 0.0, %v2077
      %v2079 = vpop.f32.mrf.mxu0
      %2080 = vmatprep.mubr.f32.mxu0 0.0
      %2081 = vmatmul.mubr.f32.gmra.mxu0 %v1856
      %v2082 = vpop.f32.mrf.mxu0
      %v2083 = vadd.f32 0.0, %v2082
      %v2084 = vpop.f32.mrf.mxu0
      %2085 = vdwg.mxu0
      %v2086 = vadd.f32 %v1814, %v1928
      %v2087 = vadd.f32 %v1815, %v1933
      %v2088 = vadd.f32 %v1816, %v1938
      %v2089 = vadd.f32 %v1817, %v1943
      %v2090 = vadd.f32 %v1818, %v1948
      %v2091 = vadd.f32 %v1819, %v1953
      %v2092 = vadd.f32 %v1820, %v1958
      %v2093 = vadd.f32 %v1821, %v1963
      %v2094 = vadd.f32 %v1822, %v1968
      %v2095 = vadd.f32 %v1823, %v1973
      %v2096 = vadd.f32 %v1824, %v1978
      %v2097 = vadd.f32 %v1825, %v1983
      %v2098 = vadd.f32 %v1826, %v1988
      %v2099 = vadd.f32 %v1827, %v1993
      %v2100 = vadd.f32 %v1828, %v1998
      %v2101 = vadd.f32 %v1829, %v2003
      %v2102 = vadd.f32 %v1830, %v2008
      %v2103 = vadd.f32 %v1831, %v2013
      %v2104 = vadd.f32 %v1832, %v2018
      %v2105 = vadd.f32 %v1833, %v2023
      %v2106 = vadd.f32 %v1834, %v2028
      %v2107 = vadd.f32 %v1835, %v2033
      %v2108 = vadd.f32 %v1836, %v2038
      %v2109 = vadd.f32 %v1837, %v2043
      %v2110 = vadd.f32 %v1838, %v2048
      %v2111 = vadd.f32 %v1839, %v2053
      %v2112 = vadd.f32 %v1840, %v2058
      %v2113 = vadd.f32 %v1841, %v2063
      %v2114 = vadd.f32 %v1842, %v2068
      %v2115 = vadd.f32 %v1843, %v2073
      %v2116 = vadd.f32 %v1844, %v2078
      %v2117 = vadd.f32 %v1845, %v2083
      %v2118 = vrot.slane %v448, 2
      %v2119 = vrot.slane %v449, 2
      %v2120 = vsel %vm1171, %v2118, %v2119
      %v2121 = vrot.slane %v450, 2
      %v2122 = vsel %vm1171, %v2119, %v2121
      %s2123 = scalar_lea.vmem %s1, 20
      %v2124 = vld [vmem:[%s2123] sm:$0xf]
      %v2125 = vsel %vm279, %v2120, 0
      %v2127 = vsel %vm279, %v2122, 0
      %v2130 = vsel %vm650, %v2124, 0
      %2132 = vmatprep.subr.mxu0 0.0
      %2133 = vmatpush1.msra.mxu0 0.0
      %2134 = vmatprep.subr.mxu0 0.0
      %2135 = vmatpush1.msra.mxu0 0.0
      %2136 = vmatprep.subr.mxu0 0.0
      %2137 = vmatpush1.msra.mxu0 0.0
      %2138 = vmatprep.subr.mxu0 0.0
      %2139 = vmatpush1.msra.mxu0 0.0
      %2140 = vmatprep.subr.mxu0 0.0
      %2141 = vmatpush1.msra.mxu0 0.0
      %2142 = vmatprep.subr.mxu0 0.0
      %2143 = vmatpush1.msra.mxu0 0.0
      %2144 = vmatprep.subr.mxu0 0.0
      %2145 = vmatpush1.msra.mxu0 0.0
      %2146 = vmatprep.subr.mxu0 0.0
      %2147 = vmatpush1.msra.mxu0 0.0
      %2148 = vmatprep.subr.mxu0 0.0
      %2149 = vmatpush1.msra.mxu0 0.0
      %2150 = vmatprep.subr.mxu0 0.0
      %2151 = vmatpush1.msra.mxu0 0.0
      %2152 = vmatprep.subr.mxu0 0.0
      %2153 = vmatpush1.msra.mxu0 0.0
      %2154 = vmatprep.subr.mxu0 0.0
      %2155 = vmatpush1.msra.mxu0 0.0
      %2156 = vmatprep.subr.mxu0 0.0
      %2157 = vmatpush1.msra.mxu0 0.0
      %2158 = vmatprep.subr.mxu0 0.0
      %2159 = vmatpush1.msra.mxu0 0.0
      %2160 = vmatprep.subr.mxu0 0.0
      %2161 = vmatpush1.msra.mxu0 0.0
      %2162 = vmatprep.subr.mxu0 0.0
      %2163 = vmatpush1.msra.mxu0 %v2130
      %2164 = vmatprep.subr.mxu0 0.0
      %2165 = vmatpush2.msra.mxu0 0.0
      %2166 = vmatprep.subr.mxu0 0.0
      %2167 = vmatpush2.msra.mxu0 0.0
      %2168 = vmatprep.subr.mxu0 0.0
      %2169 = vmatpush2.msra.mxu0 0.0
      %2170 = vmatprep.subr.mxu0 0.0
      %2171 = vmatpush2.msra.mxu0 0.0
      %2172 = vmatprep.subr.mxu0 0.0
      %2173 = vmatpush2.msra.mxu0 0.0
      %2174 = vmatprep.subr.mxu0 0.0
      %2175 = vmatpush2.msra.mxu0 0.0
      %2176 = vmatprep.subr.mxu0 0.0
      %2177 = vmatpush2.msra.mxu0 0.0
      %2178 = vmatprep.subr.mxu0 0.0
      %2179 = vmatpush2.msra.mxu0 0.0
      %2180 = vmatprep.subr.mxu0 0.0
      %2181 = vmatpush2.msra.mxu0 0.0
      %2182 = vmatprep.subr.mxu0 0.0
      %2183 = vmatpush2.msra.mxu0 0.0
      %2184 = vmatprep.subr.mxu0 0.0
      %2185 = vmatpush2.msra.mxu0 0.0
      %2186 = vmatprep.subr.mxu0 0.0
      %2187 = vmatpush2.msra.mxu0 0.0
      %2188 = vmatprep.subr.mxu0 0.0
      %2189 = vmatpush2.msra.mxu0 0.0
      %2190 = vmatprep.subr.mxu0 0.0
      %2191 = vmatpush2.msra.mxu0 0.0
      %2192 = vmatprep.subr.mxu0 0.0
      %2193 = vmatpush2.msra.mxu0 0.0
      %2194 = vmatprep.subr.mxu0 0.0
      %2195 = vmatpush2.msra.mxu0 0.0
      %2196 = vmatprep.mubr.f32.mxu0 0.0
      %2197 = vmatmul.mubr.f32.gmra.mxu0 %v1258
      %v2198 = vpop.f32.mrf.mxu0
      %v2199 = vadd.f32 0.0, %v2198
      %v2200 = vpop.f32.mrf.mxu0
      %2201 = vmatprep.mubr.f32.mxu0 0.0
      %2202 = vmatmul.mubr.f32.gmra.mxu0 %v1260
      %v2203 = vpop.f32.mrf.mxu0
      %v2204 = vadd.f32 0.0, %v2203
      %v2205 = vpop.f32.mrf.mxu0
      %2206 = vmatprep.mubr.f32.mxu0 0.0
      %2207 = vmatmul.mubr.f32.gmra.mxu0 %v1262
      %v2208 = vpop.f32.mrf.mxu0
      %v2209 = vadd.f32 0.0, %v2208
      %v2210 = vpop.f32.mrf.mxu0
      %2211 = vmatprep.mubr.f32.mxu0 0.0
      %2212 = vmatmul.mubr.f32.gmra.mxu0 %v1264
      %v2213 = vpop.f32.mrf.mxu0
      %v2214 = vadd.f32 0.0, %v2213
      %v2215 = vpop.f32.mrf.mxu0
      %2216 = vmatprep.mubr.f32.mxu0 0.0
      %2217 = vmatmul.mubr.f32.gmra.mxu0 %v1266
      %v2218 = vpop.f32.mrf.mxu0
      %v2219 = vadd.f32 0.0, %v2218
      %v2220 = vpop.f32.mrf.mxu0
      %2221 = vmatprep.mubr.f32.mxu0 0.0
      %2222 = vmatmul.mubr.f32.gmra.mxu0 %v1268
      %v2223 = vpop.f32.mrf.mxu0
      %v2224 = vadd.f32 0.0, %v2223
      %v2225 = vpop.f32.mrf.mxu0
      %2226 = vmatprep.mubr.f32.mxu0 0.0
      %2227 = vmatmul.mubr.f32.gmra.mxu0 %v1270
      %v2228 = vpop.f32.mrf.mxu0
      %v2229 = vadd.f32 0.0, %v2228
      %v2230 = vpop.f32.mrf.mxu0
      %2231 = vmatprep.mubr.f32.mxu0 0.0
      %2232 = vmatmul.mubr.f32.gmra.mxu0 %v1272
      %v2233 = vpop.f32.mrf.mxu0
      %v2234 = vadd.f32 0.0, %v2233
      %v2235 = vpop.f32.mrf.mxu0
      %2236 = vmatprep.mubr.f32.mxu0 0.0
      %2237 = vmatmul.mubr.f32.gmra.mxu0 %v1274
      %v2238 = vpop.f32.mrf.mxu0
      %v2239 = vadd.f32 0.0, %v2238
      %v2240 = vpop.f32.mrf.mxu0
      %2241 = vmatprep.mubr.f32.mxu0 0.0
      %2242 = vmatmul.mubr.f32.gmra.mxu0 %v1276
      %v2243 = vpop.f32.mrf.mxu0
      %v2244 = vadd.f32 0.0, %v2243
      %v2245 = vpop.f32.mrf.mxu0
      %2246 = vmatprep.mubr.f32.mxu0 0.0
      %2247 = vmatmul.mubr.f32.gmra.mxu0 %v1278
      %v2248 = vpop.f32.mrf.mxu0
      %v2249 = vadd.f32 0.0, %v2248
      %v2250 = vpop.f32.mrf.mxu0
      %2251 = vmatprep.mubr.f32.mxu0 0.0
      %2252 = vmatmul.mubr.f32.gmra.mxu0 %v1280
      %v2253 = vpop.f32.mrf.mxu0
      %v2254 = vadd.f32 0.0, %v2253
      %v2255 = vpop.f32.mrf.mxu0
      %2256 = vmatprep.mubr.f32.mxu0 0.0
      %2257 = vmatmul.mubr.f32.gmra.mxu0 %v1282
      %v2258 = vpop.f32.mrf.mxu0
      %v2259 = vadd.f32 0.0, %v2258
      %v2260 = vpop.f32.mrf.mxu0
      %2261 = vmatprep.mubr.f32.mxu0 0.0
      %2262 = vmatmul.mubr.f32.gmra.mxu0 %v1284
      %v2263 = vpop.f32.mrf.mxu0
      %v2264 = vadd.f32 0.0, %v2263
      %v2265 = vpop.f32.mrf.mxu0
      %2266 = vmatprep.mubr.f32.mxu0 0.0
      %2267 = vmatmul.mubr.f32.gmra.mxu0 %v1286
      %v2268 = vpop.f32.mrf.mxu0
      %v2269 = vadd.f32 0.0, %v2268
      %v2270 = vpop.f32.mrf.mxu0
      %2271 = vmatprep.mubr.f32.mxu0 0.0
      %2272 = vmatmul.mubr.f32.gmra.mxu0 %v1288
      %v2273 = vpop.f32.mrf.mxu0
      %v2274 = vadd.f32 0.0, %v2273
      %v2275 = vpop.f32.mrf.mxu0
      %2276 = vmatprep.mubr.f32.mxu0 0.0
      %2277 = vmatmul.mubr.f32.gmra.mxu0 %v1290
      %v2278 = vpop.f32.mrf.mxu0
      %v2279 = vadd.f32 0.0, %v2278
      %v2280 = vpop.f32.mrf.mxu0
      %2281 = vmatprep.mubr.f32.mxu0 0.0
      %2282 = vmatmul.mubr.f32.gmra.mxu0 %v1292
      %v2283 = vpop.f32.mrf.mxu0
      %v2284 = vadd.f32 0.0, %v2283
      %v2285 = vpop.f32.mrf.mxu0
      %2286 = vmatprep.mubr.f32.mxu0 0.0
      %2287 = vmatmul.mubr.f32.gmra.mxu0 %v1294
      %v2288 = vpop.f32.mrf.mxu0
      %v2289 = vadd.f32 0.0, %v2288
      %v2290 = vpop.f32.mrf.mxu0
      %2291 = vmatprep.mubr.f32.mxu0 0.0
      %2292 = vmatmul.mubr.f32.gmra.mxu0 %v1296
      %v2293 = vpop.f32.mrf.mxu0
      %v2294 = vadd.f32 0.0, %v2293
      %v2295 = vpop.f32.mrf.mxu0
      %2296 = vmatprep.mubr.f32.mxu0 0.0
      %2297 = vmatmul.mubr.f32.gmra.mxu0 %v1298
      %v2298 = vpop.f32.mrf.mxu0
      %v2299 = vadd.f32 0.0, %v2298
      %v2300 = vpop.f32.mrf.mxu0
      %2301 = vmatprep.mubr.f32.mxu0 0.0
      %2302 = vmatmul.mubr.f32.gmra.mxu0 %v1300
      %v2303 = vpop.f32.mrf.mxu0
      %v2304 = vadd.f32 0.0, %v2303
      %v2305 = vpop.f32.mrf.mxu0
      %2306 = vmatprep.mubr.f32.mxu0 0.0
      %2307 = vmatmul.mubr.f32.gmra.mxu0 %v1302
      %v2308 = vpop.f32.mrf.mxu0
      %v2309 = vadd.f32 0.0, %v2308
      %v2310 = vpop.f32.mrf.mxu0
      %2311 = vmatprep.mubr.f32.mxu0 0.0
      %2312 = vmatmul.mubr.f32.gmra.mxu0 %v1304
      %v2313 = vpop.f32.mrf.mxu0
      %v2314 = vadd.f32 0.0, %v2313
      %v2315 = vpop.f32.mrf.mxu0
      %2316 = vmatprep.mubr.f32.mxu0 0.0
      %2317 = vmatmul.mubr.f32.gmra.mxu0 %v1306
      %v2318 = vpop.f32.mrf.mxu0
      %v2319 = vadd.f32 0.0, %v2318
      %v2320 = vpop.f32.mrf.mxu0
      %2321 = vmatprep.mubr.f32.mxu0 0.0
      %2322 = vmatmul.mubr.f32.gmra.mxu0 %v1308
      %v2323 = vpop.f32.mrf.mxu0
      %v2324 = vadd.f32 0.0, %v2323
      %v2325 = vpop.f32.mrf.mxu0
      %2326 = vmatprep.mubr.f32.mxu0 0.0
      %2327 = vmatmul.mubr.f32.gmra.mxu0 %v1310
      %v2328 = vpop.f32.mrf.mxu0
      %v2329 = vadd.f32 0.0, %v2328
      %v2330 = vpop.f32.mrf.mxu0
      %2331 = vmatprep.mubr.f32.mxu0 0.0
      %2332 = vmatmul.mubr.f32.gmra.mxu0 %v1312
      %v2333 = vpop.f32.mrf.mxu0
      %v2334 = vadd.f32 0.0, %v2333
      %v2335 = vpop.f32.mrf.mxu0
      %2336 = vmatprep.mubr.f32.mxu0 0.0
      %2337 = vmatmul.mubr.f32.gmra.mxu0 %v1314
      %v2338 = vpop.f32.mrf.mxu0
      %v2339 = vadd.f32 0.0, %v2338
      %v2340 = vpop.f32.mrf.mxu0
      %2341 = vmatprep.mubr.f32.mxu0 0.0
      %2342 = vmatmul.mubr.f32.gmra.mxu0 %v1316
      %v2343 = vpop.f32.mrf.mxu0
      %v2344 = vadd.f32 0.0, %v2343
      %v2345 = vpop.f32.mrf.mxu0
      %2346 = vmatprep.mubr.f32.mxu0 0.0
      %2347 = vmatmul.mubr.f32.gmra.mxu0 %v2125
      %v2348 = vpop.f32.mrf.mxu0
      %v2349 = vadd.f32 0.0, %v2348
      %v2350 = vpop.f32.mrf.mxu0
      %2351 = vmatprep.mubr.f32.mxu0 0.0
      %2352 = vmatmul.mubr.f32.gmra.mxu0 %v2127
      %v2353 = vpop.f32.mrf.mxu0
      %v2354 = vadd.f32 0.0, %v2353
      %v2355 = vpop.f32.mrf.mxu0
      %2356 = vdwg.mxu0
      %v2357 = vadd.f32 %v2086, %v2199
      %v2358 = vadd.f32 %v2087, %v2204
      %v2359 = vadd.f32 %v2088, %v2209
      %v2360 = vadd.f32 %v2089, %v2214
      %v2361 = vadd.f32 %v2090, %v2219
      %v2362 = vadd.f32 %v2091, %v2224
      %v2363 = vadd.f32 %v2092, %v2229
      %v2364 = vadd.f32 %v2093, %v2234
      %v2365 = vadd.f32 %v2094, %v2239
      %v2366 = vadd.f32 %v2095, %v2244
      %v2367 = vadd.f32 %v2096, %v2249
      %v2368 = vadd.f32 %v2097, %v2254
      %v2369 = vadd.f32 %v2098, %v2259
      %v2370 = vadd.f32 %v2099, %v2264
      %v2371 = vadd.f32 %v2100, %v2269
      %v2372 = vadd.f32 %v2101, %v2274
      %v2373 = vadd.f32 %v2102, %v2279
      %v2374 = vadd.f32 %v2103, %v2284
      %v2375 = vadd.f32 %v2104, %v2289
      %v2376 = vadd.f32 %v2105, %v2294
      %v2377 = vadd.f32 %v2106, %v2299
      %v2378 = vadd.f32 %v2107, %v2304
      %v2379 = vadd.f32 %v2108, %v2309
      %v2380 = vadd.f32 %v2109, %v2314
      %v2381 = vadd.f32 %v2110, %v2319
      %v2382 = vadd.f32 %v2111, %v2324
      %v2383 = vadd.f32 %v2112, %v2329
      %v2384 = vadd.f32 %v2113, %v2334
      %v2385 = vadd.f32 %v2114, %v2339
      %v2386 = vadd.f32 %v2115, %v2344
      %v2387 = vadd.f32 %v2116, %v2349
      %v2388 = vadd.f32 %v2117, %v2354
      %s2389 = scalar_lea.vmem %s1, 24
      %v2390 = vld [vmem:[%s2389] sm:$0xf]
      %v2392 = vsel %vm279, %v451, 0
      %v2395 = vsel %vm279, %v452, 0
      %v2398 = vsel %vm650, %v2390, 0
      %2400 = vmatprep.subr.mxu0 0.0
      %2401 = vmatpush1.msra.mxu0 0.0
      %2402 = vmatprep.subr.mxu0 0.0
      %2403 = vmatpush1.msra.mxu0 0.0
      %2404 = vmatprep.subr.mxu0 0.0
      %2405 = vmatpush1.msra.mxu0 0.0
      %2406 = vmatprep.subr.mxu0 0.0
      %2407 = vmatpush1.msra.mxu0 0.0
      %2408 = vmatprep.subr.mxu0 0.0
      %2409 = vmatpush1.msra.mxu0 0.0
      %2410 = vmatprep.subr.mxu0 0.0
      %2411 = vmatpush1.msra.mxu0 0.0
      %2412 = vmatprep.subr.mxu0 0.0
      %2413 = vmatpush1.msra.mxu0 0.0
      %2414 = vmatprep.subr.mxu0 0.0
      %2415 = vmatpush1.msra.mxu0 0.0
      %2416 = vmatprep.subr.mxu0 0.0
      %2417 = vmatpush1.msra.mxu0 0.0
      %2418 = vmatprep.subr.mxu0 0.0
      %2419 = vmatpush1.msra.mxu0 0.0
      %2420 = vmatprep.subr.mxu0 0.0
      %2421 = vmatpush1.msra.mxu0 0.0
      %2422 = vmatprep.subr.mxu0 0.0
      %2423 = vmatpush1.msra.mxu0 0.0
      %2424 = vmatprep.subr.mxu0 0.0
      %2425 = vmatpush1.msra.mxu0 0.0
      %2426 = vmatprep.subr.mxu0 0.0
      %2427 = vmatpush1.msra.mxu0 0.0
      %2428 = vmatprep.subr.mxu0 0.0
      %2429 = vmatpush1.msra.mxu0 0.0
      %2430 = vmatprep.subr.mxu0 0.0
      %2431 = vmatpush1.msra.mxu0 %v2398
      %2432 = vmatprep.subr.mxu0 0.0
      %2433 = vmatpush2.msra.mxu0 0.0
      %2434 = vmatprep.subr.mxu0 0.0
      %2435 = vmatpush2.msra.mxu0 0.0
      %2436 = vmatprep.subr.mxu0 0.0
      %2437 = vmatpush2.msra.mxu0 0.0
      %2438 = vmatprep.subr.mxu0 0.0
      %2439 = vmatpush2.msra.mxu0 0.0
      %2440 = vmatprep.subr.mxu0 0.0
      %2441 = vmatpush2.msra.mxu0 0.0
      %2442 = vmatprep.subr.mxu0 0.0
      %2443 = vmatpush2.msra.mxu0 0.0
      %2444 = vmatprep.subr.mxu0 0.0
      %2445 = vmatpush2.msra.mxu0 0.0
      %2446 = vmatprep.subr.mxu0 0.0
      %2447 = vmatpush2.msra.mxu0 0.0
      %2448 = vmatprep.subr.mxu0 0.0
      %2449 = vmatpush2.msra.mxu0 0.0
      %2450 = vmatprep.subr.mxu0 0.0
      %2451 = vmatpush2.msra.mxu0 0.0
      %2452 = vmatprep.subr.mxu0 0.0
      %2453 = vmatpush2.msra.mxu0 0.0
      %2454 = vmatprep.subr.mxu0 0.0
      %2455 = vmatpush2.msra.mxu0 0.0
      %2456 = vmatprep.subr.mxu0 0.0
      %2457 = vmatpush2.msra.mxu0 0.0
      %2458 = vmatprep.subr.mxu0 0.0
      %2459 = vmatpush2.msra.mxu0 0.0
      %2460 = vmatprep.subr.mxu0 0.0
      %2461 = vmatpush2.msra.mxu0 0.0
      %2462 = vmatprep.subr.mxu0 0.0
      %2463 = vmatpush2.msra.mxu0 0.0
      %2464 = vmatprep.mubr.f32.mxu0 0.0
      %2465 = vmatmul.mubr.f32.gmra.mxu0 %v887
      %v2466 = vpop.f32.mrf.mxu0
      %v2467 = vadd.f32 0.0, %v2466
      %v2468 = vpop.f32.mrf.mxu0
      %2469 = vmatprep.mubr.f32.mxu0 0.0
      %2470 = vmatmul.mubr.f32.gmra.mxu0 %v889
      %v2471 = vpop.f32.mrf.mxu0
      %v2472 = vadd.f32 0.0, %v2471
      %v2473 = vpop.f32.mrf.mxu0
      %2474 = vmatprep.mubr.f32.mxu0 0.0
      %2475 = vmatmul.mubr.f32.gmra.mxu0 %v891
      %v2476 = vpop.f32.mrf.mxu0
      %v2477 = vadd.f32 0.0, %v2476
      %v2478 = vpop.f32.mrf.mxu0
      %2479 = vmatprep.mubr.f32.mxu0 0.0
      %2480 = vmatmul.mubr.f32.gmra.mxu0 %v893
      %v2481 = vpop.f32.mrf.mxu0
      %v2482 = vadd.f32 0.0, %v2481
      %v2483 = vpop.f32.mrf.mxu0
      %2484 = vmatprep.mubr.f32.mxu0 0.0
      %2485 = vmatmul.mubr.f32.gmra.mxu0 %v895
      %v2486 = vpop.f32.mrf.mxu0
      %v2487 = vadd.f32 0.0, %v2486
      %v2488 = vpop.f32.mrf.mxu0
      %2489 = vmatprep.mubr.f32.mxu0 0.0
      %2490 = vmatmul.mubr.f32.gmra.mxu0 %v897
      %v2491 = vpop.f32.mrf.mxu0
      %v2492 = vadd.f32 0.0, %v2491
      %v2493 = vpop.f32.mrf.mxu0
      %2494 = vmatprep.mubr.f32.mxu0 0.0
      %2495 = vmatmul.mubr.f32.gmra.mxu0 %v899
      %v2496 = vpop.f32.mrf.mxu0
      %v2497 = vadd.f32 0.0, %v2496
      %v2498 = vpop.f32.mrf.mxu0
      %2499 = vmatprep.mubr.f32.mxu0 0.0
      %2500 = vmatmul.mubr.f32.gmra.mxu0 %v901
      %v2501 = vpop.f32.mrf.mxu0
      %v2502 = vadd.f32 0.0, %v2501
      %v2503 = vpop.f32.mrf.mxu0
      %2504 = vmatprep.mubr.f32.mxu0 0.0
      %2505 = vmatmul.mubr.f32.gmra.mxu0 %v903
      %v2506 = vpop.f32.mrf.mxu0
      %v2507 = vadd.f32 0.0, %v2506
      %v2508 = vpop.f32.mrf.mxu0
      %2509 = vmatprep.mubr.f32.mxu0 0.0
      %2510 = vmatmul.mubr.f32.gmra.mxu0 %v905
      %v2511 = vpop.f32.mrf.mxu0
      %v2512 = vadd.f32 0.0, %v2511
      %v2513 = vpop.f32.mrf.mxu0
      %2514 = vmatprep.mubr.f32.mxu0 0.0
      %2515 = vmatmul.mubr.f32.gmra.mxu0 %v907
      %v2516 = vpop.f32.mrf.mxu0
      %v2517 = vadd.f32 0.0, %v2516
      %v2518 = vpop.f32.mrf.mxu0
      %2519 = vmatprep.mubr.f32.mxu0 0.0
      %2520 = vmatmul.mubr.f32.gmra.mxu0 %v909
      %v2521 = vpop.f32.mrf.mxu0
      %v2522 = vadd.f32 0.0, %v2521
      %v2523 = vpop.f32.mrf.mxu0
      %2524 = vmatprep.mubr.f32.mxu0 0.0
      %2525 = vmatmul.mubr.f32.gmra.mxu0 %v911
      %v2526 = vpop.f32.mrf.mxu0
      %v2527 = vadd.f32 0.0, %v2526
      %v2528 = vpop.f32.mrf.mxu0
      %2529 = vmatprep.mubr.f32.mxu0 0.0
      %2530 = vmatmul.mubr.f32.gmra.mxu0 %v913
      %v2531 = vpop.f32.mrf.mxu0
      %v2532 = vadd.f32 0.0, %v2531
      %v2533 = vpop.f32.mrf.mxu0
      %2534 = vmatprep.mubr.f32.mxu0 0.0
      %2535 = vmatmul.mubr.f32.gmra.mxu0 %v915
      %v2536 = vpop.f32.mrf.mxu0
      %v2537 = vadd.f32 0.0, %v2536
      %v2538 = vpop.f32.mrf.mxu0
      %2539 = vmatprep.mubr.f32.mxu0 0.0
      %2540 = vmatmul.mubr.f32.gmra.mxu0 %v917
      %v2541 = vpop.f32.mrf.mxu0
      %v2542 = vadd.f32 0.0, %v2541
      %v2543 = vpop.f32.mrf.mxu0
      %2544 = vmatprep.mubr.f32.mxu0 0.0
      %2545 = vmatmul.mubr.f32.gmra.mxu0 %v919
      %v2546 = vpop.f32.mrf.mxu0
      %v2547 = vadd.f32 0.0, %v2546
      %v2548 = vpop.f32.mrf.mxu0
      %2549 = vmatprep.mubr.f32.mxu0 0.0
      %2550 = vmatmul.mubr.f32.gmra.mxu0 %v921
      %v2551 = vpop.f32.mrf.mxu0
      %v2552 = vadd.f32 0.0, %v2551
      %v2553 = vpop.f32.mrf.mxu0
      %2554 = vmatprep.mubr.f32.mxu0 0.0
      %2555 = vmatmul.mubr.f32.gmra.mxu0 %v923
      %v2556 = vpop.f32.mrf.mxu0
      %v2557 = vadd.f32 0.0, %v2556
      %v2558 = vpop.f32.mrf.mxu0
      %2559 = vmatprep.mubr.f32.mxu0 0.0
      %2560 = vmatmul.mubr.f32.gmra.mxu0 %v925
      %v2561 = vpop.f32.mrf.mxu0
      %v2562 = vadd.f32 0.0, %v2561
      %v2563 = vpop.f32.mrf.mxu0
      %2564 = vmatprep.mubr.f32.mxu0 0.0
      %2565 = vmatmul.mubr.f32.gmra.mxu0 %v927
      %v2566 = vpop.f32.mrf.mxu0
      %v2567 = vadd.f32 0.0, %v2566
      %v2568 = vpop.f32.mrf.mxu0
      %2569 = vmatprep.mubr.f32.mxu0 0.0
      %2570 = vmatmul.mubr.f32.gmra.mxu0 %v929
      %v2571 = vpop.f32.mrf.mxu0
      %v2572 = vadd.f32 0.0, %v2571
      %v2573 = vpop.f32.mrf.mxu0
      %2574 = vmatprep.mubr.f32.mxu0 0.0
      %2575 = vmatmul.mubr.f32.gmra.mxu0 %v931
      %v2576 = vpop.f32.mrf.mxu0
      %v2577 = vadd.f32 0.0, %v2576
      %v2578 = vpop.f32.mrf.mxu0
      %2579 = vmatprep.mubr.f32.mxu0 0.0
      %2580 = vmatmul.mubr.f32.gmra.mxu0 %v933
      %v2581 = vpop.f32.mrf.mxu0
      %v2582 = vadd.f32 0.0, %v2581
      %v2583 = vpop.f32.mrf.mxu0
      %2584 = vmatprep.mubr.f32.mxu0 0.0
      %2585 = vmatmul.mubr.f32.gmra.mxu0 %v935
      %v2586 = vpop.f32.mrf.mxu0
      %v2587 = vadd.f32 0.0, %v2586
      %v2588 = vpop.f32.mrf.mxu0
      %2589 = vmatprep.mubr.f32.mxu0 0.0
      %2590 = vmatmul.mubr.f32.gmra.mxu0 %v937
      %v2591 = vpop.f32.mrf.mxu0
      %v2592 = vadd.f32 0.0, %v2591
      %v2593 = vpop.f32.mrf.mxu0
      %2594 = vmatprep.mubr.f32.mxu0 0.0
      %2595 = vmatmul.mubr.f32.gmra.mxu0 %v939
      %v2596 = vpop.f32.mrf.mxu0
      %v2597 = vadd.f32 0.0, %v2596
      %v2598 = vpop.f32.mrf.mxu0
      %2599 = vmatprep.mubr.f32.mxu0 0.0
      %2600 = vmatmul.mubr.f32.gmra.mxu0 %v941
      %v2601 = vpop.f32.mrf.mxu0
      %v2602 = vadd.f32 0.0, %v2601
      %v2603 = vpop.f32.mrf.mxu0
      %2604 = vmatprep.mubr.f32.mxu0 0.0
      %2605 = vmatmul.mubr.f32.gmra.mxu0 %v1581
      %v2606 = vpop.f32.mrf.mxu0
      %v2607 = vadd.f32 0.0, %v2606
      %v2608 = vpop.f32.mrf.mxu0
      %2609 = vmatprep.mubr.f32.mxu0 0.0
      %2610 = vmatmul.mubr.f32.gmra.mxu0 %v1584
      %v2611 = vpop.f32.mrf.mxu0
      %v2612 = vadd.f32 0.0, %v2611
      %v2613 = vpop.f32.mrf.mxu0
      %2614 = vmatprep.mubr.f32.mxu0 0.0
      %2615 = vmatmul.mubr.f32.gmra.mxu0 %v2392
      %v2616 = vpop.f32.mrf.mxu0
      %v2617 = vadd.f32 0.0, %v2616
      %v2618 = vpop.f32.mrf.mxu0
      %2619 = vmatprep.mubr.f32.mxu0 0.0
      %2620 = vmatmul.mubr.f32.gmra.mxu0 %v2395
      %v2621 = vpop.f32.mrf.mxu0
      %v2622 = vadd.f32 0.0, %v2621
      %v2623 = vpop.f32.mrf.mxu0
      %2624 = vdwg.mxu0
      %v2625 = vadd.f32 %v2357, %v2467
      %v2626 = vadd.f32 %v2358, %v2472
      %v2627 = vadd.f32 %v2359, %v2477
      %v2628 = vadd.f32 %v2360, %v2482
      %v2629 = vadd.f32 %v2361, %v2487
      %v2630 = vadd.f32 %v2362, %v2492
      %v2631 = vadd.f32 %v2363, %v2497
      %v2632 = vadd.f32 %v2364, %v2502
      %v2633 = vadd.f32 %v2365, %v2507
      %v2634 = vadd.f32 %v2366, %v2512
      %v2635 = vadd.f32 %v2367, %v2517
      %v2636 = vadd.f32 %v2368, %v2522
      %v2637 = vadd.f32 %v2369, %v2527
      %v2638 = vadd.f32 %v2370, %v2532
      %v2639 = vadd.f32 %v2371, %v2537
      %v2640 = vadd.f32 %v2372, %v2542
      %v2641 = vadd.f32 %v2373, %v2547
      %v2642 = vadd.f32 %v2374, %v2552
      %v2643 = vadd.f32 %v2375, %v2557
      %v2644 = vadd.f32 %v2376, %v2562
      %v2645 = vadd.f32 %v2377, %v2567
      %v2646 = vadd.f32 %v2378, %v2572
      %v2647 = vadd.f32 %v2379, %v2577
      %v2648 = vadd.f32 %v2380, %v2582
      %v2649 = vadd.f32 %v2381, %v2587
      %v2650 = vadd.f32 %v2382, %v2592
      %v2651 = vadd.f32 %v2383, %v2597
      %v2652 = vadd.f32 %v2384, %v2602
      %v2653 = vadd.f32 %v2385, %v2607
      %v2654 = vadd.f32 %v2386, %v2612
      %v2655 = vadd.f32 %v2387, %v2617
      %v2656 = vadd.f32 %v2388, %v2622
      %v2658 = vrot.slane %v451, 1
      %v2659 = vrot.slane %v452, 1
      %v2660 = vsel %vm503, %v2658, %v2659
      %v2661 = vrot.slane %v453, 1
      %v2662 = vsel %vm503, %v2659, %v2661
      %s2663 = scalar_lea.vmem %s1, 28
      %v2664 = vld [vmem:[%s2663] sm:$0xf]
      %v2665 = vsel %vm279, %v2660, 0
      %v2667 = vsel %vm279, %v2662, 0
      %v2670 = vsel %vm650, %v2664, 0
      %2672 = vmatprep.subr.mxu0 0.0
      %2673 = vmatpush1.msra.mxu0 0.0
      %2674 = vmatprep.subr.mxu0 0.0
      %2675 = vmatpush1.msra.mxu0 0.0
      %2676 = vmatprep.subr.mxu0 0.0
      %2677 = vmatpush1.msra.mxu0 0.0
      %2678 = vmatprep.subr.mxu0 0.0
      %2679 = vmatpush1.msra.mxu0 0.0
      %2680 = vmatprep.subr.mxu0 0.0
      %2681 = vmatpush1.msra.mxu0 0.0
      %2682 = vmatprep.subr.mxu0 0.0
      %2683 = vmatpush1.msra.mxu0 0.0
      %2684 = vmatprep.subr.mxu0 0.0
      %2685 = vmatpush1.msra.mxu0 0.0
      %2686 = vmatprep.subr.mxu0 0.0
      %2687 = vmatpush1.msra.mxu0 0.0
      %2688 = vmatprep.subr.mxu0 0.0
      %2689 = vmatpush1.msra.mxu0 0.0
      %2690 = vmatprep.subr.mxu0 0.0
      %2691 = vmatpush1.msra.mxu0 0.0
      %2692 = vmatprep.subr.mxu0 0.0
      %2693 = vmatpush1.msra.mxu0 0.0
      %2694 = vmatprep.subr.mxu0 0.0
      %2695 = vmatpush1.msra.mxu0 0.0
      %2696 = vmatprep.subr.mxu0 0.0
      %2697 = vmatpush1.msra.mxu0 0.0
      %2698 = vmatprep.subr.mxu0 0.0
      %2699 = vmatpush1.msra.mxu0 0.0
      %2700 = vmatprep.subr.mxu0 0.0
      %2701 = vmatpush1.msra.mxu0 0.0
      %2702 = vmatprep.subr.mxu0 0.0
      %2703 = vmatpush1.msra.mxu0 %v2670
      %2704 = vmatprep.subr.mxu0 0.0
      %2705 = vmatpush2.msra.mxu0 0.0
      %2706 = vmatprep.subr.mxu0 0.0
      %2707 = vmatpush2.msra.mxu0 0.0
      %2708 = vmatprep.subr.mxu0 0.0
      %2709 = vmatpush2.msra.mxu0 0.0
      %2710 = vmatprep.subr.mxu0 0.0
      %2711 = vmatpush2.msra.mxu0 0.0
      %2712 = vmatprep.subr.mxu0 0.0
      %2713 = vmatpush2.msra.mxu0 0.0
      %2714 = vmatprep.subr.mxu0 0.0
      %2715 = vmatpush2.msra.mxu0 0.0
      %2716 = vmatprep.subr.mxu0 0.0
      %2717 = vmatpush2.msra.mxu0 0.0
      %2718 = vmatprep.subr.mxu0 0.0
      %2719 = vmatpush2.msra.mxu0 0.0
      %2720 = vmatprep.subr.mxu0 0.0
      %2721 = vmatpush2.msra.mxu0 0.0
      %2722 = vmatprep.subr.mxu0 0.0
      %2723 = vmatpush2.msra.mxu0 0.0
      %2724 = vmatprep.subr.mxu0 0.0
      %2725 = vmatpush2.msra.mxu0 0.0
      %2726 = vmatprep.subr.mxu0 0.0
      %2727 = vmatpush2.msra.mxu0 0.0
      %2728 = vmatprep.subr.mxu0 0.0
      %2729 = vmatpush2.msra.mxu0 0.0
      %2730 = vmatprep.subr.mxu0 0.0
      %2731 = vmatpush2.msra.mxu0 0.0
      %2732 = vmatprep.subr.mxu0 0.0
      %2733 = vmatpush2.msra.mxu0 0.0
      %2734 = vmatprep.subr.mxu0 0.0
      %2735 = vmatpush2.msra.mxu0 0.0
      %2736 = vmatprep.mubr.f32.mxu0 0.0
      %2737 = vmatmul.mubr.f32.gmra.mxu0 %v594
      %v2738 = vpop.f32.mrf.mxu0
      %v2739 = vadd.f32 0.0, %v2738
      %v2740 = vpop.f32.mrf.mxu0
      %2741 = vmatprep.mubr.f32.mxu0 0.0
      %2742 = vmatmul.mubr.f32.gmra.mxu0 %v596
      %v2743 = vpop.f32.mrf.mxu0
      %v2744 = vadd.f32 0.0, %v2743
      %v2745 = vpop.f32.mrf.mxu0
      %2746 = vmatprep.mubr.f32.mxu0 0.0
      %2747 = vmatmul.mubr.f32.gmra.mxu0 %v598
      %v2748 = vpop.f32.mrf.mxu0
      %v2749 = vadd.f32 0.0, %v2748
      %v2750 = vpop.f32.mrf.mxu0
      %2751 = vmatprep.mubr.f32.mxu0 0.0
      %2752 = vmatmul.mubr.f32.gmra.mxu0 %v600
      %v2753 = vpop.f32.mrf.mxu0
      %v2754 = vadd.f32 0.0, %v2753
      %v2755 = vpop.f32.mrf.mxu0
      %2756 = vmatprep.mubr.f32.mxu0 0.0
      %2757 = vmatmul.mubr.f32.gmra.mxu0 %v602
      %v2758 = vpop.f32.mrf.mxu0
      %v2759 = vadd.f32 0.0, %v2758
      %v2760 = vpop.f32.mrf.mxu0
      %2761 = vmatprep.mubr.f32.mxu0 0.0
      %2762 = vmatmul.mubr.f32.gmra.mxu0 %v604
      %v2763 = vpop.f32.mrf.mxu0
      %v2764 = vadd.f32 0.0, %v2763
      %v2765 = vpop.f32.mrf.mxu0
      %2766 = vmatprep.mubr.f32.mxu0 0.0
      %2767 = vmatmul.mubr.f32.gmra.mxu0 %v606
      %v2768 = vpop.f32.mrf.mxu0
      %v2769 = vadd.f32 0.0, %v2768
      %v2770 = vpop.f32.mrf.mxu0
      %2771 = vmatprep.mubr.f32.mxu0 0.0
      %2772 = vmatmul.mubr.f32.gmra.mxu0 %v608
      %v2773 = vpop.f32.mrf.mxu0
      %v2774 = vadd.f32 0.0, %v2773
      %v2775 = vpop.f32.mrf.mxu0
      %2776 = vmatprep.mubr.f32.mxu0 0.0
      %2777 = vmatmul.mubr.f32.gmra.mxu0 %v610
      %v2778 = vpop.f32.mrf.mxu0
      %v2779 = vadd.f32 0.0, %v2778
      %v2780 = vpop.f32.mrf.mxu0
      %2781 = vmatprep.mubr.f32.mxu0 0.0
      %2782 = vmatmul.mubr.f32.gmra.mxu0 %v612
      %v2783 = vpop.f32.mrf.mxu0
      %v2784 = vadd.f32 0.0, %v2783
      %v2785 = vpop.f32.mrf.mxu0
      %2786 = vmatprep.mubr.f32.mxu0 0.0
      %2787 = vmatmul.mubr.f32.gmra.mxu0 %v614
      %v2788 = vpop.f32.mrf.mxu0
      %v2789 = vadd.f32 0.0, %v2788
      %v2790 = vpop.f32.mrf.mxu0
      %2791 = vmatprep.mubr.f32.mxu0 0.0
      %2792 = vmatmul.mubr.f32.gmra.mxu0 %v616
      %v2793 = vpop.f32.mrf.mxu0
      %v2794 = vadd.f32 0.0, %v2793
      %v2795 = vpop.f32.mrf.mxu0
      %2796 = vmatprep.mubr.f32.mxu0 0.0
      %2797 = vmatmul.mubr.f32.gmra.mxu0 %v618
      %v2798 = vpop.f32.mrf.mxu0
      %v2799 = vadd.f32 0.0, %v2798
      %v2800 = vpop.f32.mrf.mxu0
      %2801 = vmatprep.mubr.f32.mxu0 0.0
      %2802 = vmatmul.mubr.f32.gmra.mxu0 %v620
      %v2803 = vpop.f32.mrf.mxu0
      %v2804 = vadd.f32 0.0, %v2803
      %v2805 = vpop.f32.mrf.mxu0
      %2806 = vmatprep.mubr.f32.mxu0 0.0
      %2807 = vmatmul.mubr.f32.gmra.mxu0 %v622
      %v2808 = vpop.f32.mrf.mxu0
      %v2809 = vadd.f32 0.0, %v2808
      %v2810 = vpop.f32.mrf.mxu0
      %2811 = vmatprep.mubr.f32.mxu0 0.0
      %2812 = vmatmul.mubr.f32.gmra.mxu0 %v624
      %v2813 = vpop.f32.mrf.mxu0
      %v2814 = vadd.f32 0.0, %v2813
      %v2815 = vpop.f32.mrf.mxu0
      %2816 = vmatprep.mubr.f32.mxu0 0.0
      %2817 = vmatmul.mubr.f32.gmra.mxu0 %v626
      %v2818 = vpop.f32.mrf.mxu0
      %v2819 = vadd.f32 0.0, %v2818
      %v2820 = vpop.f32.mrf.mxu0
      %2821 = vmatprep.mubr.f32.mxu0 0.0
      %2822 = vmatmul.mubr.f32.gmra.mxu0 %v628
      %v2823 = vpop.f32.mrf.mxu0
      %v2824 = vadd.f32 0.0, %v2823
      %v2825 = vpop.f32.mrf.mxu0
      %2826 = vmatprep.mubr.f32.mxu0 0.0
      %2827 = vmatmul.mubr.f32.gmra.mxu0 %v630
      %v2828 = vpop.f32.mrf.mxu0
      %v2829 = vadd.f32 0.0, %v2828
      %v2830 = vpop.f32.mrf.mxu0
      %2831 = vmatprep.mubr.f32.mxu0 0.0
      %2832 = vmatmul.mubr.f32.gmra.mxu0 %v632
      %v2833 = vpop.f32.mrf.mxu0
      %v2834 = vadd.f32 0.0, %v2833
      %v2835 = vpop.f32.mrf.mxu0
      %2836 = vmatprep.mubr.f32.mxu0 0.0
      %2837 = vmatmul.mubr.f32.gmra.mxu0 %v634
      %v2838 = vpop.f32.mrf.mxu0
      %v2839 = vadd.f32 0.0, %v2838
      %v2840 = vpop.f32.mrf.mxu0
      %2841 = vmatprep.mubr.f32.mxu0 0.0
      %2842 = vmatmul.mubr.f32.gmra.mxu0 %v636
      %v2843 = vpop.f32.mrf.mxu0
      %v2844 = vadd.f32 0.0, %v2843
      %v2845 = vpop.f32.mrf.mxu0
      %2846 = vmatprep.mubr.f32.mxu0 0.0
      %2847 = vmatmul.mubr.f32.gmra.mxu0 %v638
      %v2848 = vpop.f32.mrf.mxu0
      %v2849 = vadd.f32 0.0, %v2848
      %v2850 = vpop.f32.mrf.mxu0
      %2851 = vmatprep.mubr.f32.mxu0 0.0
      %2852 = vmatmul.mubr.f32.gmra.mxu0 %v640
      %v2853 = vpop.f32.mrf.mxu0
      %v2854 = vadd.f32 0.0, %v2853
      %v2855 = vpop.f32.mrf.mxu0
      %2856 = vmatprep.mubr.f32.mxu0 0.0
      %2857 = vmatmul.mubr.f32.gmra.mxu0 %v642
      %v2858 = vpop.f32.mrf.mxu0
      %v2859 = vadd.f32 0.0, %v2858
      %v2860 = vpop.f32.mrf.mxu0
      %2861 = vmatprep.mubr.f32.mxu0 0.0
      %2862 = vmatmul.mubr.f32.gmra.mxu0 %v644
      %v2863 = vpop.f32.mrf.mxu0
      %v2864 = vadd.f32 0.0, %v2863
      %v2865 = vpop.f32.mrf.mxu0
      %2866 = vmatprep.mubr.f32.mxu0 0.0
      %2867 = vmatmul.mubr.f32.gmra.mxu0 %v646
      %v2868 = vpop.f32.mrf.mxu0
      %v2869 = vadd.f32 0.0, %v2868
      %v2870 = vpop.f32.mrf.mxu0
      %2871 = vmatprep.mubr.f32.mxu0 0.0
      %2872 = vmatmul.mubr.f32.gmra.mxu0 %v648
      %v2873 = vpop.f32.mrf.mxu0
      %v2874 = vadd.f32 0.0, %v2873
      %v2875 = vpop.f32.mrf.mxu0
      %2876 = vmatprep.mubr.f32.mxu0 0.0
      %2877 = vmatmul.mubr.f32.gmra.mxu0 %v1854
      %v2878 = vpop.f32.mrf.mxu0
      %v2879 = vadd.f32 0.0, %v2878
      %v2880 = vpop.f32.mrf.mxu0
      %2881 = vmatprep.mubr.f32.mxu0 0.0
      %2882 = vmatmul.mubr.f32.gmra.mxu0 %v1856
      %v2883 = vpop.f32.mrf.mxu0
      %v2884 = vadd.f32 0.0, %v2883
      %v2885 = vpop.f32.mrf.mxu0
      %2886 = vmatprep.mubr.f32.mxu0 0.0
      %2887 = vmatmul.mubr.f32.gmra.mxu0 %v2665
      %v2888 = vpop.f32.mrf.mxu0
      %v2889 = vadd.f32 0.0, %v2888
      %v2890 = vpop.f32.mrf.mxu0
      %2891 = vmatprep.mubr.f32.mxu0 0.0
      %2892 = vmatmul.mubr.f32.gmra.mxu0 %v2667
      %v2893 = vpop.f32.mrf.mxu0
      %v2894 = vadd.f32 0.0, %v2893
      %v2895 = vpop.f32.mrf.mxu0
      %2896 = vdwg.mxu0
      %v2897 = vadd.f32 %v2625, %v2739
      %v2898 = vadd.f32 %v2626, %v2744
      %v2899 = vadd.f32 %v2627, %v2749
      %v2900 = vadd.f32 %v2628, %v2754
      %v2901 = vadd.f32 %v2629, %v2759
      %v2902 = vadd.f32 %v2630, %v2764
      %v2903 = vadd.f32 %v2631, %v2769
      %v2904 = vadd.f32 %v2632, %v2774
      %v2905 = vadd.f32 %v2633, %v2779
      %v2906 = vadd.f32 %v2634, %v2784
      %v2907 = vadd.f32 %v2635, %v2789
      %v2908 = vadd.f32 %v2636, %v2794
      %v2909 = vadd.f32 %v2637, %v2799
      %v2910 = vadd.f32 %v2638, %v2804
      %v2911 = vadd.f32 %v2639, %v2809
      %v2912 = vadd.f32 %v2640, %v2814
      %v2913 = vadd.f32 %v2641, %v2819
      %v2914 = vadd.f32 %v2642, %v2824
      %v2915 = vadd.f32 %v2643, %v2829
      %v2916 = vadd.f32 %v2644, %v2834
      %v2917 = vadd.f32 %v2645, %v2839
      %v2918 = vadd.f32 %v2646, %v2844
      %v2919 = vadd.f32 %v2647, %v2849
      %v2920 = vadd.f32 %v2648, %v2854
      %v2921 = vadd.f32 %v2649, %v2859
      %v2922 = vadd.f32 %v2650, %v2864
      %v2923 = vadd.f32 %v2651, %v2869
      %v2924 = vadd.f32 %v2652, %v2874
      %v2925 = vadd.f32 %v2653, %v2879
      %v2926 = vadd.f32 %v2654, %v2884
      %v2927 = vadd.f32 %v2655, %v2889
      %v2928 = vadd.f32 %v2656, %v2894
      %v2929 = vrot.slane %v451, 2
      %v2930 = vrot.slane %v452, 2
      %v2931 = vsel %vm1171, %v2929, %v2930
      %v2932 = vrot.slane %v453, 2
      %v2933 = vsel %vm1171, %v2930, %v2932
      %s2934 = scalar_lea.vmem %s1, 32
      %v2935 = vld [vmem:[%s2934] sm:$0xf]
      %v2936 = vsel %vm279, %v2931, 0
      %v2938 = vsel %vm279, %v2933, 0
      %v2941 = vsel %vm650, %v2935, 0
      %2943 = vmatprep.subr.mxu0 0.0
      %2944 = vmatpush1.msra.mxu0 0.0
      %2945 = vmatprep.subr.mxu0 0.0
      %2946 = vmatpush1.msra.mxu0 0.0
      %2947 = vmatprep.subr.mxu0 0.0
      %2948 = vmatpush1.msra.mxu0 0.0
      %2949 = vmatprep.subr.mxu0 0.0
      %2950 = vmatpush1.msra.mxu0 0.0
      %2951 = vmatprep.subr.mxu0 0.0
      %2952 = vmatpush1.msra.mxu0 0.0
      %2953 = vmatprep.subr.mxu0 0.0
      %2954 = vmatpush1.msra.mxu0 0.0
      %2955 = vmatprep.subr.mxu0 0.0
      %2956 = vmatpush1.msra.mxu0 0.0
      %2957 = vmatprep.subr.mxu0 0.0
      %2958 = vmatpush1.msra.mxu0 0.0
      %2959 = vmatprep.subr.mxu0 0.0
      %2960 = vmatpush1.msra.mxu0 0.0
      %2961 = vmatprep.subr.mxu0 0.0
      %2962 = vmatpush1.msra.mxu0 0.0
      %2963 = vmatprep.subr.mxu0 0.0
      %2964 = vmatpush1.msra.mxu0 0.0
      %2965 = vmatprep.subr.mxu0 0.0
      %2966 = vmatpush1.msra.mxu0 0.0
      %2967 = vmatprep.subr.mxu0 0.0
      %2968 = vmatpush1.msra.mxu0 0.0
      %2969 = vmatprep.subr.mxu0 0.0
      %2970 = vmatpush1.msra.mxu0 0.0
      %2971 = vmatprep.subr.mxu0 0.0
      %2972 = vmatpush1.msra.mxu0 0.0
      %2973 = vmatprep.subr.mxu0 0.0
      %2974 = vmatpush1.msra.mxu0 %v2941
      %2975 = vmatprep.subr.mxu0 0.0
      %2976 = vmatpush2.msra.mxu0 0.0
      %2977 = vmatprep.subr.mxu0 0.0
      %2978 = vmatpush2.msra.mxu0 0.0
      %2979 = vmatprep.subr.mxu0 0.0
      %2980 = vmatpush2.msra.mxu0 0.0
      %2981 = vmatprep.subr.mxu0 0.0
      %2982 = vmatpush2.msra.mxu0 0.0
      %2983 = vmatprep.subr.mxu0 0.0
      %2984 = vmatpush2.msra.mxu0 0.0
      %2985 = vmatprep.subr.mxu0 0.0
      %2986 = vmatpush2.msra.mxu0 0.0
      %2987 = vmatprep.subr.mxu0 0.0
      %2988 = vmatpush2.msra.mxu0 0.0
      %2989 = vmatprep.subr.mxu0 0.0
      %2990 = vmatpush2.msra.mxu0 0.0
      %2991 = vmatprep.subr.mxu0 0.0
      %2992 = vmatpush2.msra.mxu0 0.0
      %2993 = vmatprep.subr.mxu0 0.0
      %2994 = vmatpush2.msra.mxu0 0.0
      %2995 = vmatprep.subr.mxu0 0.0
      %2996 = vmatpush2.msra.mxu0 0.0
      %2997 = vmatprep.subr.mxu0 0.0
      %2998 = vmatpush2.msra.mxu0 0.0
      %2999 = vmatprep.subr.mxu0 0.0
      %3000 = vmatpush2.msra.mxu0 0.0
      %3001 = vmatprep.subr.mxu0 0.0
      %3002 = vmatpush2.msra.mxu0 0.0
      %3003 = vmatprep.subr.mxu0 0.0
      %3004 = vmatpush2.msra.mxu0 0.0
      %3005 = vmatprep.subr.mxu0 0.0
      %3006 = vmatpush2.msra.mxu0 0.0
      %3007 = vmatprep.mubr.f32.mxu0 0.0
      %3008 = vmatmul.mubr.f32.gmra.mxu0 %v1262
      %v3009 = vpop.f32.mrf.mxu0
      %v3010 = vadd.f32 0.0, %v3009
      %v3011 = vpop.f32.mrf.mxu0
      %3012 = vmatprep.mubr.f32.mxu0 0.0
      %3013 = vmatmul.mubr.f32.gmra.mxu0 %v1264
      %v3014 = vpop.f32.mrf.mxu0
      %v3015 = vadd.f32 0.0, %v3014
      %v3016 = vpop.f32.mrf.mxu0
      %3017 = vmatprep.mubr.f32.mxu0 0.0
      %3018 = vmatmul.mubr.f32.gmra.mxu0 %v1266
      %v3019 = vpop.f32.mrf.mxu0
      %v3020 = vadd.f32 0.0, %v3019
      %v3021 = vpop.f32.mrf.mxu0
      %3022 = vmatprep.mubr.f32.mxu0 0.0
      %3023 = vmatmul.mubr.f32.gmra.mxu0 %v1268
      %v3024 = vpop.f32.mrf.mxu0
      %v3025 = vadd.f32 0.0, %v3024
      %v3026 = vpop.f32.mrf.mxu0
      %3027 = vmatprep.mubr.f32.mxu0 0.0
      %3028 = vmatmul.mubr.f32.gmra.mxu0 %v1270
      %v3029 = vpop.f32.mrf.mxu0
      %v3030 = vadd.f32 0.0, %v3029
      %v3031 = vpop.f32.mrf.mxu0
      %3032 = vmatprep.mubr.f32.mxu0 0.0
      %3033 = vmatmul.mubr.f32.gmra.mxu0 %v1272
      %v3034 = vpop.f32.mrf.mxu0
      %v3035 = vadd.f32 0.0, %v3034
      %v3036 = vpop.f32.mrf.mxu0
      %3037 = vmatprep.mubr.f32.mxu0 0.0
      %3038 = vmatmul.mubr.f32.gmra.mxu0 %v1274
      %v3039 = vpop.f32.mrf.mxu0
      %v3040 = vadd.f32 0.0, %v3039
      %v3041 = vpop.f32.mrf.mxu0
      %3042 = vmatprep.mubr.f32.mxu0 0.0
      %3043 = vmatmul.mubr.f32.gmra.mxu0 %v1276
      %v3044 = vpop.f32.mrf.mxu0
      %v3045 = vadd.f32 0.0, %v3044
      %v3046 = vpop.f32.mrf.mxu0
      %3047 = vmatprep.mubr.f32.mxu0 0.0
      %3048 = vmatmul.mubr.f32.gmra.mxu0 %v1278
      %v3049 = vpop.f32.mrf.mxu0
      %v3050 = vadd.f32 0.0, %v3049
      %v3051 = vpop.f32.mrf.mxu0
      %3052 = vmatprep.mubr.f32.mxu0 0.0
      %3053 = vmatmul.mubr.f32.gmra.mxu0 %v1280
      %v3054 = vpop.f32.mrf.mxu0
      %v3055 = vadd.f32 0.0, %v3054
      %v3056 = vpop.f32.mrf.mxu0
      %3057 = vmatprep.mubr.f32.mxu0 0.0
      %3058 = vmatmul.mubr.f32.gmra.mxu0 %v1282
      %v3059 = vpop.f32.mrf.mxu0
      %v3060 = vadd.f32 0.0, %v3059
      %v3061 = vpop.f32.mrf.mxu0
      %3062 = vmatprep.mubr.f32.mxu0 0.0
      %3063 = vmatmul.mubr.f32.gmra.mxu0 %v1284
      %v3064 = vpop.f32.mrf.mxu0
      %v3065 = vadd.f32 0.0, %v3064
      %v3066 = vpop.f32.mrf.mxu0
      %3067 = vmatprep.mubr.f32.mxu0 0.0
      %3068 = vmatmul.mubr.f32.gmra.mxu0 %v1286
      %v3069 = vpop.f32.mrf.mxu0
      %v3070 = vadd.f32 0.0, %v3069
      %v3071 = vpop.f32.mrf.mxu0
      %3072 = vmatprep.mubr.f32.mxu0 0.0
      %3073 = vmatmul.mubr.f32.gmra.mxu0 %v1288
      %v3074 = vpop.f32.mrf.mxu0
      %v3075 = vadd.f32 0.0, %v3074
      %v3076 = vpop.f32.mrf.mxu0
      %3077 = vmatprep.mubr.f32.mxu0 0.0
      %3078 = vmatmul.mubr.f32.gmra.mxu0 %v1290
      %v3079 = vpop.f32.mrf.mxu0
      %v3080 = vadd.f32 0.0, %v3079
      %v3081 = vpop.f32.mrf.mxu0
      %3082 = vmatprep.mubr.f32.mxu0 0.0
      %3083 = vmatmul.mubr.f32.gmra.mxu0 %v1292
      %v3084 = vpop.f32.mrf.mxu0
      %v3085 = vadd.f32 0.0, %v3084
      %v3086 = vpop.f32.mrf.mxu0
      %3087 = vmatprep.mubr.f32.mxu0 0.0
      %3088 = vmatmul.mubr.f32.gmra.mxu0 %v1294
      %v3089 = vpop.f32.mrf.mxu0
      %v3090 = vadd.f32 0.0, %v3089
      %v3091 = vpop.f32.mrf.mxu0
      %3092 = vmatprep.mubr.f32.mxu0 0.0
      %3093 = vmatmul.mubr.f32.gmra.mxu0 %v1296
      %v3094 = vpop.f32.mrf.mxu0
      %v3095 = vadd.f32 0.0, %v3094
      %v3096 = vpop.f32.mrf.mxu0
      %3097 = vmatprep.mubr.f32.mxu0 0.0
      %3098 = vmatmul.mubr.f32.gmra.mxu0 %v1298
      %v3099 = vpop.f32.mrf.mxu0
      %v3100 = vadd.f32 0.0, %v3099
      %v3101 = vpop.f32.mrf.mxu0
      %3102 = vmatprep.mubr.f32.mxu0 0.0
      %3103 = vmatmul.mubr.f32.gmra.mxu0 %v1300
      %v3104 = vpop.f32.mrf.mxu0
      %v3105 = vadd.f32 0.0, %v3104
      %v3106 = vpop.f32.mrf.mxu0
      %3107 = vmatprep.mubr.f32.mxu0 0.0
      %3108 = vmatmul.mubr.f32.gmra.mxu0 %v1302
      %v3109 = vpop.f32.mrf.mxu0
      %v3110 = vadd.f32 0.0, %v3109
      %v3111 = vpop.f32.mrf.mxu0
      %3112 = vmatprep.mubr.f32.mxu0 0.0
      %3113 = vmatmul.mubr.f32.gmra.mxu0 %v1304
      %v3114 = vpop.f32.mrf.mxu0
      %v3115 = vadd.f32 0.0, %v3114
      %v3116 = vpop.f32.mrf.mxu0
      %3117 = vmatprep.mubr.f32.mxu0 0.0
      %3118 = vmatmul.mubr.f32.gmra.mxu0 %v1306
      %v3119 = vpop.f32.mrf.mxu0
      %v3120 = vadd.f32 0.0, %v3119
      %v3121 = vpop.f32.mrf.mxu0
      %3122 = vmatprep.mubr.f32.mxu0 0.0
      %3123 = vmatmul.mubr.f32.gmra.mxu0 %v1308
      %v3124 = vpop.f32.mrf.mxu0
      %v3125 = vadd.f32 0.0, %v3124
      %v3126 = vpop.f32.mrf.mxu0
      %3127 = vmatprep.mubr.f32.mxu0 0.0
      %3128 = vmatmul.mubr.f32.gmra.mxu0 %v1310
      %v3129 = vpop.f32.mrf.mxu0
      %v3130 = vadd.f32 0.0, %v3129
      %v3131 = vpop.f32.mrf.mxu0
      %3132 = vmatprep.mubr.f32.mxu0 0.0
      %3133 = vmatmul.mubr.f32.gmra.mxu0 %v1312
      %v3134 = vpop.f32.mrf.mxu0
      %v3135 = vadd.f32 0.0, %v3134
      %v3136 = vpop.f32.mrf.mxu0
      %3137 = vmatprep.mubr.f32.mxu0 0.0
      %3138 = vmatmul.mubr.f32.gmra.mxu0 %v1314
      %v3139 = vpop.f32.mrf.mxu0
      %v3140 = vadd.f32 0.0, %v3139
      %v3141 = vpop.f32.mrf.mxu0
      %3142 = vmatprep.mubr.f32.mxu0 0.0
      %3143 = vmatmul.mubr.f32.gmra.mxu0 %v1316
      %v3144 = vpop.f32.mrf.mxu0
      %v3145 = vadd.f32 0.0, %v3144
      %v3146 = vpop.f32.mrf.mxu0
      %3147 = vmatprep.mubr.f32.mxu0 0.0
      %3148 = vmatmul.mubr.f32.gmra.mxu0 %v2125
      %v3149 = vpop.f32.mrf.mxu0
      %v3150 = vadd.f32 0.0, %v3149
      %v3151 = vpop.f32.mrf.mxu0
      %3152 = vmatprep.mubr.f32.mxu0 0.0
      %3153 = vmatmul.mubr.f32.gmra.mxu0 %v2127
      %v3154 = vpop.f32.mrf.mxu0
      %v3155 = vadd.f32 0.0, %v3154
      %v3156 = vpop.f32.mrf.mxu0
      %3157 = vmatprep.mubr.f32.mxu0 0.0
      %3158 = vmatmul.mubr.f32.gmra.mxu0 %v2936
      %v3159 = vpop.f32.mrf.mxu0
      %v3160 = vadd.f32 0.0, %v3159
      %v3161 = vpop.f32.mrf.mxu0
      %3162 = vmatprep.mubr.f32.mxu0 0.0
      %3163 = vmatmul.mubr.f32.gmra.mxu0 %v2938
      %v3164 = vpop.f32.mrf.mxu0
      %v3165 = vadd.f32 0.0, %v3164
      %v3166 = vpop.f32.mrf.mxu0
      %3167 = vdwg.mxu0
      %v3168 = vadd.f32 %v2897, %v3010
      %v3169 = vadd.f32 %v2898, %v3015
      %v3170 = vadd.f32 %v2899, %v3020
      %v3171 = vadd.f32 %v2900, %v3025
      %v3172 = vadd.f32 %v2901, %v3030
      %v3173 = vadd.f32 %v2902, %v3035
      %v3174 = vadd.f32 %v2903, %v3040
      %v3175 = vadd.f32 %v2904, %v3045
      %v3176 = vadd.f32 %v2905, %v3050
      %v3177 = vadd.f32 %v2906, %v3055
      %v3178 = vadd.f32 %v2907, %v3060
      %v3179 = vadd.f32 %v2908, %v3065
      %v3180 = vadd.f32 %v2909, %v3070
      %v3181 = vadd.f32 %v2910, %v3075
      %v3182 = vadd.f32 %v2911, %v3080
      %v3183 = vadd.f32 %v2912, %v3085
      %v3184 = vadd.f32 %v2913, %v3090
      %v3185 = vadd.f32 %v2914, %v3095
      %v3186 = vadd.f32 %v2915, %v3100
      %v3187 = vadd.f32 %v2916, %v3105
      %v3188 = vadd.f32 %v2917, %v3110
      %v3189 = vadd.f32 %v2918, %v3115
      %v3190 = vadd.f32 %v2919, %v3120
      %v3191 = vadd.f32 %v2920, %v3125
      %v3192 = vadd.f32 %v2921, %v3130
      %v3193 = vadd.f32 %v2922, %v3135
      %v3194 = vadd.f32 %v2923, %v3140
      %v3195 = vadd.f32 %v2924, %v3145
      %v3196 = vadd.f32 %v2925, %v3150
      %v3197 = vadd.f32 %v2926, %v3155
      %v3198 = vadd.f32 %v2927, %v3160
      %v3199 = vadd.f32 %v2928, %v3165
      %v3200 = vld [vmem:[%s2] sm:$0x1]
      %v3202 = vlaneseq
      %v3203 = vshrl.u32 %v3202, 7
      %v3204 = vsub.s32 0, %v3203
      %v3205 = vrot.slane %v3200, %v3204
      %v3207 = vmul.f32 %v3168, %v3205
      %v3208 = vmul.f32 %v3169, %v3205
      %v3209 = vmul.f32 %v3170, %v3205
      %v3210 = vmul.f32 %v3171, %v3205
      %v3211 = vmul.f32 %v3172, %v3205
      %v3212 = vmul.f32 %v3173, %v3205
      %v3213 = vmul.f32 %v3174, %v3205
      %v3214 = vmul.f32 %v3175, %v3205
      %v3215 = vmul.f32 %v3176, %v3205
      %v3216 = vmul.f32 %v3177, %v3205
      %v3217 = vmul.f32 %v3178, %v3205
      %v3218 = vmul.f32 %v3179, %v3205
      %v3219 = vmul.f32 %v3180, %v3205
      %v3220 = vmul.f32 %v3181, %v3205
      %v3221 = vmul.f32 %v3182, %v3205
      %v3222 = vmul.f32 %v3183, %v3205
      %v3223 = vmul.f32 %v3184, %v3205
      %v3224 = vmul.f32 %v3185, %v3205
      %v3225 = vmul.f32 %v3186, %v3205
      %v3226 = vmul.f32 %v3187, %v3205
      %v3227 = vmul.f32 %v3188, %v3205
      %v3228 = vmul.f32 %v3189, %v3205
      %v3229 = vmul.f32 %v3190, %v3205
      %v3230 = vmul.f32 %v3191, %v3205
      %v3231 = vmul.f32 %v3192, %v3205
      %v3232 = vmul.f32 %v3193, %v3205
      %v3233 = vmul.f32 %v3194, %v3205
      %v3234 = vmul.f32 %v3195, %v3205
      %v3235 = vmul.f32 %v3196, %v3205
      %v3236 = vmul.f32 %v3197, %v3205
      %v3237 = vmul.f32 %v3198, %v3205
      %v3238 = vmul.f32 %v3199, %v3205
      %v3239 = vld [vmem:[%s3] sm:$0x1]
      %v3241 = vlaneseq
      %v3242 = vshrl.u32 %v3241, 7
      %v3243 = vsub.s32 0, %v3242
      %v3244 = vrot.slane %v3239, %v3243
      %v3246 = vadd.f32 %v3207, %v3244
      %v3247 = vadd.f32 %v3208, %v3244
      %v3248 = vadd.f32 %v3209, %v3244
      %v3249 = vadd.f32 %v3210, %v3244
      %v3250 = vadd.f32 %v3211, %v3244
      %v3251 = vadd.f32 %v3212, %v3244
      %v3252 = vadd.f32 %v3213, %v3244
      %v3253 = vadd.f32 %v3214, %v3244
      %v3254 = vadd.f32 %v3215, %v3244
      %v3255 = vadd.f32 %v3216, %v3244
      %v3256 = vadd.f32 %v3217, %v3244
      %v3257 = vadd.f32 %v3218, %v3244
      %v3258 = vadd.f32 %v3219, %v3244
      %v3259 = vadd.f32 %v3220, %v3244
      %v3260 = vadd.f32 %v3221, %v3244
      %v3261 = vadd.f32 %v3222, %v3244
      %v3262 = vadd.f32 %v3223, %v3244
      %v3263 = vadd.f32 %v3224, %v3244
      %v3264 = vadd.f32 %v3225, %v3244
      %v3265 = vadd.f32 %v3226, %v3244
      %v3266 = vadd.f32 %v3227, %v3244
      %v3267 = vadd.f32 %v3228, %v3244
      %v3268 = vadd.f32 %v3229, %v3244
      %v3269 = vadd.f32 %v3230, %v3244
      %v3270 = vadd.f32 %v3231, %v3244
      %v3271 = vadd.f32 %v3232, %v3244
      %v3272 = vadd.f32 %v3233, %v3244
      %v3273 = vadd.f32 %v3234, %v3244
      %v3274 = vadd.f32 %v3235, %v3244
      %v3275 = vadd.f32 %v3236, %v3244
      %v3276 = vadd.f32 %v3237, %v3244
      %v3277 = vadd.f32 %v3238, %v3244
      %v3278 = vmax.f32 %v3246, 0.0
      %v3279 = vmax.f32 %v3247, 0.0
      %v3280 = vmax.f32 %v3248, 0.0
      %v3281 = vmax.f32 %v3249, 0.0
      %v3282 = vmax.f32 %v3250, 0.0
      %v3283 = vmax.f32 %v3251, 0.0
      %v3284 = vmax.f32 %v3252, 0.0
      %v3285 = vmax.f32 %v3253, 0.0
      %v3286 = vmax.f32 %v3254, 0.0
      %v3287 = vmax.f32 %v3255, 0.0
      %v3288 = vmax.f32 %v3256, 0.0
      %v3289 = vmax.f32 %v3257, 0.0
      %v3290 = vmax.f32 %v3258, 0.0
      %v3291 = vmax.f32 %v3259, 0.0
      %v3292 = vmax.f32 %v3260, 0.0
      %v3293 = vmax.f32 %v3261, 0.0
      %v3294 = vmax.f32 %v3262, 0.0
      %v3295 = vmax.f32 %v3263, 0.0
      %v3296 = vmax.f32 %v3264, 0.0
      %v3297 = vmax.f32 %v3265, 0.0
      %v3298 = vmax.f32 %v3266, 0.0
      %v3299 = vmax.f32 %v3267, 0.0
      %v3300 = vmax.f32 %v3268, 0.0
      %v3301 = vmax.f32 %v3269, 0.0
      %v3302 = vmax.f32 %v3270, 0.0
      %v3303 = vmax.f32 %v3271, 0.0
      %v3304 = vmax.f32 %v3272, 0.0
      %v3305 = vmax.f32 %v3273, 0.0
      %v3306 = vmax.f32 %v3274, 0.0
      %v3307 = vmax.f32 %v3275, 0.0
      %v3308 = vmax.f32 %v3276, 0.0
      %v3309 = vmax.f32 %v3277, 0.0
      %3310 = vst.msk [vmem:[#allocation3] sm:$0xff] %vm279, 0.0
      %3311 = vst.msk [vmem:[#allocation3 + $0x8] sm:$0xff] %vm279, 0.0
      %3312 = vst.msk [vmem:[#allocation3 + $0x10] sm:$0x3] %vm282, 0.0
      %3313 = vst.msk [vmem:[#allocation3 + $0x18] sm:$0xff] %vm279, 0.0
      %3314 = vst.msk [vmem:[#allocation3 + $0x20] sm:$0xff] %vm279, 0.0
      %3315 = vst.msk [vmem:[#allocation3 + $0x28] sm:$0x3] %vm282, 0.0
      %3316 = vst.msk [vmem:[#allocation3 + $0x30] sm:$0xff] %vm279, 0.0
      %3317 = vst.msk [vmem:[#allocation3 + $0x38] sm:$0xff] %vm279, 0.0
      %3318 = vst.msk [vmem:[#allocation3 + $0x40] sm:$0x3] %vm282, 0.0
      %3319 = vst.msk [vmem:[#allocation3 + $0x48] sm:$0xff] %vm279, 0.0
      %3320 = vst.msk [vmem:[#allocation3 + $0x50] sm:$0xff] %vm279, 0.0
      %3321 = vst.msk [vmem:[#allocation3 + $0x58] sm:$0x3] %vm282, 0.0
      %3322 = vst.msk [vmem:[#allocation3 + $0x60] sm:$0xff] %vm279, 0.0
      %3323 = vst.msk [vmem:[#allocation3 + $0x68] sm:$0xff] %vm279, 0.0
      %3324 = vst.msk [vmem:[#allocation3 + $0x70] sm:$0x3] %vm282, 0.0
      %3325 = vst.msk [vmem:[#allocation3 + $0x78] sm:$0xff] %vm279, 0.0
      %3326 = vst.msk [vmem:[#allocation3 + $0x80] sm:$0xff] %vm279, 0.0
      %3327 = vst.msk [vmem:[#allocation3 + $0x88] sm:$0x3] %vm282, 0.0
      %3328 = vst.msk [vmem:[#allocation3 + $0x90] sm:$0xff] %vm279, 0.0
      %3329 = vst.msk [vmem:[#allocation3 + $0x98] sm:$0xff] %vm279, 0.0
      %3330 = vst.msk [vmem:[#allocation3 + $0xa0] sm:$0x3] %vm282, 0.0
      %3331 = vst.msk [vmem:[#allocation3 + $0xa8] sm:$0xff] %vm279, 0.0
      %3332 = vst.msk [vmem:[#allocation3 + $0xb0] sm:$0xff] %vm279, 0.0
      %3333 = vst.msk [vmem:[#allocation3 + $0xb8] sm:$0x3] %vm282, 0.0
      %3334 = vst.msk [vmem:[#allocation3 + $0xc0] sm:$0xff] %vm279, 0.0
      %3335 = vst.msk [vmem:[#allocation3 + $0xc8] sm:$0xff] %vm279, 0.0
      %3336 = vst.msk [vmem:[#allocation3 + $0xd0] sm:$0x3] %vm282, 0.0
      %3337 = vst.msk [vmem:[#allocation3 + $0xd8] sm:$0xff] %vm279, 0.0
      %3338 = vst.msk [vmem:[#allocation3 + $0xe0] sm:$0xff] %vm279, 0.0
      %3339 = vst.msk [vmem:[#allocation3 + $0xe8] sm:$0x3] %vm282, 0.0
      %3340 = vst.msk [vmem:[#allocation3 + $0xf0] sm:$0xff] %vm279, 0.0
      %3341 = vst.msk [vmem:[#allocation3 + $0xf8] sm:$0xff] %vm279, 0.0
      %3342 = vst.msk [vmem:[#allocation3 + $0x100] sm:$0x3] %vm282, 0.0
      %3343 = vst.msk [vmem:[#allocation3 + $0x108] sm:$0xff] %vm279, 0.0
      %3344 = vst.msk [vmem:[#allocation3 + $0x110] sm:$0xff] %vm279, 0.0
      %3345 = vst.msk [vmem:[#allocation3 + $0x118] sm:$0x3] %vm282, 0.0
      %3346 = vst.msk [vmem:[#allocation3 + $0x120] sm:$0xff] %vm279, 0.0
      %3347 = vst.msk [vmem:[#allocation3 + $0x128] sm:$0xff] %vm279, 0.0
      %3348 = vst.msk [vmem:[#allocation3 + $0x130] sm:$0x3] %vm282, 0.0
      %3349 = vst.msk [vmem:[#allocation3 + $0x138] sm:$0xff] %vm279, 0.0
      %3350 = vst.msk [vmem:[#allocation3 + $0x140] sm:$0xff] %vm279, 0.0
      %3351 = vst.msk [vmem:[#allocation3 + $0x148] sm:$0x3] %vm282, 0.0
      %3352 = vst.msk [vmem:[#allocation3 + $0x150] sm:$0xff] %vm279, 0.0
      %3353 = vst.msk [vmem:[#allocation3 + $0x158] sm:$0xff] %vm279, 0.0
      %3354 = vst.msk [vmem:[#allocation3 + $0x160] sm:$0x3] %vm282, 0.0
      %3355 = vst.msk [vmem:[#allocation3 + $0x168] sm:$0xff] %vm279, 0.0
      %3356 = vst.msk [vmem:[#allocation3 + $0x170] sm:$0xff] %vm279, 0.0
      %3357 = vst.msk [vmem:[#allocation3 + $0x178] sm:$0x3] %vm282, 0.0
      %3358 = vst.msk [vmem:[#allocation3 + $0x180] sm:$0xff] %vm279, 0.0
      %3359 = vst.msk [vmem:[#allocation3 + $0x188] sm:$0xff] %vm279, 0.0
      %3360 = vst.msk [vmem:[#allocation3 + $0x190] sm:$0x3] %vm282, 0.0
      %3361 = vst.msk [vmem:[#allocation3 + $0x198] sm:$0xff] %vm279, 0.0
      %3362 = vst.msk [vmem:[#allocation3 + $0x1a0] sm:$0xff] %vm279, 0.0
      %3363 = vst.msk [vmem:[#allocation3 + $0x1a8] sm:$0x3] %vm282, 0.0
      %s3364 = scalar_lea.vmem [#allocation3], 24
      %3365 = vst.msk [vmem:[%s3364 + $0x1] sm:$0xff] %vm279, %v3278
      %3366 = vst.msk [vmem:[%s3364 + $0x9] sm:$0xff] %vm279, %v3279
      %3367 = vst.msk [vmem:[%s3364 + $0x19] sm:$0xff] %vm279, %v3280
      %3368 = vst.msk [vmem:[%s3364 + $0x21] sm:$0xff] %vm279, %v3281
      %3369 = vst.msk [vmem:[%s3364 + $0x31] sm:$0xff] %vm279, %v3282
      %3370 = vst.msk [vmem:[%s3364 + $0x39] sm:$0xff] %vm279, %v3283
      %3371 = vst.msk [vmem:[%s3364 + $0x49] sm:$0xff] %vm279, %v3284
      %3372 = vst.msk [vmem:[%s3364 + $0x51] sm:$0xff] %vm279, %v3285
      %3373 = vst.msk [vmem:[%s3364 + $0x61] sm:$0xff] %vm279, %v3286
      %3374 = vst.msk [vmem:[%s3364 + $0x69] sm:$0xff] %vm279, %v3287
      %3375 = vst.msk [vmem:[%s3364 + $0x79] sm:$0xff] %vm279, %v3288
      %3376 = vst.msk [vmem:[%s3364 + $0x81] sm:$0xff] %vm279, %v3289
      %3377 = vst.msk [vmem:[%s3364 + $0x91] sm:$0xff] %vm279, %v3290
      %3378 = vst.msk [vmem:[%s3364 + $0x99] sm:$0xff] %vm279, %v3291
      %3379 = vst.msk [vmem:[%s3364 + $0xa9] sm:$0xff] %vm279, %v3292
      %3380 = vst.msk [vmem:[%s3364 + $0xb1] sm:$0xff] %vm279, %v3293
      %3381 = vst.msk [vmem:[%s3364 + $0xc1] sm:$0xff] %vm279, %v3294
      %3382 = vst.msk [vmem:[%s3364 + $0xc9] sm:$0xff] %vm279, %v3295
      %3383 = vst.msk [vmem:[%s3364 + $0xd9] sm:$0xff] %vm279, %v3296
      %3384 = vst.msk [vmem:[%s3364 + $0xe1] sm:$0xff] %vm279, %v3297
      %3385 = vst.msk [vmem:[%s3364 + $0xf1] sm:$0xff] %vm279, %v3298
      %3386 = vst.msk [vmem:[%s3364 + $0xf9] sm:$0xff] %vm279, %v3299
      %3387 = vst.msk [vmem:[%s3364 + $0x109] sm:$0xff] %vm279, %v3300
      %3388 = vst.msk [vmem:[%s3364 + $0x111] sm:$0xff] %vm279, %v3301
      %3389 = vst.msk [vmem:[%s3364 + $0x121] sm:$0xff] %vm279, %v3302
      %3390 = vst.msk [vmem:[%s3364 + $0x129] sm:$0xff] %vm279, %v3303
      %3391 = vst.msk [vmem:[%s3364 + $0x139] sm:$0xff] %vm279, %v3304
      %3392 = vst.msk [vmem:[%s3364 + $0x141] sm:$0xff] %vm279, %v3305
      %3393 = vst.msk [vmem:[%s3364 + $0x151] sm:$0xff] %vm279, %v3306
      %3394 = vst.msk [vmem:[%s3364 + $0x159] sm:$0xff] %vm279, %v3307
      %3395 = vst.msk [vmem:[%s3364 + $0x169] sm:$0xff] %vm279, %v3308
      %3396 = vst.msk [vmem:[%s3364 + $0x171] sm:$0xff] %vm279, %v3309
      %v3397 = vld [vmem:[#allocation3] sm:$0xff]
      %v3398 = vld [vmem:[#allocation3 + $0x8] sm:$0xff]
      %v3399 = vld [vmem:[#allocation3 + $0x10] sm:$0x3]
      %v3400 = vld [vmem:[#allocation3 + $0x18] sm:$0xff]
      %v3401 = vld [vmem:[#allocation3 + $0x20] sm:$0xff]
      %v3402 = vld [vmem:[#allocation3 + $0x28] sm:$0x3]
      %v3403 = vld [vmem:[#allocation3 + $0x30] sm:$0xff]
      %v3404 = vld [vmem:[#allocation3 + $0x38] sm:$0xff]
      %v3405 = vld [vmem:[#allocation3 + $0x40] sm:$0x3]
      %v3406 = vld [vmem:[#allocation3 + $0x48] sm:$0xff]
      %v3407 = vld [vmem:[#allocation3 + $0x50] sm:$0xff]
      %v3408 = vld [vmem:[#allocation3 + $0x58] sm:$0x3]
      %v3409 = vld [vmem:[#allocation3 + $0x60] sm:$0xff]
      %v3410 = vld [vmem:[#allocation3 + $0x68] sm:$0xff]
      %v3411 = vld [vmem:[#allocation3 + $0x70] sm:$0x3]
      %v3412 = vld [vmem:[#allocation3 + $0x78] sm:$0xff]
      %v3413 = vld [vmem:[#allocation3 + $0x80] sm:$0xff]
      %v3414 = vld [vmem:[#allocation3 + $0x88] sm:$0x3]
      %v3415 = vld [vmem:[#allocation3 + $0x90] sm:$0xff]
      %v3416 = vld [vmem:[#allocation3 + $0x98] sm:$0xff]
      %v3417 = vld [vmem:[#allocation3 + $0xa0] sm:$0x3]
      %v3418 = vld [vmem:[#allocation3 + $0xa8] sm:$0xff]
      %v3419 = vld [vmem:[#allocation3 + $0xb0] sm:$0xff]
      %v3420 = vld [vmem:[#allocation3 + $0xb8] sm:$0x3]
      %v3421 = vld [vmem:[#allocation3 + $0xc0] sm:$0xff]
      %v3422 = vld [vmem:[#allocation3 + $0xc8] sm:$0xff]
      %v3423 = vld [vmem:[#allocation3 + $0xd0] sm:$0x3]
      %v3424 = vld [vmem:[#allocation3 + $0xd8] sm:$0xff]
      %v3425 = vld [vmem:[#allocation3 + $0xe0] sm:$0xff]
      %v3426 = vld [vmem:[#allocation3 + $0xe8] sm:$0x3]
      %v3427 = vld [vmem:[#allocation3 + $0xf0] sm:$0xff]
      %v3428 = vld [vmem:[#allocation3 + $0xf8] sm:$0xff]
      %v3429 = vld [vmem:[#allocation3 + $0x100] sm:$0x3]
      %v3430 = vld [vmem:[#allocation3 + $0x108] sm:$0xff]
      %v3431 = vld [vmem:[#allocation3 + $0x110] sm:$0xff]
      %v3432 = vld [vmem:[#allocation3 + $0x118] sm:$0x3]
      %v3433 = vld [vmem:[#allocation3 + $0x120] sm:$0xff]
      %v3434 = vld [vmem:[#allocation3 + $0x128] sm:$0xff]
      %v3435 = vld [vmem:[#allocation3 + $0x130] sm:$0x3]
      %v3436 = vld [vmem:[#allocation3 + $0x138] sm:$0xff]
      %v3437 = vld [vmem:[#allocation3 + $0x140] sm:$0xff]
      %v3438 = vld [vmem:[#allocation3 + $0x148] sm:$0x3]
      %v3439 = vld [vmem:[#allocation3 + $0x150] sm:$0xff]
      %v3440 = vld [vmem:[#allocation3 + $0x158] sm:$0xff]
      %v3441 = vld [vmem:[#allocation3 + $0x160] sm:$0x3]
      %v3442 = vld [vmem:[#allocation3 + $0x168] sm:$0xff]
      %v3443 = vld [vmem:[#allocation3 + $0x170] sm:$0xff]
      %v3444 = vld [vmem:[#allocation3 + $0x178] sm:$0x3]
      %v3445 = vld [vmem:[#allocation3 + $0x180] sm:$0xff]
      %v3446 = vld [vmem:[#allocation3 + $0x188] sm:$0xff]
      %v3447 = vld [vmem:[#allocation3 + $0x190] sm:$0x3]
      %v3448 = vld [vmem:[#allocation3 + $0x198] sm:$0xff]
      %v3449 = vld [vmem:[#allocation3 + $0x1a0] sm:$0xff]
      %v3450 = vld [vmem:[#allocation3 + $0x1a8] sm:$0x3]
      %v3451 = vld [vmem:[%s4] sm:$0xf]
      %v3500 = vrot.slane %v3397, 1
      %v3501 = vrot.slane %v3398, 1
      %v3502 = vsel %vm503, %v3500, %v3501
      %v3503 = vrot.slane %v3399, 1
      %v3504 = vsel %vm503, %v3501, %v3503
      %v3505 = vrot.slane %v3400, 1
      %v3506 = vrot.slane %v3401, 1
      %v3507 = vsel %vm503, %v3505, %v3506
      %v3508 = vrot.slane %v3402, 1
      %v3509 = vsel %vm503, %v3506, %v3508
      %v3510 = vrot.slane %v3403, 1
      %v3511 = vrot.slane %v3404, 1
      %v3512 = vsel %vm503, %v3510, %v3511
      %v3513 = vrot.slane %v3405, 1
      %v3514 = vsel %vm503, %v3511, %v3513
      %v3515 = vrot.slane %v3406, 1
      %v3516 = vrot.slane %v3407, 1
      %v3517 = vsel %vm503, %v3515, %v3516
      %v3518 = vrot.slane %v3408, 1
      %v3519 = vsel %vm503, %v3516, %v3518
      %v3520 = vrot.slane %v3409, 1
      %v3521 = vrot.slane %v3410, 1
      %v3522 = vsel %vm503, %v3520, %v3521
      %v3523 = vrot.slane %v3411, 1
      %v3524 = vsel %vm503, %v3521, %v3523
      %v3525 = vrot.slane %v3412, 1
      %v3526 = vrot.slane %v3413, 1
      %v3527 = vsel %vm503, %v3525, %v3526
      %v3528 = vrot.slane %v3414, 1
      %v3529 = vsel %vm503, %v3526, %v3528
      %v3530 = vrot.slane %v3415, 1
      %v3531 = vrot.slane %v3416, 1
      %v3532 = vsel %vm503, %v3530, %v3531
      %v3533 = vrot.slane %v3417, 1
      %v3534 = vsel %vm503, %v3531, %v3533
      %v3535 = vrot.slane %v3418, 1
      %v3536 = vrot.slane %v3419, 1
      %v3537 = vsel %vm503, %v3535, %v3536
      %v3538 = vrot.slane %v3420, 1
      %v3539 = vsel %vm503, %v3536, %v3538
      %v3540 = vrot.slane %v3421, 1
      %v3541 = vrot.slane %v3422, 1
      %v3542 = vsel %vm503, %v3540, %v3541
      %v3543 = vrot.slane %v3423, 1
      %v3544 = vsel %vm503, %v3541, %v3543
      %v3545 = vrot.slane %v3424, 1
      %v3546 = vrot.slane %v3425, 1
      %v3547 = vsel %vm503, %v3545, %v3546
      %v3548 = vrot.slane %v3426, 1
      %v3549 = vsel %vm503, %v3546, %v3548
      %v3550 = vrot.slane %v3427, 1
      %v3551 = vrot.slane %v3428, 1
      %v3552 = vsel %vm503, %v3550, %v3551
      %v3553 = vrot.slane %v3429, 1
      %v3554 = vsel %vm503, %v3551, %v3553
      %v3555 = vrot.slane %v3430, 1
      %v3556 = vrot.slane %v3431, 1
      %v3557 = vsel %vm503, %v3555, %v3556
      %v3558 = vrot.slane %v3432, 1
      %v3559 = vsel %vm503, %v3556, %v3558
      %v3560 = vrot.slane %v3433, 1
      %v3561 = vrot.slane %v3434, 1
      %v3562 = vsel %vm503, %v3560, %v3561
      %v3563 = vrot.slane %v3435, 1
      %v3564 = vsel %vm503, %v3561, %v3563
      %v3565 = vrot.slane %v3436, 1
      %v3566 = vrot.slane %v3437, 1
      %v3567 = vsel %vm503, %v3565, %v3566
      %v3568 = vrot.slane %v3438, 1
      %v3569 = vsel %vm503, %v3566, %v3568
      %v3570 = vrot.slane %v3439, 1
      %v3571 = vrot.slane %v3440, 1
      %v3572 = vsel %vm503, %v3570, %v3571
      %v3573 = vrot.slane %v3441, 1
      %v3574 = vsel %vm503, %v3571, %v3573
      %v3575 = vrot.slane %v3442, 1
      %v3576 = vrot.slane %v3443, 1
      %v3577 = vsel %vm503, %v3575, %v3576
      %v3578 = vrot.slane %v3444, 1
      %v3579 = vsel %vm503, %v3576, %v3578
      %s3580 = scalar_lea.vmem %s4, 4
      %v3581 = vld [vmem:[%s3580] sm:$0xf]
      %v3582 = vsel %vm279, %v3502, 0
      %v3584 = vsel %vm279, %v3504, 0
      %v3586 = vsel %vm279, %v3507, 0
      %v3588 = vsel %vm279, %v3509, 0
      %v3590 = vsel %vm279, %v3512, 0
      %v3592 = vsel %vm279, %v3514, 0
      %v3594 = vsel %vm279, %v3517, 0
      %v3596 = vsel %vm279, %v3519, 0
      %v3598 = vsel %vm279, %v3522, 0
      %v3600 = vsel %vm279, %v3524, 0
      %v3602 = vsel %vm279, %v3527, 0
      %v3604 = vsel %vm279, %v3529, 0
      %v3606 = vsel %vm279, %v3532, 0
      %v3608 = vsel %vm279, %v3534, 0
      %v3610 = vsel %vm279, %v3537, 0
      %v3612 = vsel %vm279, %v3539, 0
      %v3614 = vsel %vm279, %v3542, 0
      %v3616 = vsel %vm279, %v3544, 0
      %v3618 = vsel %vm279, %v3547, 0
      %v3620 = vsel %vm279, %v3549, 0
      %v3622 = vsel %vm279, %v3552, 0
      %v3624 = vsel %vm279, %v3554, 0
      %v3626 = vsel %vm279, %v3557, 0
      %v3628 = vsel %vm279, %v3559, 0
      %v3630 = vsel %vm279, %v3562, 0
      %v3632 = vsel %vm279, %v3564, 0
      %v3634 = vsel %vm279, %v3567, 0
      %v3636 = vsel %vm279, %v3569, 0
      %v3638 = vsel %vm279, %v3572, 0
      %v3640 = vsel %vm279, %v3574, 0
      %v3642 = vsel %vm279, %v3577, 0
      %v3644 = vsel %vm279, %v3579, 0
      %v3647 = vsel %vm650, %v3581, 0
      %3649 = vmatprep.subr.mxu0 0.0
      %3650 = vmatpush1.msra.mxu0 0.0
      %3651 = vmatprep.subr.mxu0 0.0
      %3652 = vmatpush1.msra.mxu0 0.0
      %3653 = vmatprep.subr.mxu0 0.0
      %3654 = vmatpush1.msra.mxu0 0.0
      %3655 = vmatprep.subr.mxu0 0.0
      %3656 = vmatpush1.msra.mxu0 0.0
      %3657 = vmatprep.subr.mxu0 0.0
      %3658 = vmatpush1.msra.mxu0 0.0
      %3659 = vmatprep.subr.mxu0 0.0
      %3660 = vmatpush1.msra.mxu0 0.0
      %3661 = vmatprep.subr.mxu0 0.0
      %3662 = vmatpush1.msra.mxu0 0.0
      %3663 = vmatprep.subr.mxu0 0.0
      %3664 = vmatpush1.msra.mxu0 0.0
      %3665 = vmatprep.subr.mxu0 0.0
      %3666 = vmatpush1.msra.mxu0 0.0
      %3667 = vmatprep.subr.mxu0 0.0
      %3668 = vmatpush1.msra.mxu0 0.0
      %3669 = vmatprep.subr.mxu0 0.0
      %3670 = vmatpush1.msra.mxu0 0.0
      %3671 = vmatprep.subr.mxu0 0.0
      %3672 = vmatpush1.msra.mxu0 0.0
      %3673 = vmatprep.subr.mxu0 0.0
      %3674 = vmatpush1.msra.mxu0 0.0
      %3675 = vmatprep.subr.mxu0 0.0
      %3676 = vmatpush1.msra.mxu0 0.0
      %3677 = vmatprep.subr.mxu0 0.0
      %3678 = vmatpush1.msra.mxu0 0.0
      %3679 = vmatprep.subr.mxu0 0.0
      %3680 = vmatpush1.msra.mxu0 %v3647
      %3681 = vmatprep.subr.mxu0 0.0
      %3682 = vmatpush2.msra.mxu0 0.0
      %3683 = vmatprep.subr.mxu0 0.0
      %3684 = vmatpush2.msra.mxu0 0.0
      %3685 = vmatprep.subr.mxu0 0.0
      %3686 = vmatpush2.msra.mxu0 0.0
      %3687 = vmatprep.subr.mxu0 0.0
      %3688 = vmatpush2.msra.mxu0 0.0
      %3689 = vmatprep.subr.mxu0 0.0
      %3690 = vmatpush2.msra.mxu0 0.0
      %3691 = vmatprep.subr.mxu0 0.0
      %3692 = vmatpush2.msra.mxu0 0.0
      %3693 = vmatprep.subr.mxu0 0.0
      %3694 = vmatpush2.msra.mxu0 0.0
      %3695 = vmatprep.subr.mxu0 0.0
      %3696 = vmatpush2.msra.mxu0 0.0
      %3697 = vmatprep.subr.mxu0 0.0
      %3698 = vmatpush2.msra.mxu0 0.0
      %3699 = vmatprep.subr.mxu0 0.0
      %3700 = vmatpush2.msra.mxu0 0.0
      %3701 = vmatprep.subr.mxu0 0.0
      %3702 = vmatpush2.msra.mxu0 0.0
      %3703 = vmatprep.subr.mxu0 0.0
      %3704 = vmatpush2.msra.mxu0 0.0
      %3705 = vmatprep.subr.mxu0 0.0
      %3706 = vmatpush2.msra.mxu0 0.0
      %3707 = vmatprep.subr.mxu0 0.0
      %3708 = vmatpush2.msra.mxu0 0.0
      %3709 = vmatprep.subr.mxu0 0.0
      %3710 = vmatpush2.msra.mxu0 0.0
      %3711 = vmatprep.subr.mxu0 0.0
      %3712 = vmatpush2.msra.mxu0 0.0
      %3713 = vmatprep.mubr.f32.mxu0 0.0
      %3714 = vmatmul.mubr.f32.gmra.mxu0 %v3582
      %v3715 = vpop.f32.mrf.mxu0
      %v3716 = vadd.f32 0.0, %v3715
      %v3717 = vpop.f32.mrf.mxu0
      %3718 = vmatprep.mubr.f32.mxu0 0.0
      %3719 = vmatmul.mubr.f32.gmra.mxu0 %v3584
      %v3720 = vpop.f32.mrf.mxu0
      %v3721 = vadd.f32 0.0, %v3720
      %v3722 = vpop.f32.mrf.mxu0
      %3723 = vmatprep.mubr.f32.mxu0 0.0
      %3724 = vmatmul.mubr.f32.gmra.mxu0 %v3586
      %v3725 = vpop.f32.mrf.mxu0
      %v3726 = vadd.f32 0.0, %v3725
      %v3727 = vpop.f32.mrf.mxu0
      %3728 = vmatprep.mubr.f32.mxu0 0.0
      %3729 = vmatmul.mubr.f32.gmra.mxu0 %v3588
      %v3730 = vpop.f32.mrf.mxu0
      %v3731 = vadd.f32 0.0, %v3730
      %v3732 = vpop.f32.mrf.mxu0
      %3733 = vmatprep.mubr.f32.mxu0 0.0
      %3734 = vmatmul.mubr.f32.gmra.mxu0 %v3590
      %v3735 = vpop.f32.mrf.mxu0
      %v3736 = vadd.f32 0.0, %v3735
      %v3737 = vpop.f32.mrf.mxu0
      %3738 = vmatprep.mubr.f32.mxu0 0.0
      %3739 = vmatmul.mubr.f32.gmra.mxu0 %v3592
      %v3740 = vpop.f32.mrf.mxu0
      %v3741 = vadd.f32 0.0, %v3740
      %v3742 = vpop.f32.mrf.mxu0
      %3743 = vmatprep.mubr.f32.mxu0 0.0
      %3744 = vmatmul.mubr.f32.gmra.mxu0 %v3594
      %v3745 = vpop.f32.mrf.mxu0
      %v3746 = vadd.f32 0.0, %v3745
      %v3747 = vpop.f32.mrf.mxu0
      %3748 = vmatprep.mubr.f32.mxu0 0.0
      %3749 = vmatmul.mubr.f32.gmra.mxu0 %v3596
      %v3750 = vpop.f32.mrf.mxu0
      %v3751 = vadd.f32 0.0, %v3750
      %v3752 = vpop.f32.mrf.mxu0
      %3753 = vmatprep.mubr.f32.mxu0 0.0
      %3754 = vmatmul.mubr.f32.gmra.mxu0 %v3598
      %v3755 = vpop.f32.mrf.mxu0
      %v3756 = vadd.f32 0.0, %v3755
      %v3757 = vpop.f32.mrf.mxu0
      %3758 = vmatprep.mubr.f32.mxu0 0.0
      %3759 = vmatmul.mubr.f32.gmra.mxu0 %v3600
      %v3760 = vpop.f32.mrf.mxu0
      %v3761 = vadd.f32 0.0, %v3760
      %v3762 = vpop.f32.mrf.mxu0
      %3763 = vmatprep.mubr.f32.mxu0 0.0
      %3764 = vmatmul.mubr.f32.gmra.mxu0 %v3602
      %v3765 = vpop.f32.mrf.mxu0
      %v3766 = vadd.f32 0.0, %v3765
      %v3767 = vpop.f32.mrf.mxu0
      %3768 = vmatprep.mubr.f32.mxu0 0.0
      %3769 = vmatmul.mubr.f32.gmra.mxu0 %v3604
      %v3770 = vpop.f32.mrf.mxu0
      %v3771 = vadd.f32 0.0, %v3770
      %v3772 = vpop.f32.mrf.mxu0
      %3773 = vmatprep.mubr.f32.mxu0 0.0
      %3774 = vmatmul.mubr.f32.gmra.mxu0 %v3606
      %v3775 = vpop.f32.mrf.mxu0
      %v3776 = vadd.f32 0.0, %v3775
      %v3777 = vpop.f32.mrf.mxu0
      %3778 = vmatprep.mubr.f32.mxu0 0.0
      %3779 = vmatmul.mubr.f32.gmra.mxu0 %v3608
      %v3780 = vpop.f32.mrf.mxu0
      %v3781 = vadd.f32 0.0, %v3780
      %v3782 = vpop.f32.mrf.mxu0
      %3783 = vmatprep.mubr.f32.mxu0 0.0
      %3784 = vmatmul.mubr.f32.gmra.mxu0 %v3610
      %v3785 = vpop.f32.mrf.mxu0
      %v3786 = vadd.f32 0.0, %v3785
      %v3787 = vpop.f32.mrf.mxu0
      %3788 = vmatprep.mubr.f32.mxu0 0.0
      %3789 = vmatmul.mubr.f32.gmra.mxu0 %v3612
      %v3790 = vpop.f32.mrf.mxu0
      %v3791 = vadd.f32 0.0, %v3790
      %v3792 = vpop.f32.mrf.mxu0
      %3793 = vmatprep.mubr.f32.mxu0 0.0
      %3794 = vmatmul.mubr.f32.gmra.mxu0 %v3614
      %v3795 = vpop.f32.mrf.mxu0
      %v3796 = vadd.f32 0.0, %v3795
      %v3797 = vpop.f32.mrf.mxu0
      %3798 = vmatprep.mubr.f32.mxu0 0.0
      %3799 = vmatmul.mubr.f32.gmra.mxu0 %v3616
      %v3800 = vpop.f32.mrf.mxu0
      %v3801 = vadd.f32 0.0, %v3800
      %v3802 = vpop.f32.mrf.mxu0
      %3803 = vmatprep.mubr.f32.mxu0 0.0
      %3804 = vmatmul.mubr.f32.gmra.mxu0 %v3618
      %v3805 = vpop.f32.mrf.mxu0
      %v3806 = vadd.f32 0.0, %v3805
      %v3807 = vpop.f32.mrf.mxu0
      %3808 = vmatprep.mubr.f32.mxu0 0.0
      %3809 = vmatmul.mubr.f32.gmra.mxu0 %v3620
      %v3810 = vpop.f32.mrf.mxu0
      %v3811 = vadd.f32 0.0, %v3810
      %v3812 = vpop.f32.mrf.mxu0
      %3813 = vmatprep.mubr.f32.mxu0 0.0
      %3814 = vmatmul.mubr.f32.gmra.mxu0 %v3622
      %v3815 = vpop.f32.mrf.mxu0
      %v3816 = vadd.f32 0.0, %v3815
      %v3817 = vpop.f32.mrf.mxu0
      %3818 = vmatprep.mubr.f32.mxu0 0.0
      %3819 = vmatmul.mubr.f32.gmra.mxu0 %v3624
      %v3820 = vpop.f32.mrf.mxu0
      %v3821 = vadd.f32 0.0, %v3820
      %v3822 = vpop.f32.mrf.mxu0
      %3823 = vmatprep.mubr.f32.mxu0 0.0
      %3824 = vmatmul.mubr.f32.gmra.mxu0 %v3626
      %v3825 = vpop.f32.mrf.mxu0
      %v3826 = vadd.f32 0.0, %v3825
      %v3827 = vpop.f32.mrf.mxu0
      %3828 = vmatprep.mubr.f32.mxu0 0.0
      %3829 = vmatmul.mubr.f32.gmra.mxu0 %v3628
      %v3830 = vpop.f32.mrf.mxu0
      %v3831 = vadd.f32 0.0, %v3830
      %v3832 = vpop.f32.mrf.mxu0
      %3833 = vmatprep.mubr.f32.mxu0 0.0
      %3834 = vmatmul.mubr.f32.gmra.mxu0 %v3630
      %v3835 = vpop.f32.mrf.mxu0
      %v3836 = vadd.f32 0.0, %v3835
      %v3837 = vpop.f32.mrf.mxu0
      %3838 = vmatprep.mubr.f32.mxu0 0.0
      %3839 = vmatmul.mubr.f32.gmra.mxu0 %v3632
      %v3840 = vpop.f32.mrf.mxu0
      %v3841 = vadd.f32 0.0, %v3840
      %v3842 = vpop.f32.mrf.mxu0
      %3843 = vmatprep.mubr.f32.mxu0 0.0
      %3844 = vmatmul.mubr.f32.gmra.mxu0 %v3634
      %v3845 = vpop.f32.mrf.mxu0
      %v3846 = vadd.f32 0.0, %v3845
      %v3847 = vpop.f32.mrf.mxu0
      %3848 = vmatprep.mubr.f32.mxu0 0.0
      %3849 = vmatmul.mubr.f32.gmra.mxu0 %v3636
      %v3850 = vpop.f32.mrf.mxu0
      %v3851 = vadd.f32 0.0, %v3850
      %v3852 = vpop.f32.mrf.mxu0
      %3853 = vmatprep.mubr.f32.mxu0 0.0
      %3854 = vmatmul.mubr.f32.gmra.mxu0 %v3638
      %v3855 = vpop.f32.mrf.mxu0
      %v3856 = vadd.f32 0.0, %v3855
      %v3857 = vpop.f32.mrf.mxu0
      %3858 = vmatprep.mubr.f32.mxu0 0.0
      %3859 = vmatmul.mubr.f32.gmra.mxu0 %v3640
      %v3860 = vpop.f32.mrf.mxu0
      %v3861 = vadd.f32 0.0, %v3860
      %v3862 = vpop.f32.mrf.mxu0
      %3863 = vmatprep.mubr.f32.mxu0 0.0
      %3864 = vmatmul.mubr.f32.gmra.mxu0 %v3642
      %v3865 = vpop.f32.mrf.mxu0
      %v3866 = vadd.f32 0.0, %v3865
      %v3867 = vpop.f32.mrf.mxu0
      %3868 = vmatprep.mubr.f32.mxu0 0.0
      %3869 = vmatmul.mubr.f32.gmra.mxu0 %v3644
      %v3870 = vpop.f32.mrf.mxu0
      %v3871 = vadd.f32 0.0, %v3870
      %v3872 = vpop.f32.mrf.mxu0
      %3873 = vdwg.mxu0
      %v3874 = vsel %vm279, %v3397, 0
      %v3876 = vsel %vm279, %v3398, 0
      %v3878 = vsel %vm279, %v3400, 0
      %v3880 = vsel %vm279, %v3401, 0
      %v3882 = vsel %vm279, %v3403, 0
      %v3884 = vsel %vm279, %v3404, 0
      %v3886 = vsel %vm279, %v3406, 0
      %v3888 = vsel %vm279, %v3407, 0
      %v3890 = vsel %vm279, %v3409, 0
      %v3892 = vsel %vm279, %v3410, 0
      %v3894 = vsel %vm279, %v3412, 0
      %v3896 = vsel %vm279, %v3413, 0
      %v3898 = vsel %vm279, %v3415, 0
      %v3900 = vsel %vm279, %v3416, 0
      %v3902 = vsel %vm279, %v3418, 0
      %v3904 = vsel %vm279, %v3419, 0
      %v3906 = vsel %vm279, %v3421, 0
      %v3908 = vsel %vm279, %v3422, 0
      %v3910 = vsel %vm279, %v3424, 0
      %v3912 = vsel %vm279, %v3425, 0
      %v3914 = vsel %vm279, %v3427, 0
      %v3916 = vsel %vm279, %v3428, 0
      %v3918 = vsel %vm279, %v3430, 0
      %v3920 = vsel %vm279, %v3431, 0
      %v3922 = vsel %vm279, %v3433, 0
      %v3924 = vsel %vm279, %v3434, 0
      %v3926 = vsel %vm279, %v3436, 0
      %v3928 = vsel %vm279, %v3437, 0
      %v3930 = vsel %vm279, %v3439, 0
      %v3932 = vsel %vm279, %v3440, 0
      %v3934 = vsel %vm279, %v3442, 0
      %v3936 = vsel %vm279, %v3443, 0
      %v3939 = vsel %vm650, %v3451, 0
      %3941 = vmatprep.subr.mxu0 0.0
      %3942 = vmatpush1.msra.mxu0 0.0
      %3943 = vmatprep.subr.mxu0 0.0
      %3944 = vmatpush1.msra.mxu0 0.0
      %3945 = vmatprep.subr.mxu0 0.0
      %3946 = vmatpush1.msra.mxu0 0.0
      %3947 = vmatprep.subr.mxu0 0.0
      %3948 = vmatpush1.msra.mxu0 0.0
      %3949 = vmatprep.subr.mxu0 0.0
      %3950 = vmatpush1.msra.mxu0 0.0
      %3951 = vmatprep.subr.mxu0 0.0
      %3952 = vmatpush1.msra.mxu0 0.0
      %3953 = vmatprep.subr.mxu0 0.0
      %3954 = vmatpush1.msra.mxu0 0.0
      %3955 = vmatprep.subr.mxu0 0.0
      %3956 = vmatpush1.msra.mxu0 0.0
      %3957 = vmatprep.subr.mxu0 0.0
      %3958 = vmatpush1.msra.mxu0 0.0
      %3959 = vmatprep.subr.mxu0 0.0
      %3960 = vmatpush1.msra.mxu0 0.0
      %3961 = vmatprep.subr.mxu0 0.0
      %3962 = vmatpush1.msra.mxu0 0.0
      %3963 = vmatprep.subr.mxu0 0.0
      %3964 = vmatpush1.msra.mxu0 0.0
      %3965 = vmatprep.subr.mxu0 0.0
      %3966 = vmatpush1.msra.mxu0 0.0
      %3967 = vmatprep.subr.mxu0 0.0
      %3968 = vmatpush1.msra.mxu0 0.0
      %3969 = vmatprep.subr.mxu0 0.0
      %3970 = vmatpush1.msra.mxu0 0.0
      %3971 = vmatprep.subr.mxu0 0.0
      %3972 = vmatpush1.msra.mxu0 %v3939
      %3973 = vmatprep.subr.mxu0 0.0
      %3974 = vmatpush2.msra.mxu0 0.0
      %3975 = vmatprep.subr.mxu0 0.0
      %3976 = vmatpush2.msra.mxu0 0.0
      %3977 = vmatprep.subr.mxu0 0.0
      %3978 = vmatpush2.msra.mxu0 0.0
      %3979 = vmatprep.subr.mxu0 0.0
      %3980 = vmatpush2.msra.mxu0 0.0
      %3981 = vmatprep.subr.mxu0 0.0
      %3982 = vmatpush2.msra.mxu0 0.0
      %3983 = vmatprep.subr.mxu0 0.0
      %3984 = vmatpush2.msra.mxu0 0.0
      %3985 = vmatprep.subr.mxu0 0.0
      %3986 = vmatpush2.msra.mxu0 0.0
      %3987 = vmatprep.subr.mxu0 0.0
      %3988 = vmatpush2.msra.mxu0 0.0
      %3989 = vmatprep.subr.mxu0 0.0
      %3990 = vmatpush2.msra.mxu0 0.0
      %3991 = vmatprep.subr.mxu0 0.0
      %3992 = vmatpush2.msra.mxu0 0.0
      %3993 = vmatprep.subr.mxu0 0.0
      %3994 = vmatpush2.msra.mxu0 0.0
      %3995 = vmatprep.subr.mxu0 0.0
      %3996 = vmatpush2.msra.mxu0 0.0
      %3997 = vmatprep.subr.mxu0 0.0
      %3998 = vmatpush2.msra.mxu0 0.0
      %3999 = vmatprep.subr.mxu0 0.0
      %4000 = vmatpush2.msra.mxu0 0.0
      %4001 = vmatprep.subr.mxu0 0.0
      %4002 = vmatpush2.msra.mxu0 0.0
      %4003 = vmatprep.subr.mxu0 0.0
      %4004 = vmatpush2.msra.mxu0 0.0
      %4005 = vmatprep.mubr.f32.mxu0 0.0
      %4006 = vmatmul.mubr.f32.gmra.mxu0 %v3874
      %v4007 = vpop.f32.mrf.mxu0
      %v4008 = vadd.f32 %v3716, %v4007
      %v4009 = vpop.f32.mrf.mxu0
      %4010 = vmatprep.mubr.f32.mxu0 0.0
      %4011 = vmatmul.mubr.f32.gmra.mxu0 %v3876
      %v4012 = vpop.f32.mrf.mxu0
      %v4013 = vadd.f32 %v3721, %v4012
      %v4014 = vpop.f32.mrf.mxu0
      %4015 = vmatprep.mubr.f32.mxu0 0.0
      %4016 = vmatmul.mubr.f32.gmra.mxu0 %v3878
      %v4017 = vpop.f32.mrf.mxu0
      %v4018 = vadd.f32 %v3726, %v4017
      %v4019 = vpop.f32.mrf.mxu0
      %4020 = vmatprep.mubr.f32.mxu0 0.0
      %4021 = vmatmul.mubr.f32.gmra.mxu0 %v3880
      %v4022 = vpop.f32.mrf.mxu0
      %v4023 = vadd.f32 %v3731, %v4022
      %v4024 = vpop.f32.mrf.mxu0
      %4025 = vmatprep.mubr.f32.mxu0 0.0
      %4026 = vmatmul.mubr.f32.gmra.mxu0 %v3882
      %v4027 = vpop.f32.mrf.mxu0
      %v4028 = vadd.f32 %v3736, %v4027
      %v4029 = vpop.f32.mrf.mxu0
      %4030 = vmatprep.mubr.f32.mxu0 0.0
      %4031 = vmatmul.mubr.f32.gmra.mxu0 %v3884
      %v4032 = vpop.f32.mrf.mxu0
      %v4033 = vadd.f32 %v3741, %v4032
      %v4034 = vpop.f32.mrf.mxu0
      %4035 = vmatprep.mubr.f32.mxu0 0.0
      %4036 = vmatmul.mubr.f32.gmra.mxu0 %v3886
      %v4037 = vpop.f32.mrf.mxu0
      %v4038 = vadd.f32 %v3746, %v4037
      %v4039 = vpop.f32.mrf.mxu0
      %4040 = vmatprep.mubr.f32.mxu0 0.0
      %4041 = vmatmul.mubr.f32.gmra.mxu0 %v3888
      %v4042 = vpop.f32.mrf.mxu0
      %v4043 = vadd.f32 %v3751, %v4042
      %v4044 = vpop.f32.mrf.mxu0
      %4045 = vmatprep.mubr.f32.mxu0 0.0
      %4046 = vmatmul.mubr.f32.gmra.mxu0 %v3890
      %v4047 = vpop.f32.mrf.mxu0
      %v4048 = vadd.f32 %v3756, %v4047
      %v4049 = vpop.f32.mrf.mxu0
      %4050 = vmatprep.mubr.f32.mxu0 0.0
      %4051 = vmatmul.mubr.f32.gmra.mxu0 %v3892
      %v4052 = vpop.f32.mrf.mxu0
      %v4053 = vadd.f32 %v3761, %v4052
      %v4054 = vpop.f32.mrf.mxu0
      %4055 = vmatprep.mubr.f32.mxu0 0.0
      %4056 = vmatmul.mubr.f32.gmra.mxu0 %v3894
      %v4057 = vpop.f32.mrf.mxu0
      %v4058 = vadd.f32 %v3766, %v4057
      %v4059 = vpop.f32.mrf.mxu0
      %4060 = vmatprep.mubr.f32.mxu0 0.0
      %4061 = vmatmul.mubr.f32.gmra.mxu0 %v3896
      %v4062 = vpop.f32.mrf.mxu0
      %v4063 = vadd.f32 %v3771, %v4062
      %v4064 = vpop.f32.mrf.mxu0
      %4065 = vmatprep.mubr.f32.mxu0 0.0
      %4066 = vmatmul.mubr.f32.gmra.mxu0 %v3898
      %v4067 = vpop.f32.mrf.mxu0
      %v4068 = vadd.f32 %v3776, %v4067
      %v4069 = vpop.f32.mrf.mxu0
      %4070 = vmatprep.mubr.f32.mxu0 0.0
      %4071 = vmatmul.mubr.f32.gmra.mxu0 %v3900
      %v4072 = vpop.f32.mrf.mxu0
      %v4073 = vadd.f32 %v3781, %v4072
      %v4074 = vpop.f32.mrf.mxu0
      %4075 = vmatprep.mubr.f32.mxu0 0.0
      %4076 = vmatmul.mubr.f32.gmra.mxu0 %v3902
      %v4077 = vpop.f32.mrf.mxu0
      %v4078 = vadd.f32 %v3786, %v4077
      %v4079 = vpop.f32.mrf.mxu0
      %4080 = vmatprep.mubr.f32.mxu0 0.0
      %4081 = vmatmul.mubr.f32.gmra.mxu0 %v3904
      %v4082 = vpop.f32.mrf.mxu0
      %v4083 = vadd.f32 %v3791, %v4082
      %v4084 = vpop.f32.mrf.mxu0
      %4085 = vmatprep.mubr.f32.mxu0 0.0
      %4086 = vmatmul.mubr.f32.gmra.mxu0 %v3906
      %v4087 = vpop.f32.mrf.mxu0
      %v4088 = vadd.f32 %v3796, %v4087
      %v4089 = vpop.f32.mrf.mxu0
      %4090 = vmatprep.mubr.f32.mxu0 0.0
      %4091 = vmatmul.mubr.f32.gmra.mxu0 %v3908
      %v4092 = vpop.f32.mrf.mxu0
      %v4093 = vadd.f32 %v3801, %v4092
      %v4094 = vpop.f32.mrf.mxu0
      %4095 = vmatprep.mubr.f32.mxu0 0.0
      %4096 = vmatmul.mubr.f32.gmra.mxu0 %v3910
      %v4097 = vpop.f32.mrf.mxu0
      %v4098 = vadd.f32 %v3806, %v4097
      %v4099 = vpop.f32.mrf.mxu0
      %4100 = vmatprep.mubr.f32.mxu0 0.0
      %4101 = vmatmul.mubr.f32.gmra.mxu0 %v3912
      %v4102 = vpop.f32.mrf.mxu0
      %v4103 = vadd.f32 %v3811, %v4102
      %v4104 = vpop.f32.mrf.mxu0
      %4105 = vmatprep.mubr.f32.mxu0 0.0
      %4106 = vmatmul.mubr.f32.gmra.mxu0 %v3914
      %v4107 = vpop.f32.mrf.mxu0
      %v4108 = vadd.f32 %v3816, %v4107
      %v4109 = vpop.f32.mrf.mxu0
      %4110 = vmatprep.mubr.f32.mxu0 0.0
      %4111 = vmatmul.mubr.f32.gmra.mxu0 %v3916
      %v4112 = vpop.f32.mrf.mxu0
      %v4113 = vadd.f32 %v3821, %v4112
      %v4114 = vpop.f32.mrf.mxu0
      %4115 = vmatprep.mubr.f32.mxu0 0.0
      %4116 = vmatmul.mubr.f32.gmra.mxu0 %v3918
      %v4117 = vpop.f32.mrf.mxu0
      %v4118 = vadd.f32 %v3826, %v4117
      %v4119 = vpop.f32.mrf.mxu0
      %4120 = vmatprep.mubr.f32.mxu0 0.0
      %4121 = vmatmul.mubr.f32.gmra.mxu0 %v3920
      %v4122 = vpop.f32.mrf.mxu0
      %v4123 = vadd.f32 %v3831, %v4122
      %v4124 = vpop.f32.mrf.mxu0
      %4125 = vmatprep.mubr.f32.mxu0 0.0
      %4126 = vmatmul.mubr.f32.gmra.mxu0 %v3922
      %v4127 = vpop.f32.mrf.mxu0
      %v4128 = vadd.f32 %v3836, %v4127
      %v4129 = vpop.f32.mrf.mxu0
      %4130 = vmatprep.mubr.f32.mxu0 0.0
      %4131 = vmatmul.mubr.f32.gmra.mxu0 %v3924
      %v4132 = vpop.f32.mrf.mxu0
      %v4133 = vadd.f32 %v3841, %v4132
      %v4134 = vpop.f32.mrf.mxu0
      %4135 = vmatprep.mubr.f32.mxu0 0.0
      %4136 = vmatmul.mubr.f32.gmra.mxu0 %v3926
      %v4137 = vpop.f32.mrf.mxu0
      %v4138 = vadd.f32 %v3846, %v4137
      %v4139 = vpop.f32.mrf.mxu0
      %4140 = vmatprep.mubr.f32.mxu0 0.0
      %4141 = vmatmul.mubr.f32.gmra.mxu0 %v3928
      %v4142 = vpop.f32.mrf.mxu0
      %v4143 = vadd.f32 %v3851, %v4142
      %v4144 = vpop.f32.mrf.mxu0
      %4145 = vmatprep.mubr.f32.mxu0 0.0
      %4146 = vmatmul.mubr.f32.gmra.mxu0 %v3930
      %v4147 = vpop.f32.mrf.mxu0
      %v4148 = vadd.f32 %v3856, %v4147
      %v4149 = vpop.f32.mrf.mxu0
      %4150 = vmatprep.mubr.f32.mxu0 0.0
      %4151 = vmatmul.mubr.f32.gmra.mxu0 %v3932
      %v4152 = vpop.f32.mrf.mxu0
      %v4153 = vadd.f32 %v3861, %v4152
      %v4154 = vpop.f32.mrf.mxu0
      %4155 = vmatprep.mubr.f32.mxu0 0.0
      %4156 = vmatmul.mubr.f32.gmra.mxu0 %v3934
      %v4157 = vpop.f32.mrf.mxu0
      %v4158 = vadd.f32 %v3866, %v4157
      %v4159 = vpop.f32.mrf.mxu0
      %4160 = vmatprep.mubr.f32.mxu0 0.0
      %4161 = vmatmul.mubr.f32.gmra.mxu0 %v3936
      %v4162 = vpop.f32.mrf.mxu0
      %v4163 = vadd.f32 %v3871, %v4162
      %v4164 = vpop.f32.mrf.mxu0
      %4165 = vdwg.mxu0
      %v4166 = vrot.slane %v3397, 2
      %v4167 = vrot.slane %v3398, 2
      %v4168 = vsel %vm1171, %v4166, %v4167
      %v4169 = vrot.slane %v3399, 2
      %v4170 = vsel %vm1171, %v4167, %v4169
      %v4171 = vrot.slane %v3400, 2
      %v4172 = vrot.slane %v3401, 2
      %v4173 = vsel %vm1171, %v4171, %v4172
      %v4174 = vrot.slane %v3402, 2
      %v4175 = vsel %vm1171, %v4172, %v4174
      %v4176 = vrot.slane %v3403, 2
      %v4177 = vrot.slane %v3404, 2
      %v4178 = vsel %vm1171, %v4176, %v4177
      %v4179 = vrot.slane %v3405, 2
      %v4180 = vsel %vm1171, %v4177, %v4179
      %v4181 = vrot.slane %v3406, 2
      %v4182 = vrot.slane %v3407, 2
      %v4183 = vsel %vm1171, %v4181, %v4182
      %v4184 = vrot.slane %v3408, 2
      %v4185 = vsel %vm1171, %v4182, %v4184
      %v4186 = vrot.slane %v3409, 2
      %v4187 = vrot.slane %v3410, 2
      %v4188 = vsel %vm1171, %v4186, %v4187
      %v4189 = vrot.slane %v3411, 2
      %v4190 = vsel %vm1171, %v4187, %v4189
      %v4191 = vrot.slane %v3412, 2
      %v4192 = vrot.slane %v3413, 2
      %v4193 = vsel %vm1171, %v4191, %v4192
      %v4194 = vrot.slane %v3414, 2
      %v4195 = vsel %vm1171, %v4192, %v4194
      %v4196 = vrot.slane %v3415, 2
      %v4197 = vrot.slane %v3416, 2
      %v4198 = vsel %vm1171, %v4196, %v4197
      %v4199 = vrot.slane %v3417, 2
      %v4200 = vsel %vm1171, %v4197, %v4199
      %v4201 = vrot.slane %v3418, 2
      %v4202 = vrot.slane %v3419, 2
      %v4203 = vsel %vm1171, %v4201, %v4202
      %v4204 = vrot.slane %v3420, 2
      %v4205 = vsel %vm1171, %v4202, %v4204
      %v4206 = vrot.slane %v3421, 2
      %v4207 = vrot.slane %v3422, 2
      %v4208 = vsel %vm1171, %v4206, %v4207
      %v4209 = vrot.slane %v3423, 2
      %v4210 = vsel %vm1171, %v4207, %v4209
      %v4211 = vrot.slane %v3424, 2
      %v4212 = vrot.slane %v3425, 2
      %v4213 = vsel %vm1171, %v4211, %v4212
      %v4214 = vrot.slane %v3426, 2
      %v4215 = vsel %vm1171, %v4212, %v4214
      %v4216 = vrot.slane %v3427, 2
      %v4217 = vrot.slane %v3428, 2
      %v4218 = vsel %vm1171, %v4216, %v4217
      %v4219 = vrot.slane %v3429, 2
      %v4220 = vsel %vm1171, %v4217, %v4219
      %v4221 = vrot.slane %v3430, 2
      %v4222 = vrot.slane %v3431, 2
      %v4223 = vsel %vm1171, %v4221, %v4222
      %v4224 = vrot.slane %v3432, 2
      %v4225 = vsel %vm1171, %v4222, %v4224
      %v4226 = vrot.slane %v3433, 2
      %v4227 = vrot.slane %v3434, 2
      %v4228 = vsel %vm1171, %v4226, %v4227
      %v4229 = vrot.slane %v3435, 2
      %v4230 = vsel %vm1171, %v4227, %v4229
      %v4231 = vrot.slane %v3436, 2
      %v4232 = vrot.slane %v3437, 2
      %v4233 = vsel %vm1171, %v4231, %v4232
      %v4234 = vrot.slane %v3438, 2
      %v4235 = vsel %vm1171, %v4232, %v4234
      %v4236 = vrot.slane %v3439, 2
      %v4237 = vrot.slane %v3440, 2
      %v4238 = vsel %vm1171, %v4236, %v4237
      %v4239 = vrot.slane %v3441, 2
      %v4240 = vsel %vm1171, %v4237, %v4239
      %v4241 = vrot.slane %v3442, 2
      %v4242 = vrot.slane %v3443, 2
      %v4243 = vsel %vm1171, %v4241, %v4242
      %v4244 = vrot.slane %v3444, 2
      %v4245 = vsel %vm1171, %v4242, %v4244
      %s4246 = scalar_lea.vmem %s4, 8
      %v4247 = vld [vmem:[%s4246] sm:$0xf]
      %v4248 = vsel %vm279, %v4168, 0
      %v4250 = vsel %vm279, %v4170, 0
      %v4252 = vsel %vm279, %v4173, 0
      %v4254 = vsel %vm279, %v4175, 0
      %v4256 = vsel %vm279, %v4178, 0
      %v4258 = vsel %vm279, %v4180, 0
      %v4260 = vsel %vm279, %v4183, 0
      %v4262 = vsel %vm279, %v4185, 0
      %v4264 = vsel %vm279, %v4188, 0
      %v4266 = vsel %vm279, %v4190, 0
      %v4268 = vsel %vm279, %v4193, 0
      %v4270 = vsel %vm279, %v4195, 0
      %v4272 = vsel %vm279, %v4198, 0
      %v4274 = vsel %vm279, %v4200, 0
      %v4276 = vsel %vm279, %v4203, 0
      %v4278 = vsel %vm279, %v4205, 0
      %v4280 = vsel %vm279, %v4208, 0
      %v4282 = vsel %vm279, %v4210, 0
      %v4284 = vsel %vm279, %v4213, 0
      %v4286 = vsel %vm279, %v4215, 0
      %v4288 = vsel %vm279, %v4218, 0
      %v4290 = vsel %vm279, %v4220, 0
      %v4292 = vsel %vm279, %v4223, 0
      %v4294 = vsel %vm279, %v4225, 0
      %v4296 = vsel %vm279, %v4228, 0
      %v4298 = vsel %vm279, %v4230, 0
      %v4300 = vsel %vm279, %v4233, 0
      %v4302 = vsel %vm279, %v4235, 0
      %v4304 = vsel %vm279, %v4238, 0
      %v4306 = vsel %vm279, %v4240, 0
      %v4308 = vsel %vm279, %v4243, 0
      %v4310 = vsel %vm279, %v4245, 0
      %v4313 = vsel %vm650, %v4247, 0
      %4315 = vmatprep.subr.mxu0 0.0
      %4316 = vmatpush1.msra.mxu0 0.0
      %4317 = vmatprep.subr.mxu0 0.0
      %4318 = vmatpush1.msra.mxu0 0.0
      %4319 = vmatprep.subr.mxu0 0.0
      %4320 = vmatpush1.msra.mxu0 0.0
      %4321 = vmatprep.subr.mxu0 0.0
      %4322 = vmatpush1.msra.mxu0 0.0
      %4323 = vmatprep.subr.mxu0 0.0
      %4324 = vmatpush1.msra.mxu0 0.0
      %4325 = vmatprep.subr.mxu0 0.0
      %4326 = vmatpush1.msra.mxu0 0.0
      %4327 = vmatprep.subr.mxu0 0.0
      %4328 = vmatpush1.msra.mxu0 0.0
      %4329 = vmatprep.subr.mxu0 0.0
      %4330 = vmatpush1.msra.mxu0 0.0
      %4331 = vmatprep.subr.mxu0 0.0
      %4332 = vmatpush1.msra.mxu0 0.0
      %4333 = vmatprep.subr.mxu0 0.0
      %4334 = vmatpush1.msra.mxu0 0.0
      %4335 = vmatprep.subr.mxu0 0.0
      %4336 = vmatpush1.msra.mxu0 0.0
      %4337 = vmatprep.subr.mxu0 0.0
      %4338 = vmatpush1.msra.mxu0 0.0
      %4339 = vmatprep.subr.mxu0 0.0
      %4340 = vmatpush1.msra.mxu0 0.0
      %4341 = vmatprep.subr.mxu0 0.0
      %4342 = vmatpush1.msra.mxu0 0.0
      %4343 = vmatprep.subr.mxu0 0.0
      %4344 = vmatpush1.msra.mxu0 0.0
      %4345 = vmatprep.subr.mxu0 0.0
      %4346 = vmatpush1.msra.mxu0 %v4313
      %4347 = vmatprep.subr.mxu0 0.0
      %4348 = vmatpush2.msra.mxu0 0.0
      %4349 = vmatprep.subr.mxu0 0.0
      %4350 = vmatpush2.msra.mxu0 0.0
      %4351 = vmatprep.subr.mxu0 0.0
      %4352 = vmatpush2.msra.mxu0 0.0
      %4353 = vmatprep.subr.mxu0 0.0
      %4354 = vmatpush2.msra.mxu0 0.0
      %4355 = vmatprep.subr.mxu0 0.0
      %4356 = vmatpush2.msra.mxu0 0.0
      %4357 = vmatprep.subr.mxu0 0.0
      %4358 = vmatpush2.msra.mxu0 0.0
      %4359 = vmatprep.subr.mxu0 0.0
      %4360 = vmatpush2.msra.mxu0 0.0
      %4361 = vmatprep.subr.mxu0 0.0
      %4362 = vmatpush2.msra.mxu0 0.0
      %4363 = vmatprep.subr.mxu0 0.0
      %4364 = vmatpush2.msra.mxu0 0.0
      %4365 = vmatprep.subr.mxu0 0.0
      %4366 = vmatpush2.msra.mxu0 0.0
      %4367 = vmatprep.subr.mxu0 0.0
      %4368 = vmatpush2.msra.mxu0 0.0
      %4369 = vmatprep.subr.mxu0 0.0
      %4370 = vmatpush2.msra.mxu0 0.0
      %4371 = vmatprep.subr.mxu0 0.0
      %4372 = vmatpush2.msra.mxu0 0.0
      %4373 = vmatprep.subr.mxu0 0.0
      %4374 = vmatpush2.msra.mxu0 0.0
      %4375 = vmatprep.subr.mxu0 0.0
      %4376 = vmatpush2.msra.mxu0 0.0
      %4377 = vmatprep.subr.mxu0 0.0
      %4378 = vmatpush2.msra.mxu0 0.0
      %4379 = vmatprep.mubr.f32.mxu0 0.0
      %4380 = vmatmul.mubr.f32.gmra.mxu0 %v4248
      %v4381 = vpop.f32.mrf.mxu0
      %v4382 = vadd.f32 0.0, %v4381
      %v4383 = vpop.f32.mrf.mxu0
      %4384 = vmatprep.mubr.f32.mxu0 0.0
      %4385 = vmatmul.mubr.f32.gmra.mxu0 %v4250
      %v4386 = vpop.f32.mrf.mxu0
      %v4387 = vadd.f32 0.0, %v4386
      %v4388 = vpop.f32.mrf.mxu0
      %4389 = vmatprep.mubr.f32.mxu0 0.0
      %4390 = vmatmul.mubr.f32.gmra.mxu0 %v4252
      %v4391 = vpop.f32.mrf.mxu0
      %v4392 = vadd.f32 0.0, %v4391
      %v4393 = vpop.f32.mrf.mxu0
      %4394 = vmatprep.mubr.f32.mxu0 0.0
      %4395 = vmatmul.mubr.f32.gmra.mxu0 %v4254
      %v4396 = vpop.f32.mrf.mxu0
      %v4397 = vadd.f32 0.0, %v4396
      %v4398 = vpop.f32.mrf.mxu0
      %4399 = vmatprep.mubr.f32.mxu0 0.0
      %4400 = vmatmul.mubr.f32.gmra.mxu0 %v4256
      %v4401 = vpop.f32.mrf.mxu0
      %v4402 = vadd.f32 0.0, %v4401
      %v4403 = vpop.f32.mrf.mxu0
      %4404 = vmatprep.mubr.f32.mxu0 0.0
      %4405 = vmatmul.mubr.f32.gmra.mxu0 %v4258
      %v4406 = vpop.f32.mrf.mxu0
      %v4407 = vadd.f32 0.0, %v4406
      %v4408 = vpop.f32.mrf.mxu0
      %4409 = vmatprep.mubr.f32.mxu0 0.0
      %4410 = vmatmul.mubr.f32.gmra.mxu0 %v4260
      %v4411 = vpop.f32.mrf.mxu0
      %v4412 = vadd.f32 0.0, %v4411
      %v4413 = vpop.f32.mrf.mxu0
      %4414 = vmatprep.mubr.f32.mxu0 0.0
      %4415 = vmatmul.mubr.f32.gmra.mxu0 %v4262
      %v4416 = vpop.f32.mrf.mxu0
      %v4417 = vadd.f32 0.0, %v4416
      %v4418 = vpop.f32.mrf.mxu0
      %4419 = vmatprep.mubr.f32.mxu0 0.0
      %4420 = vmatmul.mubr.f32.gmra.mxu0 %v4264
      %v4421 = vpop.f32.mrf.mxu0
      %v4422 = vadd.f32 0.0, %v4421
      %v4423 = vpop.f32.mrf.mxu0
      %4424 = vmatprep.mubr.f32.mxu0 0.0
      %4425 = vmatmul.mubr.f32.gmra.mxu0 %v4266
      %v4426 = vpop.f32.mrf.mxu0
      %v4427 = vadd.f32 0.0, %v4426
      %v4428 = vpop.f32.mrf.mxu0
      %4429 = vmatprep.mubr.f32.mxu0 0.0
      %4430 = vmatmul.mubr.f32.gmra.mxu0 %v4268
      %v4431 = vpop.f32.mrf.mxu0
      %v4432 = vadd.f32 0.0, %v4431
      %v4433 = vpop.f32.mrf.mxu0
      %4434 = vmatprep.mubr.f32.mxu0 0.0
      %4435 = vmatmul.mubr.f32.gmra.mxu0 %v4270
      %v4436 = vpop.f32.mrf.mxu0
      %v4437 = vadd.f32 0.0, %v4436
      %v4438 = vpop.f32.mrf.mxu0
      %4439 = vmatprep.mubr.f32.mxu0 0.0
      %4440 = vmatmul.mubr.f32.gmra.mxu0 %v4272
      %v4441 = vpop.f32.mrf.mxu0
      %v4442 = vadd.f32 0.0, %v4441
      %v4443 = vpop.f32.mrf.mxu0
      %4444 = vmatprep.mubr.f32.mxu0 0.0
      %4445 = vmatmul.mubr.f32.gmra.mxu0 %v4274
      %v4446 = vpop.f32.mrf.mxu0
      %v4447 = vadd.f32 0.0, %v4446
      %v4448 = vpop.f32.mrf.mxu0
      %4449 = vmatprep.mubr.f32.mxu0 0.0
      %4450 = vmatmul.mubr.f32.gmra.mxu0 %v4276
      %v4451 = vpop.f32.mrf.mxu0
      %v4452 = vadd.f32 0.0, %v4451
      %v4453 = vpop.f32.mrf.mxu0
      %4454 = vmatprep.mubr.f32.mxu0 0.0
      %4455 = vmatmul.mubr.f32.gmra.mxu0 %v4278
      %v4456 = vpop.f32.mrf.mxu0
      %v4457 = vadd.f32 0.0, %v4456
      %v4458 = vpop.f32.mrf.mxu0
      %4459 = vmatprep.mubr.f32.mxu0 0.0
      %4460 = vmatmul.mubr.f32.gmra.mxu0 %v4280
      %v4461 = vpop.f32.mrf.mxu0
      %v4462 = vadd.f32 0.0, %v4461
      %v4463 = vpop.f32.mrf.mxu0
      %4464 = vmatprep.mubr.f32.mxu0 0.0
      %4465 = vmatmul.mubr.f32.gmra.mxu0 %v4282
      %v4466 = vpop.f32.mrf.mxu0
      %v4467 = vadd.f32 0.0, %v4466
      %v4468 = vpop.f32.mrf.mxu0
      %4469 = vmatprep.mubr.f32.mxu0 0.0
      %4470 = vmatmul.mubr.f32.gmra.mxu0 %v4284
      %v4471 = vpop.f32.mrf.mxu0
      %v4472 = vadd.f32 0.0, %v4471
      %v4473 = vpop.f32.mrf.mxu0
      %4474 = vmatprep.mubr.f32.mxu0 0.0
      %4475 = vmatmul.mubr.f32.gmra.mxu0 %v4286
      %v4476 = vpop.f32.mrf.mxu0
      %v4477 = vadd.f32 0.0, %v4476
      %v4478 = vpop.f32.mrf.mxu0
      %4479 = vmatprep.mubr.f32.mxu0 0.0
      %4480 = vmatmul.mubr.f32.gmra.mxu0 %v4288
      %v4481 = vpop.f32.mrf.mxu0
      %v4482 = vadd.f32 0.0, %v4481
      %v4483 = vpop.f32.mrf.mxu0
      %4484 = vmatprep.mubr.f32.mxu0 0.0
      %4485 = vmatmul.mubr.f32.gmra.mxu0 %v4290
      %v4486 = vpop.f32.mrf.mxu0
      %v4487 = vadd.f32 0.0, %v4486
      %v4488 = vpop.f32.mrf.mxu0
      %4489 = vmatprep.mubr.f32.mxu0 0.0
      %4490 = vmatmul.mubr.f32.gmra.mxu0 %v4292
      %v4491 = vpop.f32.mrf.mxu0
      %v4492 = vadd.f32 0.0, %v4491
      %v4493 = vpop.f32.mrf.mxu0
      %4494 = vmatprep.mubr.f32.mxu0 0.0
      %4495 = vmatmul.mubr.f32.gmra.mxu0 %v4294
      %v4496 = vpop.f32.mrf.mxu0
      %v4497 = vadd.f32 0.0, %v4496
      %v4498 = vpop.f32.mrf.mxu0
      %4499 = vmatprep.mubr.f32.mxu0 0.0
      %4500 = vmatmul.mubr.f32.gmra.mxu0 %v4296
      %v4501 = vpop.f32.mrf.mxu0
      %v4502 = vadd.f32 0.0, %v4501
      %v4503 = vpop.f32.mrf.mxu0
      %4504 = vmatprep.mubr.f32.mxu0 0.0
      %4505 = vmatmul.mubr.f32.gmra.mxu0 %v4298
      %v4506 = vpop.f32.mrf.mxu0
      %v4507 = vadd.f32 0.0, %v4506
      %v4508 = vpop.f32.mrf.mxu0
      %4509 = vmatprep.mubr.f32.mxu0 0.0
      %4510 = vmatmul.mubr.f32.gmra.mxu0 %v4300
      %v4511 = vpop.f32.mrf.mxu0
      %v4512 = vadd.f32 0.0, %v4511
      %v4513 = vpop.f32.mrf.mxu0
      %4514 = vmatprep.mubr.f32.mxu0 0.0
      %4515 = vmatmul.mubr.f32.gmra.mxu0 %v4302
      %v4516 = vpop.f32.mrf.mxu0
      %v4517 = vadd.f32 0.0, %v4516
      %v4518 = vpop.f32.mrf.mxu0
      %4519 = vmatprep.mubr.f32.mxu0 0.0
      %4520 = vmatmul.mubr.f32.gmra.mxu0 %v4304
      %v4521 = vpop.f32.mrf.mxu0
      %v4522 = vadd.f32 0.0, %v4521
      %v4523 = vpop.f32.mrf.mxu0
      %4524 = vmatprep.mubr.f32.mxu0 0.0
      %4525 = vmatmul.mubr.f32.gmra.mxu0 %v4306
      %v4526 = vpop.f32.mrf.mxu0
      %v4527 = vadd.f32 0.0, %v4526
      %v4528 = vpop.f32.mrf.mxu0
      %4529 = vmatprep.mubr.f32.mxu0 0.0
      %4530 = vmatmul.mubr.f32.gmra.mxu0 %v4308
      %v4531 = vpop.f32.mrf.mxu0
      %v4532 = vadd.f32 0.0, %v4531
      %v4533 = vpop.f32.mrf.mxu0
      %4534 = vmatprep.mubr.f32.mxu0 0.0
      %4535 = vmatmul.mubr.f32.gmra.mxu0 %v4310
      %v4536 = vpop.f32.mrf.mxu0
      %v4537 = vadd.f32 0.0, %v4536
      %v4538 = vpop.f32.mrf.mxu0
      %4539 = vdwg.mxu0
      %v4540 = vadd.f32 %v4008, %v4382
      %v4541 = vadd.f32 %v4013, %v4387
      %v4542 = vadd.f32 %v4018, %v4392
      %v4543 = vadd.f32 %v4023, %v4397
      %v4544 = vadd.f32 %v4028, %v4402
      %v4545 = vadd.f32 %v4033, %v4407
      %v4546 = vadd.f32 %v4038, %v4412
      %v4547 = vadd.f32 %v4043, %v4417
      %v4548 = vadd.f32 %v4048, %v4422
      %v4549 = vadd.f32 %v4053, %v4427
      %v4550 = vadd.f32 %v4058, %v4432
      %v4551 = vadd.f32 %v4063, %v4437
      %v4552 = vadd.f32 %v4068, %v4442
      %v4553 = vadd.f32 %v4073, %v4447
      %v4554 = vadd.f32 %v4078, %v4452
      %v4555 = vadd.f32 %v4083, %v4457
      %v4556 = vadd.f32 %v4088, %v4462
      %v4557 = vadd.f32 %v4093, %v4467
      %v4558 = vadd.f32 %v4098, %v4472
      %v4559 = vadd.f32 %v4103, %v4477
      %v4560 = vadd.f32 %v4108, %v4482
      %v4561 = vadd.f32 %v4113, %v4487
      %v4562 = vadd.f32 %v4118, %v4492
      %v4563 = vadd.f32 %v4123, %v4497
      %v4564 = vadd.f32 %v4128, %v4502
      %v4565 = vadd.f32 %v4133, %v4507
      %v4566 = vadd.f32 %v4138, %v4512
      %v4567 = vadd.f32 %v4143, %v4517
      %v4568 = vadd.f32 %v4148, %v4522
      %v4569 = vadd.f32 %v4153, %v4527
      %v4570 = vadd.f32 %v4158, %v4532
      %v4571 = vadd.f32 %v4163, %v4537
      %s4572 = scalar_lea.vmem %s4, 12
      %v4573 = vld [vmem:[%s4572] sm:$0xf]
      %v4575 = vsel %vm279, %v3445, 0
      %v4578 = vsel %vm279, %v3446, 0
      %v4581 = vsel %vm650, %v4573, 0
      %4583 = vmatprep.subr.mxu0 0.0
      %4584 = vmatpush1.msra.mxu0 0.0
      %4585 = vmatprep.subr.mxu0 0.0
      %4586 = vmatpush1.msra.mxu0 0.0
      %4587 = vmatprep.subr.mxu0 0.0
      %4588 = vmatpush1.msra.mxu0 0.0
      %4589 = vmatprep.subr.mxu0 0.0
      %4590 = vmatpush1.msra.mxu0 0.0
      %4591 = vmatprep.subr.mxu0 0.0
      %4592 = vmatpush1.msra.mxu0 0.0
      %4593 = vmatprep.subr.mxu0 0.0
      %4594 = vmatpush1.msra.mxu0 0.0
      %4595 = vmatprep.subr.mxu0 0.0
      %4596 = vmatpush1.msra.mxu0 0.0
      %4597 = vmatprep.subr.mxu0 0.0
      %4598 = vmatpush1.msra.mxu0 0.0
      %4599 = vmatprep.subr.mxu0 0.0
      %4600 = vmatpush1.msra.mxu0 0.0
      %4601 = vmatprep.subr.mxu0 0.0
      %4602 = vmatpush1.msra.mxu0 0.0
      %4603 = vmatprep.subr.mxu0 0.0
      %4604 = vmatpush1.msra.mxu0 0.0
      %4605 = vmatprep.subr.mxu0 0.0
      %4606 = vmatpush1.msra.mxu0 0.0
      %4607 = vmatprep.subr.mxu0 0.0
      %4608 = vmatpush1.msra.mxu0 0.0
      %4609 = vmatprep.subr.mxu0 0.0
      %4610 = vmatpush1.msra.mxu0 0.0
      %4611 = vmatprep.subr.mxu0 0.0
      %4612 = vmatpush1.msra.mxu0 0.0
      %4613 = vmatprep.subr.mxu0 0.0
      %4614 = vmatpush1.msra.mxu0 %v4581
      %4615 = vmatprep.subr.mxu0 0.0
      %4616 = vmatpush2.msra.mxu0 0.0
      %4617 = vmatprep.subr.mxu0 0.0
      %4618 = vmatpush2.msra.mxu0 0.0
      %4619 = vmatprep.subr.mxu0 0.0
      %4620 = vmatpush2.msra.mxu0 0.0
      %4621 = vmatprep.subr.mxu0 0.0
      %4622 = vmatpush2.msra.mxu0 0.0
      %4623 = vmatprep.subr.mxu0 0.0
      %4624 = vmatpush2.msra.mxu0 0.0
      %4625 = vmatprep.subr.mxu0 0.0
      %4626 = vmatpush2.msra.mxu0 0.0
      %4627 = vmatprep.subr.mxu0 0.0
      %4628 = vmatpush2.msra.mxu0 0.0
      %4629 = vmatprep.subr.mxu0 0.0
      %4630 = vmatpush2.msra.mxu0 0.0
      %4631 = vmatprep.subr.mxu0 0.0
      %4632 = vmatpush2.msra.mxu0 0.0
      %4633 = vmatprep.subr.mxu0 0.0
      %4634 = vmatpush2.msra.mxu0 0.0
      %4635 = vmatprep.subr.mxu0 0.0
      %4636 = vmatpush2.msra.mxu0 0.0
      %4637 = vmatprep.subr.mxu0 0.0
      %4638 = vmatpush2.msra.mxu0 0.0
      %4639 = vmatprep.subr.mxu0 0.0
      %4640 = vmatpush2.msra.mxu0 0.0
      %4641 = vmatprep.subr.mxu0 0.0
      %4642 = vmatpush2.msra.mxu0 0.0
      %4643 = vmatprep.subr.mxu0 0.0
      %4644 = vmatpush2.msra.mxu0 0.0
      %4645 = vmatprep.subr.mxu0 0.0
      %4646 = vmatpush2.msra.mxu0 0.0
      %4647 = vmatprep.mubr.f32.mxu0 0.0
      %4648 = vmatmul.mubr.f32.gmra.mxu0 %v3878
      %v4649 = vpop.f32.mrf.mxu0
      %v4650 = vadd.f32 0.0, %v4649
      %v4651 = vpop.f32.mrf.mxu0
      %4652 = vmatprep.mubr.f32.mxu0 0.0
      %4653 = vmatmul.mubr.f32.gmra.mxu0 %v3880
      %v4654 = vpop.f32.mrf.mxu0
      %v4655 = vadd.f32 0.0, %v4654
      %v4656 = vpop.f32.mrf.mxu0
      %4657 = vmatprep.mubr.f32.mxu0 0.0
      %4658 = vmatmul.mubr.f32.gmra.mxu0 %v3882
      %v4659 = vpop.f32.mrf.mxu0
      %v4660 = vadd.f32 0.0, %v4659
      %v4661 = vpop.f32.mrf.mxu0
      %4662 = vmatprep.mubr.f32.mxu0 0.0
      %4663 = vmatmul.mubr.f32.gmra.mxu0 %v3884
      %v4664 = vpop.f32.mrf.mxu0
      %v4665 = vadd.f32 0.0, %v4664
      %v4666 = vpop.f32.mrf.mxu0
      %4667 = vmatprep.mubr.f32.mxu0 0.0
      %4668 = vmatmul.mubr.f32.gmra.mxu0 %v3886
      %v4669 = vpop.f32.mrf.mxu0
      %v4670 = vadd.f32 0.0, %v4669
      %v4671 = vpop.f32.mrf.mxu0
      %4672 = vmatprep.mubr.f32.mxu0 0.0
      %4673 = vmatmul.mubr.f32.gmra.mxu0 %v3888
      %v4674 = vpop.f32.mrf.mxu0
      %v4675 = vadd.f32 0.0, %v4674
      %v4676 = vpop.f32.mrf.mxu0
      %4677 = vmatprep.mubr.f32.mxu0 0.0
      %4678 = vmatmul.mubr.f32.gmra.mxu0 %v3890
      %v4679 = vpop.f32.mrf.mxu0
      %v4680 = vadd.f32 0.0, %v4679
      %v4681 = vpop.f32.mrf.mxu0
      %4682 = vmatprep.mubr.f32.mxu0 0.0
      %4683 = vmatmul.mubr.f32.gmra.mxu0 %v3892
      %v4684 = vpop.f32.mrf.mxu0
      %v4685 = vadd.f32 0.0, %v4684
      %v4686 = vpop.f32.mrf.mxu0
      %4687 = vmatprep.mubr.f32.mxu0 0.0
      %4688 = vmatmul.mubr.f32.gmra.mxu0 %v3894
      %v4689 = vpop.f32.mrf.mxu0
      %v4690 = vadd.f32 0.0, %v4689
      %v4691 = vpop.f32.mrf.mxu0
      %4692 = vmatprep.mubr.f32.mxu0 0.0
      %4693 = vmatmul.mubr.f32.gmra.mxu0 %v3896
      %v4694 = vpop.f32.mrf.mxu0
      %v4695 = vadd.f32 0.0, %v4694
      %v4696 = vpop.f32.mrf.mxu0
      %4697 = vmatprep.mubr.f32.mxu0 0.0
      %4698 = vmatmul.mubr.f32.gmra.mxu0 %v3898
      %v4699 = vpop.f32.mrf.mxu0
      %v4700 = vadd.f32 0.0, %v4699
      %v4701 = vpop.f32.mrf.mxu0
      %4702 = vmatprep.mubr.f32.mxu0 0.0
      %4703 = vmatmul.mubr.f32.gmra.mxu0 %v3900
      %v4704 = vpop.f32.mrf.mxu0
      %v4705 = vadd.f32 0.0, %v4704
      %v4706 = vpop.f32.mrf.mxu0
      %4707 = vmatprep.mubr.f32.mxu0 0.0
      %4708 = vmatmul.mubr.f32.gmra.mxu0 %v3902
      %v4709 = vpop.f32.mrf.mxu0
      %v4710 = vadd.f32 0.0, %v4709
      %v4711 = vpop.f32.mrf.mxu0
      %4712 = vmatprep.mubr.f32.mxu0 0.0
      %4713 = vmatmul.mubr.f32.gmra.mxu0 %v3904
      %v4714 = vpop.f32.mrf.mxu0
      %v4715 = vadd.f32 0.0, %v4714
      %v4716 = vpop.f32.mrf.mxu0
      %4717 = vmatprep.mubr.f32.mxu0 0.0
      %4718 = vmatmul.mubr.f32.gmra.mxu0 %v3906
      %v4719 = vpop.f32.mrf.mxu0
      %v4720 = vadd.f32 0.0, %v4719
      %v4721 = vpop.f32.mrf.mxu0
      %4722 = vmatprep.mubr.f32.mxu0 0.0
      %4723 = vmatmul.mubr.f32.gmra.mxu0 %v3908
      %v4724 = vpop.f32.mrf.mxu0
      %v4725 = vadd.f32 0.0, %v4724
      %v4726 = vpop.f32.mrf.mxu0
      %4727 = vmatprep.mubr.f32.mxu0 0.0
      %4728 = vmatmul.mubr.f32.gmra.mxu0 %v3910
      %v4729 = vpop.f32.mrf.mxu0
      %v4730 = vadd.f32 0.0, %v4729
      %v4731 = vpop.f32.mrf.mxu0
      %4732 = vmatprep.mubr.f32.mxu0 0.0
      %4733 = vmatmul.mubr.f32.gmra.mxu0 %v3912
      %v4734 = vpop.f32.mrf.mxu0
      %v4735 = vadd.f32 0.0, %v4734
      %v4736 = vpop.f32.mrf.mxu0
      %4737 = vmatprep.mubr.f32.mxu0 0.0
      %4738 = vmatmul.mubr.f32.gmra.mxu0 %v3914
      %v4739 = vpop.f32.mrf.mxu0
      %v4740 = vadd.f32 0.0, %v4739
      %v4741 = vpop.f32.mrf.mxu0
      %4742 = vmatprep.mubr.f32.mxu0 0.0
      %4743 = vmatmul.mubr.f32.gmra.mxu0 %v3916
      %v4744 = vpop.f32.mrf.mxu0
      %v4745 = vadd.f32 0.0, %v4744
      %v4746 = vpop.f32.mrf.mxu0
      %4747 = vmatprep.mubr.f32.mxu0 0.0
      %4748 = vmatmul.mubr.f32.gmra.mxu0 %v3918
      %v4749 = vpop.f32.mrf.mxu0
      %v4750 = vadd.f32 0.0, %v4749
      %v4751 = vpop.f32.mrf.mxu0
      %4752 = vmatprep.mubr.f32.mxu0 0.0
      %4753 = vmatmul.mubr.f32.gmra.mxu0 %v3920
      %v4754 = vpop.f32.mrf.mxu0
      %v4755 = vadd.f32 0.0, %v4754
      %v4756 = vpop.f32.mrf.mxu0
      %4757 = vmatprep.mubr.f32.mxu0 0.0
      %4758 = vmatmul.mubr.f32.gmra.mxu0 %v3922
      %v4759 = vpop.f32.mrf.mxu0
      %v4760 = vadd.f32 0.0, %v4759
      %v4761 = vpop.f32.mrf.mxu0
      %4762 = vmatprep.mubr.f32.mxu0 0.0
      %4763 = vmatmul.mubr.f32.gmra.mxu0 %v3924
      %v4764 = vpop.f32.mrf.mxu0
      %v4765 = vadd.f32 0.0, %v4764
      %v4766 = vpop.f32.mrf.mxu0
      %4767 = vmatprep.mubr.f32.mxu0 0.0
      %4768 = vmatmul.mubr.f32.gmra.mxu0 %v3926
      %v4769 = vpop.f32.mrf.mxu0
      %v4770 = vadd.f32 0.0, %v4769
      %v4771 = vpop.f32.mrf.mxu0
      %4772 = vmatprep.mubr.f32.mxu0 0.0
      %4773 = vmatmul.mubr.f32.gmra.mxu0 %v3928
      %v4774 = vpop.f32.mrf.mxu0
      %v4775 = vadd.f32 0.0, %v4774
      %v4776 = vpop.f32.mrf.mxu0
      %4777 = vmatprep.mubr.f32.mxu0 0.0
      %4778 = vmatmul.mubr.f32.gmra.mxu0 %v3930
      %v4779 = vpop.f32.mrf.mxu0
      %v4780 = vadd.f32 0.0, %v4779
      %v4781 = vpop.f32.mrf.mxu0
      %4782 = vmatprep.mubr.f32.mxu0 0.0
      %4783 = vmatmul.mubr.f32.gmra.mxu0 %v3932
      %v4784 = vpop.f32.mrf.mxu0
      %v4785 = vadd.f32 0.0, %v4784
      %v4786 = vpop.f32.mrf.mxu0
      %4787 = vmatprep.mubr.f32.mxu0 0.0
      %4788 = vmatmul.mubr.f32.gmra.mxu0 %v3934
      %v4789 = vpop.f32.mrf.mxu0
      %v4790 = vadd.f32 0.0, %v4789
      %v4791 = vpop.f32.mrf.mxu0
      %4792 = vmatprep.mubr.f32.mxu0 0.0
      %4793 = vmatmul.mubr.f32.gmra.mxu0 %v3936
      %v4794 = vpop.f32.mrf.mxu0
      %v4795 = vadd.f32 0.0, %v4794
      %v4796 = vpop.f32.mrf.mxu0
      %4797 = vmatprep.mubr.f32.mxu0 0.0
      %4798 = vmatmul.mubr.f32.gmra.mxu0 %v4575
      %v4799 = vpop.f32.mrf.mxu0
      %v4800 = vadd.f32 0.0, %v4799
      %v4801 = vpop.f32.mrf.mxu0
      %4802 = vmatprep.mubr.f32.mxu0 0.0
      %4803 = vmatmul.mubr.f32.gmra.mxu0 %v4578
      %v4804 = vpop.f32.mrf.mxu0
      %v4805 = vadd.f32 0.0, %v4804
      %v4806 = vpop.f32.mrf.mxu0
      %4807 = vdwg.mxu0
      %v4808 = vadd.f32 %v4540, %v4650
      %v4809 = vadd.f32 %v4541, %v4655
      %v4810 = vadd.f32 %v4542, %v4660
      %v4811 = vadd.f32 %v4543, %v4665
      %v4812 = vadd.f32 %v4544, %v4670
      %v4813 = vadd.f32 %v4545, %v4675
      %v4814 = vadd.f32 %v4546, %v4680
      %v4815 = vadd.f32 %v4547, %v4685
      %v4816 = vadd.f32 %v4548, %v4690
      %v4817 = vadd.f32 %v4549, %v4695
      %v4818 = vadd.f32 %v4550, %v4700
      %v4819 = vadd.f32 %v4551, %v4705
      %v4820 = vadd.f32 %v4552, %v4710
      %v4821 = vadd.f32 %v4553, %v4715
      %v4822 = vadd.f32 %v4554, %v4720
      %v4823 = vadd.f32 %v4555, %v4725
      %v4824 = vadd.f32 %v4556, %v4730
      %v4825 = vadd.f32 %v4557, %v4735
      %v4826 = vadd.f32 %v4558, %v4740
      %v4827 = vadd.f32 %v4559, %v4745
      %v4828 = vadd.f32 %v4560, %v4750
      %v4829 = vadd.f32 %v4561, %v4755
      %v4830 = vadd.f32 %v4562, %v4760
      %v4831 = vadd.f32 %v4563, %v4765
      %v4832 = vadd.f32 %v4564, %v4770
      %v4833 = vadd.f32 %v4565, %v4775
      %v4834 = vadd.f32 %v4566, %v4780
      %v4835 = vadd.f32 %v4567, %v4785
      %v4836 = vadd.f32 %v4568, %v4790
      %v4837 = vadd.f32 %v4569, %v4795
      %v4838 = vadd.f32 %v4570, %v4800
      %v4839 = vadd.f32 %v4571, %v4805
      %v4841 = vrot.slane %v3445, 1
      %v4842 = vrot.slane %v3446, 1
      %v4843 = vsel %vm503, %v4841, %v4842
      %v4844 = vrot.slane %v3447, 1
      %v4845 = vsel %vm503, %v4842, %v4844
      %s4846 = scalar_lea.vmem %s4, 16
      %v4847 = vld [vmem:[%s4846] sm:$0xf]
      %v4848 = vsel %vm279, %v4843, 0
      %v4850 = vsel %vm279, %v4845, 0
      %v4853 = vsel %vm650, %v4847, 0
      %4855 = vmatprep.subr.mxu0 0.0
      %4856 = vmatpush1.msra.mxu0 0.0
      %4857 = vmatprep.subr.mxu0 0.0
      %4858 = vmatpush1.msra.mxu0 0.0
      %4859 = vmatprep.subr.mxu0 0.0
      %4860 = vmatpush1.msra.mxu0 0.0
      %4861 = vmatprep.subr.mxu0 0.0
      %4862 = vmatpush1.msra.mxu0 0.0
      %4863 = vmatprep.subr.mxu0 0.0
      %4864 = vmatpush1.msra.mxu0 0.0
      %4865 = vmatprep.subr.mxu0 0.0
      %4866 = vmatpush1.msra.mxu0 0.0
      %4867 = vmatprep.subr.mxu0 0.0
      %4868 = vmatpush1.msra.mxu0 0.0
      %4869 = vmatprep.subr.mxu0 0.0
      %4870 = vmatpush1.msra.mxu0 0.0
      %4871 = vmatprep.subr.mxu0 0.0
      %4872 = vmatpush1.msra.mxu0 0.0
      %4873 = vmatprep.subr.mxu0 0.0
      %4874 = vmatpush1.msra.mxu0 0.0
      %4875 = vmatprep.subr.mxu0 0.0
      %4876 = vmatpush1.msra.mxu0 0.0
      %4877 = vmatprep.subr.mxu0 0.0
      %4878 = vmatpush1.msra.mxu0 0.0
      %4879 = vmatprep.subr.mxu0 0.0
      %4880 = vmatpush1.msra.mxu0 0.0
      %4881 = vmatprep.subr.mxu0 0.0
      %4882 = vmatpush1.msra.mxu0 0.0
      %4883 = vmatprep.subr.mxu0 0.0
      %4884 = vmatpush1.msra.mxu0 0.0
      %4885 = vmatprep.subr.mxu0 0.0
      %4886 = vmatpush1.msra.mxu0 %v4853
      %4887 = vmatprep.subr.mxu0 0.0
      %4888 = vmatpush2.msra.mxu0 0.0
      %4889 = vmatprep.subr.mxu0 0.0
      %4890 = vmatpush2.msra.mxu0 0.0
      %4891 = vmatprep.subr.mxu0 0.0
      %4892 = vmatpush2.msra.mxu0 0.0
      %4893 = vmatprep.subr.mxu0 0.0
      %4894 = vmatpush2.msra.mxu0 0.0
      %4895 = vmatprep.subr.mxu0 0.0
      %4896 = vmatpush2.msra.mxu0 0.0
      %4897 = vmatprep.subr.mxu0 0.0
      %4898 = vmatpush2.msra.mxu0 0.0
      %4899 = vmatprep.subr.mxu0 0.0
      %4900 = vmatpush2.msra.mxu0 0.0
      %4901 = vmatprep.subr.mxu0 0.0
      %4902 = vmatpush2.msra.mxu0 0.0
      %4903 = vmatprep.subr.mxu0 0.0
      %4904 = vmatpush2.msra.mxu0 0.0
      %4905 = vmatprep.subr.mxu0 0.0
      %4906 = vmatpush2.msra.mxu0 0.0
      %4907 = vmatprep.subr.mxu0 0.0
      %4908 = vmatpush2.msra.mxu0 0.0
      %4909 = vmatprep.subr.mxu0 0.0
      %4910 = vmatpush2.msra.mxu0 0.0
      %4911 = vmatprep.subr.mxu0 0.0
      %4912 = vmatpush2.msra.mxu0 0.0
      %4913 = vmatprep.subr.mxu0 0.0
      %4914 = vmatpush2.msra.mxu0 0.0
      %4915 = vmatprep.subr.mxu0 0.0
      %4916 = vmatpush2.msra.mxu0 0.0
      %4917 = vmatprep.subr.mxu0 0.0
      %4918 = vmatpush2.msra.mxu0 0.0
      %4919 = vmatprep.mubr.f32.mxu0 0.0
      %4920 = vmatmul.mubr.f32.gmra.mxu0 %v3586
      %v4921 = vpop.f32.mrf.mxu0
      %v4922 = vadd.f32 0.0, %v4921
      %v4923 = vpop.f32.mrf.mxu0
      %4924 = vmatprep.mubr.f32.mxu0 0.0
      %4925 = vmatmul.mubr.f32.gmra.mxu0 %v3588
      %v4926 = vpop.f32.mrf.mxu0
      %v4927 = vadd.f32 0.0, %v4926
      %v4928 = vpop.f32.mrf.mxu0
      %4929 = vmatprep.mubr.f32.mxu0 0.0
      %4930 = vmatmul.mubr.f32.gmra.mxu0 %v3590
      %v4931 = vpop.f32.mrf.mxu0
      %v4932 = vadd.f32 0.0, %v4931
      %v4933 = vpop.f32.mrf.mxu0
      %4934 = vmatprep.mubr.f32.mxu0 0.0
      %4935 = vmatmul.mubr.f32.gmra.mxu0 %v3592
      %v4936 = vpop.f32.mrf.mxu0
      %v4937 = vadd.f32 0.0, %v4936
      %v4938 = vpop.f32.mrf.mxu0
      %4939 = vmatprep.mubr.f32.mxu0 0.0
      %4940 = vmatmul.mubr.f32.gmra.mxu0 %v3594
      %v4941 = vpop.f32.mrf.mxu0
      %v4942 = vadd.f32 0.0, %v4941
      %v4943 = vpop.f32.mrf.mxu0
      %4944 = vmatprep.mubr.f32.mxu0 0.0
      %4945 = vmatmul.mubr.f32.gmra.mxu0 %v3596
      %v4946 = vpop.f32.mrf.mxu0
      %v4947 = vadd.f32 0.0, %v4946
      %v4948 = vpop.f32.mrf.mxu0
      %4949 = vmatprep.mubr.f32.mxu0 0.0
      %4950 = vmatmul.mubr.f32.gmra.mxu0 %v3598
      %v4951 = vpop.f32.mrf.mxu0
      %v4952 = vadd.f32 0.0, %v4951
      %v4953 = vpop.f32.mrf.mxu0
      %4954 = vmatprep.mubr.f32.mxu0 0.0
      %4955 = vmatmul.mubr.f32.gmra.mxu0 %v3600
      %v4956 = vpop.f32.mrf.mxu0
      %v4957 = vadd.f32 0.0, %v4956
      %v4958 = vpop.f32.mrf.mxu0
      %4959 = vmatprep.mubr.f32.mxu0 0.0
      %4960 = vmatmul.mubr.f32.gmra.mxu0 %v3602
      %v4961 = vpop.f32.mrf.mxu0
      %v4962 = vadd.f32 0.0, %v4961
      %v4963 = vpop.f32.mrf.mxu0
      %4964 = vmatprep.mubr.f32.mxu0 0.0
      %4965 = vmatmul.mubr.f32.gmra.mxu0 %v3604
      %v4966 = vpop.f32.mrf.mxu0
      %v4967 = vadd.f32 0.0, %v4966
      %v4968 = vpop.f32.mrf.mxu0
      %4969 = vmatprep.mubr.f32.mxu0 0.0
      %4970 = vmatmul.mubr.f32.gmra.mxu0 %v3606
      %v4971 = vpop.f32.mrf.mxu0
      %v4972 = vadd.f32 0.0, %v4971
      %v4973 = vpop.f32.mrf.mxu0
      %4974 = vmatprep.mubr.f32.mxu0 0.0
      %4975 = vmatmul.mubr.f32.gmra.mxu0 %v3608
      %v4976 = vpop.f32.mrf.mxu0
      %v4977 = vadd.f32 0.0, %v4976
      %v4978 = vpop.f32.mrf.mxu0
      %4979 = vmatprep.mubr.f32.mxu0 0.0
      %4980 = vmatmul.mubr.f32.gmra.mxu0 %v3610
      %v4981 = vpop.f32.mrf.mxu0
      %v4982 = vadd.f32 0.0, %v4981
      %v4983 = vpop.f32.mrf.mxu0
      %4984 = vmatprep.mubr.f32.mxu0 0.0
      %4985 = vmatmul.mubr.f32.gmra.mxu0 %v3612
      %v4986 = vpop.f32.mrf.mxu0
      %v4987 = vadd.f32 0.0, %v4986
      %v4988 = vpop.f32.mrf.mxu0
      %4989 = vmatprep.mubr.f32.mxu0 0.0
      %4990 = vmatmul.mubr.f32.gmra.mxu0 %v3614
      %v4991 = vpop.f32.mrf.mxu0
      %v4992 = vadd.f32 0.0, %v4991
      %v4993 = vpop.f32.mrf.mxu0
      %4994 = vmatprep.mubr.f32.mxu0 0.0
      %4995 = vmatmul.mubr.f32.gmra.mxu0 %v3616
      %v4996 = vpop.f32.mrf.mxu0
      %v4997 = vadd.f32 0.0, %v4996
      %v4998 = vpop.f32.mrf.mxu0
      %4999 = vmatprep.mubr.f32.mxu0 0.0
      %5000 = vmatmul.mubr.f32.gmra.mxu0 %v3618
      %v5001 = vpop.f32.mrf.mxu0
      %v5002 = vadd.f32 0.0, %v5001
      %v5003 = vpop.f32.mrf.mxu0
      %5004 = vmatprep.mubr.f32.mxu0 0.0
      %5005 = vmatmul.mubr.f32.gmra.mxu0 %v3620
      %v5006 = vpop.f32.mrf.mxu0
      %v5007 = vadd.f32 0.0, %v5006
      %v5008 = vpop.f32.mrf.mxu0
      %5009 = vmatprep.mubr.f32.mxu0 0.0
      %5010 = vmatmul.mubr.f32.gmra.mxu0 %v3622
      %v5011 = vpop.f32.mrf.mxu0
      %v5012 = vadd.f32 0.0, %v5011
      %v5013 = vpop.f32.mrf.mxu0
      %5014 = vmatprep.mubr.f32.mxu0 0.0
      %5015 = vmatmul.mubr.f32.gmra.mxu0 %v3624
      %v5016 = vpop.f32.mrf.mxu0
      %v5017 = vadd.f32 0.0, %v5016
      %v5018 = vpop.f32.mrf.mxu0
      %5019 = vmatprep.mubr.f32.mxu0 0.0
      %5020 = vmatmul.mubr.f32.gmra.mxu0 %v3626
      %v5021 = vpop.f32.mrf.mxu0
      %v5022 = vadd.f32 0.0, %v5021
      %v5023 = vpop.f32.mrf.mxu0
      %5024 = vmatprep.mubr.f32.mxu0 0.0
      %5025 = vmatmul.mubr.f32.gmra.mxu0 %v3628
      %v5026 = vpop.f32.mrf.mxu0
      %v5027 = vadd.f32 0.0, %v5026
      %v5028 = vpop.f32.mrf.mxu0
      %5029 = vmatprep.mubr.f32.mxu0 0.0
      %5030 = vmatmul.mubr.f32.gmra.mxu0 %v3630
      %v5031 = vpop.f32.mrf.mxu0
      %v5032 = vadd.f32 0.0, %v5031
      %v5033 = vpop.f32.mrf.mxu0
      %5034 = vmatprep.mubr.f32.mxu0 0.0
      %5035 = vmatmul.mubr.f32.gmra.mxu0 %v3632
      %v5036 = vpop.f32.mrf.mxu0
      %v5037 = vadd.f32 0.0, %v5036
      %v5038 = vpop.f32.mrf.mxu0
      %5039 = vmatprep.mubr.f32.mxu0 0.0
      %5040 = vmatmul.mubr.f32.gmra.mxu0 %v3634
      %v5041 = vpop.f32.mrf.mxu0
      %v5042 = vadd.f32 0.0, %v5041
      %v5043 = vpop.f32.mrf.mxu0
      %5044 = vmatprep.mubr.f32.mxu0 0.0
      %5045 = vmatmul.mubr.f32.gmra.mxu0 %v3636
      %v5046 = vpop.f32.mrf.mxu0
      %v5047 = vadd.f32 0.0, %v5046
      %v5048 = vpop.f32.mrf.mxu0
      %5049 = vmatprep.mubr.f32.mxu0 0.0
      %5050 = vmatmul.mubr.f32.gmra.mxu0 %v3638
      %v5051 = vpop.f32.mrf.mxu0
      %v5052 = vadd.f32 0.0, %v5051
      %v5053 = vpop.f32.mrf.mxu0
      %5054 = vmatprep.mubr.f32.mxu0 0.0
      %5055 = vmatmul.mubr.f32.gmra.mxu0 %v3640
      %v5056 = vpop.f32.mrf.mxu0
      %v5057 = vadd.f32 0.0, %v5056
      %v5058 = vpop.f32.mrf.mxu0
      %5059 = vmatprep.mubr.f32.mxu0 0.0
      %5060 = vmatmul.mubr.f32.gmra.mxu0 %v3642
      %v5061 = vpop.f32.mrf.mxu0
      %v5062 = vadd.f32 0.0, %v5061
      %v5063 = vpop.f32.mrf.mxu0
      %5064 = vmatprep.mubr.f32.mxu0 0.0
      %5065 = vmatmul.mubr.f32.gmra.mxu0 %v3644
      %v5066 = vpop.f32.mrf.mxu0
      %v5067 = vadd.f32 0.0, %v5066
      %v5068 = vpop.f32.mrf.mxu0
      %5069 = vmatprep.mubr.f32.mxu0 0.0
      %5070 = vmatmul.mubr.f32.gmra.mxu0 %v4848
      %v5071 = vpop.f32.mrf.mxu0
      %v5072 = vadd.f32 0.0, %v5071
      %v5073 = vpop.f32.mrf.mxu0
      %5074 = vmatprep.mubr.f32.mxu0 0.0
      %5075 = vmatmul.mubr.f32.gmra.mxu0 %v4850
      %v5076 = vpop.f32.mrf.mxu0
      %v5077 = vadd.f32 0.0, %v5076
      %v5078 = vpop.f32.mrf.mxu0
      %5079 = vdwg.mxu0
      %v5080 = vadd.f32 %v4808, %v4922
      %v5081 = vadd.f32 %v4809, %v4927
      %v5082 = vadd.f32 %v4810, %v4932
      %v5083 = vadd.f32 %v4811, %v4937
      %v5084 = vadd.f32 %v4812, %v4942
      %v5085 = vadd.f32 %v4813, %v4947
      %v5086 = vadd.f32 %v4814, %v4952
      %v5087 = vadd.f32 %v4815, %v4957
      %v5088 = vadd.f32 %v4816, %v4962
      %v5089 = vadd.f32 %v4817, %v4967
      %v5090 = vadd.f32 %v4818, %v4972
      %v5091 = vadd.f32 %v4819, %v4977
      %v5092 = vadd.f32 %v4820, %v4982
      %v5093 = vadd.f32 %v4821, %v4987
      %v5094 = vadd.f32 %v4822, %v4992
      %v5095 = vadd.f32 %v4823, %v4997
      %v5096 = vadd.f32 %v4824, %v5002
      %v5097 = vadd.f32 %v4825, %v5007
      %v5098 = vadd.f32 %v4826, %v5012
      %v5099 = vadd.f32 %v4827, %v5017
      %v5100 = vadd.f32 %v4828, %v5022
      %v5101 = vadd.f32 %v4829, %v5027
      %v5102 = vadd.f32 %v4830, %v5032
      %v5103 = vadd.f32 %v4831, %v5037
      %v5104 = vadd.f32 %v4832, %v5042
      %v5105 = vadd.f32 %v4833, %v5047
      %v5106 = vadd.f32 %v4834, %v5052
      %v5107 = vadd.f32 %v4835, %v5057
      %v5108 = vadd.f32 %v4836, %v5062
      %v5109 = vadd.f32 %v4837, %v5067
      %v5110 = vadd.f32 %v4838, %v5072
      %v5111 = vadd.f32 %v4839, %v5077
      %v5112 = vrot.slane %v3445, 2
      %v5113 = vrot.slane %v3446, 2
      %v5114 = vsel %vm1171, %v5112, %v5113
      %v5115 = vrot.slane %v3447, 2
      %v5116 = vsel %vm1171, %v5113, %v5115
      %s5117 = scalar_lea.vmem %s4, 20
      %v5118 = vld [vmem:[%s5117] sm:$0xf]
      %v5119 = vsel %vm279, %v5114, 0
      %v5121 = vsel %vm279, %v5116, 0
      %v5124 = vsel %vm650, %v5118, 0
      %5126 = vmatprep.subr.mxu0 0.0
      %5127 = vmatpush1.msra.mxu0 0.0
      %5128 = vmatprep.subr.mxu0 0.0
      %5129 = vmatpush1.msra.mxu0 0.0
      %5130 = vmatprep.subr.mxu0 0.0
      %5131 = vmatpush1.msra.mxu0 0.0
      %5132 = vmatprep.subr.mxu0 0.0
      %5133 = vmatpush1.msra.mxu0 0.0
      %5134 = vmatprep.subr.mxu0 0.0
      %5135 = vmatpush1.msra.mxu0 0.0
      %5136 = vmatprep.subr.mxu0 0.0
      %5137 = vmatpush1.msra.mxu0 0.0
      %5138 = vmatprep.subr.mxu0 0.0
      %5139 = vmatpush1.msra.mxu0 0.0
      %5140 = vmatprep.subr.mxu0 0.0
      %5141 = vmatpush1.msra.mxu0 0.0
      %5142 = vmatprep.subr.mxu0 0.0
      %5143 = vmatpush1.msra.mxu0 0.0
      %5144 = vmatprep.subr.mxu0 0.0
      %5145 = vmatpush1.msra.mxu0 0.0
      %5146 = vmatprep.subr.mxu0 0.0
      %5147 = vmatpush1.msra.mxu0 0.0
      %5148 = vmatprep.subr.mxu0 0.0
      %5149 = vmatpush1.msra.mxu0 0.0
      %5150 = vmatprep.subr.mxu0 0.0
      %5151 = vmatpush1.msra.mxu0 0.0
      %5152 = vmatprep.subr.mxu0 0.0
      %5153 = vmatpush1.msra.mxu0 0.0
      %5154 = vmatprep.subr.mxu0 0.0
      %5155 = vmatpush1.msra.mxu0 0.0
      %5156 = vmatprep.subr.mxu0 0.0
      %5157 = vmatpush1.msra.mxu0 %v5124
      %5158 = vmatprep.subr.mxu0 0.0
      %5159 = vmatpush2.msra.mxu0 0.0
      %5160 = vmatprep.subr.mxu0 0.0
      %5161 = vmatpush2.msra.mxu0 0.0
      %5162 = vmatprep.subr.mxu0 0.0
      %5163 = vmatpush2.msra.mxu0 0.0
      %5164 = vmatprep.subr.mxu0 0.0
      %5165 = vmatpush2.msra.mxu0 0.0
      %5166 = vmatprep.subr.mxu0 0.0
      %5167 = vmatpush2.msra.mxu0 0.0
      %5168 = vmatprep.subr.mxu0 0.0
      %5169 = vmatpush2.msra.mxu0 0.0
      %5170 = vmatprep.subr.mxu0 0.0
      %5171 = vmatpush2.msra.mxu0 0.0
      %5172 = vmatprep.subr.mxu0 0.0
      %5173 = vmatpush2.msra.mxu0 0.0
      %5174 = vmatprep.subr.mxu0 0.0
      %5175 = vmatpush2.msra.mxu0 0.0
      %5176 = vmatprep.subr.mxu0 0.0
      %5177 = vmatpush2.msra.mxu0 0.0
      %5178 = vmatprep.subr.mxu0 0.0
      %5179 = vmatpush2.msra.mxu0 0.0
      %5180 = vmatprep.subr.mxu0 0.0
      %5181 = vmatpush2.msra.mxu0 0.0
      %5182 = vmatprep.subr.mxu0 0.0
      %5183 = vmatpush2.msra.mxu0 0.0
      %5184 = vmatprep.subr.mxu0 0.0
      %5185 = vmatpush2.msra.mxu0 0.0
      %5186 = vmatprep.subr.mxu0 0.0
      %5187 = vmatpush2.msra.mxu0 0.0
      %5188 = vmatprep.subr.mxu0 0.0
      %5189 = vmatpush2.msra.mxu0 0.0
      %5190 = vmatprep.mubr.f32.mxu0 0.0
      %5191 = vmatmul.mubr.f32.gmra.mxu0 %v4252
      %v5192 = vpop.f32.mrf.mxu0
      %v5193 = vadd.f32 0.0, %v5192
      %v5194 = vpop.f32.mrf.mxu0
      %5195 = vmatprep.mubr.f32.mxu0 0.0
      %5196 = vmatmul.mubr.f32.gmra.mxu0 %v4254
      %v5197 = vpop.f32.mrf.mxu0
      %v5198 = vadd.f32 0.0, %v5197
      %v5199 = vpop.f32.mrf.mxu0
      %5200 = vmatprep.mubr.f32.mxu0 0.0
      %5201 = vmatmul.mubr.f32.gmra.mxu0 %v4256
      %v5202 = vpop.f32.mrf.mxu0
      %v5203 = vadd.f32 0.0, %v5202
      %v5204 = vpop.f32.mrf.mxu0
      %5205 = vmatprep.mubr.f32.mxu0 0.0
      %5206 = vmatmul.mubr.f32.gmra.mxu0 %v4258
      %v5207 = vpop.f32.mrf.mxu0
      %v5208 = vadd.f32 0.0, %v5207
      %v5209 = vpop.f32.mrf.mxu0
      %5210 = vmatprep.mubr.f32.mxu0 0.0
      %5211 = vmatmul.mubr.f32.gmra.mxu0 %v4260
      %v5212 = vpop.f32.mrf.mxu0
      %v5213 = vadd.f32 0.0, %v5212
      %v5214 = vpop.f32.mrf.mxu0
      %5215 = vmatprep.mubr.f32.mxu0 0.0
      %5216 = vmatmul.mubr.f32.gmra.mxu0 %v4262
      %v5217 = vpop.f32.mrf.mxu0
      %v5218 = vadd.f32 0.0, %v5217
      %v5219 = vpop.f32.mrf.mxu0
      %5220 = vmatprep.mubr.f32.mxu0 0.0
      %5221 = vmatmul.mubr.f32.gmra.mxu0 %v4264
      %v5222 = vpop.f32.mrf.mxu0
      %v5223 = vadd.f32 0.0, %v5222
      %v5224 = vpop.f32.mrf.mxu0
      %5225 = vmatprep.mubr.f32.mxu0 0.0
      %5226 = vmatmul.mubr.f32.gmra.mxu0 %v4266
      %v5227 = vpop.f32.mrf.mxu0
      %v5228 = vadd.f32 0.0, %v5227
      %v5229 = vpop.f32.mrf.mxu0
      %5230 = vmatprep.mubr.f32.mxu0 0.0
      %5231 = vmatmul.mubr.f32.gmra.mxu0 %v4268
      %v5232 = vpop.f32.mrf.mxu0
      %v5233 = vadd.f32 0.0, %v5232
      %v5234 = vpop.f32.mrf.mxu0
      %5235 = vmatprep.mubr.f32.mxu0 0.0
      %5236 = vmatmul.mubr.f32.gmra.mxu0 %v4270
      %v5237 = vpop.f32.mrf.mxu0
      %v5238 = vadd.f32 0.0, %v5237
      %v5239 = vpop.f32.mrf.mxu0
      %5240 = vmatprep.mubr.f32.mxu0 0.0
      %5241 = vmatmul.mubr.f32.gmra.mxu0 %v4272
      %v5242 = vpop.f32.mrf.mxu0
      %v5243 = vadd.f32 0.0, %v5242
      %v5244 = vpop.f32.mrf.mxu0
      %5245 = vmatprep.mubr.f32.mxu0 0.0
      %5246 = vmatmul.mubr.f32.gmra.mxu0 %v4274
      %v5247 = vpop.f32.mrf.mxu0
      %v5248 = vadd.f32 0.0, %v5247
      %v5249 = vpop.f32.mrf.mxu0
      %5250 = vmatprep.mubr.f32.mxu0 0.0
      %5251 = vmatmul.mubr.f32.gmra.mxu0 %v4276
      %v5252 = vpop.f32.mrf.mxu0
      %v5253 = vadd.f32 0.0, %v5252
      %v5254 = vpop.f32.mrf.mxu0
      %5255 = vmatprep.mubr.f32.mxu0 0.0
      %5256 = vmatmul.mubr.f32.gmra.mxu0 %v4278
      %v5257 = vpop.f32.mrf.mxu0
      %v5258 = vadd.f32 0.0, %v5257
      %v5259 = vpop.f32.mrf.mxu0
      %5260 = vmatprep.mubr.f32.mxu0 0.0
      %5261 = vmatmul.mubr.f32.gmra.mxu0 %v4280
      %v5262 = vpop.f32.mrf.mxu0
      %v5263 = vadd.f32 0.0, %v5262
      %v5264 = vpop.f32.mrf.mxu0
      %5265 = vmatprep.mubr.f32.mxu0 0.0
      %5266 = vmatmul.mubr.f32.gmra.mxu0 %v4282
      %v5267 = vpop.f32.mrf.mxu0
      %v5268 = vadd.f32 0.0, %v5267
      %v5269 = vpop.f32.mrf.mxu0
      %5270 = vmatprep.mubr.f32.mxu0 0.0
      %5271 = vmatmul.mubr.f32.gmra.mxu0 %v4284
      %v5272 = vpop.f32.mrf.mxu0
      %v5273 = vadd.f32 0.0, %v5272
      %v5274 = vpop.f32.mrf.mxu0
      %5275 = vmatprep.mubr.f32.mxu0 0.0
      %5276 = vmatmul.mubr.f32.gmra.mxu0 %v4286
      %v5277 = vpop.f32.mrf.mxu0
      %v5278 = vadd.f32 0.0, %v5277
      %v5279 = vpop.f32.mrf.mxu0
      %5280 = vmatprep.mubr.f32.mxu0 0.0
      %5281 = vmatmul.mubr.f32.gmra.mxu0 %v4288
      %v5282 = vpop.f32.mrf.mxu0
      %v5283 = vadd.f32 0.0, %v5282
      %v5284 = vpop.f32.mrf.mxu0
      %5285 = vmatprep.mubr.f32.mxu0 0.0
      %5286 = vmatmul.mubr.f32.gmra.mxu0 %v4290
      %v5287 = vpop.f32.mrf.mxu0
      %v5288 = vadd.f32 0.0, %v5287
      %v5289 = vpop.f32.mrf.mxu0
      %5290 = vmatprep.mubr.f32.mxu0 0.0
      %5291 = vmatmul.mubr.f32.gmra.mxu0 %v4292
      %v5292 = vpop.f32.mrf.mxu0
      %v5293 = vadd.f32 0.0, %v5292
      %v5294 = vpop.f32.mrf.mxu0
      %5295 = vmatprep.mubr.f32.mxu0 0.0
      %5296 = vmatmul.mubr.f32.gmra.mxu0 %v4294
      %v5297 = vpop.f32.mrf.mxu0
      %v5298 = vadd.f32 0.0, %v5297
      %v5299 = vpop.f32.mrf.mxu0
      %5300 = vmatprep.mubr.f32.mxu0 0.0
      %5301 = vmatmul.mubr.f32.gmra.mxu0 %v4296
      %v5302 = vpop.f32.mrf.mxu0
      %v5303 = vadd.f32 0.0, %v5302
      %v5304 = vpop.f32.mrf.mxu0
      %5305 = vmatprep.mubr.f32.mxu0 0.0
      %5306 = vmatmul.mubr.f32.gmra.mxu0 %v4298
      %v5307 = vpop.f32.mrf.mxu0
      %v5308 = vadd.f32 0.0, %v5307
      %v5309 = vpop.f32.mrf.mxu0
      %5310 = vmatprep.mubr.f32.mxu0 0.0
      %5311 = vmatmul.mubr.f32.gmra.mxu0 %v4300
      %v5312 = vpop.f32.mrf.mxu0
      %v5313 = vadd.f32 0.0, %v5312
      %v5314 = vpop.f32.mrf.mxu0
      %5315 = vmatprep.mubr.f32.mxu0 0.0
      %5316 = vmatmul.mubr.f32.gmra.mxu0 %v4302
      %v5317 = vpop.f32.mrf.mxu0
      %v5318 = vadd.f32 0.0, %v5317
      %v5319 = vpop.f32.mrf.mxu0
      %5320 = vmatprep.mubr.f32.mxu0 0.0
      %5321 = vmatmul.mubr.f32.gmra.mxu0 %v4304
      %v5322 = vpop.f32.mrf.mxu0
      %v5323 = vadd.f32 0.0, %v5322
      %v5324 = vpop.f32.mrf.mxu0
      %5325 = vmatprep.mubr.f32.mxu0 0.0
      %5326 = vmatmul.mubr.f32.gmra.mxu0 %v4306
      %v5327 = vpop.f32.mrf.mxu0
      %v5328 = vadd.f32 0.0, %v5327
      %v5329 = vpop.f32.mrf.mxu0
      %5330 = vmatprep.mubr.f32.mxu0 0.0
      %5331 = vmatmul.mubr.f32.gmra.mxu0 %v4308
      %v5332 = vpop.f32.mrf.mxu0
      %v5333 = vadd.f32 0.0, %v5332
      %v5334 = vpop.f32.mrf.mxu0
      %5335 = vmatprep.mubr.f32.mxu0 0.0
      %5336 = vmatmul.mubr.f32.gmra.mxu0 %v4310
      %v5337 = vpop.f32.mrf.mxu0
      %v5338 = vadd.f32 0.0, %v5337
      %v5339 = vpop.f32.mrf.mxu0
      %5340 = vmatprep.mubr.f32.mxu0 0.0
      %5341 = vmatmul.mubr.f32.gmra.mxu0 %v5119
      %v5342 = vpop.f32.mrf.mxu0
      %v5343 = vadd.f32 0.0, %v5342
      %v5344 = vpop.f32.mrf.mxu0
      %5345 = vmatprep.mubr.f32.mxu0 0.0
      %5346 = vmatmul.mubr.f32.gmra.mxu0 %v5121
      %v5347 = vpop.f32.mrf.mxu0
      %v5348 = vadd.f32 0.0, %v5347
      %v5349 = vpop.f32.mrf.mxu0
      %5350 = vdwg.mxu0
      %v5351 = vadd.f32 %v5080, %v5193
      %v5352 = vadd.f32 %v5081, %v5198
      %v5353 = vadd.f32 %v5082, %v5203
      %v5354 = vadd.f32 %v5083, %v5208
      %v5355 = vadd.f32 %v5084, %v5213
      %v5356 = vadd.f32 %v5085, %v5218
      %v5357 = vadd.f32 %v5086, %v5223
      %v5358 = vadd.f32 %v5087, %v5228
      %v5359 = vadd.f32 %v5088, %v5233
      %v5360 = vadd.f32 %v5089, %v5238
      %v5361 = vadd.f32 %v5090, %v5243
      %v5362 = vadd.f32 %v5091, %v5248
      %v5363 = vadd.f32 %v5092, %v5253
      %v5364 = vadd.f32 %v5093, %v5258
      %v5365 = vadd.f32 %v5094, %v5263
      %v5366 = vadd.f32 %v5095, %v5268
      %v5367 = vadd.f32 %v5096, %v5273
      %v5368 = vadd.f32 %v5097, %v5278
      %v5369 = vadd.f32 %v5098, %v5283
      %v5370 = vadd.f32 %v5099, %v5288
      %v5371 = vadd.f32 %v5100, %v5293
      %v5372 = vadd.f32 %v5101, %v5298
      %v5373 = vadd.f32 %v5102, %v5303
      %v5374 = vadd.f32 %v5103, %v5308
      %v5375 = vadd.f32 %v5104, %v5313
      %v5376 = vadd.f32 %v5105, %v5318
      %v5377 = vadd.f32 %v5106, %v5323
      %v5378 = vadd.f32 %v5107, %v5328
      %v5379 = vadd.f32 %v5108, %v5333
      %v5380 = vadd.f32 %v5109, %v5338
      %v5381 = vadd.f32 %v5110, %v5343
      %v5382 = vadd.f32 %v5111, %v5348
      %s5383 = scalar_lea.vmem %s4, 24
      %v5384 = vld [vmem:[%s5383] sm:$0xf]
      %v5386 = vsel %vm279, %v3448, 0
      %v5389 = vsel %vm279, %v3449, 0
      %v5392 = vsel %vm650, %v5384, 0
      %5394 = vmatprep.subr.mxu0 0.0
      %5395 = vmatpush1.msra.mxu0 0.0
      %5396 = vmatprep.subr.mxu0 0.0
      %5397 = vmatpush1.msra.mxu0 0.0
      %5398 = vmatprep.subr.mxu0 0.0
      %5399 = vmatpush1.msra.mxu0 0.0
      %5400 = vmatprep.subr.mxu0 0.0
      %5401 = vmatpush1.msra.mxu0 0.0
      %5402 = vmatprep.subr.mxu0 0.0
      %5403 = vmatpush1.msra.mxu0 0.0
      %5404 = vmatprep.subr.mxu0 0.0
      %5405 = vmatpush1.msra.mxu0 0.0
      %5406 = vmatprep.subr.mxu0 0.0
      %5407 = vmatpush1.msra.mxu0 0.0
      %5408 = vmatprep.subr.mxu0 0.0
      %5409 = vmatpush1.msra.mxu0 0.0
      %5410 = vmatprep.subr.mxu0 0.0
      %5411 = vmatpush1.msra.mxu0 0.0
      %5412 = vmatprep.subr.mxu0 0.0
      %5413 = vmatpush1.msra.mxu0 0.0
      %5414 = vmatprep.subr.mxu0 0.0
      %5415 = vmatpush1.msra.mxu0 0.0
      %5416 = vmatprep.subr.mxu0 0.0
      %5417 = vmatpush1.msra.mxu0 0.0
      %5418 = vmatprep.subr.mxu0 0.0
      %5419 = vmatpush1.msra.mxu0 0.0
      %5420 = vmatprep.subr.mxu0 0.0
      %5421 = vmatpush1.msra.mxu0 0.0
      %5422 = vmatprep.subr.mxu0 0.0
      %5423 = vmatpush1.msra.mxu0 0.0
      %5424 = vmatprep.subr.mxu0 0.0
      %5425 = vmatpush1.msra.mxu0 %v5392
      %5426 = vmatprep.subr.mxu0 0.0
      %5427 = vmatpush2.msra.mxu0 0.0
      %5428 = vmatprep.subr.mxu0 0.0
      %5429 = vmatpush2.msra.mxu0 0.0
      %5430 = vmatprep.subr.mxu0 0.0
      %5431 = vmatpush2.msra.mxu0 0.0
      %5432 = vmatprep.subr.mxu0 0.0
      %5433 = vmatpush2.msra.mxu0 0.0
      %5434 = vmatprep.subr.mxu0 0.0
      %5435 = vmatpush2.msra.mxu0 0.0
      %5436 = vmatprep.subr.mxu0 0.0
      %5437 = vmatpush2.msra.mxu0 0.0
      %5438 = vmatprep.subr.mxu0 0.0
      %5439 = vmatpush2.msra.mxu0 0.0
      %5440 = vmatprep.subr.mxu0 0.0
      %5441 = vmatpush2.msra.mxu0 0.0
      %5442 = vmatprep.subr.mxu0 0.0
      %5443 = vmatpush2.msra.mxu0 0.0
      %5444 = vmatprep.subr.mxu0 0.0
      %5445 = vmatpush2.msra.mxu0 0.0
      %5446 = vmatprep.subr.mxu0 0.0
      %5447 = vmatpush2.msra.mxu0 0.0
      %5448 = vmatprep.subr.mxu0 0.0
      %5449 = vmatpush2.msra.mxu0 0.0
      %5450 = vmatprep.subr.mxu0 0.0
      %5451 = vmatpush2.msra.mxu0 0.0
      %5452 = vmatprep.subr.mxu0 0.0
      %5453 = vmatpush2.msra.mxu0 0.0
      %5454 = vmatprep.subr.mxu0 0.0
      %5455 = vmatpush2.msra.mxu0 0.0
      %5456 = vmatprep.subr.mxu0 0.0
      %5457 = vmatpush2.msra.mxu0 0.0
      %5458 = vmatprep.mubr.f32.mxu0 0.0
      %5459 = vmatmul.mubr.f32.gmra.mxu0 %v3882
      %v5460 = vpop.f32.mrf.mxu0
      %v5461 = vadd.f32 0.0, %v5460
      %v5462 = vpop.f32.mrf.mxu0
      %5463 = vmatprep.mubr.f32.mxu0 0.0
      %5464 = vmatmul.mubr.f32.gmra.mxu0 %v3884
      %v5465 = vpop.f32.mrf.mxu0
      %v5466 = vadd.f32 0.0, %v5465
      %v5467 = vpop.f32.mrf.mxu0
      %5468 = vmatprep.mubr.f32.mxu0 0.0
      %5469 = vmatmul.mubr.f32.gmra.mxu0 %v3886
      %v5470 = vpop.f32.mrf.mxu0
      %v5471 = vadd.f32 0.0, %v5470
      %v5472 = vpop.f32.mrf.mxu0
      %5473 = vmatprep.mubr.f32.mxu0 0.0
      %5474 = vmatmul.mubr.f32.gmra.mxu0 %v3888
      %v5475 = vpop.f32.mrf.mxu0
      %v5476 = vadd.f32 0.0, %v5475
      %v5477 = vpop.f32.mrf.mxu0
      %5478 = vmatprep.mubr.f32.mxu0 0.0
      %5479 = vmatmul.mubr.f32.gmra.mxu0 %v3890
      %v5480 = vpop.f32.mrf.mxu0
      %v5481 = vadd.f32 0.0, %v5480
      %v5482 = vpop.f32.mrf.mxu0
      %5483 = vmatprep.mubr.f32.mxu0 0.0
      %5484 = vmatmul.mubr.f32.gmra.mxu0 %v3892
      %v5485 = vpop.f32.mrf.mxu0
      %v5486 = vadd.f32 0.0, %v5485
      %v5487 = vpop.f32.mrf.mxu0
      %5488 = vmatprep.mubr.f32.mxu0 0.0
      %5489 = vmatmul.mubr.f32.gmra.mxu0 %v3894
      %v5490 = vpop.f32.mrf.mxu0
      %v5491 = vadd.f32 0.0, %v5490
      %v5492 = vpop.f32.mrf.mxu0
      %5493 = vmatprep.mubr.f32.mxu0 0.0
      %5494 = vmatmul.mubr.f32.gmra.mxu0 %v3896
      %v5495 = vpop.f32.mrf.mxu0
      %v5496 = vadd.f32 0.0, %v5495
      %v5497 = vpop.f32.mrf.mxu0
      %5498 = vmatprep.mubr.f32.mxu0 0.0
      %5499 = vmatmul.mubr.f32.gmra.mxu0 %v3898
      %v5500 = vpop.f32.mrf.mxu0
      %v5501 = vadd.f32 0.0, %v5500
      %v5502 = vpop.f32.mrf.mxu0
      %5503 = vmatprep.mubr.f32.mxu0 0.0
      %5504 = vmatmul.mubr.f32.gmra.mxu0 %v3900
      %v5505 = vpop.f32.mrf.mxu0
      %v5506 = vadd.f32 0.0, %v5505
      %v5507 = vpop.f32.mrf.mxu0
      %5508 = vmatprep.mubr.f32.mxu0 0.0
      %5509 = vmatmul.mubr.f32.gmra.mxu0 %v3902
      %v5510 = vpop.f32.mrf.mxu0
      %v5511 = vadd.f32 0.0, %v5510
      %v5512 = vpop.f32.mrf.mxu0
      %5513 = vmatprep.mubr.f32.mxu0 0.0
      %5514 = vmatmul.mubr.f32.gmra.mxu0 %v3904
      %v5515 = vpop.f32.mrf.mxu0
      %v5516 = vadd.f32 0.0, %v5515
      %v5517 = vpop.f32.mrf.mxu0
      %5518 = vmatprep.mubr.f32.mxu0 0.0
      %5519 = vmatmul.mubr.f32.gmra.mxu0 %v3906
      %v5520 = vpop.f32.mrf.mxu0
      %v5521 = vadd.f32 0.0, %v5520
      %v5522 = vpop.f32.mrf.mxu0
      %5523 = vmatprep.mubr.f32.mxu0 0.0
      %5524 = vmatmul.mubr.f32.gmra.mxu0 %v3908
      %v5525 = vpop.f32.mrf.mxu0
      %v5526 = vadd.f32 0.0, %v5525
      %v5527 = vpop.f32.mrf.mxu0
      %5528 = vmatprep.mubr.f32.mxu0 0.0
      %5529 = vmatmul.mubr.f32.gmra.mxu0 %v3910
      %v5530 = vpop.f32.mrf.mxu0
      %v5531 = vadd.f32 0.0, %v5530
      %v5532 = vpop.f32.mrf.mxu0
      %5533 = vmatprep.mubr.f32.mxu0 0.0
      %5534 = vmatmul.mubr.f32.gmra.mxu0 %v3912
      %v5535 = vpop.f32.mrf.mxu0
      %v5536 = vadd.f32 0.0, %v5535
      %v5537 = vpop.f32.mrf.mxu0
      %5538 = vmatprep.mubr.f32.mxu0 0.0
      %5539 = vmatmul.mubr.f32.gmra.mxu0 %v3914
      %v5540 = vpop.f32.mrf.mxu0
      %v5541 = vadd.f32 0.0, %v5540
      %v5542 = vpop.f32.mrf.mxu0
      %5543 = vmatprep.mubr.f32.mxu0 0.0
      %5544 = vmatmul.mubr.f32.gmra.mxu0 %v3916
      %v5545 = vpop.f32.mrf.mxu0
      %v5546 = vadd.f32 0.0, %v5545
      %v5547 = vpop.f32.mrf.mxu0
      %5548 = vmatprep.mubr.f32.mxu0 0.0
      %5549 = vmatmul.mubr.f32.gmra.mxu0 %v3918
      %v5550 = vpop.f32.mrf.mxu0
      %v5551 = vadd.f32 0.0, %v5550
      %v5552 = vpop.f32.mrf.mxu0
      %5553 = vmatprep.mubr.f32.mxu0 0.0
      %5554 = vmatmul.mubr.f32.gmra.mxu0 %v3920
      %v5555 = vpop.f32.mrf.mxu0
      %v5556 = vadd.f32 0.0, %v5555
      %v5557 = vpop.f32.mrf.mxu0
      %5558 = vmatprep.mubr.f32.mxu0 0.0
      %5559 = vmatmul.mubr.f32.gmra.mxu0 %v3922
      %v5560 = vpop.f32.mrf.mxu0
      %v5561 = vadd.f32 0.0, %v5560
      %v5562 = vpop.f32.mrf.mxu0
      %5563 = vmatprep.mubr.f32.mxu0 0.0
      %5564 = vmatmul.mubr.f32.gmra.mxu0 %v3924
      %v5565 = vpop.f32.mrf.mxu0
      %v5566 = vadd.f32 0.0, %v5565
      %v5567 = vpop.f32.mrf.mxu0
      %5568 = vmatprep.mubr.f32.mxu0 0.0
      %5569 = vmatmul.mubr.f32.gmra.mxu0 %v3926
      %v5570 = vpop.f32.mrf.mxu0
      %v5571 = vadd.f32 0.0, %v5570
      %v5572 = vpop.f32.mrf.mxu0
      %5573 = vmatprep.mubr.f32.mxu0 0.0
      %5574 = vmatmul.mubr.f32.gmra.mxu0 %v3928
      %v5575 = vpop.f32.mrf.mxu0
      %v5576 = vadd.f32 0.0, %v5575
      %v5577 = vpop.f32.mrf.mxu0
      %5578 = vmatprep.mubr.f32.mxu0 0.0
      %5579 = vmatmul.mubr.f32.gmra.mxu0 %v3930
      %v5580 = vpop.f32.mrf.mxu0
      %v5581 = vadd.f32 0.0, %v5580
      %v5582 = vpop.f32.mrf.mxu0
      %5583 = vmatprep.mubr.f32.mxu0 0.0
      %5584 = vmatmul.mubr.f32.gmra.mxu0 %v3932
      %v5585 = vpop.f32.mrf.mxu0
      %v5586 = vadd.f32 0.0, %v5585
      %v5587 = vpop.f32.mrf.mxu0
      %5588 = vmatprep.mubr.f32.mxu0 0.0
      %5589 = vmatmul.mubr.f32.gmra.mxu0 %v3934
      %v5590 = vpop.f32.mrf.mxu0
      %v5591 = vadd.f32 0.0, %v5590
      %v5592 = vpop.f32.mrf.mxu0
      %5593 = vmatprep.mubr.f32.mxu0 0.0
      %5594 = vmatmul.mubr.f32.gmra.mxu0 %v3936
      %v5595 = vpop.f32.mrf.mxu0
      %v5596 = vadd.f32 0.0, %v5595
      %v5597 = vpop.f32.mrf.mxu0
      %5598 = vmatprep.mubr.f32.mxu0 0.0
      %5599 = vmatmul.mubr.f32.gmra.mxu0 %v4575
      %v5600 = vpop.f32.mrf.mxu0
      %v5601 = vadd.f32 0.0, %v5600
      %v5602 = vpop.f32.mrf.mxu0
      %5603 = vmatprep.mubr.f32.mxu0 0.0
      %5604 = vmatmul.mubr.f32.gmra.mxu0 %v4578
      %v5605 = vpop.f32.mrf.mxu0
      %v5606 = vadd.f32 0.0, %v5605
      %v5607 = vpop.f32.mrf.mxu0
      %5608 = vmatprep.mubr.f32.mxu0 0.0
      %5609 = vmatmul.mubr.f32.gmra.mxu0 %v5386
      %v5610 = vpop.f32.mrf.mxu0
      %v5611 = vadd.f32 0.0, %v5610
      %v5612 = vpop.f32.mrf.mxu0
      %5613 = vmatprep.mubr.f32.mxu0 0.0
      %5614 = vmatmul.mubr.f32.gmra.mxu0 %v5389
      %v5615 = vpop.f32.mrf.mxu0
      %v5616 = vadd.f32 0.0, %v5615
      %v5617 = vpop.f32.mrf.mxu0
      %5618 = vdwg.mxu0
      %v5619 = vadd.f32 %v5351, %v5461
      %v5620 = vadd.f32 %v5352, %v5466
      %v5621 = vadd.f32 %v5353, %v5471
      %v5622 = vadd.f32 %v5354, %v5476
      %v5623 = vadd.f32 %v5355, %v5481
      %v5624 = vadd.f32 %v5356, %v5486
      %v5625 = vadd.f32 %v5357, %v5491
      %v5626 = vadd.f32 %v5358, %v5496
      %v5627 = vadd.f32 %v5359, %v5501
      %v5628 = vadd.f32 %v5360, %v5506
      %v5629 = vadd.f32 %v5361, %v5511
      %v5630 = vadd.f32 %v5362, %v5516
      %v5631 = vadd.f32 %v5363, %v5521
      %v5632 = vadd.f32 %v5364, %v5526
      %v5633 = vadd.f32 %v5365, %v5531
      %v5634 = vadd.f32 %v5366, %v5536
      %v5635 = vadd.f32 %v5367, %v5541
      %v5636 = vadd.f32 %v5368, %v5546
      %v5637 = vadd.f32 %v5369, %v5551
      %v5638 = vadd.f32 %v5370, %v5556
      %v5639 = vadd.f32 %v5371, %v5561
      %v5640 = vadd.f32 %v5372, %v5566
      %v5641 = vadd.f32 %v5373, %v5571
      %v5642 = vadd.f32 %v5374, %v5576
      %v5643 = vadd.f32 %v5375, %v5581
      %v5644 = vadd.f32 %v5376, %v5586
      %v5645 = vadd.f32 %v5377, %v5591
      %v5646 = vadd.f32 %v5378, %v5596
      %v5647 = vadd.f32 %v5379, %v5601
      %v5648 = vadd.f32 %v5380, %v5606
      %v5649 = vadd.f32 %v5381, %v5611
      %v5650 = vadd.f32 %v5382, %v5616
      %v5652 = vrot.slane %v3448, 1
      %v5653 = vrot.slane %v3449, 1
      %v5654 = vsel %vm503, %v5652, %v5653
      %v5655 = vrot.slane %v3450, 1
      %v5656 = vsel %vm503, %v5653, %v5655
      %s5657 = scalar_lea.vmem %s4, 28
      %v5658 = vld [vmem:[%s5657] sm:$0xf]
      %v5659 = vsel %vm279, %v5654, 0
      %v5661 = vsel %vm279, %v5656, 0
      %v5664 = vsel %vm650, %v5658, 0
      %5666 = vmatprep.subr.mxu0 0.0
      %5667 = vmatpush1.msra.mxu0 0.0
      %5668 = vmatprep.subr.mxu0 0.0
      %5669 = vmatpush1.msra.mxu0 0.0
      %5670 = vmatprep.subr.mxu0 0.0
      %5671 = vmatpush1.msra.mxu0 0.0
      %5672 = vmatprep.subr.mxu0 0.0
      %5673 = vmatpush1.msra.mxu0 0.0
      %5674 = vmatprep.subr.mxu0 0.0
      %5675 = vmatpush1.msra.mxu0 0.0
      %5676 = vmatprep.subr.mxu0 0.0
      %5677 = vmatpush1.msra.mxu0 0.0
      %5678 = vmatprep.subr.mxu0 0.0
      %5679 = vmatpush1.msra.mxu0 0.0
      %5680 = vmatprep.subr.mxu0 0.0
      %5681 = vmatpush1.msra.mxu0 0.0
      %5682 = vmatprep.subr.mxu0 0.0
      %5683 = vmatpush1.msra.mxu0 0.0
      %5684 = vmatprep.subr.mxu0 0.0
      %5685 = vmatpush1.msra.mxu0 0.0
      %5686 = vmatprep.subr.mxu0 0.0
      %5687 = vmatpush1.msra.mxu0 0.0
      %5688 = vmatprep.subr.mxu0 0.0
      %5689 = vmatpush1.msra.mxu0 0.0
      %5690 = vmatprep.subr.mxu0 0.0
      %5691 = vmatpush1.msra.mxu0 0.0
      %5692 = vmatprep.subr.mxu0 0.0
      %5693 = vmatpush1.msra.mxu0 0.0
      %5694 = vmatprep.subr.mxu0 0.0
      %5695 = vmatpush1.msra.mxu0 0.0
      %5696 = vmatprep.subr.mxu0 0.0
      %5697 = vmatpush1.msra.mxu0 %v5664
      %5698 = vmatprep.subr.mxu0 0.0
      %5699 = vmatpush2.msra.mxu0 0.0
      %5700 = vmatprep.subr.mxu0 0.0
      %5701 = vmatpush2.msra.mxu0 0.0
      %5702 = vmatprep.subr.mxu0 0.0
      %5703 = vmatpush2.msra.mxu0 0.0
      %5704 = vmatprep.subr.mxu0 0.0
      %5705 = vmatpush2.msra.mxu0 0.0
      %5706 = vmatprep.subr.mxu0 0.0
      %5707 = vmatpush2.msra.mxu0 0.0
      %5708 = vmatprep.subr.mxu0 0.0
      %5709 = vmatpush2.msra.mxu0 0.0
      %5710 = vmatprep.subr.mxu0 0.0
      %5711 = vmatpush2.msra.mxu0 0.0
      %5712 = vmatprep.subr.mxu0 0.0
      %5713 = vmatpush2.msra.mxu0 0.0
      %5714 = vmatprep.subr.mxu0 0.0
      %5715 = vmatpush2.msra.mxu0 0.0
      %5716 = vmatprep.subr.mxu0 0.0
      %5717 = vmatpush2.msra.mxu0 0.0
      %5718 = vmatprep.subr.mxu0 0.0
      %5719 = vmatpush2.msra.mxu0 0.0
      %5720 = vmatprep.subr.mxu0 0.0
      %5721 = vmatpush2.msra.mxu0 0.0
      %5722 = vmatprep.subr.mxu0 0.0
      %5723 = vmatpush2.msra.mxu0 0.0
      %5724 = vmatprep.subr.mxu0 0.0
      %5725 = vmatpush2.msra.mxu0 0.0
      %5726 = vmatprep.subr.mxu0 0.0
      %5727 = vmatpush2.msra.mxu0 0.0
      %5728 = vmatprep.subr.mxu0 0.0
      %5729 = vmatpush2.msra.mxu0 0.0
      %5730 = vmatprep.mubr.f32.mxu0 0.0
      %5731 = vmatmul.mubr.f32.gmra.mxu0 %v3590
      %v5732 = vpop.f32.mrf.mxu0
      %v5733 = vadd.f32 0.0, %v5732
      %v5734 = vpop.f32.mrf.mxu0
      %5735 = vmatprep.mubr.f32.mxu0 0.0
      %5736 = vmatmul.mubr.f32.gmra.mxu0 %v3592
      %v5737 = vpop.f32.mrf.mxu0
      %v5738 = vadd.f32 0.0, %v5737
      %v5739 = vpop.f32.mrf.mxu0
      %5740 = vmatprep.mubr.f32.mxu0 0.0
      %5741 = vmatmul.mubr.f32.gmra.mxu0 %v3594
      %v5742 = vpop.f32.mrf.mxu0
      %v5743 = vadd.f32 0.0, %v5742
      %v5744 = vpop.f32.mrf.mxu0
      %5745 = vmatprep.mubr.f32.mxu0 0.0
      %5746 = vmatmul.mubr.f32.gmra.mxu0 %v3596
      %v5747 = vpop.f32.mrf.mxu0
      %v5748 = vadd.f32 0.0, %v5747
      %v5749 = vpop.f32.mrf.mxu0
      %5750 = vmatprep.mubr.f32.mxu0 0.0
      %5751 = vmatmul.mubr.f32.gmra.mxu0 %v3598
      %v5752 = vpop.f32.mrf.mxu0
      %v5753 = vadd.f32 0.0, %v5752
      %v5754 = vpop.f32.mrf.mxu0
      %5755 = vmatprep.mubr.f32.mxu0 0.0
      %5756 = vmatmul.mubr.f32.gmra.mxu0 %v3600
      %v5757 = vpop.f32.mrf.mxu0
      %v5758 = vadd.f32 0.0, %v5757
      %v5759 = vpop.f32.mrf.mxu0
      %5760 = vmatprep.mubr.f32.mxu0 0.0
      %5761 = vmatmul.mubr.f32.gmra.mxu0 %v3602
      %v5762 = vpop.f32.mrf.mxu0
      %v5763 = vadd.f32 0.0, %v5762
      %v5764 = vpop.f32.mrf.mxu0
      %5765 = vmatprep.mubr.f32.mxu0 0.0
      %5766 = vmatmul.mubr.f32.gmra.mxu0 %v3604
      %v5767 = vpop.f32.mrf.mxu0
      %v5768 = vadd.f32 0.0, %v5767
      %v5769 = vpop.f32.mrf.mxu0
      %5770 = vmatprep.mubr.f32.mxu0 0.0
      %5771 = vmatmul.mubr.f32.gmra.mxu0 %v3606
      %v5772 = vpop.f32.mrf.mxu0
      %v5773 = vadd.f32 0.0, %v5772
      %v5774 = vpop.f32.mrf.mxu0
      %5775 = vmatprep.mubr.f32.mxu0 0.0
      %5776 = vmatmul.mubr.f32.gmra.mxu0 %v3608
      %v5777 = vpop.f32.mrf.mxu0
      %v5778 = vadd.f32 0.0, %v5777
      %v5779 = vpop.f32.mrf.mxu0
      %5780 = vmatprep.mubr.f32.mxu0 0.0
      %5781 = vmatmul.mubr.f32.gmra.mxu0 %v3610
      %v5782 = vpop.f32.mrf.mxu0
      %v5783 = vadd.f32 0.0, %v5782
      %v5784 = vpop.f32.mrf.mxu0
      %5785 = vmatprep.mubr.f32.mxu0 0.0
      %5786 = vmatmul.mubr.f32.gmra.mxu0 %v3612
      %v5787 = vpop.f32.mrf.mxu0
      %v5788 = vadd.f32 0.0, %v5787
      %v5789 = vpop.f32.mrf.mxu0
      %5790 = vmatprep.mubr.f32.mxu0 0.0
      %5791 = vmatmul.mubr.f32.gmra.mxu0 %v3614
      %v5792 = vpop.f32.mrf.mxu0
      %v5793 = vadd.f32 0.0, %v5792
      %v5794 = vpop.f32.mrf.mxu0
      %5795 = vmatprep.mubr.f32.mxu0 0.0
      %5796 = vmatmul.mubr.f32.gmra.mxu0 %v3616
      %v5797 = vpop.f32.mrf.mxu0
      %v5798 = vadd.f32 0.0, %v5797
      %v5799 = vpop.f32.mrf.mxu0
      %5800 = vmatprep.mubr.f32.mxu0 0.0
      %5801 = vmatmul.mubr.f32.gmra.mxu0 %v3618
      %v5802 = vpop.f32.mrf.mxu0
      %v5803 = vadd.f32 0.0, %v5802
      %v5804 = vpop.f32.mrf.mxu0
      %5805 = vmatprep.mubr.f32.mxu0 0.0
      %5806 = vmatmul.mubr.f32.gmra.mxu0 %v3620
      %v5807 = vpop.f32.mrf.mxu0
      %v5808 = vadd.f32 0.0, %v5807
      %v5809 = vpop.f32.mrf.mxu0
      %5810 = vmatprep.mubr.f32.mxu0 0.0
      %5811 = vmatmul.mubr.f32.gmra.mxu0 %v3622
      %v5812 = vpop.f32.mrf.mxu0
      %v5813 = vadd.f32 0.0, %v5812
      %v5814 = vpop.f32.mrf.mxu0
      %5815 = vmatprep.mubr.f32.mxu0 0.0
      %5816 = vmatmul.mubr.f32.gmra.mxu0 %v3624
      %v5817 = vpop.f32.mrf.mxu0
      %v5818 = vadd.f32 0.0, %v5817
      %v5819 = vpop.f32.mrf.mxu0
      %5820 = vmatprep.mubr.f32.mxu0 0.0
      %5821 = vmatmul.mubr.f32.gmra.mxu0 %v3626
      %v5822 = vpop.f32.mrf.mxu0
      %v5823 = vadd.f32 0.0, %v5822
      %v5824 = vpop.f32.mrf.mxu0
      %5825 = vmatprep.mubr.f32.mxu0 0.0
      %5826 = vmatmul.mubr.f32.gmra.mxu0 %v3628
      %v5827 = vpop.f32.mrf.mxu0
      %v5828 = vadd.f32 0.0, %v5827
      %v5829 = vpop.f32.mrf.mxu0
      %5830 = vmatprep.mubr.f32.mxu0 0.0
      %5831 = vmatmul.mubr.f32.gmra.mxu0 %v3630
      %v5832 = vpop.f32.mrf.mxu0
      %v5833 = vadd.f32 0.0, %v5832
      %v5834 = vpop.f32.mrf.mxu0
      %5835 = vmatprep.mubr.f32.mxu0 0.0
      %5836 = vmatmul.mubr.f32.gmra.mxu0 %v3632
      %v5837 = vpop.f32.mrf.mxu0
      %v5838 = vadd.f32 0.0, %v5837
      %v5839 = vpop.f32.mrf.mxu0
      %5840 = vmatprep.mubr.f32.mxu0 0.0
      %5841 = vmatmul.mubr.f32.gmra.mxu0 %v3634
      %v5842 = vpop.f32.mrf.mxu0
      %v5843 = vadd.f32 0.0, %v5842
      %v5844 = vpop.f32.mrf.mxu0
      %5845 = vmatprep.mubr.f32.mxu0 0.0
      %5846 = vmatmul.mubr.f32.gmra.mxu0 %v3636
      %v5847 = vpop.f32.mrf.mxu0
      %v5848 = vadd.f32 0.0, %v5847
      %v5849 = vpop.f32.mrf.mxu0
      %5850 = vmatprep.mubr.f32.mxu0 0.0
      %5851 = vmatmul.mubr.f32.gmra.mxu0 %v3638
      %v5852 = vpop.f32.mrf.mxu0
      %v5853 = vadd.f32 0.0, %v5852
      %v5854 = vpop.f32.mrf.mxu0
      %5855 = vmatprep.mubr.f32.mxu0 0.0
      %5856 = vmatmul.mubr.f32.gmra.mxu0 %v3640
      %v5857 = vpop.f32.mrf.mxu0
      %v5858 = vadd.f32 0.0, %v5857
      %v5859 = vpop.f32.mrf.mxu0
      %5860 = vmatprep.mubr.f32.mxu0 0.0
      %5861 = vmatmul.mubr.f32.gmra.mxu0 %v3642
      %v5862 = vpop.f32.mrf.mxu0
      %v5863 = vadd.f32 0.0, %v5862
      %v5864 = vpop.f32.mrf.mxu0
      %5865 = vmatprep.mubr.f32.mxu0 0.0
      %5866 = vmatmul.mubr.f32.gmra.mxu0 %v3644
      %v5867 = vpop.f32.mrf.mxu0
      %v5868 = vadd.f32 0.0, %v5867
      %v5869 = vpop.f32.mrf.mxu0
      %5870 = vmatprep.mubr.f32.mxu0 0.0
      %5871 = vmatmul.mubr.f32.gmra.mxu0 %v4848
      %v5872 = vpop.f32.mrf.mxu0
      %v5873 = vadd.f32 0.0, %v5872
      %v5874 = vpop.f32.mrf.mxu0
      %5875 = vmatprep.mubr.f32.mxu0 0.0
      %5876 = vmatmul.mubr.f32.gmra.mxu0 %v4850
      %v5877 = vpop.f32.mrf.mxu0
      %v5878 = vadd.f32 0.0, %v5877
      %v5879 = vpop.f32.mrf.mxu0
      %5880 = vmatprep.mubr.f32.mxu0 0.0
      %5881 = vmatmul.mubr.f32.gmra.mxu0 %v5659
      %v5882 = vpop.f32.mrf.mxu0
      %v5883 = vadd.f32 0.0, %v5882
      %v5884 = vpop.f32.mrf.mxu0
      %5885 = vmatprep.mubr.f32.mxu0 0.0
      %5886 = vmatmul.mubr.f32.gmra.mxu0 %v5661
      %v5887 = vpop.f32.mrf.mxu0
      %v5888 = vadd.f32 0.0, %v5887
      %v5889 = vpop.f32.mrf.mxu0
      %5890 = vdwg.mxu0
      %v5891 = vadd.f32 %v5619, %v5733
      %v5892 = vadd.f32 %v5620, %v5738
      %v5893 = vadd.f32 %v5621, %v5743
      %v5894 = vadd.f32 %v5622, %v5748
      %v5895 = vadd.f32 %v5623, %v5753
      %v5896 = vadd.f32 %v5624, %v5758
      %v5897 = vadd.f32 %v5625, %v5763
      %v5898 = vadd.f32 %v5626, %v5768
      %v5899 = vadd.f32 %v5627, %v5773
      %v5900 = vadd.f32 %v5628, %v5778
      %v5901 = vadd.f32 %v5629, %v5783
      %v5902 = vadd.f32 %v5630, %v5788
      %v5903 = vadd.f32 %v5631, %v5793
      %v5904 = vadd.f32 %v5632, %v5798
      %v5905 = vadd.f32 %v5633, %v5803
      %v5906 = vadd.f32 %v5634, %v5808
      %v5907 = vadd.f32 %v5635, %v5813
      %v5908 = vadd.f32 %v5636, %v5818
      %v5909 = vadd.f32 %v5637, %v5823
      %v5910 = vadd.f32 %v5638, %v5828
      %v5911 = vadd.f32 %v5639, %v5833
      %v5912 = vadd.f32 %v5640, %v5838
      %v5913 = vadd.f32 %v5641, %v5843
      %v5914 = vadd.f32 %v5642, %v5848
      %v5915 = vadd.f32 %v5643, %v5853
      %v5916 = vadd.f32 %v5644, %v5858
      %v5917 = vadd.f32 %v5645, %v5863
      %v5918 = vadd.f32 %v5646, %v5868
      %v5919 = vadd.f32 %v5647, %v5873
      %v5920 = vadd.f32 %v5648, %v5878
      %v5921 = vadd.f32 %v5649, %v5883
      %v5922 = vadd.f32 %v5650, %v5888
      %v5923 = vrot.slane %v3448, 2
      %v5924 = vrot.slane %v3449, 2
      %v5925 = vsel %vm1171, %v5923, %v5924
      %v5926 = vrot.slane %v3450, 2
      %v5927 = vsel %vm1171, %v5924, %v5926
      %s5928 = scalar_lea.vmem %s4, 32
      %v5929 = vld [vmem:[%s5928] sm:$0xf]
      %v5930 = vsel %vm279, %v5925, 0
      %v5932 = vsel %vm279, %v5927, 0
      %v5935 = vsel %vm650, %v5929, 0
      %5937 = vmatprep.subr.mxu0 0.0
      %5938 = vmatpush1.msra.mxu0 0.0
      %5939 = vmatprep.subr.mxu0 0.0
      %5940 = vmatpush1.msra.mxu0 0.0
      %5941 = vmatprep.subr.mxu0 0.0
      %5942 = vmatpush1.msra.mxu0 0.0
      %5943 = vmatprep.subr.mxu0 0.0
      %5944 = vmatpush1.msra.mxu0 0.0
      %5945 = vmatprep.subr.mxu0 0.0
      %5946 = vmatpush1.msra.mxu0 0.0
      %5947 = vmatprep.subr.mxu0 0.0
      %5948 = vmatpush1.msra.mxu0 0.0
      %5949 = vmatprep.subr.mxu0 0.0
      %5950 = vmatpush1.msra.mxu0 0.0
      %5951 = vmatprep.subr.mxu0 0.0
      %5952 = vmatpush1.msra.mxu0 0.0
      %5953 = vmatprep.subr.mxu0 0.0
      %5954 = vmatpush1.msra.mxu0 0.0
      %5955 = vmatprep.subr.mxu0 0.0
      %5956 = vmatpush1.msra.mxu0 0.0
      %5957 = vmatprep.subr.mxu0 0.0
      %5958 = vmatpush1.msra.mxu0 0.0
      %5959 = vmatprep.subr.mxu0 0.0
      %5960 = vmatpush1.msra.mxu0 0.0
      %5961 = vmatprep.subr.mxu0 0.0
      %5962 = vmatpush1.msra.mxu0 0.0
      %5963 = vmatprep.subr.mxu0 0.0
      %5964 = vmatpush1.msra.mxu0 0.0
      %5965 = vmatprep.subr.mxu0 0.0
      %5966 = vmatpush1.msra.mxu0 0.0
      %5967 = vmatprep.subr.mxu0 0.0
      %5968 = vmatpush1.msra.mxu0 %v5935
      %5969 = vmatprep.subr.mxu0 0.0
      %5970 = vmatpush2.msra.mxu0 0.0
      %5971 = vmatprep.subr.mxu0 0.0
      %5972 = vmatpush2.msra.mxu0 0.0
      %5973 = vmatprep.subr.mxu0 0.0
      %5974 = vmatpush2.msra.mxu0 0.0
      %5975 = vmatprep.subr.mxu0 0.0
      %5976 = vmatpush2.msra.mxu0 0.0
      %5977 = vmatprep.subr.mxu0 0.0
      %5978 = vmatpush2.msra.mxu0 0.0
      %5979 = vmatprep.subr.mxu0 0.0
      %5980 = vmatpush2.msra.mxu0 0.0
      %5981 = vmatprep.subr.mxu0 0.0
      %5982 = vmatpush2.msra.mxu0 0.0
      %5983 = vmatprep.subr.mxu0 0.0
      %5984 = vmatpush2.msra.mxu0 0.0
      %5985 = vmatprep.subr.mxu0 0.0
      %5986 = vmatpush2.msra.mxu0 0.0
      %5987 = vmatprep.subr.mxu0 0.0
      %5988 = vmatpush2.msra.mxu0 0.0
      %5989 = vmatprep.subr.mxu0 0.0
      %5990 = vmatpush2.msra.mxu0 0.0
      %5991 = vmatprep.subr.mxu0 0.0
      %5992 = vmatpush2.msra.mxu0 0.0
      %5993 = vmatprep.subr.mxu0 0.0
      %5994 = vmatpush2.msra.mxu0 0.0
      %5995 = vmatprep.subr.mxu0 0.0
      %5996 = vmatpush2.msra.mxu0 0.0
      %5997 = vmatprep.subr.mxu0 0.0
      %5998 = vmatpush2.msra.mxu0 0.0
      %5999 = vmatprep.subr.mxu0 0.0
      %6000 = vmatpush2.msra.mxu0 0.0
      %6001 = vmatprep.mubr.f32.mxu0 0.0
      %6002 = vmatmul.mubr.f32.gmra.mxu0 %v4256
      %v6003 = vpop.f32.mrf.mxu0
      %v6004 = vadd.f32 0.0, %v6003
      %v6005 = vpop.f32.mrf.mxu0
      %6006 = vmatprep.mubr.f32.mxu0 0.0
      %6007 = vmatmul.mubr.f32.gmra.mxu0 %v4258
      %v6008 = vpop.f32.mrf.mxu0
      %v6009 = vadd.f32 0.0, %v6008
      %v6010 = vpop.f32.mrf.mxu0
      %6011 = vmatprep.mubr.f32.mxu0 0.0
      %6012 = vmatmul.mubr.f32.gmra.mxu0 %v4260
      %v6013 = vpop.f32.mrf.mxu0
      %v6014 = vadd.f32 0.0, %v6013
      %v6015 = vpop.f32.mrf.mxu0
      %6016 = vmatprep.mubr.f32.mxu0 0.0
      %6017 = vmatmul.mubr.f32.gmra.mxu0 %v4262
      %v6018 = vpop.f32.mrf.mxu0
      %v6019 = vadd.f32 0.0, %v6018
      %v6020 = vpop.f32.mrf.mxu0
      %6021 = vmatprep.mubr.f32.mxu0 0.0
      %6022 = vmatmul.mubr.f32.gmra.mxu0 %v4264
      %v6023 = vpop.f32.mrf.mxu0
      %v6024 = vadd.f32 0.0, %v6023
      %v6025 = vpop.f32.mrf.mxu0
      %6026 = vmatprep.mubr.f32.mxu0 0.0
      %6027 = vmatmul.mubr.f32.gmra.mxu0 %v4266
      %v6028 = vpop.f32.mrf.mxu0
      %v6029 = vadd.f32 0.0, %v6028
      %v6030 = vpop.f32.mrf.mxu0
      %6031 = vmatprep.mubr.f32.mxu0 0.0
      %6032 = vmatmul.mubr.f32.gmra.mxu0 %v4268
      %v6033 = vpop.f32.mrf.mxu0
      %v6034 = vadd.f32 0.0, %v6033
      %v6035 = vpop.f32.mrf.mxu0
      %6036 = vmatprep.mubr.f32.mxu0 0.0
      %6037 = vmatmul.mubr.f32.gmra.mxu0 %v4270
      %v6038 = vpop.f32.mrf.mxu0
      %v6039 = vadd.f32 0.0, %v6038
      %v6040 = vpop.f32.mrf.mxu0
      %6041 = vmatprep.mubr.f32.mxu0 0.0
      %6042 = vmatmul.mubr.f32.gmra.mxu0 %v4272
      %v6043 = vpop.f32.mrf.mxu0
      %v6044 = vadd.f32 0.0, %v6043
      %v6045 = vpop.f32.mrf.mxu0
      %6046 = vmatprep.mubr.f32.mxu0 0.0
      %6047 = vmatmul.mubr.f32.gmra.mxu0 %v4274
      %v6048 = vpop.f32.mrf.mxu0
      %v6049 = vadd.f32 0.0, %v6048
      %v6050 = vpop.f32.mrf.mxu0
      %6051 = vmatprep.mubr.f32.mxu0 0.0
      %6052 = vmatmul.mubr.f32.gmra.mxu0 %v4276
      %v6053 = vpop.f32.mrf.mxu0
      %v6054 = vadd.f32 0.0, %v6053
      %v6055 = vpop.f32.mrf.mxu0
      %6056 = vmatprep.mubr.f32.mxu0 0.0
      %6057 = vmatmul.mubr.f32.gmra.mxu0 %v4278
      %v6058 = vpop.f32.mrf.mxu0
      %v6059 = vadd.f32 0.0, %v6058
      %v6060 = vpop.f32.mrf.mxu0
      %6061 = vmatprep.mubr.f32.mxu0 0.0
      %6062 = vmatmul.mubr.f32.gmra.mxu0 %v4280
      %v6063 = vpop.f32.mrf.mxu0
      %v6064 = vadd.f32 0.0, %v6063
      %v6065 = vpop.f32.mrf.mxu0
      %6066 = vmatprep.mubr.f32.mxu0 0.0
      %6067 = vmatmul.mubr.f32.gmra.mxu0 %v4282
      %v6068 = vpop.f32.mrf.mxu0
      %v6069 = vadd.f32 0.0, %v6068
      %v6070 = vpop.f32.mrf.mxu0
      %6071 = vmatprep.mubr.f32.mxu0 0.0
      %6072 = vmatmul.mubr.f32.gmra.mxu0 %v4284
      %v6073 = vpop.f32.mrf.mxu0
      %v6074 = vadd.f32 0.0, %v6073
      %v6075 = vpop.f32.mrf.mxu0
      %6076 = vmatprep.mubr.f32.mxu0 0.0
      %6077 = vmatmul.mubr.f32.gmra.mxu0 %v4286
      %v6078 = vpop.f32.mrf.mxu0
      %v6079 = vadd.f32 0.0, %v6078
      %v6080 = vpop.f32.mrf.mxu0
      %6081 = vmatprep.mubr.f32.mxu0 0.0
      %6082 = vmatmul.mubr.f32.gmra.mxu0 %v4288
      %v6083 = vpop.f32.mrf.mxu0
      %v6084 = vadd.f32 0.0, %v6083
      %v6085 = vpop.f32.mrf.mxu0
      %6086 = vmatprep.mubr.f32.mxu0 0.0
      %6087 = vmatmul.mubr.f32.gmra.mxu0 %v4290
      %v6088 = vpop.f32.mrf.mxu0
      %v6089 = vadd.f32 0.0, %v6088
      %v6090 = vpop.f32.mrf.mxu0
      %6091 = vmatprep.mubr.f32.mxu0 0.0
      %6092 = vmatmul.mubr.f32.gmra.mxu0 %v4292
      %v6093 = vpop.f32.mrf.mxu0
      %v6094 = vadd.f32 0.0, %v6093
      %v6095 = vpop.f32.mrf.mxu0
      %6096 = vmatprep.mubr.f32.mxu0 0.0
      %6097 = vmatmul.mubr.f32.gmra.mxu0 %v4294
      %v6098 = vpop.f32.mrf.mxu0
      %v6099 = vadd.f32 0.0, %v6098
      %v6100 = vpop.f32.mrf.mxu0
      %6101 = vmatprep.mubr.f32.mxu0 0.0
      %6102 = vmatmul.mubr.f32.gmra.mxu0 %v4296
      %v6103 = vpop.f32.mrf.mxu0
      %v6104 = vadd.f32 0.0, %v6103
      %v6105 = vpop.f32.mrf.mxu0
      %6106 = vmatprep.mubr.f32.mxu0 0.0
      %6107 = vmatmul.mubr.f32.gmra.mxu0 %v4298
      %v6108 = vpop.f32.mrf.mxu0
      %v6109 = vadd.f32 0.0, %v6108
      %v6110 = vpop.f32.mrf.mxu0
      %6111 = vmatprep.mubr.f32.mxu0 0.0
      %6112 = vmatmul.mubr.f32.gmra.mxu0 %v4300
      %v6113 = vpop.f32.mrf.mxu0
      %v6114 = vadd.f32 0.0, %v6113
      %v6115 = vpop.f32.mrf.mxu0
      %6116 = vmatprep.mubr.f32.mxu0 0.0
      %6117 = vmatmul.mubr.f32.gmra.mxu0 %v4302
      %v6118 = vpop.f32.mrf.mxu0
      %v6119 = vadd.f32 0.0, %v6118
      %v6120 = vpop.f32.mrf.mxu0
      %6121 = vmatprep.mubr.f32.mxu0 0.0
      %6122 = vmatmul.mubr.f32.gmra.mxu0 %v4304
      %v6123 = vpop.f32.mrf.mxu0
      %v6124 = vadd.f32 0.0, %v6123
      %v6125 = vpop.f32.mrf.mxu0
      %6126 = vmatprep.mubr.f32.mxu0 0.0
      %6127 = vmatmul.mubr.f32.gmra.mxu0 %v4306
      %v6128 = vpop.f32.mrf.mxu0
      %v6129 = vadd.f32 0.0, %v6128
      %v6130 = vpop.f32.mrf.mxu0
      %6131 = vmatprep.mubr.f32.mxu0 0.0
      %6132 = vmatmul.mubr.f32.gmra.mxu0 %v4308
      %v6133 = vpop.f32.mrf.mxu0
      %v6134 = vadd.f32 0.0, %v6133
      %v6135 = vpop.f32.mrf.mxu0
      %6136 = vmatprep.mubr.f32.mxu0 0.0
      %6137 = vmatmul.mubr.f32.gmra.mxu0 %v4310
      %v6138 = vpop.f32.mrf.mxu0
      %v6139 = vadd.f32 0.0, %v6138
      %v6140 = vpop.f32.mrf.mxu0
      %6141 = vmatprep.mubr.f32.mxu0 0.0
      %6142 = vmatmul.mubr.f32.gmra.mxu0 %v5119
      %v6143 = vpop.f32.mrf.mxu0
      %v6144 = vadd.f32 0.0, %v6143
      %v6145 = vpop.f32.mrf.mxu0
      %6146 = vmatprep.mubr.f32.mxu0 0.0
      %6147 = vmatmul.mubr.f32.gmra.mxu0 %v5121
      %v6148 = vpop.f32.mrf.mxu0
      %v6149 = vadd.f32 0.0, %v6148
      %v6150 = vpop.f32.mrf.mxu0
      %6151 = vmatprep.mubr.f32.mxu0 0.0
      %6152 = vmatmul.mubr.f32.gmra.mxu0 %v5930
      %v6153 = vpop.f32.mrf.mxu0
      %v6154 = vadd.f32 0.0, %v6153
      %v6155 = vpop.f32.mrf.mxu0
      %6156 = vmatprep.mubr.f32.mxu0 0.0
      %6157 = vmatmul.mubr.f32.gmra.mxu0 %v5932
      %v6158 = vpop.f32.mrf.mxu0
      %v6159 = vadd.f32 0.0, %v6158
      %v6160 = vpop.f32.mrf.mxu0
      %6161 = vdwg.mxu0
      %v6162 = vadd.f32 %v5891, %v6004
      %v6163 = vadd.f32 %v5892, %v6009
      %v6164 = vadd.f32 %v5893, %v6014
      %v6165 = vadd.f32 %v5894, %v6019
      %v6166 = vadd.f32 %v5895, %v6024
      %v6167 = vadd.f32 %v5896, %v6029
      %v6168 = vadd.f32 %v5897, %v6034
      %v6169 = vadd.f32 %v5898, %v6039
      %v6170 = vadd.f32 %v5899, %v6044
      %v6171 = vadd.f32 %v5900, %v6049
      %v6172 = vadd.f32 %v5901, %v6054
      %v6173 = vadd.f32 %v5902, %v6059
      %v6174 = vadd.f32 %v5903, %v6064
      %v6175 = vadd.f32 %v5904, %v6069
      %v6176 = vadd.f32 %v5905, %v6074
      %v6177 = vadd.f32 %v5906, %v6079
      %v6178 = vadd.f32 %v5907, %v6084
      %v6179 = vadd.f32 %v5908, %v6089
      %v6180 = vadd.f32 %v5909, %v6094
      %v6181 = vadd.f32 %v5910, %v6099
      %v6182 = vadd.f32 %v5911, %v6104
      %v6183 = vadd.f32 %v5912, %v6109
      %v6184 = vadd.f32 %v5913, %v6114
      %v6185 = vadd.f32 %v5914, %v6119
      %v6186 = vadd.f32 %v5915, %v6124
      %v6187 = vadd.f32 %v5916, %v6129
      %v6188 = vadd.f32 %v5917, %v6134
      %v6189 = vadd.f32 %v5918, %v6139
      %v6190 = vadd.f32 %v5919, %v6144
      %v6191 = vadd.f32 %v5920, %v6149
      %v6192 = vadd.f32 %v5921, %v6154
      %v6193 = vadd.f32 %v5922, %v6159
      %v6194 = vld [vmem:[%s5] sm:$0x1]
      %v6196 = vlaneseq
      %v6197 = vshrl.u32 %v6196, 7
      %v6198 = vsub.s32 0, %v6197
      %v6199 = vrot.slane %v6194, %v6198
      %v6201 = vmul.f32 %v6162, %v6199
      %v6202 = vmul.f32 %v6163, %v6199
      %v6203 = vmul.f32 %v6164, %v6199
      %v6204 = vmul.f32 %v6165, %v6199
      %v6205 = vmul.f32 %v6166, %v6199
      %v6206 = vmul.f32 %v6167, %v6199
      %v6207 = vmul.f32 %v6168, %v6199
      %v6208 = vmul.f32 %v6169, %v6199
      %v6209 = vmul.f32 %v6170, %v6199
      %v6210 = vmul.f32 %v6171, %v6199
      %v6211 = vmul.f32 %v6172, %v6199
      %v6212 = vmul.f32 %v6173, %v6199
      %v6213 = vmul.f32 %v6174, %v6199
      %v6214 = vmul.f32 %v6175, %v6199
      %v6215 = vmul.f32 %v6176, %v6199
      %v6216 = vmul.f32 %v6177, %v6199
      %v6217 = vmul.f32 %v6178, %v6199
      %v6218 = vmul.f32 %v6179, %v6199
      %v6219 = vmul.f32 %v6180, %v6199
      %v6220 = vmul.f32 %v6181, %v6199
      %v6221 = vmul.f32 %v6182, %v6199
      %v6222 = vmul.f32 %v6183, %v6199
      %v6223 = vmul.f32 %v6184, %v6199
      %v6224 = vmul.f32 %v6185, %v6199
      %v6225 = vmul.f32 %v6186, %v6199
      %v6226 = vmul.f32 %v6187, %v6199
      %v6227 = vmul.f32 %v6188, %v6199
      %v6228 = vmul.f32 %v6189, %v6199
      %v6229 = vmul.f32 %v6190, %v6199
      %v6230 = vmul.f32 %v6191, %v6199
      %v6231 = vmul.f32 %v6192, %v6199
      %v6232 = vmul.f32 %v6193, %v6199
      %v6233 = vld [vmem:[%s6] sm:$0x1]
      %v6235 = vlaneseq
      %v6236 = vshrl.u32 %v6235, 7
      %v6237 = vsub.s32 0, %v6236
      %v6238 = vrot.slane %v6233, %v6237
      %v6240 = vadd.f32 %v6201, %v6238
      %v6241 = vadd.f32 %v6202, %v6238
      %v6242 = vadd.f32 %v6203, %v6238
      %v6243 = vadd.f32 %v6204, %v6238
      %v6244 = vadd.f32 %v6205, %v6238
      %v6245 = vadd.f32 %v6206, %v6238
      %v6246 = vadd.f32 %v6207, %v6238
      %v6247 = vadd.f32 %v6208, %v6238
      %v6248 = vadd.f32 %v6209, %v6238
      %v6249 = vadd.f32 %v6210, %v6238
      %v6250 = vadd.f32 %v6211, %v6238
      %v6251 = vadd.f32 %v6212, %v6238
      %v6252 = vadd.f32 %v6213, %v6238
      %v6253 = vadd.f32 %v6214, %v6238
      %v6254 = vadd.f32 %v6215, %v6238
      %v6255 = vadd.f32 %v6216, %v6238
      %v6256 = vadd.f32 %v6217, %v6238
      %v6257 = vadd.f32 %v6218, %v6238
      %v6258 = vadd.f32 %v6219, %v6238
      %v6259 = vadd.f32 %v6220, %v6238
      %v6260 = vadd.f32 %v6221, %v6238
      %v6261 = vadd.f32 %v6222, %v6238
      %v6262 = vadd.f32 %v6223, %v6238
      %v6263 = vadd.f32 %v6224, %v6238
      %v6264 = vadd.f32 %v6225, %v6238
      %v6265 = vadd.f32 %v6226, %v6238
      %v6266 = vadd.f32 %v6227, %v6238
      %v6267 = vadd.f32 %v6228, %v6238
      %v6268 = vadd.f32 %v6229, %v6238
      %v6269 = vadd.f32 %v6230, %v6238
      %v6270 = vadd.f32 %v6231, %v6238
      %v6271 = vadd.f32 %v6232, %v6238
      %v6272 = vld [vmem:[%s273] sm:$0xff]
      %v6273 = vld [vmem:[%s273 + $0x8] sm:$0xff]
      %v6274 = vld [vmem:[%s273 + $0x10] sm:$0xff]
      %v6275 = vld [vmem:[%s273 + $0x18] sm:$0xff]
      %v6276 = vld [vmem:[%s273 + $0x20] sm:$0xff]
      %v6277 = vld [vmem:[%s273 + $0x28] sm:$0xff]
      %v6278 = vld [vmem:[%s273 + $0x30] sm:$0xff]
      %v6279 = vld [vmem:[%s273 + $0x38] sm:$0xff]
      %v6280 = vld [vmem:[%s273 + $0x40] sm:$0xff]
      %v6281 = vld [vmem:[%s273 + $0x48] sm:$0xff]
      %v6282 = vld [vmem:[%s273 + $0x50] sm:$0xff]
      %v6283 = vld [vmem:[%s273 + $0x58] sm:$0xff]
      %v6284 = vld [vmem:[%s273 + $0x60] sm:$0xff]
      %v6285 = vld [vmem:[%s273 + $0x68] sm:$0xff]
      %v6286 = vld [vmem:[%s273 + $0x70] sm:$0xff]
      %v6287 = vld [vmem:[%s273 + $0x78] sm:$0xff]
      %v6288 = vld [vmem:[%s273 + $0x80] sm:$0xff]
      %v6289 = vld [vmem:[%s273 + $0x88] sm:$0xff]
      %v6290 = vld [vmem:[%s273 + $0x90] sm:$0xff]
      %v6291 = vld [vmem:[%s273 + $0x98] sm:$0xff]
      %v6292 = vld [vmem:[%s273 + $0xa0] sm:$0xff]
      %v6293 = vld [vmem:[%s273 + $0xa8] sm:$0xff]
      %v6294 = vld [vmem:[%s273 + $0xb0] sm:$0xff]
      %v6295 = vld [vmem:[%s273 + $0xb8] sm:$0xff]
      %v6296 = vld [vmem:[%s273 + $0xc0] sm:$0xff]
      %v6297 = vld [vmem:[%s273 + $0xc8] sm:$0xff]
      %v6298 = vld [vmem:[%s273 + $0xd0] sm:$0xff]
      %v6299 = vld [vmem:[%s273 + $0xd8] sm:$0xff]
      %v6300 = vld [vmem:[%s273 + $0xe0] sm:$0xff]
      %v6301 = vld [vmem:[%s273 + $0xe8] sm:$0xff]
      %v6302 = vld [vmem:[%s273 + $0xf0] sm:$0xff]
      %v6303 = vld [vmem:[%s273 + $0xf8] sm:$0xff]
      %v6304 = vadd.f32 %v6240, %v6272
      %v6305 = vadd.f32 %v6241, %v6273
      %v6306 = vadd.f32 %v6242, %v6274
      %v6307 = vadd.f32 %v6243, %v6275
      %v6308 = vadd.f32 %v6244, %v6276
      %v6309 = vadd.f32 %v6245, %v6277
      %v6310 = vadd.f32 %v6246, %v6278
      %v6311 = vadd.f32 %v6247, %v6279
      %v6312 = vadd.f32 %v6248, %v6280
      %v6313 = vadd.f32 %v6249, %v6281
      %v6314 = vadd.f32 %v6250, %v6282
      %v6315 = vadd.f32 %v6251, %v6283
      %v6316 = vadd.f32 %v6252, %v6284
      %v6317 = vadd.f32 %v6253, %v6285
      %v6318 = vadd.f32 %v6254, %v6286
      %v6319 = vadd.f32 %v6255, %v6287
      %v6320 = vadd.f32 %v6256, %v6288
      %v6321 = vadd.f32 %v6257, %v6289
      %v6322 = vadd.f32 %v6258, %v6290
      %v6323 = vadd.f32 %v6259, %v6291
      %v6324 = vadd.f32 %v6260, %v6292
      %v6325 = vadd.f32 %v6261, %v6293
      %v6326 = vadd.f32 %v6262, %v6294
      %v6327 = vadd.f32 %v6263, %v6295
      %v6328 = vadd.f32 %v6264, %v6296
      %v6329 = vadd.f32 %v6265, %v6297
      %v6330 = vadd.f32 %v6266, %v6298
      %v6331 = vadd.f32 %v6267, %v6299
      %v6332 = vadd.f32 %v6268, %v6300
      %v6333 = vadd.f32 %v6269, %v6301
      %v6334 = vadd.f32 %v6270, %v6302
      %v6335 = vadd.f32 %v6271, %v6303
      %v6336 = vmax.f32 %v6304, 0.0
      %v6337 = vmax.f32 %v6305, 0.0
      %v6338 = vmax.f32 %v6306, 0.0
      %v6339 = vmax.f32 %v6307, 0.0
      %v6340 = vmax.f32 %v6308, 0.0
      %v6341 = vmax.f32 %v6309, 0.0
      %v6342 = vmax.f32 %v6310, 0.0
      %v6343 = vmax.f32 %v6311, 0.0
      %v6344 = vmax.f32 %v6312, 0.0
      %v6345 = vmax.f32 %v6313, 0.0
      %v6346 = vmax.f32 %v6314, 0.0
      %v6347 = vmax.f32 %v6315, 0.0
      %v6348 = vmax.f32 %v6316, 0.0
      %v6349 = vmax.f32 %v6317, 0.0
      %v6350 = vmax.f32 %v6318, 0.0
      %v6351 = vmax.f32 %v6319, 0.0
      %v6352 = vmax.f32 %v6320, 0.0
      %v6353 = vmax.f32 %v6321, 0.0
      %v6354 = vmax.f32 %v6322, 0.0
      %v6355 = vmax.f32 %v6323, 0.0
      %v6356 = vmax.f32 %v6324, 0.0
      %v6357 = vmax.f32 %v6325, 0.0
      %v6358 = vmax.f32 %v6326, 0.0
      %v6359 = vmax.f32 %v6327, 0.0
      %v6360 = vmax.f32 %v6328, 0.0
      %v6361 = vmax.f32 %v6329, 0.0
      %v6362 = vmax.f32 %v6330, 0.0
      %v6363 = vmax.f32 %v6331, 0.0
      %v6364 = vmax.f32 %v6332, 0.0
      %v6365 = vmax.f32 %v6333, 0.0
      %v6366 = vmax.f32 %v6334, 0.0
      %v6367 = vmax.f32 %v6335, 0.0
      %6368 = vst.msk [vmem:[%s278] sm:$0xff] %vm279, %v6336
      %6369 = vst.msk [vmem:[%s278 + $0x8] sm:$0xff] %vm279, %v6337
      %6370 = vst.msk [vmem:[%s278 + $0x10] sm:$0xff] %vm279, %v6338
      %6371 = vst.msk [vmem:[%s278 + $0x18] sm:$0xff] %vm279, %v6339
      %6372 = vst.msk [vmem:[%s278 + $0x20] sm:$0xff] %vm279, %v6340
      %6373 = vst.msk [vmem:[%s278 + $0x28] sm:$0xff] %vm279, %v6341
      %6374 = vst.msk [vmem:[%s278 + $0x30] sm:$0xff] %vm279, %v6342
      %6375 = vst.msk [vmem:[%s278 + $0x38] sm:$0xff] %vm279, %v6343
      %6376 = vst.msk [vmem:[%s278 + $0x40] sm:$0xff] %vm279, %v6344
      %6377 = vst.msk [vmem:[%s278 + $0x48] sm:$0xff] %vm279, %v6345
      %6378 = vst.msk [vmem:[%s278 + $0x50] sm:$0xff] %vm279, %v6346
      %6379 = vst.msk [vmem:[%s278 + $0x58] sm:$0xff] %vm279, %v6347
      %6380 = vst.msk [vmem:[%s278 + $0x60] sm:$0xff] %vm279, %v6348
      %6381 = vst.msk [vmem:[%s278 + $0x68] sm:$0xff] %vm279, %v6349
      %6382 = vst.msk [vmem:[%s278 + $0x70] sm:$0xff] %vm279, %v6350
      %6383 = vst.msk [vmem:[%s278 + $0x78] sm:$0xff] %vm279, %v6351
      %6384 = vst.msk [vmem:[%s278 + $0x80] sm:$0xff] %vm279, %v6352
      %6385 = vst.msk [vmem:[%s278 + $0x88] sm:$0xff] %vm279, %v6353
      %6386 = vst.msk [vmem:[%s278 + $0x90] sm:$0xff] %vm279, %v6354
      %6387 = vst.msk [vmem:[%s278 + $0x98] sm:$0xff] %vm279, %v6355
      %6388 = vst.msk [vmem:[%s278 + $0xa0] sm:$0xff] %vm279, %v6356
      %6389 = vst.msk [vmem:[%s278 + $0xa8] sm:$0xff] %vm279, %v6357
      %6390 = vst.msk [vmem:[%s278 + $0xb0] sm:$0xff] %vm279, %v6358
      %6391 = vst.msk [vmem:[%s278 + $0xb8] sm:$0xff] %vm279, %v6359
      %6392 = vst.msk [vmem:[%s278 + $0xc0] sm:$0xff] %vm279, %v6360
      %6393 = vst.msk [vmem:[%s278 + $0xc8] sm:$0xff] %vm279, %v6361
      %6394 = vst.msk [vmem:[%s278 + $0xd0] sm:$0xff] %vm279, %v6362
      %6395 = vst.msk [vmem:[%s278 + $0xd8] sm:$0xff] %vm279, %v6363
      %6396 = vst.msk [vmem:[%s278 + $0xe0] sm:$0xff] %vm279, %v6364
      %6397 = vst.msk [vmem:[%s278 + $0xe8] sm:$0xff] %vm279, %v6365
      %6398 = vst.msk [vmem:[%s278 + $0xf0] sm:$0xff] %vm279, %v6366
      %6399 = vst.msk [vmem:[%s278 + $0xf8] sm:$0xff] %vm279, %v6367
      %p6400 = scmp.lt.s32.totalorder %s18, 1
      %s6401 = scalar_select %p6400, %s18, 1
      %s6402 = smul.addr %s6401, 32
      %s6403 = smul.addr %s6402, 8
      %s6404 = scalar_lea.vmem %s7, %s6403
      // Predicated region
      $region49: #{tpu_custom_call.1} parent=47 // pred_check
        %p6405 = pneg %p188
      $region50: #{tpu_custom_call.1} parent=47 // pred_check_branch
        %6407 = sbr.rel (%p6405) target = $region52
      $region51: #{tpu_custom_call.1} parent=47 // pred_region
        _
      $region52: #{tpu_custom_call.1} parent=47 // pred_fallthru
        _
    $region48: #{tpu_custom_call.1} parent=5 // pred_fallthru
      _
    %p6408 = scmp.le.s32.totalorder 2, %s13
    // Predicated region
    $region53: #{tpu_custom_call.1} parent=5 // pred_check
      %p6409 = pneg %p6408
    $region54: #{tpu_custom_call.1} parent=5 // pred_check_branch
      %6411 = sbr.rel (%p6409) target = $region56
    $region55: #{tpu_custom_call.1} parent=5 // pred_region
      %s6412 = ssub.s32 %s13, 2
      // Predicated region
      $region57: #{tpu_custom_call.1} parent=55 // pred_check
        %p6413 = pneg %p194
      $region58: #{tpu_custom_call.1} parent=55 // pred_check_branch
        %6415 = sbr.rel (%p6413) target = $region60
      $region59: #{tpu_custom_call.1} parent=55 // pred_region
        %p6416 = scmp.lt.s32.totalorder %s19, 1
        %s6417 = scalar_select %p6416, %s19, 1
        %s6418 = smul.addr %s6417, 32
        %s6419 = smul.addr %s6418, 8
        %s6420 = scalar_lea.vmem %s7, %s6419
      $region60: #{tpu_custom_call.1} parent=55 // pred_fallthru
        _
    $region56: #{tpu_custom_call.1} parent=5 // pred_fallthru
      _
  $region6: #{tpu_custom_call.1} parent=0 // loop_footer
    %s17 = sadd.s32 1, %s13
  $region7: #{tpu_custom_call.1} parent=0 // loop_footer_branch
    %12 = sbr.rel target = $region3
  $region8: #{tpu_custom_call.1} parent=0 // loop_exit
    _

</llo_original>
